<compile_context>
chip_gen: v6e
topology: v6e:2x2x1
jax: 0.10.0
libtpu: 0.0.40
codegen_flags: <defaults>
</compile_context>

<pallas_src>
import functools

import jax
import jax.numpy as jnp
from jax.experimental import pallas as pl
from jax.experimental.pallas import tpu as pltpu


# ----------------------------------------------------------------------------
# Fused ASPP kernel: one image per grid step.
# ----------------------------------------------------------------------------
def _aspp_fused_kernel(x_ref, pb_ref, wm_ref, w3_ref, scm_ref, shm_ref,
                       sc3_ref, sh3_ref, w6m_ref, w6f_ref, sc6_ref, sh6_ref,
                       w7_ref, b7_ref, o_ref, xp_scr,
                       *, H, W, Ph, PwL, full_dils):
    C = x_ref.shape[3]
    M = H * W

    xc = x_ref[0]                                          # [H, W, C] f32
    x_center = xc.reshape(M, C).astype(jnp.bfloat16)       # [M, C] bf16

    # ---- merged group: 1x1 conv + every dilated branch whose dilation >= H
    #      and >= W (those reduce exactly to their center tap).  One matmul,
    #      one fused folded-BN + ReLU epilogue.
    hm = jnp.dot(x_center, wm_ref[...], preferred_element_type=jnp.float32)
    hm = jnp.maximum(hm * scm_ref[...] + shm_ref[...], 0.0)   # [M, 256*nm] f32

    # Head accumulation: cat @ w6 computed group-wise (cat never materialized).
    acc6 = jnp.dot(hm.astype(jnp.bfloat16), w6m_ref[...],
                   preferred_element_type=jnp.float32)        # [M, 256] f32

    # ---- non-degenerate dilated 3x3 branches via shifted windows of a
    #      zero-padded VMEM scratch image (no padded tensor in HBM).
    if full_dils:
        # Re-zero the halo every step: under a 'parallel' megacore split each
        # core starts at an arbitrary program_id, so init-at-step-0 is unsafe.
        xp_scr[...] = jnp.zeros(xp_scr.shape, xp_scr.dtype)
        xp_scr[Ph:Ph + H, PwL:PwL + W, :] = xc              # tile-aligned store

    for b, d in enumerate(full_dils):
        acc = None
        for ky in range(3):
            if abs(ky - 1) * d >= H:     # tap rows lie entirely in zero padding
                continue
            for kx in range(3):
                if abs(kx - 1) * d >= W:  # tap cols lie entirely in zero padding
                    continue
                if ky == 1 and kx == 1:
                    xt = x_center
                else:
                    oh = Ph + (ky - 1) * d
                    ow = PwL + (kx - 1) * d
                    # Static invariant: every used tap stays inside the scratch.
                    assert 0 <= oh and oh + H <= xp_scr.shape[0]
                    assert 0 <= ow and ow + W <= xp_scr.shape[1]
                    xt = xp_scr[oh:oh + H, ow:ow + W, :].reshape(M, C)
                    xt = xt.astype(jnp.bfloat16)
                c = jnp.dot(xt, w3_ref[b, ky * 3 + kx],
                            preferred_element_type=jnp.float32)
                acc = c if acc is None else acc + c
        hb = jnp.maximum(acc * sc3_ref[b:b + 1, :] + sh3_ref[b:b + 1, :], 0.0)
        acc6 = acc6 + jnp.dot(hb.astype(jnp.bfloat16), w6f_ref[b],
                              preferred_element_type=jnp.float32)

    # Pooled-branch contribution (spatially constant per image), BN6 + ReLU.
    acc6 = acc6 + pb_ref[0]                                 # [1,256] broadcast
    h6 = jnp.maximum(acc6 * sc6_ref[...] + sh6_ref[...], 0.0)

    # Final classifier conv (+ bias); class dim padded to 128 lanes.
    out = jnp.dot(h6.astype(jnp.bfloat16), w7_ref[...],
                  preferred_element_type=jnp.float32) + b7_ref[...]
    o_ref[0, :, :] = out.astype(o_ref.dtype)


# ----------------------------------------------------------------------------
# Parameter init (deterministic, synthetic)
# ----------------------------------------------------------------------------
def init_conv(key, cin, cout, kh=1, kw=1):
    wk, bk = jax.random.split(key)
    w = jax.random.normal(wk, (kh, kw, cin, cout), jnp.float32) * 0.05  # HWIO
    b = jax.random.normal(bk, (cout,), jnp.float32) * 0.1
    return w, b


def init_bn(key, c):
    k1, k2, k3, k4 = jax.random.split(key, 4)
    gamma = 1.0 + 0.1 * jax.random.normal(k1, (c,), jnp.float32)
    beta = 0.1 * jax.random.normal(k2, (c,), jnp.float32)
    mean = 0.1 * jax.random.normal(k3, (c,), jnp.float32)
    var = 1.0 + 0.1 * jax.random.uniform(k4, (c,), jnp.float32)
    return gamma, beta, mean, var


def bn_fold(conv_bias, gamma, beta, mean, var, eps=1e-5):
    """Fold conv bias + eval-mode BN into (scale, shift) applied post-matmul."""
    s = gamma / jnp.sqrt(var + eps)
    t = (conv_bias - mean) * s + beta
    return s, t


def init_aspp_params(key, num_classes):
    keys = jax.random.split(key, 16)
    p = {}
    p["w_1x1_1"], b1 = init_conv(keys[0], 512, 256, 1, 1)
    p["s1"], p["t1"] = bn_fold(b1, *init_bn(keys[1], 256))

    p["w_3x3_1"], b2 = init_conv(keys[2], 512, 256, 3, 3)
    p["s2"], p["t2"] = bn_fold(b2, *init_bn(keys[3], 256))

    p["w_3x3_2"], b3 = init_conv(keys[4], 512, 256, 3, 3)
    p["s3"], p["t3"] = bn_fold(b3, *init_bn(keys[5], 256))

    p["w_3x3_3"], b4 = init_conv(keys[6], 512, 256, 3, 3)
    p["s4"], p["t4"] = bn_fold(b4, *init_bn(keys[7], 256))

    p["w_1x1_2"], b5 = init_conv(keys[8], 512, 256, 1, 1)
    p["s5"], p["t5"] = bn_fold(b5, *init_bn(keys[9], 256))

    p["w_1x1_3"], b6 = init_conv(keys[10], 1280, 256, 1, 1)
    p["s6"], p["t6"] = bn_fold(b6, *init_bn(keys[11], 256))

    p["w_1x1_4"], p["b7"] = init_conv(keys[12], 256, num_classes, 1, 1)
    return p


# ----------------------------------------------------------------------------
# ASPP forward (Pallas)
# ----------------------------------------------------------------------------
def aspp_forward(x_nchw, p, num_classes, dilations=(6, 12, 18)):
    N, Cin, H, W = x_nchw.shape
    x = jnp.transpose(x_nchw, (0, 2, 3, 1))                   # NHWC f32
    M = H * W

    w3_all = (p["w_3x3_1"], p["w_3x3_2"], p["w_3x3_3"])
    s3_all = (p["s2"], p["s3"], p["s4"])
    t3_all = (p["t2"], p["t3"], p["t4"])
    w6 = p["w_1x1_3"].reshape(1280, 256)

    # Split dilated branches: 'degenerate' ones (d >= H and d >= W) reduce
    # exactly to their center tap and merge with the 1x1 branch.
    degen = [i for i, d in enumerate(dilations) if d >= H and d >= W]
    full = [i for i, d in enumerate(dilations) if not (d >= H and d >= W)]
    full_dils = tuple(dilations[i] for i in full)

    merged_w = [p["w_1x1_1"].reshape(Cin, 256)]
    merged_s = [p["s1"]]
    merged_t = [p["t1"]]
    merged_rows = [w6[0:256]]
    for i in degen:
        merged_w.append(w3_all[i][1, 1])                      # center tap [Cin,256]
        merged_s.append(s3_all[i])
        merged_t.append(t3_all[i])
        merged_rows.append(w6[256 * (i + 1):256 * (i + 2)])
    nm = len(merged_w)
    wm = jnp.concatenate(merged_w, axis=1).astype(jnp.bfloat16)      # [Cin, 256*nm]
    scm = jnp.concatenate(merged_s).reshape(1, 256 * nm)
    shm = jnp.concatenate(merged_t).reshape(1, 256 * nm)
    w6m = jnp.concatenate(merged_rows, axis=0).astype(jnp.bfloat16)  # [256*nm, 256]

    if full:
        w3 = jnp.stack([w3_all[i].reshape(9, Cin, 256) for i in full],
                       axis=0).astype(jnp.bfloat16)           # [nf, 9, Cin, 256]
        sc3 = jnp.stack([s3_all[i] for i in full], axis=0)    # [nf, 256]
        sh3 = jnp.stack([t3_all[i] for i in full], axis=0)
        w6f = jnp.stack([w6[256 * (i + 1):256 * (i + 2)] for i in full],
                        axis=0).astype(jnp.bfloat16)          # [nf, 256, 256]
    else:  # dummies; the tap loop is statically empty so these are never read
        w3 = jnp.zeros((1, 1, Cin, 256), jnp.bfloat16)
        sc3 = jnp.zeros((1, 256), jnp.float32)
        sh3 = jnp.zeros((1, 256), jnp.float32)
        w6f = jnp.zeros((1, 256, 256), jnp.bfloat16)

    # Padded-scratch geometry: pad only as far as taps that can touch real data
    # reach; the left W-pad is rounded up to an 8-sublane multiple so the
    # per-step center store into the f32 scratch is tile aligned.
    Ph = max([d for d in full_dils if d < H], default=0)
    Pw = max([d for d in full_dils if d < W], default=0)
    PwL = ((Pw + 7) // 8) * 8
    HP = H + 2 * Ph
    WP = PwL + W + Pw

    # Pooled branch (N rows of work): f32 XLA, pre-contracted with its w6 rows
    # so it enters the fused head as a per-image bias.  (Bilinear upsample from
    # a 1x1 pool output is an exact constant broadcast.)
    pooled = jnp.mean(x, axis=(1, 2))                                  # [N, Cin]
    pool_feat = jnp.maximum(
        jnp.dot(pooled, p["w_1x1_2"].reshape(Cin, 256)) * p["s5"] + p["t5"], 0.0)
    pool_bias = jnp.dot(pool_feat, w6[1024:1280]).reshape(N, 1, 256)   # [N,1,256]

    # Head / classifier weights (class dim zero-padded to 128 lanes).
    cpad = ((num_classes + 127) // 128) * 128
    w7 = p["w_1x1_4"].reshape(256, num_classes)
    w7p = jnp.zeros((256, cpad), jnp.float32).at[:, :num_classes].set(w7)
    w7p = w7p.astype(jnp.bfloat16)
    b7p = jnp.zeros((1, cpad), jnp.float32).at[0, :num_classes].set(p["b7"])
    sc6 = p["s6"].reshape(1, 256)
    sh6 = p["t6"].reshape(1, 256)

    kern = functools.partial(_aspp_fused_kernel, H=H, W=W, Ph=Ph, PwL=PwL,
                             full_dils=full_dils)
    const2 = lambda n: (0, 0)
    const3 = lambda n: (0, 0, 0)
    const4 = lambda n: (0, 0, 0, 0)

    out = pl.pallas_call(
        kern,
        out_shape=jax.ShapeDtypeStruct((N, M, cpad), jnp.float32),
        grid_spec=pltpu.PrefetchScalarGridSpec(
            num_scalar_prefetch=0,
            grid=(N,),
            in_specs=[
                pl.BlockSpec((1, H, W, Cin), lambda n: (n, 0, 0, 0)),  # raw image
                pl.BlockSpec((1, 1, 256), lambda n: (n, 0, 0)),        # pool bias
                pl.BlockSpec(wm.shape, const2),    # resident weights below
                pl.BlockSpec(w3.shape, const4),
                pl.BlockSpec(scm.shape, const2),
                pl.BlockSpec(shm.shape, const2),
                pl.BlockSpec(sc3.shape, const2),
                pl.BlockSpec(sh3.shape, const2),
                pl.BlockSpec(w6m.shape, const2),
                pl.BlockSpec(w6f.shape, const3),
                pl.BlockSpec(sc6.shape, const2),
                pl.BlockSpec(sh6.shape, const2),
                pl.BlockSpec(w7p.shape, const2),
                pl.BlockSpec(b7p.shape, const2),
            ],
            out_specs=pl.BlockSpec((1, M, cpad), lambda n: (n, 0, 0)),
            scratch_shapes=[pltpu.VMEM((HP, WP, Cin), jnp.float32)],
        ),
        compiler_params=pltpu.CompilerParams(
            dimension_semantics=("parallel",),
            vmem_limit_bytes=32 * 1024 * 1024),
    )(x, pool_bias, wm, w3, scm, shm, sc3, sh3, w6m, w6f, sc6, sh6, w7p, b7p)

    out = out[:, :, :num_classes].reshape(N, H, W, num_classes)
    return jnp.transpose(out, (0, 3, 1, 2))                   # -> NCHW


# ----------------------------------------------------------------------------
# Pure-JAX reference (f32, for correctness check)
# ----------------------------------------------------------------------------
def _conv_ref(x_nhwc, w_hwio, dil, pad):
    return jax.lax.conv_general_dilated(
        x_nhwc, w_hwio, window_strides=(1, 1),
        padding=((pad, pad), (pad, pad)), rhs_dilation=(dil, dil),
        dimension_numbers=("NHWC", "HWIO", "NHWC"))


def aspp_reference(x_nchw, p, num_classes):
    N, Cin, H, W = x_nchw.shape
    x = jnp.transpose(x_nchw, (0, 2, 3, 1))

    def bn_relu(y, s, t):
        return jnp.maximum(y * s + t, 0.0)

    o1 = bn_relu(_conv_ref(x, p["w_1x1_1"], 1, 0), p["s1"], p["t1"])
    o2 = bn_relu(_conv_ref(x, p["w_3x3_1"], 6, 6), p["s2"], p["t2"])
    o3 = bn_relu(_conv_ref(x, p["w_3x3_2"], 12, 12), p["s3"], p["t3"])
    o4 = bn_relu(_conv_ref(x, p["w_3x3_3"], 18, 18), p["s4"], p["t4"])
    pooled = jnp.mean(x, axis=(1, 2), keepdims=True)
    oi = bn_relu(_conv_ref(pooled, p["w_1x1_2"], 1, 0), p["s5"], p["t5"])
    oi = jnp.broadcast_to(oi, (N, H, W, 256))
    cat = jnp.concatenate([o1, o2, o3, o4, oi], axis=-1)
    out = bn_relu(_conv_ref(cat, p["w_1x1_3"], 1, 0), p["s6"], p["t6"])
    out = _conv_ref(out, p["w_1x1_4"], 1, 0) + p["b7"]
    return jnp.transpose(out, (0, 3, 1, 2))


# ----------------------------------------------------------------------------
if __name__ == "__main__":
    num_classes = 8
    N, C, H, W = 2, 512, 8, 8   # channels fixed by the module (Conv2d(512, ...))

    key = jax.random.PRNGKey(0)
    kx_, kp_ = jax.random.split(key)
    x = jax.random.normal(kx_, (N, C, H, W), jnp.float32)
    params = init_aspp_params(kp_, num_classes)

    fwd = jax.jit(lambda a: aspp_forward(a, params, num_classes))
    out = jax.block_until_ready(fwd(x))

    ref = aspp_reference(x, params, num_classes)
    assert out.shape == (N, num_classes, H, W)
    assert bool(jnp.all(jnp.isfinite(out)))
    # bf16 MXU matmuls with f32 accumulation vs. f32 reference -> loose tolerance.
    assert bool(jnp.allclose(out, ref, rtol=5e-2, atol=1e-1)), (
        float(jnp.max(jnp.abs(out - ref))))

    print("KERNEL_OK")
</pallas_src>

<mosaic_0001>
module attributes {stable_mosaic.version = 11 : i64} {
  func.func @_aspp_fused_kernel(%arg0: i32, %arg1: memref<1x8x8x512xf32, #tpu.memory_space<vmem>>, %arg2: memref<1x1x256xf32, #tpu.memory_space<vmem>>, %arg3: memref<512x768xbf16, #tpu.memory_space<vmem>>, %arg4: memref<1x9x512x256xbf16, #tpu.memory_space<vmem>>, %arg5: memref<1x768xf32, #tpu.memory_space<vmem>>, %arg6: memref<1x768xf32, #tpu.memory_space<vmem>>, %arg7: memref<1x256xf32, #tpu.memory_space<vmem>>, %arg8: memref<1x256xf32, #tpu.memory_space<vmem>>, %arg9: memref<768x256xbf16, #tpu.memory_space<vmem>>, %arg10: memref<1x256x256xbf16, #tpu.memory_space<vmem>>, %arg11: memref<1x256xf32, #tpu.memory_space<vmem>>, %arg12: memref<1x256xf32, #tpu.memory_space<vmem>>, %arg13: memref<256x128xbf16, #tpu.memory_space<vmem>>, %arg14: memref<1x128xf32, #tpu.memory_space<vmem>>, %arg15: memref<1x64x128xf32, #tpu.memory_space<vmem>>, %arg16: memref<20x22x512xf32, #tpu.memory_space<vmem>>) attributes {dimension_semantics = [#tpu.dimension_semantics<parallel>], iteration_bounds = array<i64: 2>, scalar_prefetch = 0 : i64, scratch_operands = 1 : i64, tpu.core_type = #tpu.core_type<tc>, window_params = [{transform_indices = @transform_0, window_bounds = array<i64: 1, 8, 8, 512>}, {transform_indices = @transform_1, window_bounds = array<i64: 1, 1, 256>}, {pipeline_mode = #tpu.pipeline_mode<synchronous>, transform_indices = @transform_2, window_bounds = array<i64: 512, 768>}, {pipeline_mode = #tpu.pipeline_mode<synchronous>, transform_indices = @transform_3, window_bounds = array<i64: 1, 9, 512, 256>}, {pipeline_mode = #tpu.pipeline_mode<synchronous>, transform_indices = @transform_4, window_bounds = array<i64: 1, 768>}, {pipeline_mode = #tpu.pipeline_mode<synchronous>, transform_indices = @transform_5, window_bounds = array<i64: 1, 768>}, {pipeline_mode = #tpu.pipeline_mode<synchronous>, transform_indices = @transform_6, window_bounds = array<i64: 1, 256>}, {pipeline_mode = #tpu.pipeline_mode<synchronous>, transform_indices = @transform_7, window_bounds = array<i64: 1, 256>}, {pipeline_mode = #tpu.pipeline_mode<synchronous>, transform_indices = @transform_8, window_bounds = array<i64: 768, 256>}, {pipeline_mode = #tpu.pipeline_mode<synchronous>, transform_indices = @transform_9, window_bounds = array<i64: 1, 256, 256>}, {pipeline_mode = #tpu.pipeline_mode<synchronous>, transform_indices = @transform_10, window_bounds = array<i64: 1, 256>}, {pipeline_mode = #tpu.pipeline_mode<synchronous>, transform_indices = @transform_11, window_bounds = array<i64: 1, 256>}, {pipeline_mode = #tpu.pipeline_mode<synchronous>, transform_indices = @transform_12, window_bounds = array<i64: 256, 128>}, {pipeline_mode = #tpu.pipeline_mode<synchronous>, transform_indices = @transform_13, window_bounds = array<i64: 1, 128>}, {transform_indices = @transform_14, window_bounds = array<i64: 1, 64, 128>}]} {
    %c0 = arith.constant 0 : index
    %c0_0 = arith.constant 0 : index
    %c0_1 = arith.constant 0 : index
    %c0_2 = arith.constant 0 : index
    %0 = vector.load %arg1[%c0, %c0_0, %c0_1, %c0_2] : memref<1x8x8x512xf32, #tpu.memory_space<vmem>>, vector<1x8x8x512xf32>
    %1 = vector.shape_cast %0 : vector<1x8x8x512xf32> to vector<8x8x512xf32>
    %2 = vector.shape_cast %1 : vector<8x8x512xf32> to vector<64x512xf32>
    %3 = arith.truncf %2 : vector<64x512xf32> to vector<64x512xbf16>
    %c0_3 = arith.constant 0 : index
    %c0_4 = arith.constant 0 : index
    %4 = vector.load %arg3[%c0_3, %c0_4] : memref<512x768xbf16, #tpu.memory_space<vmem>>, vector<512x768xbf16>
    %cst = arith.constant dense<0.000000e+00> : vector<64x768xf32>
    %5 = tpu.matmul %3, %4, %cst {dimension_numbers = #tpu.dot_dimension_numbers<[1], [0], [0], [1], [0, 0, 1, 1], [], []>} : vector<64x512xbf16>, vector<512x768xbf16>, vector<64x768xf32> -> vector<64x768xf32>
    %c0_5 = arith.constant 0 : index
    %c0_6 = arith.constant 0 : index
    %6 = vector.load %arg5[%c0_5, %c0_6] : memref<1x768xf32, #tpu.memory_space<vmem>>, vector<1x768xf32>
    %7 = vector.broadcast %6 : vector<1x768xf32> to vector<64x768xf32>
    %8 = arith.mulf %5, %7 : vector<64x768xf32>
    %c0_7 = arith.constant 0 : index
    %c0_8 = arith.constant 0 : index
    %9 = vector.load %arg6[%c0_7, %c0_8] : memref<1x768xf32, #tpu.memory_space<vmem>>, vector<1x768xf32>
    %10 = vector.broadcast %9 : vector<1x768xf32> to vector<64x768xf32>
    %11 = arith.addf %8, %10 : vector<64x768xf32>
    %cst_9 = arith.constant 0.000000e+00 : f32
    %12 = vector.broadcast %cst_9 : f32 to vector<64x768xf32>
    %13 = arith.maximumf %11, %12 : vector<64x768xf32>
    %14 = arith.truncf %13 : vector<64x768xf32> to vector<64x768xbf16>
    %c0_10 = arith.constant 0 : index
    %c0_11 = arith.constant 0 : index
    %15 = vector.load %arg9[%c0_10, %c0_11] : memref<768x256xbf16, #tpu.memory_space<vmem>>, vector<768x256xbf16>
    %cst_12 = arith.constant dense<0.000000e+00> : vector<64x256xf32>
    %16 = tpu.matmul %14, %15, %cst_12 {dimension_numbers = #tpu.dot_dimension_numbers<[1], [0], [0], [1], [0, 0, 1, 1], [], []>} : vector<64x768xbf16>, vector<768x256xbf16>, vector<64x256xf32> -> vector<64x256xf32>
    %cst_13 = arith.constant 0.000000e+00 : f32
    %17 = vector.broadcast %cst_13 : f32 to vector<20x22x512xf32>
    %c0_14 = arith.constant 0 : index
    %c0_15 = arith.constant 0 : index
    %c0_16 = arith.constant 0 : index
    %18 = vector.load %arg16[%c0_14, %c0_15, %c0_16] : memref<20x22x512xf32, #tpu.memory_space<vmem>>, vector<20x22x512xf32>
    tpu.vector_store %arg16[%c0_14, %c0_15, %c0_16], %17 {strides = array<i32>} : memref<20x22x512xf32, #tpu.memory_space<vmem>>, vector<20x22x512xf32>,
    %c6 = arith.constant 6 : index
    %c8 = arith.constant 8 : index
    %c0_17 = arith.constant 0 : index
    %19 = vector.load %arg16[%c6, %c8, %c0_17] : memref<20x22x512xf32, #tpu.memory_space<vmem>>, vector<8x8x512xf32>
    tpu.vector_store %arg16[%c6, %c8, %c0_17], %1 {strides = array<i32>} : memref<20x22x512xf32, #tpu.memory_space<vmem>>, vector<8x8x512xf32>,
    %c0_18 = arith.constant 0 : index
    %c2 = arith.constant 2 : index
    %c0_19 = arith.constant 0 : index
    %20 = vector.load %arg16[%c0_18, %c2, %c0_19] : memref<20x22x512xf32, #tpu.memory_space<vmem>>, vector<8x8x512xf32>
    %21 = vector.shape_cast %20 : vector<8x8x512xf32> to vector<64x512xf32>
    %22 = arith.truncf %21 : vector<64x512xf32> to vector<64x512xbf16>
    %c0_20 = arith.constant 0 : index
    %c0_21 = arith.constant 0 : index
    %c0_22 = arith.constant 0 : index
    %c0_23 = arith.constant 0 : index
    %23 = vector.load %arg4[%c0_20, %c0_21, %c0_22, %c0_23] : memref<1x9x512x256xbf16, #tpu.memory_space<vmem>>, vector<1x1x512x256xbf16>
    %24 = vector.shape_cast %23 : vector<1x1x512x256xbf16> to vector<512x256xbf16>
    %cst_24 = arith.constant dense<0.000000e+00> : vector<64x256xf32>
    %25 = tpu.matmul %22, %24, %cst_24 {dimension_numbers = #tpu.dot_dimension_numbers<[1], [0], [0], [1], [0, 0, 1, 1], [], []>} : vector<64x512xbf16>, vector<512x256xbf16>, vector<64x256xf32> -> vector<64x256xf32>
    %c0_25 = arith.constant 0 : index
    %c8_26 = arith.constant 8 : index
    %c0_27 = arith.constant 0 : index
    %26 = vector.load %arg16[%c0_25, %c8_26, %c0_27] : memref<20x22x512xf32, #tpu.memory_space<vmem>>, vector<8x8x512xf32>
    %27 = vector.shape_cast %26 : vector<8x8x512xf32> to vector<64x512xf32>
    %28 = arith.truncf %27 : vector<64x512xf32> to vector<64x512xbf16>
    %c0_28 = arith.constant 0 : index
    %c1 = arith.constant 1 : index
    %c0_29 = arith.constant 0 : index
    %c0_30 = arith.constant 0 : index
    %29 = vector.load %arg4[%c0_28, %c1, %c0_29, %c0_30] : memref<1x9x512x256xbf16, #tpu.memory_space<vmem>>, vector<1x1x512x256xbf16>
    %30 = vector.shape_cast %29 : vector<1x1x512x256xbf16> to vector<512x256xbf16>
    %cst_31 = arith.constant dense<0.000000e+00> : vector<64x256xf32>
    %31 = tpu.matmul %28, %30, %cst_31 {dimension_numbers = #tpu.dot_dimension_numbers<[1], [0], [0], [1], [0, 0, 1, 1], [], []>} : vector<64x512xbf16>, vector<512x256xbf16>, vector<64x256xf32> -> vector<64x256xf32>
    %32 = arith.addf %25, %31 : vector<64x256xf32>
    %c0_32 = arith.constant 0 : index
    %c14 = arith.constant 14 : index
    %c0_33 = arith.constant 0 : index
    %33 = vector.load %arg16[%c0_32, %c14, %c0_33] : memref<20x22x512xf32, #tpu.memory_space<vmem>>, vector<8x8x512xf32>
    %34 = vector.shape_cast %33 : vector<8x8x512xf32> to vector<64x512xf32>
    %35 = arith.truncf %34 : vector<64x512xf32> to vector<64x512xbf16>
    %c0_34 = arith.constant 0 : index
    %c2_35 = arith.constant 2 : index
    %c0_36 = arith.constant 0 : index
    %c0_37 = arith.constant 0 : index
    %36 = vector.load %arg4[%c0_34, %c2_35, %c0_36, %c0_37] : memref<1x9x512x256xbf16, #tpu.memory_space<vmem>>, vector<1x1x512x256xbf16>
    %37 = vector.shape_cast %36 : vector<1x1x512x256xbf16> to vector<512x256xbf16>
    %cst_38 = arith.constant dense<0.000000e+00> : vector<64x256xf32>
    %38 = tpu.matmul %35, %37, %cst_38 {dimension_numbers = #tpu.dot_dimension_numbers<[1], [0], [0], [1], [0, 0, 1, 1], [], []>} : vector<64x512xbf16>, vector<512x256xbf16>, vector<64x256xf32> -> vector<64x256xf32>
    %39 = arith.addf %32, %38 : vector<64x256xf32>
    %c6_39 = arith.constant 6 : index
    %c2_40 = arith.constant 2 : index
    %c0_41 = arith.constant 0 : index
    %40 = vector.load %arg16[%c6_39, %c2_40, %c0_41] : memref<20x22x512xf32, #tpu.memory_space<vmem>>, vector<8x8x512xf32>
    %41 = vector.shape_cast %40 : vector<8x8x512xf32> to vector<64x512xf32>
    %42 = arith.truncf %41 : vector<64x512xf32> to vector<64x512xbf16>
    %c0_42 = arith.constant 0 : index
    %c3 = arith.constant 3 : index
    %c0_43 = arith.constant 0 : index
    %c0_44 = arith.constant 0 : index
    %43 = vector.load %arg4[%c0_42, %c3, %c0_43, %c0_44] : memref<1x9x512x256xbf16, #tpu.memory_space<vmem>>, vector<1x1x512x256xbf16>
    %44 = vector.shape_cast %43 : vector<1x1x512x256xbf16> to vector<512x256xbf16>
    %cst_45 = arith.constant dense<0.000000e+00> : vector<64x256xf32>
    %45 = tpu.matmul %42, %44, %cst_45 {dimension_numbers = #tpu.dot_dimension_numbers<[1], [0], [0], [1], [0, 0, 1, 1], [], []>} : vector<64x512xbf16>, vector<512x256xbf16>, vector<64x256xf32> -> vector<64x256xf32>
    %46 = arith.addf %39, %45 : vector<64x256xf32>
    %c0_46 = arith.constant 0 : index
    %c4 = arith.constant 4 : index
    %c0_47 = arith.constant 0 : index
    %c0_48 = arith.constant 0 : index
    %47 = vector.load %arg4[%c0_46, %c4, %c0_47, %c0_48] : memref<1x9x512x256xbf16, #tpu.memory_space<vmem>>, vector<1x1x512x256xbf16>
    %48 = vector.shape_cast %47 : vector<1x1x512x256xbf16> to vector<512x256xbf16>
    %cst_49 = arith.constant dense<0.000000e+00> : vector<64x256xf32>
    %49 = tpu.matmul %3, %48, %cst_49 {dimension_numbers = #tpu.dot_dimension_numbers<[1], [0], [0], [1], [0, 0, 1, 1], [], []>} : vector<64x512xbf16>, vector<512x256xbf16>, vector<64x256xf32> -> vector<64x256xf32>
    %50 = arith.addf %46, %49 : vector<64x256xf32>
    %c6_50 = arith.constant 6 : index
    %c14_51 = arith.constant 14 : index
    %c0_52 = arith.constant 0 : index
    %51 = vector.load %arg16[%c6_50, %c14_51, %c0_52] : memref<20x22x512xf32, #tpu.memory_space<vmem>>, vector<8x8x512xf32>
    %52 = vector.shape_cast %51 : vector<8x8x512xf32> to vector<64x512xf32>
    %53 = arith.truncf %52 : vector<64x512xf32> to vector<64x512xbf16>
    %c0_53 = arith.constant 0 : index
    %c5 = arith.constant 5 : index
    %c0_54 = arith.constant 0 : index
    %c0_55 = arith.constant 0 : index
    %54 = vector.load %arg4[%c0_53, %c5, %c0_54, %c0_55] : memref<1x9x512x256xbf16, #tpu.memory_space<vmem>>, vector<1x1x512x256xbf16>
    %55 = vector.shape_cast %54 : vector<1x1x512x256xbf16> to vector<512x256xbf16>
    %cst_56 = arith.constant dense<0.000000e+00> : vector<64x256xf32>
    %56 = tpu.matmul %53, %55, %cst_56 {dimension_numbers = #tpu.dot_dimension_numbers<[1], [0], [0], [1], [0, 0, 1, 1], [], []>} : vector<64x512xbf16>, vector<512x256xbf16>, vector<64x256xf32> -> vector<64x256xf32>
    %57 = arith.addf %50, %56 : vector<64x256xf32>
    %c12 = arith.constant 12 : index
    %c2_57 = arith.constant 2 : index
    %c0_58 = arith.constant 0 : index
    %58 = vector.load %arg16[%c12, %c2_57, %c0_58] : memref<20x22x512xf32, #tpu.memory_space<vmem>>, vector<8x8x512xf32>
    %59 = vector.shape_cast %58 : vector<8x8x512xf32> to vector<64x512xf32>
    %60 = arith.truncf %59 : vector<64x512xf32> to vector<64x512xbf16>
    %c0_59 = arith.constant 0 : index
    %c6_60 = arith.constant 6 : index
    %c0_61 = arith.constant 0 : index
    %c0_62 = arith.constant 0 : index
    %61 = vector.load %arg4[%c0_59, %c6_60, %c0_61, %c0_62] : memref<1x9x512x256xbf16, #tpu.memory_space<vmem>>, vector<1x1x512x256xbf16>
    %62 = vector.shape_cast %61 : vector<1x1x512x256xbf16> to vector<512x256xbf16>
    %cst_63 = arith.constant dense<0.000000e+00> : vector<64x256xf32>
    %63 = tpu.matmul %60, %62, %cst_63 {dimension_numbers = #tpu.dot_dimension_numbers<[1], [0], [0], [1], [0, 0, 1, 1], [], []>} : vector<64x512xbf16>, vector<512x256xbf16>, vector<64x256xf32> -> vector<64x256xf32>
    %64 = arith.addf %57, %63 : vector<64x256xf32>
    %c12_64 = arith.constant 12 : index
    %c8_65 = arith.constant 8 : index
    %c0_66 = arith.constant 0 : index
    %65 = vector.load %arg16[%c12_64, %c8_65, %c0_66] : memref<20x22x512xf32, #tpu.memory_space<vmem>>, vector<8x8x512xf32>
    %66 = vector.shape_cast %65 : vector<8x8x512xf32> to vector<64x512xf32>
    %67 = arith.truncf %66 : vector<64x512xf32> to vector<64x512xbf16>
    %c0_67 = arith.constant 0 : index
    %c7 = arith.constant 7 : index
    %c0_68 = arith.constant 0 : index
    %c0_69 = arith.constant 0 : index
    %68 = vector.load %arg4[%c0_67, %c7, %c0_68, %c0_69] : memref<1x9x512x256xbf16, #tpu.memory_space<vmem>>, vector<1x1x512x256xbf16>
    %69 = vector.shape_cast %68 : vector<1x1x512x256xbf16> to vector<512x256xbf16>
    %cst_70 = arith.constant dense<0.000000e+00> : vector<64x256xf32>
    %70 = tpu.matmul %67, %69, %cst_70 {dimension_numbers = #tpu.dot_dimension_numbers<[1], [0], [0], [1], [0, 0, 1, 1], [], []>} : vector<64x512xbf16>, vector<512x256xbf16>, vector<64x256xf32> -> vector<64x256xf32>
    %71 = arith.addf %64, %70 : vector<64x256xf32>
    %c12_71 = arith.constant 12 : index
    %c14_72 = arith.constant 14 : index
    %c0_73 = arith.constant 0 : index
    %72 = vector.load %arg16[%c12_71, %c14_72, %c0_73] : memref<20x22x512xf32, #tpu.memory_space<vmem>>, vector<8x8x512xf32>
    %73 = vector.shape_cast %72 : vector<8x8x512xf32> to vector<64x512xf32>
    %74 = arith.truncf %73 : vector<64x512xf32> to vector<64x512xbf16>
    %c0_74 = arith.constant 0 : index
    %c8_75 = arith.constant 8 : index
    %c0_76 = arith.constant 0 : index
    %c0_77 = arith.constant 0 : index
    %75 = vector.load %arg4[%c0_74, %c8_75, %c0_76, %c0_77] : memref<1x9x512x256xbf16, #tpu.memory_space<vmem>>, vector<1x1x512x256xbf16>
    %76 = vector.shape_cast %75 : vector<1x1x512x256xbf16> to vector<512x256xbf16>
    %cst_78 = arith.constant dense<0.000000e+00> : vector<64x256xf32>
    %77 = tpu.matmul %74, %76, %cst_78 {dimension_numbers = #tpu.dot_dimension_numbers<[1], [0], [0], [1], [0, 0, 1, 1], [], []>} : vector<64x512xbf16>, vector<512x256xbf16>, vector<64x256xf32> -> vector<64x256xf32>
    %78 = arith.addf %71, %77 : vector<64x256xf32>
    %c0_79 = arith.constant 0 : index
    %c0_80 = arith.constant 0 : index
    %79 = vector.load %arg7[%c0_79, %c0_80] : memref<1x256xf32, #tpu.memory_space<vmem>>, vector<1x256xf32>
    %80 = vector.broadcast %79 : vector<1x256xf32> to vector<64x256xf32>
    %81 = arith.mulf %78, %80 : vector<64x256xf32>
    %c0_81 = arith.constant 0 : index
    %c0_82 = arith.constant 0 : index
    %82 = vector.load %arg8[%c0_81, %c0_82] : memref<1x256xf32, #tpu.memory_space<vmem>>, vector<1x256xf32>
    %83 = vector.broadcast %82 : vector<1x256xf32> to vector<64x256xf32>
    %84 = arith.addf %81, %83 : vector<64x256xf32>
    %cst_83 = arith.constant 0.000000e+00 : f32
    %85 = vector.broadcast %cst_83 : f32 to vector<64x256xf32>
    %86 = arith.maximumf %84, %85 : vector<64x256xf32>
    %87 = arith.truncf %86 : vector<64x256xf32> to vector<64x256xbf16>
    %c0_84 = arith.constant 0 : index
    %c0_85 = arith.constant 0 : index
    %c0_86 = arith.constant 0 : index
    %88 = vector.load %arg10[%c0_84, %c0_85, %c0_86] : memref<1x256x256xbf16, #tpu.memory_space<vmem>>, vector<1x256x256xbf16>
    %89 = vector.shape_cast %88 : vector<1x256x256xbf16> to vector<256x256xbf16>
    %cst_87 = arith.constant dense<0.000000e+00> : vector<64x256xf32>
    %90 = tpu.matmul %87, %89, %cst_87 {dimension_numbers = #tpu.dot_dimension_numbers<[1], [0], [0], [1], [0, 0, 1, 1], [], []>} : vector<64x256xbf16>, vector<256x256xbf16>, vector<64x256xf32> -> vector<64x256xf32>
    %91 = arith.addf %16, %90 : vector<64x256xf32>
    %c0_88 = arith.constant 0 : index
    %c0_89 = arith.constant 0 : index
    %c0_90 = arith.constant 0 : index
    %92 = vector.load %arg2[%c0_88, %c0_89, %c0_90] : memref<1x1x256xf32, #tpu.memory_space<vmem>>, vector<1x1x256xf32>
    %93 = vector.shape_cast %92 : vector<1x1x256xf32> to vector<1x256xf32>
    %94 = vector.broadcast %93 : vector<1x256xf32> to vector<64x256xf32>
    %95 = arith.addf %91, %94 : vector<64x256xf32>
    %c0_91 = arith.constant 0 : index
    %c0_92 = arith.constant 0 : index
    %96 = vector.load %arg11[%c0_91, %c0_92] : memref<1x256xf32, #tpu.memory_space<vmem>>, vector<1x256xf32>
    %97 = vector.broadcast %96 : vector<1x256xf32> to vector<64x256xf32>
    %98 = arith.mulf %95, %97 : vector<64x256xf32>
    %c0_93 = arith.constant 0 : index
    %c0_94 = arith.constant 0 : index
    %99 = vector.load %arg12[%c0_93, %c0_94] : memref<1x256xf32, #tpu.memory_space<vmem>>, vector<1x256xf32>
    %100 = vector.broadcast %99 : vector<1x256xf32> to vector<64x256xf32>
    %101 = arith.addf %98, %100 : vector<64x256xf32>
    %cst_95 = arith.constant 0.000000e+00 : f32
    %102 = vector.broadcast %cst_95 : f32 to vector<64x256xf32>
    %103 = arith.maximumf %101, %102 : vector<64x256xf32>
    %104 = arith.truncf %103 : vector<64x256xf32> to vector<64x256xbf16>
    %c0_96 = arith.constant 0 : index
    %c0_97 = arith.constant 0 : index
    %105 = vector.load %arg13[%c0_96, %c0_97] : memref<256x128xbf16, #tpu.memory_space<vmem>>, vector<256x128xbf16>
    %cst_98 = arith.constant dense<0.000000e+00> : vector<64x128xf32>
    %106 = tpu.matmul %104, %105, %cst_98 {dimension_numbers = #tpu.dot_dimension_numbers<[1], [0], [0], [1], [0, 0, 1, 1], [], []>} : vector<64x256xbf16>, vector<256x128xbf16>, vector<64x128xf32> -> vector<64x128xf32>
    %c0_99 = arith.constant 0 : index
    %c0_100 = arith.constant 0 : index
    %107 = vector.load %arg14[%c0_99, %c0_100] : memref<1x128xf32, #tpu.memory_space<vmem>>, vector<1x128xf32>
    %108 = vector.broadcast %107 : vector<1x128xf32> to vector<64x128xf32>
    %109 = arith.addf %106, %108 : vector<64x128xf32>
    %c0_101 = arith.constant 0 : index
    %c0_102 = arith.constant 0 : index
    %c0_103 = arith.constant 0 : index
    %110 = vector.load %arg15[%c0_101, %c0_102, %c0_103] : memref<1x64x128xf32, #tpu.memory_space<vmem>>, vector<1x64x128xf32>
    %111 = vector.shape_cast %110 : vector<1x64x128xf32> to vector<64x128xf32>
    %112 = vector.shape_cast %109 : vector<64x128xf32> to vector<1x64x128xf32>
    tpu.vector_store %arg15[%c0_101, %c0_102, %c0_103], %112 {strides = array<i32>} : memref<1x64x128xf32, #tpu.memory_space<vmem>>, vector<1x64x128xf32>,
    return
  }
  func.func @transform_0(%arg0: i32) -> (i32, i32, i32, i32) {
    %c0_i32 = arith.constant 0 : i32
    %c0_i32_0 = arith.constant 0 : i32
    %c0_i32_1 = arith.constant 0 : i32
    %c0_i32_2 = arith.constant 0 : i32
    return %arg0, %c0_i32, %c0_i32_0, %c0_i32_1 : i32, i32, i32, i32
  }
  func.func @transform_1(%arg0: i32) -> (i32, i32, i32) {
    %c0_i32 = arith.constant 0 : i32
    %c0_i32_0 = arith.constant 0 : i32
    %c0_i32_1 = arith.constant 0 : i32
    return %arg0, %c0_i32, %c0_i32_0 : i32, i32, i32
  }
  func.func @transform_2(%arg0: i32) -> (i32, i32) {
    %c0_i32 = arith.constant 0 : i32
    %c0_i32_0 = arith.constant 0 : i32
    %c0_i32_1 = arith.constant 0 : i32
    return %c0_i32, %c0_i32_0 : i32, i32
  }
  func.func @transform_3(%arg0: i32) -> (i32, i32, i32, i32) {
    %c0_i32 = arith.constant 0 : i32
    %c0_i32_0 = arith.constant 0 : i32
    %c0_i32_1 = arith.constant 0 : i32
    %c0_i32_2 = arith.constant 0 : i32
    %c0_i32_3 = arith.constant 0 : i32
    return %c0_i32, %c0_i32_0, %c0_i32_1, %c0_i32_2 : i32, i32, i32, i32
  }
  func.func @transform_4(%arg0: i32) -> (i32, i32) {
    %c0_i32 = arith.constant 0 : i32
    %c0_i32_0 = arith.constant 0 : i32
    %c0_i32_1 = arith.constant 0 : i32
    return %c0_i32, %c0_i32_0 : i32, i32
  }
  func.func @transform_5(%arg0: i32) -> (i32, i32) {
    %c0_i32 = arith.constant 0 : i32
    %c0_i32_0 = arith.constant 0 : i32
    %c0_i32_1 = arith.constant 0 : i32
    return %c0_i32, %c0_i32_0 : i32, i32
  }
  func.func @transform_6(%arg0: i32) -> (i32, i32) {
    %c0_i32 = arith.constant 0 : i32
    %c0_i32_0 = arith.constant 0 : i32
    %c0_i32_1 = arith.constant 0 : i32
    return %c0_i32, %c0_i32_0 : i32, i32
  }
  func.func @transform_7(%arg0: i32) -> (i32, i32) {
    %c0_i32 = arith.constant 0 : i32
    %c0_i32_0 = arith.constant 0 : i32
    %c0_i32_1 = arith.constant 0 : i32
    return %c0_i32, %c0_i32_0 : i32, i32
  }
  func.func @transform_8(%arg0: i32) -> (i32, i32) {
    %c0_i32 = arith.constant 0 : i32
    %c0_i32_0 = arith.constant 0 : i32
    %c0_i32_1 = arith.constant 0 : i32
    return %c0_i32, %c0_i32_0 : i32, i32
  }
  func.func @transform_9(%arg0: i32) -> (i32, i32, i32) {
    %c0_i32 = arith.constant 0 : i32
    %c0_i32_0 = arith.constant 0 : i32
    %c0_i32_1 = arith.constant 0 : i32
    %c0_i32_2 = arith.constant 0 : i32
    return %c0_i32, %c0_i32_0, %c0_i32_1 : i32, i32, i32
  }
  func.func @transform_10(%arg0: i32) -> (i32, i32) {
    %c0_i32 = arith.constant 0 : i32
    %c0_i32_0 = arith.constant 0 : i32
    %c0_i32_1 = arith.constant 0 : i32
    return %c0_i32, %c0_i32_0 : i32, i32
  }
  func.func @transform_11(%arg0: i32) -> (i32, i32) {
    %c0_i32 = arith.constant 0 : i32
    %c0_i32_0 = arith.constant 0 : i32
    %c0_i32_1 = arith.constant 0 : i32
    return %c0_i32, %c0_i32_0 : i32, i32
  }
  func.func @transform_12(%arg0: i32) -> (i32, i32) {
    %c0_i32 = arith.constant 0 : i32
    %c0_i32_0 = arith.constant 0 : i32
    %c0_i32_1 = arith.constant 0 : i32
    return %c0_i32, %c0_i32_0 : i32, i32
  }
  func.func @transform_13(%arg0: i32) -> (i32, i32) {
    %c0_i32 = arith.constant 0 : i32
    %c0_i32_0 = arith.constant 0 : i32
    %c0_i32_1 = arith.constant 0 : i32
    return %c0_i32, %c0_i32_0 : i32, i32
  }
  func.func @transform_14(%arg0: i32) -> (i32, i32, i32) {
    %c0_i32 = arith.constant 0 : i32
    %c0_i32_0 = arith.constant 0 : i32
    %c0_i32_1 = arith.constant 0 : i32
    return %arg0, %c0_i32, %c0_i32_0 : i32, i32, i32
  }
}

</mosaic_0001>

<llo_original>
// kernel: _lambda_.1
$region0: #{_lambda_.1}
  #allocation0 [shape = 'u32[]', space=smem, size = 0x4, offset = 0x4, fixed_abs, tag = 'smem constant byte address 0x4 - core index']
  #allocation1 [shape = 'u32[144,128]{1,0:T(1,128)}', space=vmem, size = 0x12000, scoped, tag = 'internal scratch']
  #allocation2 [shape = 'f32[20,22,512]{2,1,0:T(8,128)}', space=vmem, size = 0xf0000, scoped, tag = 'scratch operand']
  %s0 = inlined_call_operand.hbm [shape: f32[2,8,8,512], index: 0, kind: input, shape index: {}]
  %s1 = inlined_call_operand.vmem [shape: f32[2,1,256], index: 1, kind: input, shape index: {}]
  %s2 = inlined_call_operand.hbm [shape: bf16[512,768], index: 2, kind: input, shape index: {}]
  %s3 = inlined_call_operand.hbm [shape: bf16[1,9,512,256], index: 3, kind: input, shape index: {}]
  %s4 = inlined_call_operand.hbm [shape: f32[1,768], index: 4, kind: input, shape index: {}]
  %s5 = inlined_call_operand.hbm [shape: f32[1,768], index: 5, kind: input, shape index: {}]
  %s6 = inlined_call_operand.hbm [shape: f32[1,256], index: 6, kind: input, shape index: {}]
  %s7 = inlined_call_operand.hbm [shape: f32[1,256], index: 7, kind: input, shape index: {}]
  %s8 = inlined_call_operand.hbm [shape: bf16[768,256], index: 8, kind: input, shape index: {}]
  %s9 = inlined_call_operand.hbm [shape: bf16[1,256,256], index: 9, kind: input, shape index: {}]
  %s10 = inlined_call_operand.hbm [shape: f32[1,256], index: 10, kind: input, shape index: {}]
  %s11 = inlined_call_operand.hbm [shape: f32[1,256], index: 11, kind: input, shape index: {}]
  %s12 = inlined_call_operand.vmem [shape: bf16[256,128], index: 12, kind: input, shape index: {}]
  %s13 = inlined_call_operand.vmem [shape: f32[1,128], index: 13, kind: input, shape index: {}]
  %s14 = inlined_call_operand.vmem [shape: f32[2,64,128], index: 14, kind: output, shape index: {}]
  %s15 = sld [smem:[#allocation0]]
  $region133: #{_lambda_.1} parent=0
    _
  %s17 = ssub.s32 1, %s15
  %s18 = scalar_select 0, %s17, %s15
  $region1: #{_lambda_.1} parent=0
    #allocation3 [shape = 'u8[262144]{0}', space=vmem, size = 0x40000, scoped, tag = 'input window, operand 0']
    #allocation4 [shape = 's32[2]{0}', space=sflag, size = 0x8, scoped, tag = 'scoped memory for _lambda_.1']
    #allocation5 [shape = 'u8[786432]{0}', space=vmem, size = 0xc0000, scoped, tag = 'input window, operand 2, single buffered']
    #allocation6 [shape = 's32[1]{0}', space=sflag, size = 0x4, scoped, tag = 'scoped memory for _lambda_.1']
    #allocation7 [shape = 'u8[2359296]{0}', space=vmem, size = 0x240000, scoped, tag = 'input window, operand 3, single buffered']
    #allocation8 [shape = 'u8[3072]{0}', space=vmem, size = 0xc00, scoped, tag = 'input window, operand 4, single buffered']
    #allocation9 [shape = 's32[1]{0}', space=sflag, size = 0x4, scoped, tag = 'scoped memory for _lambda_.1']
    #allocation10 [shape = 'u8[3072]{0}', space=vmem, size = 0xc00, scoped, tag = 'input window, operand 5, single buffered']
    #allocation11 [shape = 'u8[1024]{0}', space=vmem, size = 0x400, scoped, tag = 'input window, operand 6, single buffered']
    #allocation12 [shape = 's32[1]{0}', space=sflag, size = 0x4, scoped, tag = 'scoped memory for _lambda_.1']
    #allocation13 [shape = 'u8[1024]{0}', space=vmem, size = 0x400, scoped, tag = 'input window, operand 7, single buffered']
    #allocation14 [shape = 'u8[393216]{0}', space=vmem, size = 0x60000, scoped, tag = 'input window, operand 8, single buffered']
    #allocation15 [shape = 's32[1]{0}', space=sflag, size = 0x4, scoped, tag = 'scoped memory for _lambda_.1']
    #allocation16 [shape = 'u8[131072]{0}', space=vmem, size = 0x20000, scoped, tag = 'input window, operand 9, single buffered']
    #allocation17 [shape = 'u8[1024]{0}', space=vmem, size = 0x400, scoped, tag = 'input window, operand 10, single buffered']
    #allocation18 [shape = 's32[1]{0}', space=sflag, size = 0x4, scoped, tag = 'scoped memory for _lambda_.1']
    #allocation19 [shape = 'u8[1024]{0}', space=vmem, size = 0x400, scoped, tag = 'input window, operand 11, single buffered']
    %19 = vsyncpa [#allocation4], 0
    %s20 = scalar_lea.sflag [#allocation4], 1
    %21 = vsyncpa %s20, 0
    %22 = vsyncpa [#allocation6], 0
    %23 = vsyncpa [#allocation9], 0
    %24 = vsyncpa [#allocation12], 0
    %25 = vsyncpa [#allocation15], 0
    %26 = vsyncpa [#allocation18], 0
    loop: start=0, step=1, limit=4
    $region2: #{_lambda_.1} parent=1 // loop_pre_header
      _
    $region3: #{_lambda_.1} parent=1 // loop_header
      %s28 = sphi 0, %s32
      %p29 = scmp.ge.s32.totalorder %s28, 4
      %s38 = sphi 0, %s40
      %s41 = sphi 0, %s38
      %s42 = sphi 0, %s41
      %s58 = sphi 0, %s42
      %s64 = sphi 0, %s66
      %s67 = sphi 0, %s64
      %s68 = sphi 0, %s67
      %s84 = sphi 0, %s68
      %s88 = sphi 0, %s88
      %s90 = sphi 0, %s88
      %s91 = sphi 0, %s90
      %s105 = sphi 0, %s91
      %s109 = sphi 0, %s109
      %s111 = sphi 0, %s109
      %s112 = sphi 0, %s111
      %s126 = sphi 0, %s112
      %s130 = sphi 0, %s130
      %s132 = sphi 0, %s130
      %s133 = sphi 0, %s132
      %s147 = sphi 0, %s133
      %s151 = sphi 0, %s151
      %s153 = sphi 0, %s151
      %s154 = sphi 0, %s153
      %s168 = sphi 0, %s154
      %s172 = sphi 0, %s172
      %s174 = sphi 0, %s172
      %s175 = sphi 0, %s174
      %s189 = sphi 0, %s175
      %s193 = sphi 0, %s193
      %s195 = sphi 0, %s193
      %s196 = sphi 0, %s195
      %s210 = sphi 0, %s196
      %s214 = sphi 0, %s214
      %s216 = sphi 0, %s214
      %s217 = sphi 0, %s216
      %s231 = sphi 0, %s217
      %s235 = sphi 0, %s235
      %s237 = sphi 0, %s235
      %s238 = sphi 0, %s237
      %s252 = sphi 0, %s238
      %s256 = sphi 0, %s256
      %s258 = sphi 0, %s256
      %s259 = sphi 0, %s258
      %s273 = sphi 0, %s259
      %s277 = sphi 0, %s277
      %s279 = sphi 0, %s277
      %s280 = sphi 0, %s279
      %s294 = sphi 0, %s280
      %s298 = sphi 0, %s298
      %s300 = sphi 0, %s298
      %s301 = sphi 0, %s300
      %s315 = sphi 0, %s301
      %s319 = sphi 0, %s319
      %s321 = sphi 0, %s319
      %s322 = sphi 0, %s321
      %s336 = sphi 0, %s322
      %s342 = sphi 0, %s344
      %s345 = sphi 0, %s342
      %s346 = sphi 0, %s345
      %s362 = sphi 0, %s346
    $region4: #{_lambda_.1} parent=1 // loop_header_branch
      %31 = sbr.rel (%p29) target = $region8
    $region5: #{_lambda_.1} parent=1 // loop_body
      %s33 = ssub.s32 %s28, 1
      %s34 = ssub.s32 %s28, 2
      %s35 = sadd.s32 %s28, 1
      %s36 = ssub.s32 %s28, %s35
      %p37 = scmp.eq.s32.totalorder %s36, 0
      %s39 = sadd.s32 %s38, 1
      %s40 = scalar_select %p37, %s38, %s39
      %p43 = pneg %p37
      %p44 = scmp.eq.s32.totalorder %s28, 1
      %p45 = por %p43, %p44
      %p46 = scmp.ne.s32.totalorder %s38, %s41
      %p47 = scmp.eq.s32.totalorder %s28, 0
      %p48 = por %p46, %p47
      %p49 = scmp.ne.s32.totalorder %s38, %s41
      %p50 = scmp.eq.s32.totalorder %s33, 1
      %p51 = por %p49, %p50
      %p52 = scmp.ne.s32.totalorder %s41, %s42
      %p53 = scmp.eq.s32.totalorder %s33, 0
      %p54 = por %p52, %p53
      %p55 = scmp.ne.s32.totalorder %s41, %s42
      %p56 = scmp.eq.s32.totalorder %s34, 1
      %p57 = por %p55, %p56
      %p59 = scmp.ne.s32.totalorder %s42, %s58
      %p60 = scmp.eq.s32.totalorder %s34, 0
      %p61 = por %p59, %p60
      %s62 = ssub.s32 %s28, %s35
      %p63 = scmp.eq.s32.totalorder %s62, 0
      %s65 = sadd.s32 %s64, 1
      %s66 = scalar_select %p63, %s64, %s65
      %p69 = pneg %p63
      %p70 = scmp.eq.s32.totalorder %s28, 1
      %p71 = por %p69, %p70
      %p72 = scmp.ne.s32.totalorder %s64, %s67
      %p73 = scmp.eq.s32.totalorder %s28, 0
      %p74 = por %p72, %p73
      %p75 = scmp.ne.s32.totalorder %s64, %s67
      %p76 = scmp.eq.s32.totalorder %s33, 1
      %p77 = por %p75, %p76
      %p78 = scmp.ne.s32.totalorder %s67, %s68
      %p79 = scmp.eq.s32.totalorder %s33, 0
      %p80 = por %p78, %p79
      %p81 = scmp.ne.s32.totalorder %s67, %s68
      %p82 = scmp.eq.s32.totalorder %s34, 1
      %p83 = por %p81, %p82
      %p85 = scmp.ne.s32.totalorder %s68, %s84
      %p86 = scmp.eq.s32.totalorder %s34, 0
      %p87 = por %p85, %p86
      %s89 = sadd.s32 %s88, 1
      %p92 = scmp.eq.s32.totalorder %s28, 1
      %p93 = scmp.ne.s32.totalorder %s88, %s90
      %p94 = scmp.eq.s32.totalorder %s28, 0
      %p95 = por %p93, %p94
      %p96 = scmp.ne.s32.totalorder %s88, %s90
      %p97 = scmp.eq.s32.totalorder %s33, 1
      %p98 = por %p96, %p97
      %p99 = scmp.ne.s32.totalorder %s90, %s91
      %p100 = scmp.eq.s32.totalorder %s33, 0
      %p101 = por %p99, %p100
      %p102 = scmp.ne.s32.totalorder %s90, %s91
      %p103 = scmp.eq.s32.totalorder %s34, 1
      %p104 = por %p102, %p103
      %p106 = scmp.ne.s32.totalorder %s91, %s105
      %p107 = scmp.eq.s32.totalorder %s34, 0
      %p108 = por %p106, %p107
      %s110 = sadd.s32 %s109, 1
      %p113 = scmp.eq.s32.totalorder %s28, 1
      %p114 = scmp.ne.s32.totalorder %s109, %s111
      %p115 = scmp.eq.s32.totalorder %s28, 0
      %p116 = por %p114, %p115
      %p117 = scmp.ne.s32.totalorder %s109, %s111
      %p118 = scmp.eq.s32.totalorder %s33, 1
      %p119 = por %p117, %p118
      %p120 = scmp.ne.s32.totalorder %s111, %s112
      %p121 = scmp.eq.s32.totalorder %s33, 0
      %p122 = por %p120, %p121
      %p123 = scmp.ne.s32.totalorder %s111, %s112
      %p124 = scmp.eq.s32.totalorder %s34, 1
      %p125 = por %p123, %p124
      %p127 = scmp.ne.s32.totalorder %s112, %s126
      %p128 = scmp.eq.s32.totalorder %s34, 0
      %p129 = por %p127, %p128
      %s131 = sadd.s32 %s130, 1
      %p134 = scmp.eq.s32.totalorder %s28, 1
      %p135 = scmp.ne.s32.totalorder %s130, %s132
      %p136 = scmp.eq.s32.totalorder %s28, 0
      %p137 = por %p135, %p136
      %p138 = scmp.ne.s32.totalorder %s130, %s132
      %p139 = scmp.eq.s32.totalorder %s33, 1
      %p140 = por %p138, %p139
      %p141 = scmp.ne.s32.totalorder %s132, %s133
      %p142 = scmp.eq.s32.totalorder %s33, 0
      %p143 = por %p141, %p142
      %p144 = scmp.ne.s32.totalorder %s132, %s133
      %p145 = scmp.eq.s32.totalorder %s34, 1
      %p146 = por %p144, %p145
      %p148 = scmp.ne.s32.totalorder %s133, %s147
      %p149 = scmp.eq.s32.totalorder %s34, 0
      %p150 = por %p148, %p149
      %s152 = sadd.s32 %s151, 1
      %p155 = scmp.eq.s32.totalorder %s28, 1
      %p156 = scmp.ne.s32.totalorder %s151, %s153
      %p157 = scmp.eq.s32.totalorder %s28, 0
      %p158 = por %p156, %p157
      %p159 = scmp.ne.s32.totalorder %s151, %s153
      %p160 = scmp.eq.s32.totalorder %s33, 1
      %p161 = por %p159, %p160
      %p162 = scmp.ne.s32.totalorder %s153, %s154
      %p163 = scmp.eq.s32.totalorder %s33, 0
      %p164 = por %p162, %p163
      %p165 = scmp.ne.s32.totalorder %s153, %s154
      %p166 = scmp.eq.s32.totalorder %s34, 1
      %p167 = por %p165, %p166
      %p169 = scmp.ne.s32.totalorder %s154, %s168
      %p170 = scmp.eq.s32.totalorder %s34, 0
      %p171 = por %p169, %p170
      %s173 = sadd.s32 %s172, 1
      %p176 = scmp.eq.s32.totalorder %s28, 1
      %p177 = scmp.ne.s32.totalorder %s172, %s174
      %p178 = scmp.eq.s32.totalorder %s28, 0
      %p179 = por %p177, %p178
      %p180 = scmp.ne.s32.totalorder %s172, %s174
      %p181 = scmp.eq.s32.totalorder %s33, 1
      %p182 = por %p180, %p181
      %p183 = scmp.ne.s32.totalorder %s174, %s175
      %p184 = scmp.eq.s32.totalorder %s33, 0
      %p185 = por %p183, %p184
      %p186 = scmp.ne.s32.totalorder %s174, %s175
      %p187 = scmp.eq.s32.totalorder %s34, 1
      %p188 = por %p186, %p187
      %p190 = scmp.ne.s32.totalorder %s175, %s189
      %p191 = scmp.eq.s32.totalorder %s34, 0
      %p192 = por %p190, %p191
      %s194 = sadd.s32 %s193, 1
      %p197 = scmp.eq.s32.totalorder %s28, 1
      %p198 = scmp.ne.s32.totalorder %s193, %s195
      %p199 = scmp.eq.s32.totalorder %s28, 0
      %p200 = por %p198, %p199
      %p201 = scmp.ne.s32.totalorder %s193, %s195
      %p202 = scmp.eq.s32.totalorder %s33, 1
      %p203 = por %p201, %p202
      %p204 = scmp.ne.s32.totalorder %s195, %s196
      %p205 = scmp.eq.s32.totalorder %s33, 0
      %p206 = por %p204, %p205
      %p207 = scmp.ne.s32.totalorder %s195, %s196
      %p208 = scmp.eq.s32.totalorder %s34, 1
      %p209 = por %p207, %p208
      %p211 = scmp.ne.s32.totalorder %s196, %s210
      %p212 = scmp.eq.s32.totalorder %s34, 0
      %p213 = por %p211, %p212
      %s215 = sadd.s32 %s214, 1
      %p218 = scmp.eq.s32.totalorder %s28, 1
      %p219 = scmp.ne.s32.totalorder %s214, %s216
      %p220 = scmp.eq.s32.totalorder %s28, 0
      %p221 = por %p219, %p220
      %p222 = scmp.ne.s32.totalorder %s214, %s216
      %p223 = scmp.eq.s32.totalorder %s33, 1
      %p224 = por %p222, %p223
      %p225 = scmp.ne.s32.totalorder %s216, %s217
      %p226 = scmp.eq.s32.totalorder %s33, 0
      %p227 = por %p225, %p226
      %p228 = scmp.ne.s32.totalorder %s216, %s217
      %p229 = scmp.eq.s32.totalorder %s34, 1
      %p230 = por %p228, %p229
      %p232 = scmp.ne.s32.totalorder %s217, %s231
      %p233 = scmp.eq.s32.totalorder %s34, 0
      %p234 = por %p232, %p233
      %s236 = sadd.s32 %s235, 1
      %p239 = scmp.eq.s32.totalorder %s28, 1
      %p240 = scmp.ne.s32.totalorder %s235, %s237
      %p241 = scmp.eq.s32.totalorder %s28, 0
      %p242 = por %p240, %p241
      %p243 = scmp.ne.s32.totalorder %s235, %s237
      %p244 = scmp.eq.s32.totalorder %s33, 1
      %p245 = por %p243, %p244
      %p246 = scmp.ne.s32.totalorder %s237, %s238
      %p247 = scmp.eq.s32.totalorder %s33, 0
      %p248 = por %p246, %p247
      %p249 = scmp.ne.s32.totalorder %s237, %s238
      %p250 = scmp.eq.s32.totalorder %s34, 1
      %p251 = por %p249, %p250
      %p253 = scmp.ne.s32.totalorder %s238, %s252
      %p254 = scmp.eq.s32.totalorder %s34, 0
      %p255 = por %p253, %p254
      %s257 = sadd.s32 %s256, 1
      %p260 = scmp.eq.s32.totalorder %s28, 1
      %p261 = scmp.ne.s32.totalorder %s256, %s258
      %p262 = scmp.eq.s32.totalorder %s28, 0
      %p263 = por %p261, %p262
      %p264 = scmp.ne.s32.totalorder %s256, %s258
      %p265 = scmp.eq.s32.totalorder %s33, 1
      %p266 = por %p264, %p265
      %p267 = scmp.ne.s32.totalorder %s258, %s259
      %p268 = scmp.eq.s32.totalorder %s33, 0
      %p269 = por %p267, %p268
      %p270 = scmp.ne.s32.totalorder %s258, %s259
      %p271 = scmp.eq.s32.totalorder %s34, 1
      %p272 = por %p270, %p271
      %p274 = scmp.ne.s32.totalorder %s259, %s273
      %p275 = scmp.eq.s32.totalorder %s34, 0
      %p276 = por %p274, %p275
      %s278 = sadd.s32 %s277, 1
      %p281 = scmp.eq.s32.totalorder %s28, 1
      %p282 = scmp.ne.s32.totalorder %s277, %s279
      %p283 = scmp.eq.s32.totalorder %s28, 0
      %p284 = por %p282, %p283
      %p285 = scmp.ne.s32.totalorder %s277, %s279
      %p286 = scmp.eq.s32.totalorder %s33, 1
      %p287 = por %p285, %p286
      %p288 = scmp.ne.s32.totalorder %s279, %s280
      %p289 = scmp.eq.s32.totalorder %s33, 0
      %p290 = por %p288, %p289
      %p291 = scmp.ne.s32.totalorder %s279, %s280
      %p292 = scmp.eq.s32.totalorder %s34, 1
      %p293 = por %p291, %p292
      %p295 = scmp.ne.s32.totalorder %s280, %s294
      %p296 = scmp.eq.s32.totalorder %s34, 0
      %p297 = por %p295, %p296
      %s299 = sadd.s32 %s298, 1
      %p302 = scmp.eq.s32.totalorder %s28, 1
      %p303 = scmp.ne.s32.totalorder %s298, %s300
      %p304 = scmp.eq.s32.totalorder %s28, 0
      %p305 = por %p303, %p304
      %p306 = scmp.ne.s32.totalorder %s298, %s300
      %p307 = scmp.eq.s32.totalorder %s33, 1
      %p308 = por %p306, %p307
      %p309 = scmp.ne.s32.totalorder %s300, %s301
      %p310 = scmp.eq.s32.totalorder %s33, 0
      %p311 = por %p309, %p310
      %p312 = scmp.ne.s32.totalorder %s300, %s301
      %p313 = scmp.eq.s32.totalorder %s34, 1
      %p314 = por %p312, %p313
      %p316 = scmp.ne.s32.totalorder %s301, %s315
      %p317 = scmp.eq.s32.totalorder %s34, 0
      %p318 = por %p316, %p317
      %s320 = sadd.s32 %s319, 1
      %p323 = scmp.eq.s32.totalorder %s28, 1
      %p324 = scmp.ne.s32.totalorder %s319, %s321
      %p325 = scmp.eq.s32.totalorder %s28, 0
      %p326 = por %p324, %p325
      %p327 = scmp.ne.s32.totalorder %s319, %s321
      %p328 = scmp.eq.s32.totalorder %s33, 1
      %p329 = por %p327, %p328
      %p330 = scmp.ne.s32.totalorder %s321, %s322
      %p331 = scmp.eq.s32.totalorder %s33, 0
      %p332 = por %p330, %p331
      %p333 = scmp.ne.s32.totalorder %s321, %s322
      %p334 = scmp.eq.s32.totalorder %s34, 1
      %p335 = por %p333, %p334
      %p337 = scmp.ne.s32.totalorder %s322, %s336
      %p338 = scmp.eq.s32.totalorder %s34, 0
      %p339 = por %p337, %p338
      %s340 = ssub.s32 %s28, %s35
      %p341 = scmp.eq.s32.totalorder %s340, 0
      %s343 = sadd.s32 %s342, 1
      %s344 = scalar_select %p341, %s342, %s343
      %p347 = pneg %p341
      %p348 = scmp.eq.s32.totalorder %s28, 1
      %p349 = por %p347, %p348
      %p350 = scmp.ne.s32.totalorder %s342, %s345
      %p351 = scmp.eq.s32.totalorder %s28, 0
      %p352 = por %p350, %p351
      %p353 = scmp.ne.s32.totalorder %s342, %s345
      %p354 = scmp.eq.s32.totalorder %s33, 1
      %p355 = por %p353, %p354
      %p356 = scmp.ne.s32.totalorder %s345, %s346
      %p357 = scmp.eq.s32.totalorder %s33, 0
      %p358 = por %p356, %p357
      %p359 = scmp.ne.s32.totalorder %s345, %s346
      %p360 = scmp.eq.s32.totalorder %s34, 1
      %p361 = por %p359, %p360
      %p363 = scmp.ne.s32.totalorder %s346, %s362
      %p364 = scmp.eq.s32.totalorder %s34, 0
      %p365 = por %p363, %p364
      %p366 = scmp.le.s32.totalorder 1, %s28
      %p367 = scmp.lt.s32.totalorder %s28, 3
      %p368 = pnand %p366, %p367
      %p369 = pneg %p368
      // Predicated region
      $region9: #{_lambda_.1} parent=5 // pred_check
        _
      $region10: #{_lambda_.1} parent=5 // pred_check_branch
        %371 = sbr.rel (%p368) target = $region12
      $region11: #{_lambda_.1} parent=5 // pred_region
        %s372 = ssub.s32 %s28, 1
        // Predicated region
        $region13: #{_lambda_.1} parent=11 // pred_check
          %p373 = pneg %p101
        $region14: #{_lambda_.1} parent=11 // pred_check_branch
          %375 = sbr.rel (%p373) target = $region16
        $region15: #{_lambda_.1} parent=11 // pred_region
          %s377 = ssub.s32 24576, 24576
          %378 = vsyncadd [#allocation6], %s377
          %s379 = sshll.u32 [#allocation5], 4
          %s380 = int_to_ptr.vmem [resolvable:$true] %s379
          %385 = dma.hbm_to_vmem [thread:$0]  %s2, 24576, %s380, [#allocation6], 384, 384, 24
        $region16: #{_lambda_.1} parent=11 // pred_fallthru
          _
        // Predicated region
        $region17: #{_lambda_.1} parent=11 // pred_check
          %p386 = pneg %p122
        $region18: #{_lambda_.1} parent=11 // pred_check_branch
          %388 = sbr.rel (%p386) target = $region20
        $region19: #{_lambda_.1} parent=11 // pred_region
          %s390 = ssub.s32 73728, 73728
          %391 = vsyncadd [#allocation6], %s390
          %s392 = sshll.u32 [#allocation7], 4
          %s393 = int_to_ptr.vmem [resolvable:$true] %s392
          %398 = dma.hbm_to_vmem [thread:$0]  %s3, 73728, %s393, [#allocation6], 128, 128, 8
        $region20: #{_lambda_.1} parent=11 // pred_fallthru
          _
        // Predicated region
        $region21: #{_lambda_.1} parent=11 // pred_check
          %p399 = pneg %p143
        $region22: #{_lambda_.1} parent=11 // pred_check_branch
          %401 = sbr.rel (%p399) target = $region24
        $region23: #{_lambda_.1} parent=11 // pred_region
          %s403 = ssub.s32 96, 96
          %404 = vsyncadd [#allocation9], %s403
          %s406 = sshll.u32 [#allocation8], 4
          %s407 = int_to_ptr.vmem [resolvable:$true] %s406
          %409 = dma.hbm_to_vmem [thread:$0]  %s4, 96, %s407, [#allocation9]
        $region24: #{_lambda_.1} parent=11 // pred_fallthru
          _
        // Predicated region
        $region25: #{_lambda_.1} parent=11 // pred_check
          %p410 = pneg %p164
        $region26: #{_lambda_.1} parent=11 // pred_check_branch
          %412 = sbr.rel (%p410) target = $region28
        $region27: #{_lambda_.1} parent=11 // pred_region
          %s414 = ssub.s32 96, 96
          %415 = vsyncadd [#allocation9], %s414
          %s417 = sshll.u32 [#allocation10], 4
          %s418 = int_to_ptr.vmem [resolvable:$true] %s417
          %420 = dma.hbm_to_vmem [thread:$0]  %s5, 96, %s418, [#allocation9]
        $region28: #{_lambda_.1} parent=11 // pred_fallthru
          _
        // Predicated region
        $region29: #{_lambda_.1} parent=11 // pred_check
          %p421 = pneg %p185
        $region30: #{_lambda_.1} parent=11 // pred_check_branch
          %423 = sbr.rel (%p421) target = $region32
        $region31: #{_lambda_.1} parent=11 // pred_region
          %s425 = ssub.s32 32, 32
          %426 = vsyncadd [#allocation12], %s425
          %s428 = sshll.u32 [#allocation11], 4
          %s429 = int_to_ptr.vmem [resolvable:$true] %s428
          %431 = dma.hbm_to_vmem [thread:$0]  %s6, 32, %s429, [#allocation12]
        $region32: #{_lambda_.1} parent=11 // pred_fallthru
          _
        // Predicated region
        $region33: #{_lambda_.1} parent=11 // pred_check
          %p432 = pneg %p206
        $region34: #{_lambda_.1} parent=11 // pred_check_branch
          %434 = sbr.rel (%p432) target = $region36
        $region35: #{_lambda_.1} parent=11 // pred_region
          %s436 = ssub.s32 32, 32
          %437 = vsyncadd [#allocation12], %s436
          %s439 = sshll.u32 [#allocation13], 4
          %s440 = int_to_ptr.vmem [resolvable:$true] %s439
          %442 = dma.hbm_to_vmem [thread:$0]  %s7, 32, %s440, [#allocation12]
        $region36: #{_lambda_.1} parent=11 // pred_fallthru
          _
        // Predicated region
        $region37: #{_lambda_.1} parent=11 // pred_check
          %p443 = pneg %p227
        $region38: #{_lambda_.1} parent=11 // pred_check_branch
          %445 = sbr.rel (%p443) target = $region40
        $region39: #{_lambda_.1} parent=11 // pred_region
          %s447 = ssub.s32 12288, 12288
          %448 = vsyncadd [#allocation15], %s447
          %s449 = sshll.u32 [#allocation14], 4
          %s450 = int_to_ptr.vmem [resolvable:$true] %s449
          %455 = dma.hbm_to_vmem [thread:$0]  %s8, 12288, %s450, [#allocation15], 128, 128, 8
        $region40: #{_lambda_.1} parent=11 // pred_fallthru
          _
        // Predicated region
        $region41: #{_lambda_.1} parent=11 // pred_check
          %p456 = pneg %p248
        $region42: #{_lambda_.1} parent=11 // pred_check_branch
          %458 = sbr.rel (%p456) target = $region44
        $region43: #{_lambda_.1} parent=11 // pred_region
          %s460 = ssub.s32 4096, 4096
          %461 = vsyncadd [#allocation15], %s460
          %s462 = sshll.u32 [#allocation16], 4
          %s463 = int_to_ptr.vmem [resolvable:$true] %s462
          %468 = dma.hbm_to_vmem [thread:$0]  %s9, 4096, %s463, [#allocation15], 128, 128, 8
        $region44: #{_lambda_.1} parent=11 // pred_fallthru
          _
        // Predicated region
        $region45: #{_lambda_.1} parent=11 // pred_check
          %p469 = pneg %p269
        $region46: #{_lambda_.1} parent=11 // pred_check_branch
          %471 = sbr.rel (%p469) target = $region48
        $region47: #{_lambda_.1} parent=11 // pred_region
          %s473 = ssub.s32 32, 32
          %474 = vsyncadd [#allocation18], %s473
          %s476 = sshll.u32 [#allocation17], 4
          %s477 = int_to_ptr.vmem [resolvable:$true] %s476
          %479 = dma.hbm_to_vmem [thread:$0]  %s10, 32, %s477, [#allocation18]
        $region48: #{_lambda_.1} parent=11 // pred_fallthru
          _
        // Predicated region
        $region49: #{_lambda_.1} parent=11 // pred_check
          %p480 = pneg %p290
        $region50: #{_lambda_.1} parent=11 // pred_check_branch
          %482 = sbr.rel (%p480) target = $region52
        $region51: #{_lambda_.1} parent=11 // pred_region
          %s484 = ssub.s32 32, 32
          %485 = vsyncadd [#allocation18], %s484
          %s487 = sshll.u32 [#allocation19], 4
          %s488 = int_to_ptr.vmem [resolvable:$true] %s487
          %490 = dma.hbm_to_vmem [thread:$0]  %s11, 32, %s488, [#allocation18]
        $region52: #{_lambda_.1} parent=11 // pred_fallthru
          _
        // Predicated region
        $region53: #{_lambda_.1} parent=11 // pred_check
          %p491 = pneg %p311
        $region54: #{_lambda_.1} parent=11 // pred_check_branch
          %493 = sbr.rel (%p491) target = $region56
        $region55: #{_lambda_.1} parent=11 // pred_region
          _
        $region56: #{_lambda_.1} parent=11 // pred_fallthru
          _
        // Predicated region
        $region57: #{_lambda_.1} parent=11 // pred_check
          %p494 = pneg %p332
        $region58: #{_lambda_.1} parent=11 // pred_check_branch
          %496 = sbr.rel (%p494) target = $region60
        $region59: #{_lambda_.1} parent=11 // pred_region
          _
        $region60: #{_lambda_.1} parent=11 // pred_fallthru
          _
      $region12: #{_lambda_.1} parent=5 // pred_fallthru
        _
      %p497 = scmp.lt.s32.totalorder %s28, 2
      // Predicated region
      $region61: #{_lambda_.1} parent=5 // pred_check
        %p498 = pneg %p497
      $region62: #{_lambda_.1} parent=5 // pred_check_branch
        %500 = sbr.rel (%p498) target = $region64
      $region63: #{_lambda_.1} parent=5 // pred_region
        // Predicated region
        $region65: #{_lambda_.1} parent=63 // pred_check
          %p501 = pneg %p48
        $region66: #{_lambda_.1} parent=63 // pred_check_branch
          %503 = sbr.rel (%p501) target = $region68
        $region67: #{_lambda_.1} parent=63 // pred_region
          %s504 = sand.u32 %s38, 1
          %s505 = scalar_lea.sflag [#allocation4], %s504
          %s506 = sand.u32 %s38, 1
          %s507 = smul.addr %s506, 256
          %s508 = scalar_lea.vmem [#allocation3], %s507
          %s510 = ssub.s32 4096, 4096
          %511 = vsyncadd %s505, %s510
          %s512 = smul.addr %s28, 32
          %s513 = smul.addr %s512, 128
          %s514 = scalar_lea.hbm %s0, %s513
          %s515 = sshll.u32 %s508, 4
          %s516 = int_to_ptr.vmem [resolvable:$true] %s515
          %521 = dma.hbm_to_vmem [thread:$0]  %s514, 4096, %s516, %s505, 512, 512, 32
        $region68: #{_lambda_.1} parent=63 // pred_fallthru
          _
        // Predicated region
        $region69: #{_lambda_.1} parent=63 // pred_check
          %p522 = pneg %p74
        $region70: #{_lambda_.1} parent=63 // pred_check_branch
          %524 = sbr.rel (%p522) target = $region72
        $region71: #{_lambda_.1} parent=63 // pred_region
          %p525 = scmp.lt.s32.totalorder %s28, 1
          %s526 = scalar_select %p525, %s28, 1
          %s527 = smul.addr %s526, 2
          %s528 = scalar_lea.vmem %s1, %s527
        $region72: #{_lambda_.1} parent=63 // pred_fallthru
          _
      $region64: #{_lambda_.1} parent=5 // pred_fallthru
        _
      %p529 = scmp.le.s32.totalorder 1, %s28
      %p530 = scmp.lt.s32.totalorder %s28, 3
      %p531 = pnand %p529, %p530
      %p532 = pneg %p531
      // Predicated region
      $region73: #{_lambda_.1} parent=5 // pred_check
        _
      $region74: #{_lambda_.1} parent=5 // pred_check_branch
        %534 = sbr.rel (%p531) target = $region76
      $region75: #{_lambda_.1} parent=5 // pred_region
        %s535 = ssub.s32 %s28, 1
        %s536 = sand.u32 %s41, 1
        %s537 = scalar_lea.sflag [#allocation4], %s536
        %s538 = sand.u32 %s41, 1
        %s539 = smul.addr %s538, 256
        %s540 = scalar_lea.vmem [#allocation3], %s539
        // Predicated region
        $region77: #{_lambda_.1} parent=75 // pred_check
          %p541 = pneg %p54
        $region78: #{_lambda_.1} parent=75 // pred_check_branch
          %543 = sbr.rel (%p541) target = $region80
        $region79: #{_lambda_.1} parent=75 // pred_region
          %544 = dma.done %s537, 4096
        $region80: #{_lambda_.1} parent=75 // pred_fallthru
          _
        // Predicated region
        $region81: #{_lambda_.1} parent=75 // pred_check
          %p545 = pneg %p101
        $region82: #{_lambda_.1} parent=75 // pred_check_branch
          %547 = sbr.rel (%p545) target = $region84
        $region83: #{_lambda_.1} parent=75 // pred_region
          %548 = dma.done [#allocation6], 24576
        $region84: #{_lambda_.1} parent=75 // pred_fallthru
          _
        // Predicated region
        $region85: #{_lambda_.1} parent=75 // pred_check
          %p549 = pneg %p122
        $region86: #{_lambda_.1} parent=75 // pred_check_branch
          %551 = sbr.rel (%p549) target = $region88
        $region87: #{_lambda_.1} parent=75 // pred_region
          %552 = dma.done [#allocation6], 73728
        $region88: #{_lambda_.1} parent=75 // pred_fallthru
          _
        // Predicated region
        $region89: #{_lambda_.1} parent=75 // pred_check
          %p553 = pneg %p143
        $region90: #{_lambda_.1} parent=75 // pred_check_branch
          %555 = sbr.rel (%p553) target = $region92
        $region91: #{_lambda_.1} parent=75 // pred_region
          %556 = dma.done [#allocation9], 96
        $region92: #{_lambda_.1} parent=75 // pred_fallthru
          _
        // Predicated region
        $region93: #{_lambda_.1} parent=75 // pred_check
          %p557 = pneg %p164
        $region94: #{_lambda_.1} parent=75 // pred_check_branch
          %559 = sbr.rel (%p557) target = $region96
        $region95: #{_lambda_.1} parent=75 // pred_region
          %560 = dma.done [#allocation9], 96
        $region96: #{_lambda_.1} parent=75 // pred_fallthru
          _
        // Predicated region
        $region97: #{_lambda_.1} parent=75 // pred_check
          %p561 = pneg %p185
        $region98: #{_lambda_.1} parent=75 // pred_check_branch
          %563 = sbr.rel (%p561) target = $region100
        $region99: #{_lambda_.1} parent=75 // pred_region
          %564 = dma.done [#allocation12], 32
        $region100: #{_lambda_.1} parent=75 // pred_fallthru
          _
        // Predicated region
        $region101: #{_lambda_.1} parent=75 // pred_check
          %p565 = pneg %p206
        $region102: #{_lambda_.1} parent=75 // pred_check_branch
          %567 = sbr.rel (%p565) target = $region104
        $region103: #{_lambda_.1} parent=75 // pred_region
          %568 = dma.done [#allocation12], 32
        $region104: #{_lambda_.1} parent=75 // pred_fallthru
          _
        // Predicated region
        $region105: #{_lambda_.1} parent=75 // pred_check
          %p569 = pneg %p227
        $region106: #{_lambda_.1} parent=75 // pred_check_branch
          %571 = sbr.rel (%p569) target = $region108
        $region107: #{_lambda_.1} parent=75 // pred_region
          %572 = dma.done [#allocation15], 12288
        $region108: #{_lambda_.1} parent=75 // pred_fallthru
          _
        // Predicated region
        $region109: #{_lambda_.1} parent=75 // pred_check
          %p573 = pneg %p248
        $region110: #{_lambda_.1} parent=75 // pred_check_branch
          %575 = sbr.rel (%p573) target = $region112
        $region111: #{_lambda_.1} parent=75 // pred_region
          %576 = dma.done [#allocation15], 4096
        $region112: #{_lambda_.1} parent=75 // pred_fallthru
          _
        // Predicated region
        $region113: #{_lambda_.1} parent=75 // pred_check
          %p577 = pneg %p269
        $region114: #{_lambda_.1} parent=75 // pred_check_branch
          %579 = sbr.rel (%p577) target = $region116
        $region115: #{_lambda_.1} parent=75 // pred_region
          %580 = dma.done [#allocation18], 32
        $region116: #{_lambda_.1} parent=75 // pred_fallthru
          _
        // Predicated region
        $region117: #{_lambda_.1} parent=75 // pred_check
          %p581 = pneg %p290
        $region118: #{_lambda_.1} parent=75 // pred_check_branch
          %583 = sbr.rel (%p581) target = $region120
        $region119: #{_lambda_.1} parent=75 // pred_region
          %584 = dma.done [#allocation18], 32
        $region120: #{_lambda_.1} parent=75 // pred_fallthru
          _
        %s585 = sand.u32 %s41, 1
        %s586 = scalar_lea.sflag [#allocation4], %s585
        %s587 = sand.u32 %s41, 1
        %s588 = smul.addr %s587, 256
        %s589 = scalar_lea.vmem [#allocation3], %s588
        %p590 = pneg %p54
        %p591 = pneg %p51
        %p592 = scmp.lt.s32.totalorder %s33, 1
        %s593 = scalar_select %p592, %s33, 1
        %s594 = smul.addr %s593, 2
        %s595 = scalar_lea.vmem %s1, %s594
        %p596 = pneg %p80
        %p597 = pneg %p77
        %p598 = pneg %p101
        %p599 = pneg %p98
        %p600 = pneg %p122
        %p601 = pneg %p119
        %p602 = pneg %p143
        %p603 = pneg %p140
        %p604 = pneg %p164
        %p605 = pneg %p161
        %p606 = pneg %p185
        %p607 = pneg %p182
        %p608 = pneg %p206
        %p609 = pneg %p203
        %p610 = pneg %p227
        %p611 = pneg %p224
        %p612 = pneg %p248
        %p613 = pneg %p245
        %p614 = pneg %p269
        %p615 = pneg %p266
        %p616 = pneg %p290
        %p617 = pneg %p287
        %p618 = pneg %p311
        %p619 = pneg %p308
        %p620 = pneg %p332
        %p621 = pneg %p329
        %p622 = pneg %p358
        %p623 = pneg %p355
        %p624 = scmp.lt.s32.totalorder %s33, 1
        %s625 = scalar_select %p624, %s33, 1
        %s626 = smul.addr %s625, 8
        %s627 = smul.addr %s626, 8
        %s628 = scalar_lea.vmem %s14, %s627
        %p629 = scmp.lt.s32.totalorder %s33, 1
        %s630 = scalar_select %p629, %s33, 1
        %s631 = smul.addr %s630, 2
        %s632 = scalar_lea.vmem %s1, %s631
        %p633 = scmp.lt.s32.totalorder %s33, 1
        %s634 = scalar_select %p633, %s33, 1
        %s635 = smul.addr %s634, 8
        %s636 = smul.addr %s635, 8
        %s637 = scalar_lea.vmem %s14, %s636
        %v639 = vld [vmem:[%s540] sm:$0xff]
        %v640 = vld [vmem:[%s540 + $0x8] sm:$0xff]
        %v641 = vld [vmem:[%s540 + $0x10] sm:$0xff]
        %v642 = vld [vmem:[%s540 + $0x18] sm:$0xff]
        %v643 = vld [vmem:[%s540 + $0x20] sm:$0xff]
        %v644 = vld [vmem:[%s540 + $0x28] sm:$0xff]
        %v645 = vld [vmem:[%s540 + $0x30] sm:$0xff]
        %v646 = vld [vmem:[%s540 + $0x38] sm:$0xff]
        %v647 = vld [vmem:[%s540 + $0x40] sm:$0xff]
        %v648 = vld [vmem:[%s540 + $0x48] sm:$0xff]
        %v649 = vld [vmem:[%s540 + $0x50] sm:$0xff]
        %v650 = vld [vmem:[%s540 + $0x58] sm:$0xff]
        %v651 = vld [vmem:[%s540 + $0x60] sm:$0xff]
        %v652 = vld [vmem:[%s540 + $0x68] sm:$0xff]
        %v653 = vld [vmem:[%s540 + $0x70] sm:$0xff]
        %v654 = vld [vmem:[%s540 + $0x78] sm:$0xff]
        %v655 = vld [vmem:[%s540 + $0x80] sm:$0xff]
        %v656 = vld [vmem:[%s540 + $0x88] sm:$0xff]
        %v657 = vld [vmem:[%s540 + $0x90] sm:$0xff]
        %v658 = vld [vmem:[%s540 + $0x98] sm:$0xff]
        %v659 = vld [vmem:[%s540 + $0xa0] sm:$0xff]
        %v660 = vld [vmem:[%s540 + $0xa8] sm:$0xff]
        %v661 = vld [vmem:[%s540 + $0xb0] sm:$0xff]
        %v662 = vld [vmem:[%s540 + $0xb8] sm:$0xff]
        %v663 = vld [vmem:[%s540 + $0xc0] sm:$0xff]
        %v664 = vld [vmem:[%s540 + $0xc8] sm:$0xff]
        %v665 = vld [vmem:[%s540 + $0xd0] sm:$0xff]
        %v666 = vld [vmem:[%s540 + $0xd8] sm:$0xff]
        %v667 = vld [vmem:[%s540 + $0xe0] sm:$0xff]
        %v668 = vld [vmem:[%s540 + $0xe8] sm:$0xff]
        %v669 = vld [vmem:[%s540 + $0xf0] sm:$0xff]
        %v670 = vld [vmem:[%s540 + $0xf8] sm:$0xff]
        %v671 = vpack.c.bf16 %v643, %v639
        %v672 = vpack.c.bf16 %v644, %v640
        %v673 = vpack.c.bf16 %v645, %v641
        %v674 = vpack.c.bf16 %v646, %v642
        %v675 = vpack.c.bf16 %v651, %v647
        %v676 = vpack.c.bf16 %v652, %v648
        %v677 = vpack.c.bf16 %v653, %v649
        %v678 = vpack.c.bf16 %v654, %v650
        %v679 = vpack.c.bf16 %v659, %v655
        %v680 = vpack.c.bf16 %v660, %v656
        %v681 = vpack.c.bf16 %v661, %v657
        %v682 = vpack.c.bf16 %v662, %v658
        %v683 = vpack.c.bf16 %v667, %v663
        %v684 = vpack.c.bf16 %v668, %v664
        %v685 = vpack.c.bf16 %v669, %v665
        %v686 = vpack.c.bf16 %v670, %v666
        %v687 = vld [vmem:[#allocation5] sm:$0xff]
        %v688 = vld [vmem:[#allocation5 + $0x8] sm:$0xff]
        %v689 = vld [vmem:[#allocation5 + $0x10] sm:$0xff]
        %v690 = vld [vmem:[#allocation5 + $0x18] sm:$0xff]
        %v691 = vld [vmem:[#allocation5 + $0x20] sm:$0xff]
        %v692 = vld [vmem:[#allocation5 + $0x28] sm:$0xff]
        %v693 = vld [vmem:[#allocation5 + $0x30] sm:$0xff]
        %v694 = vld [vmem:[#allocation5 + $0x38] sm:$0xff]
        %v695 = vld [vmem:[#allocation5 + $0x40] sm:$0xff]
        %v696 = vld [vmem:[#allocation5 + $0x48] sm:$0xff]
        %v697 = vld [vmem:[#allocation5 + $0x50] sm:$0xff]
        %v698 = vld [vmem:[#allocation5 + $0x58] sm:$0xff]
        %v699 = vld [vmem:[#allocation5 + $0x60] sm:$0xff]
        %v700 = vld [vmem:[#allocation5 + $0x68] sm:$0xff]
        %v701 = vld [vmem:[#allocation5 + $0x70] sm:$0xff]
        %v702 = vld [vmem:[#allocation5 + $0x78] sm:$0xff]
        %v703 = vld [vmem:[#allocation5 + $0x80] sm:$0xff]
        %v704 = vld [vmem:[#allocation5 + $0x88] sm:$0xff]
        %v705 = vld [vmem:[#allocation5 + $0x90] sm:$0xff]
        %v706 = vld [vmem:[#allocation5 + $0x98] sm:$0xff]
        %v707 = vld [vmem:[#allocation5 + $0xa0] sm:$0xff]
        %v708 = vld [vmem:[#allocation5 + $0xa8] sm:$0xff]
        %v709 = vld [vmem:[#allocation5 + $0xb0] sm:$0xff]
        %v710 = vld [vmem:[#allocation5 + $0xb8] sm:$0xff]
        %v711 = vld [vmem:[#allocation5 + $0xc0] sm:$0xff]
        %v712 = vld [vmem:[#allocation5 + $0xc8] sm:$0xff]
        %v713 = vld [vmem:[#allocation5 + $0xd0] sm:$0xff]
        %v714 = vld [vmem:[#allocation5 + $0xd8] sm:$0xff]
        %v715 = vld [vmem:[#allocation5 + $0xe0] sm:$0xff]
        %v716 = vld [vmem:[#allocation5 + $0xe8] sm:$0xff]
        %v717 = vld [vmem:[#allocation5 + $0xf0] sm:$0xff]
        %v718 = vld [vmem:[#allocation5 + $0xf8] sm:$0xff]
        %v719 = vld [vmem:[#allocation5 + $0x100] sm:$0xff]
        %v720 = vld [vmem:[#allocation5 + $0x108] sm:$0xff]
        %v721 = vld [vmem:[#allocation5 + $0x110] sm:$0xff]
        %v722 = vld [vmem:[#allocation5 + $0x118] sm:$0xff]
        %v723 = vld [vmem:[#allocation5 + $0x120] sm:$0xff]
        %v724 = vld [vmem:[#allocation5 + $0x128] sm:$0xff]
        %v725 = vld [vmem:[#allocation5 + $0x130] sm:$0xff]
        %v726 = vld [vmem:[#allocation5 + $0x138] sm:$0xff]
        %v727 = vld [vmem:[#allocation5 + $0x140] sm:$0xff]
        %v728 = vld [vmem:[#allocation5 + $0x148] sm:$0xff]
        %v729 = vld [vmem:[#allocation5 + $0x150] sm:$0xff]
        %v730 = vld [vmem:[#allocation5 + $0x158] sm:$0xff]
        %v731 = vld [vmem:[#allocation5 + $0x160] sm:$0xff]
        %v732 = vld [vmem:[#allocation5 + $0x168] sm:$0xff]
        %v733 = vld [vmem:[#allocation5 + $0x170] sm:$0xff]
        %v734 = vld [vmem:[#allocation5 + $0x178] sm:$0xff]
        %v735 = vld [vmem:[#allocation5 + $0x180] sm:$0xff]
        %v736 = vld [vmem:[#allocation5 + $0x188] sm:$0xff]
        %v737 = vld [vmem:[#allocation5 + $0x190] sm:$0xff]
        %v738 = vld [vmem:[#allocation5 + $0x198] sm:$0xff]
        %v739 = vld [vmem:[#allocation5 + $0x1a0] sm:$0xff]
        %v740 = vld [vmem:[#allocation5 + $0x1a8] sm:$0xff]
        %v741 = vld [vmem:[#allocation5 + $0x1b0] sm:$0xff]
        %v742 = vld [vmem:[#allocation5 + $0x1b8] sm:$0xff]
        %v743 = vld [vmem:[#allocation5 + $0x1c0] sm:$0xff]
        %v744 = vld [vmem:[#allocation5 + $0x1c8] sm:$0xff]
        %v745 = vld [vmem:[#allocation5 + $0x1d0] sm:$0xff]
        %v746 = vld [vmem:[#allocation5 + $0x1d8] sm:$0xff]
        %v747 = vld [vmem:[#allocation5 + $0x1e0] sm:$0xff]
        %v748 = vld [vmem:[#allocation5 + $0x1e8] sm:$0xff]
        %v749 = vld [vmem:[#allocation5 + $0x1f0] sm:$0xff]
        %v750 = vld [vmem:[#allocation5 + $0x1f8] sm:$0xff]
        %v751 = vld [vmem:[#allocation5 + $0x200] sm:$0xff]
        %v752 = vld [vmem:[#allocation5 + $0x208] sm:$0xff]
        %v753 = vld [vmem:[#allocation5 + $0x210] sm:$0xff]
        %v754 = vld [vmem:[#allocation5 + $0x218] sm:$0xff]
        %v755 = vld [vmem:[#allocation5 + $0x220] sm:$0xff]
        %v756 = vld [vmem:[#allocation5 + $0x228] sm:$0xff]
        %v757 = vld [vmem:[#allocation5 + $0x230] sm:$0xff]
        %v758 = vld [vmem:[#allocation5 + $0x238] sm:$0xff]
        %v759 = vld [vmem:[#allocation5 + $0x240] sm:$0xff]
        %v760 = vld [vmem:[#allocation5 + $0x248] sm:$0xff]
        %v761 = vld [vmem:[#allocation5 + $0x250] sm:$0xff]
        %v762 = vld [vmem:[#allocation5 + $0x258] sm:$0xff]
        %v763 = vld [vmem:[#allocation5 + $0x260] sm:$0xff]
        %v764 = vld [vmem:[#allocation5 + $0x268] sm:$0xff]
        %v765 = vld [vmem:[#allocation5 + $0x270] sm:$0xff]
        %v766 = vld [vmem:[#allocation5 + $0x278] sm:$0xff]
        %v767 = vld [vmem:[#allocation5 + $0x280] sm:$0xff]
        %v768 = vld [vmem:[#allocation5 + $0x288] sm:$0xff]
        %v769 = vld [vmem:[#allocation5 + $0x290] sm:$0xff]
        %v770 = vld [vmem:[#allocation5 + $0x298] sm:$0xff]
        %v771 = vld [vmem:[#allocation5 + $0x2a0] sm:$0xff]
        %v772 = vld [vmem:[#allocation5 + $0x2a8] sm:$0xff]
        %v773 = vld [vmem:[#allocation5 + $0x2b0] sm:$0xff]
        %v774 = vld [vmem:[#allocation5 + $0x2b8] sm:$0xff]
        %v775 = vld [vmem:[#allocation5 + $0x2c0] sm:$0xff]
        %v776 = vld [vmem:[#allocation5 + $0x2c8] sm:$0xff]
        %v777 = vld [vmem:[#allocation5 + $0x2d0] sm:$0xff]
        %v778 = vld [vmem:[#allocation5 + $0x2d8] sm:$0xff]
        %v779 = vld [vmem:[#allocation5 + $0x2e0] sm:$0xff]
        %v780 = vld [vmem:[#allocation5 + $0x2e8] sm:$0xff]
        %v781 = vld [vmem:[#allocation5 + $0x2f0] sm:$0xff]
        %v782 = vld [vmem:[#allocation5 + $0x2f8] sm:$0xff]
        %v783 = vld [vmem:[#allocation5 + $0x300] sm:$0xff]
        %v784 = vld [vmem:[#allocation5 + $0x308] sm:$0xff]
        %v785 = vld [vmem:[#allocation5 + $0x310] sm:$0xff]
        %v786 = vld [vmem:[#allocation5 + $0x318] sm:$0xff]
        %v787 = vld [vmem:[#allocation5 + $0x320] sm:$0xff]
        %v788 = vld [vmem:[#allocation5 + $0x328] sm:$0xff]
        %v789 = vld [vmem:[#allocation5 + $0x330] sm:$0xff]
        %v790 = vld [vmem:[#allocation5 + $0x338] sm:$0xff]
        %v791 = vld [vmem:[#allocation5 + $0x340] sm:$0xff]
        %v792 = vld [vmem:[#allocation5 + $0x348] sm:$0xff]
        %v793 = vld [vmem:[#allocation5 + $0x350] sm:$0xff]
        %v794 = vld [vmem:[#allocation5 + $0x358] sm:$0xff]
        %v795 = vld [vmem:[#allocation5 + $0x360] sm:$0xff]
        %v796 = vld [vmem:[#allocation5 + $0x368] sm:$0xff]
        %v797 = vld [vmem:[#allocation5 + $0x370] sm:$0xff]
        %v798 = vld [vmem:[#allocation5 + $0x378] sm:$0xff]
        %v799 = vld [vmem:[#allocation5 + $0x380] sm:$0xff]
        %v800 = vld [vmem:[#allocation5 + $0x388] sm:$0xff]
        %v801 = vld [vmem:[#allocation5 + $0x390] sm:$0xff]
        %v802 = vld [vmem:[#allocation5 + $0x398] sm:$0xff]
        %v803 = vld [vmem:[#allocation5 + $0x3a0] sm:$0xff]
        %v804 = vld [vmem:[#allocation5 + $0x3a8] sm:$0xff]
        %v805 = vld [vmem:[#allocation5 + $0x3b0] sm:$0xff]
        %v806 = vld [vmem:[#allocation5 + $0x3b8] sm:$0xff]
        %v807 = vld [vmem:[#allocation5 + $0x3c0] sm:$0xff]
        %v808 = vld [vmem:[#allocation5 + $0x3c8] sm:$0xff]
        %v809 = vld [vmem:[#allocation5 + $0x3d0] sm:$0xff]
        %v810 = vld [vmem:[#allocation5 + $0x3d8] sm:$0xff]
        %v811 = vld [vmem:[#allocation5 + $0x3e0] sm:$0xff]
        %v812 = vld [vmem:[#allocation5 + $0x3e8] sm:$0xff]
        %v813 = vld [vmem:[#allocation5 + $0x3f0] sm:$0xff]
        %v814 = vld [vmem:[#allocation5 + $0x3f8] sm:$0xff]
        %v815 = vld [vmem:[#allocation5 + $0x400] sm:$0xff]
        %v816 = vld [vmem:[#allocation5 + $0x408] sm:$0xff]
        %v817 = vld [vmem:[#allocation5 + $0x410] sm:$0xff]
        %v818 = vld [vmem:[#allocation5 + $0x418] sm:$0xff]
        %v819 = vld [vmem:[#allocation5 + $0x420] sm:$0xff]
        %v820 = vld [vmem:[#allocation5 + $0x428] sm:$0xff]
        %v821 = vld [vmem:[#allocation5 + $0x430] sm:$0xff]
        %v822 = vld [vmem:[#allocation5 + $0x438] sm:$0xff]
        %v823 = vld [vmem:[#allocation5 + $0x440] sm:$0xff]
        %v824 = vld [vmem:[#allocation5 + $0x448] sm:$0xff]
        %v825 = vld [vmem:[#allocation5 + $0x450] sm:$0xff]
        %v826 = vld [vmem:[#allocation5 + $0x458] sm:$0xff]
        %v827 = vld [vmem:[#allocation5 + $0x460] sm:$0xff]
        %v828 = vld [vmem:[#allocation5 + $0x468] sm:$0xff]
        %v829 = vld [vmem:[#allocation5 + $0x470] sm:$0xff]
        %v830 = vld [vmem:[#allocation5 + $0x478] sm:$0xff]
        %v831 = vld [vmem:[#allocation5 + $0x480] sm:$0xff]
        %v832 = vld [vmem:[#allocation5 + $0x488] sm:$0xff]
        %v833 = vld [vmem:[#allocation5 + $0x490] sm:$0xff]
        %v834 = vld [vmem:[#allocation5 + $0x498] sm:$0xff]
        %v835 = vld [vmem:[#allocation5 + $0x4a0] sm:$0xff]
        %v836 = vld [vmem:[#allocation5 + $0x4a8] sm:$0xff]
        %v837 = vld [vmem:[#allocation5 + $0x4b0] sm:$0xff]
        %v838 = vld [vmem:[#allocation5 + $0x4b8] sm:$0xff]
        %v839 = vld [vmem:[#allocation5 + $0x4c0] sm:$0xff]
        %v840 = vld [vmem:[#allocation5 + $0x4c8] sm:$0xff]
        %v841 = vld [vmem:[#allocation5 + $0x4d0] sm:$0xff]
        %v842 = vld [vmem:[#allocation5 + $0x4d8] sm:$0xff]
        %v843 = vld [vmem:[#allocation5 + $0x4e0] sm:$0xff]
        %v844 = vld [vmem:[#allocation5 + $0x4e8] sm:$0xff]
        %v845 = vld [vmem:[#allocation5 + $0x4f0] sm:$0xff]
        %v846 = vld [vmem:[#allocation5 + $0x4f8] sm:$0xff]
        %v847 = vld [vmem:[#allocation5 + $0x500] sm:$0xff]
        %v848 = vld [vmem:[#allocation5 + $0x508] sm:$0xff]
        %v849 = vld [vmem:[#allocation5 + $0x510] sm:$0xff]
        %v850 = vld [vmem:[#allocation5 + $0x518] sm:$0xff]
        %v851 = vld [vmem:[#allocation5 + $0x520] sm:$0xff]
        %v852 = vld [vmem:[#allocation5 + $0x528] sm:$0xff]
        %v853 = vld [vmem:[#allocation5 + $0x530] sm:$0xff]
        %v854 = vld [vmem:[#allocation5 + $0x538] sm:$0xff]
        %v855 = vld [vmem:[#allocation5 + $0x540] sm:$0xff]
        %v856 = vld [vmem:[#allocation5 + $0x548] sm:$0xff]
        %v857 = vld [vmem:[#allocation5 + $0x550] sm:$0xff]
        %v858 = vld [vmem:[#allocation5 + $0x558] sm:$0xff]
        %v859 = vld [vmem:[#allocation5 + $0x560] sm:$0xff]
        %v860 = vld [vmem:[#allocation5 + $0x568] sm:$0xff]
        %v861 = vld [vmem:[#allocation5 + $0x570] sm:$0xff]
        %v862 = vld [vmem:[#allocation5 + $0x578] sm:$0xff]
        %v863 = vld [vmem:[#allocation5 + $0x580] sm:$0xff]
        %v864 = vld [vmem:[#allocation5 + $0x588] sm:$0xff]
        %v865 = vld [vmem:[#allocation5 + $0x590] sm:$0xff]
        %v866 = vld [vmem:[#allocation5 + $0x598] sm:$0xff]
        %v867 = vld [vmem:[#allocation5 + $0x5a0] sm:$0xff]
        %v868 = vld [vmem:[#allocation5 + $0x5a8] sm:$0xff]
        %v869 = vld [vmem:[#allocation5 + $0x5b0] sm:$0xff]
        %v870 = vld [vmem:[#allocation5 + $0x5b8] sm:$0xff]
        %v871 = vld [vmem:[#allocation5 + $0x5c0] sm:$0xff]
        %v872 = vld [vmem:[#allocation5 + $0x5c8] sm:$0xff]
        %v873 = vld [vmem:[#allocation5 + $0x5d0] sm:$0xff]
        %v874 = vld [vmem:[#allocation5 + $0x5d8] sm:$0xff]
        %v875 = vld [vmem:[#allocation5 + $0x5e0] sm:$0xff]
        %v876 = vld [vmem:[#allocation5 + $0x5e8] sm:$0xff]
        %v877 = vld [vmem:[#allocation5 + $0x5f0] sm:$0xff]
        %v878 = vld [vmem:[#allocation5 + $0x5f8] sm:$0xff]
        %v1071 = vunpack.c.l.b16 %v687
        %v1072 = vunpack.c.h.b16 %v687
        %v1073 = vunpack.c.l.b16 %v688
        %v1074 = vunpack.c.h.b16 %v688
        %v1075 = vunpack.c.l.b16 %v689
        %v1076 = vunpack.c.h.b16 %v689
        %v1077 = vunpack.c.l.b16 %v690
        %v1078 = vunpack.c.h.b16 %v690
        %v1079 = vunpack.c.l.b16 %v691
        %v1080 = vunpack.c.h.b16 %v691
        %v1081 = vunpack.c.l.b16 %v692
        %v1082 = vunpack.c.h.b16 %v692
        %v1083 = vunpack.c.l.b16 %v693
        %v1084 = vunpack.c.h.b16 %v693
        %v1085 = vunpack.c.l.b16 %v694
        %v1086 = vunpack.c.h.b16 %v694
        %v1087 = vunpack.c.l.b16 %v695
        %v1088 = vunpack.c.h.b16 %v695
        %v1089 = vunpack.c.l.b16 %v696
        %v1090 = vunpack.c.h.b16 %v696
        %v1091 = vunpack.c.l.b16 %v697
        %v1092 = vunpack.c.h.b16 %v697
        %v1093 = vunpack.c.l.b16 %v698
        %v1094 = vunpack.c.h.b16 %v698
        %v1095 = vunpack.c.l.b16 %v699
        %v1096 = vunpack.c.h.b16 %v699
        %v1097 = vunpack.c.l.b16 %v700
        %v1098 = vunpack.c.h.b16 %v700
        %v1099 = vunpack.c.l.b16 %v701
        %v1100 = vunpack.c.h.b16 %v701
        %v1101 = vunpack.c.l.b16 %v702
        %v1102 = vunpack.c.h.b16 %v702
        %v1103 = vunpack.c.l.b16 %v703
        %v1104 = vunpack.c.h.b16 %v703
        %v1105 = vunpack.c.l.b16 %v704
        %v1106 = vunpack.c.h.b16 %v704
        %v1107 = vunpack.c.l.b16 %v705
        %v1108 = vunpack.c.h.b16 %v705
        %v1109 = vunpack.c.l.b16 %v706
        %v1110 = vunpack.c.h.b16 %v706
        %v1111 = vunpack.c.l.b16 %v707
        %v1112 = vunpack.c.h.b16 %v707
        %v1113 = vunpack.c.l.b16 %v708
        %v1114 = vunpack.c.h.b16 %v708
        %v1115 = vunpack.c.l.b16 %v709
        %v1116 = vunpack.c.h.b16 %v709
        %v1117 = vunpack.c.l.b16 %v710
        %v1118 = vunpack.c.h.b16 %v710
        %v1119 = vunpack.c.l.b16 %v711
        %v1120 = vunpack.c.h.b16 %v711
        %v1121 = vunpack.c.l.b16 %v712
        %v1122 = vunpack.c.h.b16 %v712
        %v1123 = vunpack.c.l.b16 %v713
        %v1124 = vunpack.c.h.b16 %v713
        %v1125 = vunpack.c.l.b16 %v714
        %v1126 = vunpack.c.h.b16 %v714
        %v1127 = vunpack.c.l.b16 %v715
        %v1128 = vunpack.c.h.b16 %v715
        %v1129 = vunpack.c.l.b16 %v716
        %v1130 = vunpack.c.h.b16 %v716
        %v1131 = vunpack.c.l.b16 %v717
        %v1132 = vunpack.c.h.b16 %v717
        %v1133 = vunpack.c.l.b16 %v718
        %v1134 = vunpack.c.h.b16 %v718
        %v1135 = vunpack.c.l.b16 %v719
        %v1136 = vunpack.c.h.b16 %v719
        %v1137 = vunpack.c.l.b16 %v720
        %v1138 = vunpack.c.h.b16 %v720
        %v1139 = vunpack.c.l.b16 %v721
        %v1140 = vunpack.c.h.b16 %v721
        %v1141 = vunpack.c.l.b16 %v722
        %v1142 = vunpack.c.h.b16 %v722
        %v1143 = vunpack.c.l.b16 %v723
        %v1144 = vunpack.c.h.b16 %v723
        %v1145 = vunpack.c.l.b16 %v724
        %v1146 = vunpack.c.h.b16 %v724
        %v1147 = vunpack.c.l.b16 %v725
        %v1148 = vunpack.c.h.b16 %v725
        %v1149 = vunpack.c.l.b16 %v726
        %v1150 = vunpack.c.h.b16 %v726
        %v1151 = vunpack.c.l.b16 %v727
        %v1152 = vunpack.c.h.b16 %v727
        %v1153 = vunpack.c.l.b16 %v728
        %v1154 = vunpack.c.h.b16 %v728
        %v1155 = vunpack.c.l.b16 %v729
        %v1156 = vunpack.c.h.b16 %v729
        %v1157 = vunpack.c.l.b16 %v730
        %v1158 = vunpack.c.h.b16 %v730
        %v1159 = vunpack.c.l.b16 %v731
        %v1160 = vunpack.c.h.b16 %v731
        %v1161 = vunpack.c.l.b16 %v732
        %v1162 = vunpack.c.h.b16 %v732
        %v1163 = vunpack.c.l.b16 %v733
        %v1164 = vunpack.c.h.b16 %v733
        %v1165 = vunpack.c.l.b16 %v734
        %v1166 = vunpack.c.h.b16 %v734
        %v1167 = vunpack.c.l.b16 %v735
        %v1168 = vunpack.c.h.b16 %v735
        %v1169 = vunpack.c.l.b16 %v736
        %v1170 = vunpack.c.h.b16 %v736
        %v1171 = vunpack.c.l.b16 %v737
        %v1172 = vunpack.c.h.b16 %v737
        %v1173 = vunpack.c.l.b16 %v738
        %v1174 = vunpack.c.h.b16 %v738
        %v1175 = vunpack.c.l.b16 %v739
        %v1176 = vunpack.c.h.b16 %v739
        %v1177 = vunpack.c.l.b16 %v740
        %v1178 = vunpack.c.h.b16 %v740
        %v1179 = vunpack.c.l.b16 %v741
        %v1180 = vunpack.c.h.b16 %v741
        %v1181 = vunpack.c.l.b16 %v742
        %v1182 = vunpack.c.h.b16 %v742
        %v1183 = vunpack.c.l.b16 %v743
        %v1184 = vunpack.c.h.b16 %v743
        %v1185 = vunpack.c.l.b16 %v744
        %v1186 = vunpack.c.h.b16 %v744
        %v1187 = vunpack.c.l.b16 %v745
        %v1188 = vunpack.c.h.b16 %v745
        %v1189 = vunpack.c.l.b16 %v746
        %v1190 = vunpack.c.h.b16 %v746
        %v1191 = vunpack.c.l.b16 %v747
        %v1192 = vunpack.c.h.b16 %v747
        %v1193 = vunpack.c.l.b16 %v748
        %v1194 = vunpack.c.h.b16 %v748
        %v1195 = vunpack.c.l.b16 %v749
        %v1196 = vunpack.c.h.b16 %v749
        %v1197 = vunpack.c.l.b16 %v750
        %v1198 = vunpack.c.h.b16 %v750
        %v1199 = vunpack.c.l.b16 %v751
        %v1200 = vunpack.c.h.b16 %v751
        %v1201 = vunpack.c.l.b16 %v752
        %v1202 = vunpack.c.h.b16 %v752
        %v1203 = vunpack.c.l.b16 %v753
        %v1204 = vunpack.c.h.b16 %v753
        %v1205 = vunpack.c.l.b16 %v754
        %v1206 = vunpack.c.h.b16 %v754
        %v1207 = vunpack.c.l.b16 %v755
        %v1208 = vunpack.c.h.b16 %v755
        %v1209 = vunpack.c.l.b16 %v756
        %v1210 = vunpack.c.h.b16 %v756
        %v1211 = vunpack.c.l.b16 %v757
        %v1212 = vunpack.c.h.b16 %v757
        %v1213 = vunpack.c.l.b16 %v758
        %v1214 = vunpack.c.h.b16 %v758
        %v1215 = vunpack.c.l.b16 %v759
        %v1216 = vunpack.c.h.b16 %v759
        %v1217 = vunpack.c.l.b16 %v760
        %v1218 = vunpack.c.h.b16 %v760
        %v1219 = vunpack.c.l.b16 %v761
        %v1220 = vunpack.c.h.b16 %v761
        %v1221 = vunpack.c.l.b16 %v762
        %v1222 = vunpack.c.h.b16 %v762
        %v1223 = vunpack.c.l.b16 %v763
        %v1224 = vunpack.c.h.b16 %v763
        %v1225 = vunpack.c.l.b16 %v764
        %v1226 = vunpack.c.h.b16 %v764
        %v1227 = vunpack.c.l.b16 %v765
        %v1228 = vunpack.c.h.b16 %v765
        %v1229 = vunpack.c.l.b16 %v766
        %v1230 = vunpack.c.h.b16 %v766
        %v1231 = vunpack.c.l.b16 %v767
        %v1232 = vunpack.c.h.b16 %v767
        %v1233 = vunpack.c.l.b16 %v768
        %v1234 = vunpack.c.h.b16 %v768
        %v1235 = vunpack.c.l.b16 %v769
        %v1236 = vunpack.c.h.b16 %v769
        %v1237 = vunpack.c.l.b16 %v770
        %v1238 = vunpack.c.h.b16 %v770
        %v1239 = vunpack.c.l.b16 %v771
        %v1240 = vunpack.c.h.b16 %v771
        %v1241 = vunpack.c.l.b16 %v772
        %v1242 = vunpack.c.h.b16 %v772
        %v1243 = vunpack.c.l.b16 %v773
        %v1244 = vunpack.c.h.b16 %v773
        %v1245 = vunpack.c.l.b16 %v774
        %v1246 = vunpack.c.h.b16 %v774
        %v1247 = vunpack.c.l.b16 %v775
        %v1248 = vunpack.c.h.b16 %v775
        %v1249 = vunpack.c.l.b16 %v776
        %v1250 = vunpack.c.h.b16 %v776
        %v1251 = vunpack.c.l.b16 %v777
        %v1252 = vunpack.c.h.b16 %v777
        %v1253 = vunpack.c.l.b16 %v778
        %v1254 = vunpack.c.h.b16 %v778
        %v1255 = vunpack.c.l.b16 %v779
        %v1256 = vunpack.c.h.b16 %v779
        %v1257 = vunpack.c.l.b16 %v780
        %v1258 = vunpack.c.h.b16 %v780
        %v1259 = vunpack.c.l.b16 %v781
        %v1260 = vunpack.c.h.b16 %v781
        %v1261 = vunpack.c.l.b16 %v782
        %v1262 = vunpack.c.h.b16 %v782
        %v1263 = vunpack.c.l.b16 %v783
        %v1264 = vunpack.c.h.b16 %v783
        %v1265 = vunpack.c.l.b16 %v784
        %v1266 = vunpack.c.h.b16 %v784
        %v1267 = vunpack.c.l.b16 %v785
        %v1268 = vunpack.c.h.b16 %v785
        %v1269 = vunpack.c.l.b16 %v786
        %v1270 = vunpack.c.h.b16 %v786
        %v1271 = vunpack.c.l.b16 %v787
        %v1272 = vunpack.c.h.b16 %v787
        %v1273 = vunpack.c.l.b16 %v788
        %v1274 = vunpack.c.h.b16 %v788
        %v1275 = vunpack.c.l.b16 %v789
        %v1276 = vunpack.c.h.b16 %v789
        %v1277 = vunpack.c.l.b16 %v790
        %v1278 = vunpack.c.h.b16 %v790
        %v1279 = vunpack.c.l.b16 %v791
        %v1280 = vunpack.c.h.b16 %v791
        %v1281 = vunpack.c.l.b16 %v792
        %v1282 = vunpack.c.h.b16 %v792
        %v1283 = vunpack.c.l.b16 %v793
        %v1284 = vunpack.c.h.b16 %v793
        %v1285 = vunpack.c.l.b16 %v794
        %v1286 = vunpack.c.h.b16 %v794
        %v1287 = vunpack.c.l.b16 %v795
        %v1288 = vunpack.c.h.b16 %v795
        %v1289 = vunpack.c.l.b16 %v796
        %v1290 = vunpack.c.h.b16 %v796
        %v1291 = vunpack.c.l.b16 %v797
        %v1292 = vunpack.c.h.b16 %v797
        %v1293 = vunpack.c.l.b16 %v798
        %v1294 = vunpack.c.h.b16 %v798
        %v1295 = vunpack.c.l.b16 %v799
        %v1296 = vunpack.c.h.b16 %v799
        %v1297 = vunpack.c.l.b16 %v800
        %v1298 = vunpack.c.h.b16 %v800
        %v1299 = vunpack.c.l.b16 %v801
        %v1300 = vunpack.c.h.b16 %v801
        %v1301 = vunpack.c.l.b16 %v802
        %v1302 = vunpack.c.h.b16 %v802
        %v1303 = vunpack.c.l.b16 %v803
        %v1304 = vunpack.c.h.b16 %v803
        %v1305 = vunpack.c.l.b16 %v804
        %v1306 = vunpack.c.h.b16 %v804
        %v1307 = vunpack.c.l.b16 %v805
        %v1308 = vunpack.c.h.b16 %v805
        %v1309 = vunpack.c.l.b16 %v806
        %v1310 = vunpack.c.h.b16 %v806
        %v1311 = vunpack.c.l.b16 %v807
        %v1312 = vunpack.c.h.b16 %v807
        %v1313 = vunpack.c.l.b16 %v808
        %v1314 = vunpack.c.h.b16 %v808
        %v1315 = vunpack.c.l.b16 %v809
        %v1316 = vunpack.c.h.b16 %v809
        %v1317 = vunpack.c.l.b16 %v810
        %v1318 = vunpack.c.h.b16 %v810
        %v1319 = vunpack.c.l.b16 %v811
        %v1320 = vunpack.c.h.b16 %v811
        %v1321 = vunpack.c.l.b16 %v812
        %v1322 = vunpack.c.h.b16 %v812
        %v1323 = vunpack.c.l.b16 %v813
        %v1324 = vunpack.c.h.b16 %v813
        %v1325 = vunpack.c.l.b16 %v814
        %v1326 = vunpack.c.h.b16 %v814
        %v1327 = vunpack.c.l.b16 %v815
        %v1328 = vunpack.c.h.b16 %v815
        %v1329 = vunpack.c.l.b16 %v816
        %v1330 = vunpack.c.h.b16 %v816
        %v1331 = vunpack.c.l.b16 %v817
        %v1332 = vunpack.c.h.b16 %v817
        %v1333 = vunpack.c.l.b16 %v818
        %v1334 = vunpack.c.h.b16 %v818
        %v1335 = vunpack.c.l.b16 %v819
        %v1336 = vunpack.c.h.b16 %v819
        %v1337 = vunpack.c.l.b16 %v820
        %v1338 = vunpack.c.h.b16 %v820
        %v1339 = vunpack.c.l.b16 %v821
        %v1340 = vunpack.c.h.b16 %v821
        %v1341 = vunpack.c.l.b16 %v822
        %v1342 = vunpack.c.h.b16 %v822
        %v1343 = vunpack.c.l.b16 %v823
        %v1344 = vunpack.c.h.b16 %v823
        %v1345 = vunpack.c.l.b16 %v824
        %v1346 = vunpack.c.h.b16 %v824
        %v1347 = vunpack.c.l.b16 %v825
        %v1348 = vunpack.c.h.b16 %v825
        %v1349 = vunpack.c.l.b16 %v826
        %v1350 = vunpack.c.h.b16 %v826
        %v1351 = vunpack.c.l.b16 %v827
        %v1352 = vunpack.c.h.b16 %v827
        %v1353 = vunpack.c.l.b16 %v828
        %v1354 = vunpack.c.h.b16 %v828
        %v1355 = vunpack.c.l.b16 %v829
        %v1356 = vunpack.c.h.b16 %v829
        %v1357 = vunpack.c.l.b16 %v830
        %v1358 = vunpack.c.h.b16 %v830
        %v1359 = vunpack.c.l.b16 %v831
        %v1360 = vunpack.c.h.b16 %v831
        %v1361 = vunpack.c.l.b16 %v832
        %v1362 = vunpack.c.h.b16 %v832
        %v1363 = vunpack.c.l.b16 %v833
        %v1364 = vunpack.c.h.b16 %v833
        %v1365 = vunpack.c.l.b16 %v834
        %v1366 = vunpack.c.h.b16 %v834
        %v1367 = vunpack.c.l.b16 %v835
        %v1368 = vunpack.c.h.b16 %v835
        %v1369 = vunpack.c.l.b16 %v836
        %v1370 = vunpack.c.h.b16 %v836
        %v1371 = vunpack.c.l.b16 %v837
        %v1372 = vunpack.c.h.b16 %v837
        %v1373 = vunpack.c.l.b16 %v838
        %v1374 = vunpack.c.h.b16 %v838
        %v1375 = vunpack.c.l.b16 %v839
        %v1376 = vunpack.c.h.b16 %v839
        %v1377 = vunpack.c.l.b16 %v840
        %v1378 = vunpack.c.h.b16 %v840
        %v1379 = vunpack.c.l.b16 %v841
        %v1380 = vunpack.c.h.b16 %v841
        %v1381 = vunpack.c.l.b16 %v842
        %v1382 = vunpack.c.h.b16 %v842
        %v1383 = vunpack.c.l.b16 %v843
        %v1384 = vunpack.c.h.b16 %v843
        %v1385 = vunpack.c.l.b16 %v844
        %v1386 = vunpack.c.h.b16 %v844
        %v1387 = vunpack.c.l.b16 %v845
        %v1388 = vunpack.c.h.b16 %v845
        %v1389 = vunpack.c.l.b16 %v846
        %v1390 = vunpack.c.h.b16 %v846
        %v1391 = vunpack.c.l.b16 %v847
        %v1392 = vunpack.c.h.b16 %v847
        %v1393 = vunpack.c.l.b16 %v848
        %v1394 = vunpack.c.h.b16 %v848
        %v1395 = vunpack.c.l.b16 %v849
        %v1396 = vunpack.c.h.b16 %v849
        %v1397 = vunpack.c.l.b16 %v850
        %v1398 = vunpack.c.h.b16 %v850
        %v1399 = vunpack.c.l.b16 %v851
        %v1400 = vunpack.c.h.b16 %v851
        %v1401 = vunpack.c.l.b16 %v852
        %v1402 = vunpack.c.h.b16 %v852
        %v1403 = vunpack.c.l.b16 %v853
        %v1404 = vunpack.c.h.b16 %v853
        %v1405 = vunpack.c.l.b16 %v854
        %v1406 = vunpack.c.h.b16 %v854
        %v1407 = vunpack.c.l.b16 %v855
        %v1408 = vunpack.c.h.b16 %v855
        %v1409 = vunpack.c.l.b16 %v856
        %v1410 = vunpack.c.h.b16 %v856
        %v1411 = vunpack.c.l.b16 %v857
        %v1412 = vunpack.c.h.b16 %v857
        %v1413 = vunpack.c.l.b16 %v858
        %v1414 = vunpack.c.h.b16 %v858
        %v1415 = vunpack.c.l.b16 %v859
        %v1416 = vunpack.c.h.b16 %v859
        %v1417 = vunpack.c.l.b16 %v860
        %v1418 = vunpack.c.h.b16 %v860
        %v1419 = vunpack.c.l.b16 %v861
        %v1420 = vunpack.c.h.b16 %v861
        %v1421 = vunpack.c.l.b16 %v862
        %v1422 = vunpack.c.h.b16 %v862
        %v1423 = vunpack.c.l.b16 %v863
        %v1424 = vunpack.c.h.b16 %v863
        %v1425 = vunpack.c.l.b16 %v864
        %v1426 = vunpack.c.h.b16 %v864
        %v1427 = vunpack.c.l.b16 %v865
        %v1428 = vunpack.c.h.b16 %v865
        %v1429 = vunpack.c.l.b16 %v866
        %v1430 = vunpack.c.h.b16 %v866
        %v1431 = vunpack.c.l.b16 %v867
        %v1432 = vunpack.c.h.b16 %v867
        %v1433 = vunpack.c.l.b16 %v868
        %v1434 = vunpack.c.h.b16 %v868
        %v1435 = vunpack.c.l.b16 %v869
        %v1436 = vunpack.c.h.b16 %v869
        %v1437 = vunpack.c.l.b16 %v870
        %v1438 = vunpack.c.h.b16 %v870
        %v1439 = vunpack.c.l.b16 %v871
        %v1440 = vunpack.c.h.b16 %v871
        %v1441 = vunpack.c.l.b16 %v872
        %v1442 = vunpack.c.h.b16 %v872
        %v1443 = vunpack.c.l.b16 %v873
        %v1444 = vunpack.c.h.b16 %v873
        %v1445 = vunpack.c.l.b16 %v874
        %v1446 = vunpack.c.h.b16 %v874
        %v1447 = vunpack.c.l.b16 %v875
        %v1448 = vunpack.c.h.b16 %v875
        %v1449 = vunpack.c.l.b16 %v876
        %v1450 = vunpack.c.h.b16 %v876
        %v1451 = vunpack.c.l.b16 %v877
        %v1452 = vunpack.c.h.b16 %v877
        %v1453 = vunpack.c.l.b16 %v878
        %v1454 = vunpack.c.h.b16 %v878
        %v1455 = vpack.c.b16 %v1077, %v1071
        %v1456 = vpack.c.b16 %v1078, %v1072
        %v1457 = vpack.c.b16 %v1079, %v1073
        %v1458 = vpack.c.b16 %v1080, %v1074
        %v1459 = vpack.c.b16 %v1081, %v1075
        %v1460 = vpack.c.b16 %v1082, %v1076
        %v1461 = vpack.c.b16 %v1089, %v1083
        %v1462 = vpack.c.b16 %v1090, %v1084
        %v1463 = vpack.c.b16 %v1091, %v1085
        %v1464 = vpack.c.b16 %v1092, %v1086
        %v1465 = vpack.c.b16 %v1093, %v1087
        %v1466 = vpack.c.b16 %v1094, %v1088
        %v1467 = vpack.c.b16 %v1101, %v1095
        %v1468 = vpack.c.b16 %v1102, %v1096
        %v1469 = vpack.c.b16 %v1103, %v1097
        %v1470 = vpack.c.b16 %v1104, %v1098
        %v1471 = vpack.c.b16 %v1105, %v1099
        %v1472 = vpack.c.b16 %v1106, %v1100
        %v1473 = vpack.c.b16 %v1113, %v1107
        %v1474 = vpack.c.b16 %v1114, %v1108
        %v1475 = vpack.c.b16 %v1115, %v1109
        %v1476 = vpack.c.b16 %v1116, %v1110
        %v1477 = vpack.c.b16 %v1117, %v1111
        %v1478 = vpack.c.b16 %v1118, %v1112
        %v1479 = vpack.c.b16 %v1125, %v1119
        %v1480 = vpack.c.b16 %v1126, %v1120
        %v1481 = vpack.c.b16 %v1127, %v1121
        %v1482 = vpack.c.b16 %v1128, %v1122
        %v1483 = vpack.c.b16 %v1129, %v1123
        %v1484 = vpack.c.b16 %v1130, %v1124
        %v1485 = vpack.c.b16 %v1137, %v1131
        %v1486 = vpack.c.b16 %v1138, %v1132
        %v1487 = vpack.c.b16 %v1139, %v1133
        %v1488 = vpack.c.b16 %v1140, %v1134
        %v1489 = vpack.c.b16 %v1141, %v1135
        %v1490 = vpack.c.b16 %v1142, %v1136
        %v1491 = vpack.c.b16 %v1149, %v1143
        %v1492 = vpack.c.b16 %v1150, %v1144
        %v1493 = vpack.c.b16 %v1151, %v1145
        %v1494 = vpack.c.b16 %v1152, %v1146
        %v1495 = vpack.c.b16 %v1153, %v1147
        %v1496 = vpack.c.b16 %v1154, %v1148
        %v1497 = vpack.c.b16 %v1161, %v1155
        %v1498 = vpack.c.b16 %v1162, %v1156
        %v1499 = vpack.c.b16 %v1163, %v1157
        %v1500 = vpack.c.b16 %v1164, %v1158
        %v1501 = vpack.c.b16 %v1165, %v1159
        %v1502 = vpack.c.b16 %v1166, %v1160
        %v1503 = vpack.c.b16 %v1173, %v1167
        %v1504 = vpack.c.b16 %v1174, %v1168
        %v1505 = vpack.c.b16 %v1175, %v1169
        %v1506 = vpack.c.b16 %v1176, %v1170
        %v1507 = vpack.c.b16 %v1177, %v1171
        %v1508 = vpack.c.b16 %v1178, %v1172
        %v1509 = vpack.c.b16 %v1185, %v1179
        %v1510 = vpack.c.b16 %v1186, %v1180
        %v1511 = vpack.c.b16 %v1187, %v1181
        %v1512 = vpack.c.b16 %v1188, %v1182
        %v1513 = vpack.c.b16 %v1189, %v1183
        %v1514 = vpack.c.b16 %v1190, %v1184
        %v1515 = vpack.c.b16 %v1197, %v1191
        %v1516 = vpack.c.b16 %v1198, %v1192
        %v1517 = vpack.c.b16 %v1199, %v1193
        %v1518 = vpack.c.b16 %v1200, %v1194
        %v1519 = vpack.c.b16 %v1201, %v1195
        %v1520 = vpack.c.b16 %v1202, %v1196
        %v1521 = vpack.c.b16 %v1209, %v1203
        %v1522 = vpack.c.b16 %v1210, %v1204
        %v1523 = vpack.c.b16 %v1211, %v1205
        %v1524 = vpack.c.b16 %v1212, %v1206
        %v1525 = vpack.c.b16 %v1213, %v1207
        %v1526 = vpack.c.b16 %v1214, %v1208
        %v1527 = vpack.c.b16 %v1221, %v1215
        %v1528 = vpack.c.b16 %v1222, %v1216
        %v1529 = vpack.c.b16 %v1223, %v1217
        %v1530 = vpack.c.b16 %v1224, %v1218
        %v1531 = vpack.c.b16 %v1225, %v1219
        %v1532 = vpack.c.b16 %v1226, %v1220
        %v1533 = vpack.c.b16 %v1233, %v1227
        %v1534 = vpack.c.b16 %v1234, %v1228
        %v1535 = vpack.c.b16 %v1235, %v1229
        %v1536 = vpack.c.b16 %v1236, %v1230
        %v1537 = vpack.c.b16 %v1237, %v1231
        %v1538 = vpack.c.b16 %v1238, %v1232
        %v1539 = vpack.c.b16 %v1245, %v1239
        %v1540 = vpack.c.b16 %v1246, %v1240
        %v1541 = vpack.c.b16 %v1247, %v1241
        %v1542 = vpack.c.b16 %v1248, %v1242
        %v1543 = vpack.c.b16 %v1249, %v1243
        %v1544 = vpack.c.b16 %v1250, %v1244
        %v1545 = vpack.c.b16 %v1257, %v1251
        %v1546 = vpack.c.b16 %v1258, %v1252
        %v1547 = vpack.c.b16 %v1259, %v1253
        %v1548 = vpack.c.b16 %v1260, %v1254
        %v1549 = vpack.c.b16 %v1261, %v1255
        %v1550 = vpack.c.b16 %v1262, %v1256
        %v1551 = vpack.c.b16 %v1269, %v1263
        %v1552 = vpack.c.b16 %v1270, %v1264
        %v1553 = vpack.c.b16 %v1271, %v1265
        %v1554 = vpack.c.b16 %v1272, %v1266
        %v1555 = vpack.c.b16 %v1273, %v1267
        %v1556 = vpack.c.b16 %v1274, %v1268
        %v1557 = vpack.c.b16 %v1281, %v1275
        %v1558 = vpack.c.b16 %v1282, %v1276
        %v1559 = vpack.c.b16 %v1283, %v1277
        %v1560 = vpack.c.b16 %v1284, %v1278
        %v1561 = vpack.c.b16 %v1285, %v1279
        %v1562 = vpack.c.b16 %v1286, %v1280
        %v1563 = vpack.c.b16 %v1293, %v1287
        %v1564 = vpack.c.b16 %v1294, %v1288
        %v1565 = vpack.c.b16 %v1295, %v1289
        %v1566 = vpack.c.b16 %v1296, %v1290
        %v1567 = vpack.c.b16 %v1297, %v1291
        %v1568 = vpack.c.b16 %v1298, %v1292
        %v1569 = vpack.c.b16 %v1305, %v1299
        %v1570 = vpack.c.b16 %v1306, %v1300
        %v1571 = vpack.c.b16 %v1307, %v1301
        %v1572 = vpack.c.b16 %v1308, %v1302
        %v1573 = vpack.c.b16 %v1309, %v1303
        %v1574 = vpack.c.b16 %v1310, %v1304
        %v1575 = vpack.c.b16 %v1317, %v1311
        %v1576 = vpack.c.b16 %v1318, %v1312
        %v1577 = vpack.c.b16 %v1319, %v1313
        %v1578 = vpack.c.b16 %v1320, %v1314
        %v1579 = vpack.c.b16 %v1321, %v1315
        %v1580 = vpack.c.b16 %v1322, %v1316
        %v1581 = vpack.c.b16 %v1329, %v1323
        %v1582 = vpack.c.b16 %v1330, %v1324
        %v1583 = vpack.c.b16 %v1331, %v1325
        %v1584 = vpack.c.b16 %v1332, %v1326
        %v1585 = vpack.c.b16 %v1333, %v1327
        %v1586 = vpack.c.b16 %v1334, %v1328
        %v1587 = vpack.c.b16 %v1341, %v1335
        %v1588 = vpack.c.b16 %v1342, %v1336
        %v1589 = vpack.c.b16 %v1343, %v1337
        %v1590 = vpack.c.b16 %v1344, %v1338
        %v1591 = vpack.c.b16 %v1345, %v1339
        %v1592 = vpack.c.b16 %v1346, %v1340
        %v1593 = vpack.c.b16 %v1353, %v1347
        %v1594 = vpack.c.b16 %v1354, %v1348
        %v1595 = vpack.c.b16 %v1355, %v1349
        %v1596 = vpack.c.b16 %v1356, %v1350
        %v1597 = vpack.c.b16 %v1357, %v1351
        %v1598 = vpack.c.b16 %v1358, %v1352
        %v1599 = vpack.c.b16 %v1365, %v1359
        %v1600 = vpack.c.b16 %v1366, %v1360
        %v1601 = vpack.c.b16 %v1367, %v1361
        %v1602 = vpack.c.b16 %v1368, %v1362
        %v1603 = vpack.c.b16 %v1369, %v1363
        %v1604 = vpack.c.b16 %v1370, %v1364
        %v1605 = vpack.c.b16 %v1377, %v1371
        %v1606 = vpack.c.b16 %v1378, %v1372
        %v1607 = vpack.c.b16 %v1379, %v1373
        %v1608 = vpack.c.b16 %v1380, %v1374
        %v1609 = vpack.c.b16 %v1381, %v1375
        %v1610 = vpack.c.b16 %v1382, %v1376
        %v1611 = vpack.c.b16 %v1389, %v1383
        %v1612 = vpack.c.b16 %v1390, %v1384
        %v1613 = vpack.c.b16 %v1391, %v1385
        %v1614 = vpack.c.b16 %v1392, %v1386
        %v1615 = vpack.c.b16 %v1393, %v1387
        %v1616 = vpack.c.b16 %v1394, %v1388
        %v1617 = vpack.c.b16 %v1401, %v1395
        %v1618 = vpack.c.b16 %v1402, %v1396
        %v1619 = vpack.c.b16 %v1403, %v1397
        %v1620 = vpack.c.b16 %v1404, %v1398
        %v1621 = vpack.c.b16 %v1405, %v1399
        %v1622 = vpack.c.b16 %v1406, %v1400
        %v1623 = vpack.c.b16 %v1413, %v1407
        %v1624 = vpack.c.b16 %v1414, %v1408
        %v1625 = vpack.c.b16 %v1415, %v1409
        %v1626 = vpack.c.b16 %v1416, %v1410
        %v1627 = vpack.c.b16 %v1417, %v1411
        %v1628 = vpack.c.b16 %v1418, %v1412
        %v1629 = vpack.c.b16 %v1425, %v1419
        %v1630 = vpack.c.b16 %v1426, %v1420
        %v1631 = vpack.c.b16 %v1427, %v1421
        %v1632 = vpack.c.b16 %v1428, %v1422
        %v1633 = vpack.c.b16 %v1429, %v1423
        %v1634 = vpack.c.b16 %v1430, %v1424
        %v1635 = vpack.c.b16 %v1437, %v1431
        %v1636 = vpack.c.b16 %v1438, %v1432
        %v1637 = vpack.c.b16 %v1439, %v1433
        %v1638 = vpack.c.b16 %v1440, %v1434
        %v1639 = vpack.c.b16 %v1441, %v1435
        %v1640 = vpack.c.b16 %v1442, %v1436
        %v1641 = vpack.c.b16 %v1449, %v1443
        %v1642 = vpack.c.b16 %v1450, %v1444
        %v1643 = vpack.c.b16 %v1451, %v1445
        %v1644 = vpack.c.b16 %v1452, %v1446
        %v1645 = vpack.c.b16 %v1453, %v1447
        %v1646 = vpack.c.b16 %v1454, %v1448
        %1839 = vmatprep.subr.bf16.mxu0 %v1498
        %1840 = vmatpush1.bf16.msra.mxu0 %v1497
        %1841 = vmatprep.subr.bf16.mxu0 %v1492
        %1842 = vmatpush1.bf16.msra.mxu0 %v1491
        %1843 = vmatprep.subr.bf16.mxu0 %v1486
        %1844 = vmatpush1.bf16.msra.mxu0 %v1485
        %1845 = vmatprep.subr.bf16.mxu0 %v1480
        %1846 = vmatpush1.bf16.msra.mxu0 %v1479
        %1847 = vmatprep.subr.bf16.mxu0 %v1474
        %1848 = vmatpush1.bf16.msra.mxu0 %v1473
        %1849 = vmatprep.subr.bf16.mxu0 %v1468
        %1850 = vmatpush1.bf16.msra.mxu0 %v1467
        %1851 = vmatprep.subr.bf16.mxu0 %v1462
        %1852 = vmatpush1.bf16.msra.mxu0 %v1461
        %1853 = vmatprep.subr.bf16.mxu0 %v1456
        %1854 = vmatpush1.bf16.msra.mxu0 %v1455
        %1855 = vmatprep.subr.bf16.mxu0 %v1546
        %1856 = vmatpush2.bf16.msra.mxu0 %v1545
        %1857 = vmatprep.subr.bf16.mxu0 %v1540
        %1858 = vmatpush2.bf16.msra.mxu0 %v1539
        %1859 = vmatprep.subr.bf16.mxu0 %v1534
        %1860 = vmatpush2.bf16.msra.mxu0 %v1533
        %1861 = vmatprep.subr.bf16.mxu0 %v1528
        %1862 = vmatpush2.bf16.msra.mxu0 %v1527
        %1863 = vmatprep.subr.bf16.mxu0 %v1522
        %1864 = vmatpush2.bf16.msra.mxu0 %v1521
        %1865 = vmatprep.subr.bf16.mxu0 %v1516
        %1866 = vmatpush2.bf16.msra.mxu0 %v1515
        %1867 = vmatprep.subr.bf16.mxu0 %v1510
        %1868 = vmatpush2.bf16.msra.mxu0 %v1509
        %1869 = vmatprep.subr.bf16.mxu0 %v1504
        %1870 = vmatpush2.bf16.msra.mxu0 %v1503
        %1871 = vmatprep.mubr.bf16.mxu0 %v672
        %1872 = vmatmul.mubr.bf16.gmra.mxu0 %v671
        %v1873 = vpop.f32.mrf.mxu0
        %v1874 = vadd.f32 0.0, %v1873
        %v1875 = vpop.f32.mrf.mxu0
        %v1876 = vadd.f32 0.0, %v1875
        %v1877 = vpop.f32.mrf.mxu0
        %v1878 = vadd.f32 0.0, %v1877
        %v1879 = vpop.f32.mrf.mxu0
        %v1880 = vadd.f32 0.0, %v1879
        %1881 = vmatprep.mubr.bf16.mxu0 %v676
        %1882 = vmatmul.mubr.bf16.gmra.mxu0 %v675
        %v1883 = vpop.f32.mrf.mxu0
        %v1884 = vadd.f32 0.0, %v1883
        %v1885 = vpop.f32.mrf.mxu0
        %v1886 = vadd.f32 0.0, %v1885
        %v1887 = vpop.f32.mrf.mxu0
        %v1888 = vadd.f32 0.0, %v1887
        %v1889 = vpop.f32.mrf.mxu0
        %v1890 = vadd.f32 0.0, %v1889
        %1891 = vmatprep.mubr.bf16.mxu0 %v680
        %1892 = vmatmul.mubr.bf16.gmra.mxu0 %v679
        %v1893 = vpop.f32.mrf.mxu0
        %v1894 = vadd.f32 0.0, %v1893
        %v1895 = vpop.f32.mrf.mxu0
        %v1896 = vadd.f32 0.0, %v1895
        %v1897 = vpop.f32.mrf.mxu0
        %v1898 = vadd.f32 0.0, %v1897
        %v1899 = vpop.f32.mrf.mxu0
        %v1900 = vadd.f32 0.0, %v1899
        %1901 = vmatprep.mubr.bf16.mxu0 %v684
        %1902 = vmatmul.mubr.bf16.gmra.mxu0 %v683
        %v1903 = vpop.f32.mrf.mxu0
        %v1904 = vadd.f32 0.0, %v1903
        %v1905 = vpop.f32.mrf.mxu0
        %v1906 = vadd.f32 0.0, %v1905
        %v1907 = vpop.f32.mrf.mxu0
        %v1908 = vadd.f32 0.0, %v1907
        %v1909 = vpop.f32.mrf.mxu0
        %v1910 = vadd.f32 0.0, %v1909
        %1911 = vdwg.mxu0
        %1912 = vmatprep.subr.bf16.mxu0 %v1594
        %1913 = vmatpush1.bf16.msra.mxu0 %v1593
        %1914 = vmatprep.subr.bf16.mxu0 %v1588
        %1915 = vmatpush1.bf16.msra.mxu0 %v1587
        %1916 = vmatprep.subr.bf16.mxu0 %v1582
        %1917 = vmatpush1.bf16.msra.mxu0 %v1581
        %1918 = vmatprep.subr.bf16.mxu0 %v1576
        %1919 = vmatpush1.bf16.msra.mxu0 %v1575
        %1920 = vmatprep.subr.bf16.mxu0 %v1570
        %1921 = vmatpush1.bf16.msra.mxu0 %v1569
        %1922 = vmatprep.subr.bf16.mxu0 %v1564
        %1923 = vmatpush1.bf16.msra.mxu0 %v1563
        %1924 = vmatprep.subr.bf16.mxu0 %v1558
        %1925 = vmatpush1.bf16.msra.mxu0 %v1557
        %1926 = vmatprep.subr.bf16.mxu0 %v1552
        %1927 = vmatpush1.bf16.msra.mxu0 %v1551
        %1928 = vmatprep.subr.bf16.mxu0 %v1642
        %1929 = vmatpush2.bf16.msra.mxu0 %v1641
        %1930 = vmatprep.subr.bf16.mxu0 %v1636
        %1931 = vmatpush2.bf16.msra.mxu0 %v1635
        %1932 = vmatprep.subr.bf16.mxu0 %v1630
        %1933 = vmatpush2.bf16.msra.mxu0 %v1629
        %1934 = vmatprep.subr.bf16.mxu0 %v1624
        %1935 = vmatpush2.bf16.msra.mxu0 %v1623
        %1936 = vmatprep.subr.bf16.mxu0 %v1618
        %1937 = vmatpush2.bf16.msra.mxu0 %v1617
        %1938 = vmatprep.subr.bf16.mxu0 %v1612
        %1939 = vmatpush2.bf16.msra.mxu0 %v1611
        %1940 = vmatprep.subr.bf16.mxu0 %v1606
        %1941 = vmatpush2.bf16.msra.mxu0 %v1605
        %1942 = vmatprep.subr.bf16.mxu0 %v1600
        %1943 = vmatpush2.bf16.msra.mxu0 %v1599
        %1944 = vmatprep.mubr.bf16.mxu0 %v674
        %1945 = vmatmul.mubr.bf16.gmra.mxu0 %v673
        %v1946 = vpop.f32.mrf.mxu0
        %v1947 = vadd.f32 %v1874, %v1946
        %v1948 = vpop.f32.mrf.mxu0
        %v1949 = vadd.f32 %v1876, %v1948
        %v1950 = vpop.f32.mrf.mxu0
        %v1951 = vadd.f32 %v1878, %v1950
        %v1952 = vpop.f32.mrf.mxu0
        %v1953 = vadd.f32 %v1880, %v1952
        %1954 = vmatprep.mubr.bf16.mxu0 %v678
        %1955 = vmatmul.mubr.bf16.gmra.mxu0 %v677
        %v1956 = vpop.f32.mrf.mxu0
        %v1957 = vadd.f32 %v1884, %v1956
        %v1958 = vpop.f32.mrf.mxu0
        %v1959 = vadd.f32 %v1886, %v1958
        %v1960 = vpop.f32.mrf.mxu0
        %v1961 = vadd.f32 %v1888, %v1960
        %v1962 = vpop.f32.mrf.mxu0
        %v1963 = vadd.f32 %v1890, %v1962
        %1964 = vmatprep.mubr.bf16.mxu0 %v682
        %1965 = vmatmul.mubr.bf16.gmra.mxu0 %v681
        %v1966 = vpop.f32.mrf.mxu0
        %v1967 = vadd.f32 %v1894, %v1966
        %v1968 = vpop.f32.mrf.mxu0
        %v1969 = vadd.f32 %v1896, %v1968
        %v1970 = vpop.f32.mrf.mxu0
        %v1971 = vadd.f32 %v1898, %v1970
        %v1972 = vpop.f32.mrf.mxu0
        %v1973 = vadd.f32 %v1900, %v1972
        %1974 = vmatprep.mubr.bf16.mxu0 %v686
        %1975 = vmatmul.mubr.bf16.gmra.mxu0 %v685
        %v1976 = vpop.f32.mrf.mxu0
        %v1977 = vadd.f32 %v1904, %v1976
        %v1978 = vpop.f32.mrf.mxu0
        %v1979 = vadd.f32 %v1906, %v1978
        %v1980 = vpop.f32.mrf.mxu0
        %v1981 = vadd.f32 %v1908, %v1980
        %v1982 = vpop.f32.mrf.mxu0
        %v1983 = vadd.f32 %v1910, %v1982
        %1984 = vdwg.mxu0
        %1985 = vmatprep.subr.bf16.mxu0 %v1500
        %1986 = vmatpush1.bf16.msra.mxu0 %v1499
        %1987 = vmatprep.subr.bf16.mxu0 %v1494
        %1988 = vmatpush1.bf16.msra.mxu0 %v1493
        %1989 = vmatprep.subr.bf16.mxu0 %v1488
        %1990 = vmatpush1.bf16.msra.mxu0 %v1487
        %1991 = vmatprep.subr.bf16.mxu0 %v1482
        %1992 = vmatpush1.bf16.msra.mxu0 %v1481
        %1993 = vmatprep.subr.bf16.mxu0 %v1476
        %1994 = vmatpush1.bf16.msra.mxu0 %v1475
        %1995 = vmatprep.subr.bf16.mxu0 %v1470
        %1996 = vmatpush1.bf16.msra.mxu0 %v1469
        %1997 = vmatprep.subr.bf16.mxu0 %v1464
        %1998 = vmatpush1.bf16.msra.mxu0 %v1463
        %1999 = vmatprep.subr.bf16.mxu0 %v1458
        %2000 = vmatpush1.bf16.msra.mxu0 %v1457
        %2001 = vmatprep.subr.bf16.mxu0 %v1548
        %2002 = vmatpush2.bf16.msra.mxu0 %v1547
        %2003 = vmatprep.subr.bf16.mxu0 %v1542
        %2004 = vmatpush2.bf16.msra.mxu0 %v1541
        %2005 = vmatprep.subr.bf16.mxu0 %v1536
        %2006 = vmatpush2.bf16.msra.mxu0 %v1535
        %2007 = vmatprep.subr.bf16.mxu0 %v1530
        %2008 = vmatpush2.bf16.msra.mxu0 %v1529
        %2009 = vmatprep.subr.bf16.mxu0 %v1524
        %2010 = vmatpush2.bf16.msra.mxu0 %v1523
        %2011 = vmatprep.subr.bf16.mxu0 %v1518
        %2012 = vmatpush2.bf16.msra.mxu0 %v1517
        %2013 = vmatprep.subr.bf16.mxu0 %v1512
        %2014 = vmatpush2.bf16.msra.mxu0 %v1511
        %2015 = vmatprep.subr.bf16.mxu0 %v1506
        %2016 = vmatpush2.bf16.msra.mxu0 %v1505
        %2017 = vmatprep.mubr.bf16.mxu0 %v672
        %2018 = vmatmul.mubr.bf16.gmra.mxu0 %v671
        %v2019 = vpop.f32.mrf.mxu0
        %v2020 = vadd.f32 0.0, %v2019
        %v2021 = vpop.f32.mrf.mxu0
        %v2022 = vadd.f32 0.0, %v2021
        %v2023 = vpop.f32.mrf.mxu0
        %v2024 = vadd.f32 0.0, %v2023
        %v2025 = vpop.f32.mrf.mxu0
        %v2026 = vadd.f32 0.0, %v2025
        %2027 = vmatprep.mubr.bf16.mxu0 %v676
        %2028 = vmatmul.mubr.bf16.gmra.mxu0 %v675
        %v2029 = vpop.f32.mrf.mxu0
        %v2030 = vadd.f32 0.0, %v2029
        %v2031 = vpop.f32.mrf.mxu0
        %v2032 = vadd.f32 0.0, %v2031
        %v2033 = vpop.f32.mrf.mxu0
        %v2034 = vadd.f32 0.0, %v2033
        %v2035 = vpop.f32.mrf.mxu0
        %v2036 = vadd.f32 0.0, %v2035
        %2037 = vmatprep.mubr.bf16.mxu0 %v680
        %2038 = vmatmul.mubr.bf16.gmra.mxu0 %v679
        %v2039 = vpop.f32.mrf.mxu0
        %v2040 = vadd.f32 0.0, %v2039
        %v2041 = vpop.f32.mrf.mxu0
        %v2042 = vadd.f32 0.0, %v2041
        %v2043 = vpop.f32.mrf.mxu0
        %v2044 = vadd.f32 0.0, %v2043
        %v2045 = vpop.f32.mrf.mxu0
        %v2046 = vadd.f32 0.0, %v2045
        %2047 = vmatprep.mubr.bf16.mxu0 %v684
        %2048 = vmatmul.mubr.bf16.gmra.mxu0 %v683
        %v2049 = vpop.f32.mrf.mxu0
        %v2050 = vadd.f32 0.0, %v2049
        %v2051 = vpop.f32.mrf.mxu0
        %v2052 = vadd.f32 0.0, %v2051
        %v2053 = vpop.f32.mrf.mxu0
        %v2054 = vadd.f32 0.0, %v2053
        %v2055 = vpop.f32.mrf.mxu0
        %v2056 = vadd.f32 0.0, %v2055
        %2057 = vdwg.mxu0
        %2058 = vmatprep.subr.bf16.mxu0 %v1596
        %2059 = vmatpush1.bf16.msra.mxu0 %v1595
        %2060 = vmatprep.subr.bf16.mxu0 %v1590
        %2061 = vmatpush1.bf16.msra.mxu0 %v1589
        %2062 = vmatprep.subr.bf16.mxu0 %v1584
        %2063 = vmatpush1.bf16.msra.mxu0 %v1583
        %2064 = vmatprep.subr.bf16.mxu0 %v1578
        %2065 = vmatpush1.bf16.msra.mxu0 %v1577
        %2066 = vmatprep.subr.bf16.mxu0 %v1572
        %2067 = vmatpush1.bf16.msra.mxu0 %v1571
        %2068 = vmatprep.subr.bf16.mxu0 %v1566
        %2069 = vmatpush1.bf16.msra.mxu0 %v1565
        %2070 = vmatprep.subr.bf16.mxu0 %v1560
        %2071 = vmatpush1.bf16.msra.mxu0 %v1559
        %2072 = vmatprep.subr.bf16.mxu0 %v1554
        %2073 = vmatpush1.bf16.msra.mxu0 %v1553
        %2074 = vmatprep.subr.bf16.mxu0 %v1644
        %2075 = vmatpush2.bf16.msra.mxu0 %v1643
        %2076 = vmatprep.subr.bf16.mxu0 %v1638
        %2077 = vmatpush2.bf16.msra.mxu0 %v1637
        %2078 = vmatprep.subr.bf16.mxu0 %v1632
        %2079 = vmatpush2.bf16.msra.mxu0 %v1631
        %2080 = vmatprep.subr.bf16.mxu0 %v1626
        %2081 = vmatpush2.bf16.msra.mxu0 %v1625
        %2082 = vmatprep.subr.bf16.mxu0 %v1620
        %2083 = vmatpush2.bf16.msra.mxu0 %v1619
        %2084 = vmatprep.subr.bf16.mxu0 %v1614
        %2085 = vmatpush2.bf16.msra.mxu0 %v1613
        %2086 = vmatprep.subr.bf16.mxu0 %v1608
        %2087 = vmatpush2.bf16.msra.mxu0 %v1607
        %2088 = vmatprep.subr.bf16.mxu0 %v1602
        %2089 = vmatpush2.bf16.msra.mxu0 %v1601
        %2090 = vmatprep.mubr.bf16.mxu0 %v674
        %2091 = vmatmul.mubr.bf16.gmra.mxu0 %v673
        %v2092 = vpop.f32.mrf.mxu0
        %v2093 = vadd.f32 %v2020, %v2092
        %v2094 = vpop.f32.mrf.mxu0
        %v2095 = vadd.f32 %v2022, %v2094
        %v2096 = vpop.f32.mrf.mxu0
        %v2097 = vadd.f32 %v2024, %v2096
        %v2098 = vpop.f32.mrf.mxu0
        %v2099 = vadd.f32 %v2026, %v2098
        %2100 = vmatprep.mubr.bf16.mxu0 %v678
        %2101 = vmatmul.mubr.bf16.gmra.mxu0 %v677
        %v2102 = vpop.f32.mrf.mxu0
        %v2103 = vadd.f32 %v2030, %v2102
        %v2104 = vpop.f32.mrf.mxu0
        %v2105 = vadd.f32 %v2032, %v2104
        %v2106 = vpop.f32.mrf.mxu0
        %v2107 = vadd.f32 %v2034, %v2106
        %v2108 = vpop.f32.mrf.mxu0
        %v2109 = vadd.f32 %v2036, %v2108
        %2110 = vmatprep.mubr.bf16.mxu0 %v682
        %2111 = vmatmul.mubr.bf16.gmra.mxu0 %v681
        %v2112 = vpop.f32.mrf.mxu0
        %v2113 = vadd.f32 %v2040, %v2112
        %v2114 = vpop.f32.mrf.mxu0
        %v2115 = vadd.f32 %v2042, %v2114
        %v2116 = vpop.f32.mrf.mxu0
        %v2117 = vadd.f32 %v2044, %v2116
        %v2118 = vpop.f32.mrf.mxu0
        %v2119 = vadd.f32 %v2046, %v2118
        %2120 = vmatprep.mubr.bf16.mxu0 %v686
        %2121 = vmatmul.mubr.bf16.gmra.mxu0 %v685
        %v2122 = vpop.f32.mrf.mxu0
        %v2123 = vadd.f32 %v2050, %v2122
        %v2124 = vpop.f32.mrf.mxu0
        %v2125 = vadd.f32 %v2052, %v2124
        %v2126 = vpop.f32.mrf.mxu0
        %v2127 = vadd.f32 %v2054, %v2126
        %v2128 = vpop.f32.mrf.mxu0
        %v2129 = vadd.f32 %v2056, %v2128
        %2130 = vdwg.mxu0
        %2131 = vmatprep.subr.bf16.mxu0 %v1502
        %2132 = vmatpush1.bf16.msra.mxu0 %v1501
        %2133 = vmatprep.subr.bf16.mxu0 %v1496
        %2134 = vmatpush1.bf16.msra.mxu0 %v1495
        %2135 = vmatprep.subr.bf16.mxu0 %v1490
        %2136 = vmatpush1.bf16.msra.mxu0 %v1489
        %2137 = vmatprep.subr.bf16.mxu0 %v1484
        %2138 = vmatpush1.bf16.msra.mxu0 %v1483
        %2139 = vmatprep.subr.bf16.mxu0 %v1478
        %2140 = vmatpush1.bf16.msra.mxu0 %v1477
        %2141 = vmatprep.subr.bf16.mxu0 %v1472
        %2142 = vmatpush1.bf16.msra.mxu0 %v1471
        %2143 = vmatprep.subr.bf16.mxu0 %v1466
        %2144 = vmatpush1.bf16.msra.mxu0 %v1465
        %2145 = vmatprep.subr.bf16.mxu0 %v1460
        %2146 = vmatpush1.bf16.msra.mxu0 %v1459
        %2147 = vmatprep.subr.bf16.mxu0 %v1550
        %2148 = vmatpush2.bf16.msra.mxu0 %v1549
        %2149 = vmatprep.subr.bf16.mxu0 %v1544
        %2150 = vmatpush2.bf16.msra.mxu0 %v1543
        %2151 = vmatprep.subr.bf16.mxu0 %v1538
        %2152 = vmatpush2.bf16.msra.mxu0 %v1537
        %2153 = vmatprep.subr.bf16.mxu0 %v1532
        %2154 = vmatpush2.bf16.msra.mxu0 %v1531
        %2155 = vmatprep.subr.bf16.mxu0 %v1526
        %2156 = vmatpush2.bf16.msra.mxu0 %v1525
        %2157 = vmatprep.subr.bf16.mxu0 %v1520
        %2158 = vmatpush2.bf16.msra.mxu0 %v1519
        %2159 = vmatprep.subr.bf16.mxu0 %v1514
        %2160 = vmatpush2.bf16.msra.mxu0 %v1513
        %2161 = vmatprep.subr.bf16.mxu0 %v1508
        %2162 = vmatpush2.bf16.msra.mxu0 %v1507
        %2163 = vmatprep.mubr.bf16.mxu0 %v672
        %2164 = vmatmul.mubr.bf16.gmra.mxu0 %v671
        %v2165 = vpop.f32.mrf.mxu0
        %v2166 = vadd.f32 0.0, %v2165
        %v2167 = vpop.f32.mrf.mxu0
        %v2168 = vadd.f32 0.0, %v2167
        %v2169 = vpop.f32.mrf.mxu0
        %v2170 = vadd.f32 0.0, %v2169
        %v2171 = vpop.f32.mrf.mxu0
        %v2172 = vadd.f32 0.0, %v2171
        %2173 = vmatprep.mubr.bf16.mxu0 %v676
        %2174 = vmatmul.mubr.bf16.gmra.mxu0 %v675
        %v2175 = vpop.f32.mrf.mxu0
        %v2176 = vadd.f32 0.0, %v2175
        %v2177 = vpop.f32.mrf.mxu0
        %v2178 = vadd.f32 0.0, %v2177
        %v2179 = vpop.f32.mrf.mxu0
        %v2180 = vadd.f32 0.0, %v2179
        %v2181 = vpop.f32.mrf.mxu0
        %v2182 = vadd.f32 0.0, %v2181
        %2183 = vmatprep.mubr.bf16.mxu0 %v680
        %2184 = vmatmul.mubr.bf16.gmra.mxu0 %v679
        %v2185 = vpop.f32.mrf.mxu0
        %v2186 = vadd.f32 0.0, %v2185
        %v2187 = vpop.f32.mrf.mxu0
        %v2188 = vadd.f32 0.0, %v2187
        %v2189 = vpop.f32.mrf.mxu0
        %v2190 = vadd.f32 0.0, %v2189
        %v2191 = vpop.f32.mrf.mxu0
        %v2192 = vadd.f32 0.0, %v2191
        %2193 = vmatprep.mubr.bf16.mxu0 %v684
        %2194 = vmatmul.mubr.bf16.gmra.mxu0 %v683
        %v2195 = vpop.f32.mrf.mxu0
        %v2196 = vadd.f32 0.0, %v2195
        %v2197 = vpop.f32.mrf.mxu0
        %v2198 = vadd.f32 0.0, %v2197
        %v2199 = vpop.f32.mrf.mxu0
        %v2200 = vadd.f32 0.0, %v2199
        %v2201 = vpop.f32.mrf.mxu0
        %v2202 = vadd.f32 0.0, %v2201
        %2203 = vdwg.mxu0
        %2204 = vmatprep.subr.bf16.mxu0 %v1598
        %2205 = vmatpush1.bf16.msra.mxu0 %v1597
        %2206 = vmatprep.subr.bf16.mxu0 %v1592
        %2207 = vmatpush1.bf16.msra.mxu0 %v1591
        %2208 = vmatprep.subr.bf16.mxu0 %v1586
        %2209 = vmatpush1.bf16.msra.mxu0 %v1585
        %2210 = vmatprep.subr.bf16.mxu0 %v1580
        %2211 = vmatpush1.bf16.msra.mxu0 %v1579
        %2212 = vmatprep.subr.bf16.mxu0 %v1574
        %2213 = vmatpush1.bf16.msra.mxu0 %v1573
        %2214 = vmatprep.subr.bf16.mxu0 %v1568
        %2215 = vmatpush1.bf16.msra.mxu0 %v1567
        %2216 = vmatprep.subr.bf16.mxu0 %v1562
        %2217 = vmatpush1.bf16.msra.mxu0 %v1561
        %2218 = vmatprep.subr.bf16.mxu0 %v1556
        %2219 = vmatpush1.bf16.msra.mxu0 %v1555
        %2220 = vmatprep.subr.bf16.mxu0 %v1646
        %2221 = vmatpush2.bf16.msra.mxu0 %v1645
        %2222 = vmatprep.subr.bf16.mxu0 %v1640
        %2223 = vmatpush2.bf16.msra.mxu0 %v1639
        %2224 = vmatprep.subr.bf16.mxu0 %v1634
        %2225 = vmatpush2.bf16.msra.mxu0 %v1633
        %2226 = vmatprep.subr.bf16.mxu0 %v1628
        %2227 = vmatpush2.bf16.msra.mxu0 %v1627
        %2228 = vmatprep.subr.bf16.mxu0 %v1622
        %2229 = vmatpush2.bf16.msra.mxu0 %v1621
        %2230 = vmatprep.subr.bf16.mxu0 %v1616
        %2231 = vmatpush2.bf16.msra.mxu0 %v1615
        %2232 = vmatprep.subr.bf16.mxu0 %v1610
        %2233 = vmatpush2.bf16.msra.mxu0 %v1609
        %2234 = vmatprep.subr.bf16.mxu0 %v1604
        %2235 = vmatpush2.bf16.msra.mxu0 %v1603
        %2236 = vmatprep.mubr.bf16.mxu0 %v674
        %2237 = vmatmul.mubr.bf16.gmra.mxu0 %v673
        %v2238 = vpop.f32.mrf.mxu0
        %v2239 = vadd.f32 %v2166, %v2238
        %v2240 = vpop.f32.mrf.mxu0
        %v2241 = vadd.f32 %v2168, %v2240
        %v2242 = vpop.f32.mrf.mxu0
        %v2243 = vadd.f32 %v2170, %v2242
        %v2244 = vpop.f32.mrf.mxu0
        %v2245 = vadd.f32 %v2172, %v2244
        %2246 = vmatprep.mubr.bf16.mxu0 %v678
        %2247 = vmatmul.mubr.bf16.gmra.mxu0 %v677
        %v2248 = vpop.f32.mrf.mxu0
        %v2249 = vadd.f32 %v2176, %v2248
        %v2250 = vpop.f32.mrf.mxu0
        %v2251 = vadd.f32 %v2178, %v2250
        %v2252 = vpop.f32.mrf.mxu0
        %v2253 = vadd.f32 %v2180, %v2252
        %v2254 = vpop.f32.mrf.mxu0
        %v2255 = vadd.f32 %v2182, %v2254
        %2256 = vmatprep.mubr.bf16.mxu0 %v682
        %2257 = vmatmul.mubr.bf16.gmra.mxu0 %v681
        %v2258 = vpop.f32.mrf.mxu0
        %v2259 = vadd.f32 %v2186, %v2258
        %v2260 = vpop.f32.mrf.mxu0
        %v2261 = vadd.f32 %v2188, %v2260
        %v2262 = vpop.f32.mrf.mxu0
        %v2263 = vadd.f32 %v2190, %v2262
        %v2264 = vpop.f32.mrf.mxu0
        %v2265 = vadd.f32 %v2192, %v2264
        %2266 = vmatprep.mubr.bf16.mxu0 %v686
        %2267 = vmatmul.mubr.bf16.gmra.mxu0 %v685
        %v2268 = vpop.f32.mrf.mxu0
        %v2269 = vadd.f32 %v2196, %v2268
        %v2270 = vpop.f32.mrf.mxu0
        %v2271 = vadd.f32 %v2198, %v2270
        %v2272 = vpop.f32.mrf.mxu0
        %v2273 = vadd.f32 %v2200, %v2272
        %v2274 = vpop.f32.mrf.mxu0
        %v2275 = vadd.f32 %v2202, %v2274
        %2276 = vdwg.mxu0
        %v2277 = vld [vmem:[#allocation8] sm:$0x3f]
        %v2279 = vlaneseq
        %v2280 = vshrl.u32 %v2279, 7
        %v2281 = vsub.s32 0, %v2280
        %v2282 = vrot.slane %v2277, %v2281
        %v2283 = vlaneseq
        %v2284 = vshrl.u32 %v2283, 7
        %v2285 = vsub.s32 1, %v2284
        %v2286 = vrot.slane %v2277, %v2285
        %v2287 = vlaneseq
        %v2288 = vshrl.u32 %v2287, 7
        %v2289 = vsub.s32 2, %v2288
        %v2290 = vrot.slane %v2277, %v2289
        %v2291 = vlaneseq
        %v2292 = vshrl.u32 %v2291, 7
        %v2293 = vsub.s32 3, %v2292
        %v2294 = vrot.slane %v2277, %v2293
        %v2295 = vlaneseq
        %v2296 = vshrl.u32 %v2295, 7
        %v2297 = vsub.s32 4, %v2296
        %v2298 = vrot.slane %v2277, %v2297
        %v2299 = vlaneseq
        %v2300 = vshrl.u32 %v2299, 7
        %v2301 = vsub.s32 5, %v2300
        %v2302 = vrot.slane %v2277, %v2301
        %v2309 = vmul.f32 %v1947, %v2282
        %v2310 = vmul.f32 %v1949, %v2286
        %v2311 = vmul.f32 %v2093, %v2290
        %v2312 = vmul.f32 %v2095, %v2294
        %v2313 = vmul.f32 %v2239, %v2298
        %v2314 = vmul.f32 %v2241, %v2302
        %v2315 = vmul.f32 %v1951, %v2282
        %v2316 = vmul.f32 %v1953, %v2286
        %v2317 = vmul.f32 %v2097, %v2290
        %v2318 = vmul.f32 %v2099, %v2294
        %v2319 = vmul.f32 %v2243, %v2298
        %v2320 = vmul.f32 %v2245, %v2302
        %v2321 = vmul.f32 %v1957, %v2282
        %v2322 = vmul.f32 %v1959, %v2286
        %v2323 = vmul.f32 %v2103, %v2290
        %v2324 = vmul.f32 %v2105, %v2294
        %v2325 = vmul.f32 %v2249, %v2298
        %v2326 = vmul.f32 %v2251, %v2302
        %v2327 = vmul.f32 %v1961, %v2282
        %v2328 = vmul.f32 %v1963, %v2286
        %v2329 = vmul.f32 %v2107, %v2290
        %v2330 = vmul.f32 %v2109, %v2294
        %v2331 = vmul.f32 %v2253, %v2298
        %v2332 = vmul.f32 %v2255, %v2302
        %v2333 = vmul.f32 %v1967, %v2282
        %v2334 = vmul.f32 %v1969, %v2286
        %v2335 = vmul.f32 %v2113, %v2290
        %v2336 = vmul.f32 %v2115, %v2294
        %v2337 = vmul.f32 %v2259, %v2298
        %v2338 = vmul.f32 %v2261, %v2302
        %v2339 = vmul.f32 %v1971, %v2282
        %v2340 = vmul.f32 %v1973, %v2286
        %v2341 = vmul.f32 %v2117, %v2290
        %v2342 = vmul.f32 %v2119, %v2294
        %v2343 = vmul.f32 %v2263, %v2298
        %v2344 = vmul.f32 %v2265, %v2302
        %v2345 = vmul.f32 %v1977, %v2282
        %v2346 = vmul.f32 %v1979, %v2286
        %v2347 = vmul.f32 %v2123, %v2290
        %v2348 = vmul.f32 %v2125, %v2294
        %v2349 = vmul.f32 %v2269, %v2298
        %v2350 = vmul.f32 %v2271, %v2302
        %v2351 = vmul.f32 %v1981, %v2282
        %v2352 = vmul.f32 %v1983, %v2286
        %v2353 = vmul.f32 %v2127, %v2290
        %v2354 = vmul.f32 %v2129, %v2294
        %v2355 = vmul.f32 %v2273, %v2298
        %v2356 = vmul.f32 %v2275, %v2302
        %v2357 = vld [vmem:[#allocation10] sm:$0x3f]
        %v2359 = vlaneseq
        %v2360 = vshrl.u32 %v2359, 7
        %v2361 = vsub.s32 0, %v2360
        %v2362 = vrot.slane %v2357, %v2361
        %v2363 = vlaneseq
        %v2364 = vshrl.u32 %v2363, 7
        %v2365 = vsub.s32 1, %v2364
        %v2366 = vrot.slane %v2357, %v2365
        %v2367 = vlaneseq
        %v2368 = vshrl.u32 %v2367, 7
        %v2369 = vsub.s32 2, %v2368
        %v2370 = vrot.slane %v2357, %v2369
        %v2371 = vlaneseq
        %v2372 = vshrl.u32 %v2371, 7
        %v2373 = vsub.s32 3, %v2372
        %v2374 = vrot.slane %v2357, %v2373
        %v2375 = vlaneseq
        %v2376 = vshrl.u32 %v2375, 7
        %v2377 = vsub.s32 4, %v2376
        %v2378 = vrot.slane %v2357, %v2377
        %v2379 = vlaneseq
        %v2380 = vshrl.u32 %v2379, 7
        %v2381 = vsub.s32 5, %v2380
        %v2382 = vrot.slane %v2357, %v2381
        %v2389 = vadd.f32 %v2309, %v2362
        %v2390 = vadd.f32 %v2310, %v2366
        %v2391 = vadd.f32 %v2311, %v2370
        %v2392 = vadd.f32 %v2312, %v2374
        %v2393 = vadd.f32 %v2313, %v2378
        %v2394 = vadd.f32 %v2314, %v2382
        %v2395 = vadd.f32 %v2315, %v2362
        %v2396 = vadd.f32 %v2316, %v2366
        %v2397 = vadd.f32 %v2317, %v2370
        %v2398 = vadd.f32 %v2318, %v2374
        %v2399 = vadd.f32 %v2319, %v2378
        %v2400 = vadd.f32 %v2320, %v2382
        %v2401 = vadd.f32 %v2321, %v2362
        %v2402 = vadd.f32 %v2322, %v2366
        %v2403 = vadd.f32 %v2323, %v2370
        %v2404 = vadd.f32 %v2324, %v2374
        %v2405 = vadd.f32 %v2325, %v2378
        %v2406 = vadd.f32 %v2326, %v2382
        %v2407 = vadd.f32 %v2327, %v2362
        %v2408 = vadd.f32 %v2328, %v2366
        %v2409 = vadd.f32 %v2329, %v2370
        %v2410 = vadd.f32 %v2330, %v2374
        %v2411 = vadd.f32 %v2331, %v2378
        %v2412 = vadd.f32 %v2332, %v2382
        %v2413 = vadd.f32 %v2333, %v2362
        %v2414 = vadd.f32 %v2334, %v2366
        %v2415 = vadd.f32 %v2335, %v2370
        %v2416 = vadd.f32 %v2336, %v2374
        %v2417 = vadd.f32 %v2337, %v2378
        %v2418 = vadd.f32 %v2338, %v2382
        %v2419 = vadd.f32 %v2339, %v2362
        %v2420 = vadd.f32 %v2340, %v2366
        %v2421 = vadd.f32 %v2341, %v2370
        %v2422 = vadd.f32 %v2342, %v2374
        %v2423 = vadd.f32 %v2343, %v2378
        %v2424 = vadd.f32 %v2344, %v2382
        %v2425 = vadd.f32 %v2345, %v2362
        %v2426 = vadd.f32 %v2346, %v2366
        %v2427 = vadd.f32 %v2347, %v2370
        %v2428 = vadd.f32 %v2348, %v2374
        %v2429 = vadd.f32 %v2349, %v2378
        %v2430 = vadd.f32 %v2350, %v2382
        %v2431 = vadd.f32 %v2351, %v2362
        %v2432 = vadd.f32 %v2352, %v2366
        %v2433 = vadd.f32 %v2353, %v2370
        %v2434 = vadd.f32 %v2354, %v2374
        %v2435 = vadd.f32 %v2355, %v2378
        %v2436 = vadd.f32 %v2356, %v2382
        %v2437 = vmax.f32 %v2389, 0.0
        %v2438 = vmax.f32 %v2390, 0.0
        %v2439 = vmax.f32 %v2391, 0.0
        %v2440 = vmax.f32 %v2392, 0.0
        %v2441 = vmax.f32 %v2393, 0.0
        %v2442 = vmax.f32 %v2394, 0.0
        %v2443 = vmax.f32 %v2395, 0.0
        %v2444 = vmax.f32 %v2396, 0.0
        %v2445 = vmax.f32 %v2397, 0.0
        %v2446 = vmax.f32 %v2398, 0.0
        %v2447 = vmax.f32 %v2399, 0.0
        %v2448 = vmax.f32 %v2400, 0.0
        %v2449 = vmax.f32 %v2401, 0.0
        %v2450 = vmax.f32 %v2402, 0.0
        %v2451 = vmax.f32 %v2403, 0.0
        %v2452 = vmax.f32 %v2404, 0.0
        %v2453 = vmax.f32 %v2405, 0.0
        %v2454 = vmax.f32 %v2406, 0.0
        %v2455 = vmax.f32 %v2407, 0.0
        %v2456 = vmax.f32 %v2408, 0.0
        %v2457 = vmax.f32 %v2409, 0.0
        %v2458 = vmax.f32 %v2410, 0.0
        %v2459 = vmax.f32 %v2411, 0.0
        %v2460 = vmax.f32 %v2412, 0.0
        %v2461 = vmax.f32 %v2413, 0.0
        %v2462 = vmax.f32 %v2414, 0.0
        %v2463 = vmax.f32 %v2415, 0.0
        %v2464 = vmax.f32 %v2416, 0.0
        %v2465 = vmax.f32 %v2417, 0.0
        %v2466 = vmax.f32 %v2418, 0.0
        %v2467 = vmax.f32 %v2419, 0.0
        %v2468 = vmax.f32 %v2420, 0.0
        %v2469 = vmax.f32 %v2421, 0.0
        %v2470 = vmax.f32 %v2422, 0.0
        %v2471 = vmax.f32 %v2423, 0.0
        %v2472 = vmax.f32 %v2424, 0.0
        %v2473 = vmax.f32 %v2425, 0.0
        %v2474 = vmax.f32 %v2426, 0.0
        %v2475 = vmax.f32 %v2427, 0.0
        %v2476 = vmax.f32 %v2428, 0.0
        %v2477 = vmax.f32 %v2429, 0.0
        %v2478 = vmax.f32 %v2430, 0.0
        %v2479 = vmax.f32 %v2431, 0.0
        %v2480 = vmax.f32 %v2432, 0.0
        %v2481 = vmax.f32 %v2433, 0.0
        %v2482 = vmax.f32 %v2434, 0.0
        %v2483 = vmax.f32 %v2435, 0.0
        %v2484 = vmax.f32 %v2436, 0.0
        %v2485 = vpack.c.bf16 %v2443, %v2437
        %v2486 = vpack.c.bf16 %v2444, %v2438
        %v2487 = vpack.c.bf16 %v2445, %v2439
        %v2488 = vpack.c.bf16 %v2446, %v2440
        %v2489 = vpack.c.bf16 %v2447, %v2441
        %v2490 = vpack.c.bf16 %v2448, %v2442
        %v2491 = vpack.c.bf16 %v2455, %v2449
        %v2492 = vpack.c.bf16 %v2456, %v2450
        %v2493 = vpack.c.bf16 %v2457, %v2451
        %v2494 = vpack.c.bf16 %v2458, %v2452
        %v2495 = vpack.c.bf16 %v2459, %v2453
        %v2496 = vpack.c.bf16 %v2460, %v2454
        %v2497 = vpack.c.bf16 %v2467, %v2461
        %v2498 = vpack.c.bf16 %v2468, %v2462
        %v2499 = vpack.c.bf16 %v2469, %v2463
        %v2500 = vpack.c.bf16 %v2470, %v2464
        %v2501 = vpack.c.bf16 %v2471, %v2465
        %v2502 = vpack.c.bf16 %v2472, %v2466
        %v2503 = vpack.c.bf16 %v2479, %v2473
        %v2504 = vpack.c.bf16 %v2480, %v2474
        %v2505 = vpack.c.bf16 %v2481, %v2475
        %v2506 = vpack.c.bf16 %v2482, %v2476
        %v2507 = vpack.c.bf16 %v2483, %v2477
        %v2508 = vpack.c.bf16 %v2484, %v2478
        %v2509 = vld [vmem:[#allocation14] sm:$0xff]
        %v2510 = vld [vmem:[#allocation14 + $0x8] sm:$0xff]
        %v2511 = vld [vmem:[#allocation14 + $0x10] sm:$0xff]
        %v2512 = vld [vmem:[#allocation14 + $0x18] sm:$0xff]
        %v2513 = vld [vmem:[#allocation14 + $0x20] sm:$0xff]
        %v2514 = vld [vmem:[#allocation14 + $0x28] sm:$0xff]
        %v2515 = vld [vmem:[#allocation14 + $0x30] sm:$0xff]
        %v2516 = vld [vmem:[#allocation14 + $0x38] sm:$0xff]
        %v2517 = vld [vmem:[#allocation14 + $0x40] sm:$0xff]
        %v2518 = vld [vmem:[#allocation14 + $0x48] sm:$0xff]
        %v2519 = vld [vmem:[#allocation14 + $0x50] sm:$0xff]
        %v2520 = vld [vmem:[#allocation14 + $0x58] sm:$0xff]
        %v2521 = vld [vmem:[#allocation14 + $0x60] sm:$0xff]
        %v2522 = vld [vmem:[#allocation14 + $0x68] sm:$0xff]
        %v2523 = vld [vmem:[#allocation14 + $0x70] sm:$0xff]
        %v2524 = vld [vmem:[#allocation14 + $0x78] sm:$0xff]
        %v2525 = vld [vmem:[#allocation14 + $0x80] sm:$0xff]
        %v2526 = vld [vmem:[#allocation14 + $0x88] sm:$0xff]
        %v2527 = vld [vmem:[#allocation14 + $0x90] sm:$0xff]
        %v2528 = vld [vmem:[#allocation14 + $0x98] sm:$0xff]
        %v2529 = vld [vmem:[#allocation14 + $0xa0] sm:$0xff]
        %v2530 = vld [vmem:[#allocation14 + $0xa8] sm:$0xff]
        %v2531 = vld [vmem:[#allocation14 + $0xb0] sm:$0xff]
        %v2532 = vld [vmem:[#allocation14 + $0xb8] sm:$0xff]
        %v2533 = vld [vmem:[#allocation14 + $0xc0] sm:$0xff]
        %v2534 = vld [vmem:[#allocation14 + $0xc8] sm:$0xff]
        %v2535 = vld [vmem:[#allocation14 + $0xd0] sm:$0xff]
        %v2536 = vld [vmem:[#allocation14 + $0xd8] sm:$0xff]
        %v2537 = vld [vmem:[#allocation14 + $0xe0] sm:$0xff]
        %v2538 = vld [vmem:[#allocation14 + $0xe8] sm:$0xff]
        %v2539 = vld [vmem:[#allocation14 + $0xf0] sm:$0xff]
        %v2540 = vld [vmem:[#allocation14 + $0xf8] sm:$0xff]
        %v2541 = vld [vmem:[#allocation14 + $0x100] sm:$0xff]
        %v2542 = vld [vmem:[#allocation14 + $0x108] sm:$0xff]
        %v2543 = vld [vmem:[#allocation14 + $0x110] sm:$0xff]
        %v2544 = vld [vmem:[#allocation14 + $0x118] sm:$0xff]
        %v2545 = vld [vmem:[#allocation14 + $0x120] sm:$0xff]
        %v2546 = vld [vmem:[#allocation14 + $0x128] sm:$0xff]
        %v2547 = vld [vmem:[#allocation14 + $0x130] sm:$0xff]
        %v2548 = vld [vmem:[#allocation14 + $0x138] sm:$0xff]
        %v2549 = vld [vmem:[#allocation14 + $0x140] sm:$0xff]
        %v2550 = vld [vmem:[#allocation14 + $0x148] sm:$0xff]
        %v2551 = vld [vmem:[#allocation14 + $0x150] sm:$0xff]
        %v2552 = vld [vmem:[#allocation14 + $0x158] sm:$0xff]
        %v2553 = vld [vmem:[#allocation14 + $0x160] sm:$0xff]
        %v2554 = vld [vmem:[#allocation14 + $0x168] sm:$0xff]
        %v2555 = vld [vmem:[#allocation14 + $0x170] sm:$0xff]
        %v2556 = vld [vmem:[#allocation14 + $0x178] sm:$0xff]
        %v2557 = vld [vmem:[#allocation14 + $0x180] sm:$0xff]
        %v2558 = vld [vmem:[#allocation14 + $0x188] sm:$0xff]
        %v2559 = vld [vmem:[#allocation14 + $0x190] sm:$0xff]
        %v2560 = vld [vmem:[#allocation14 + $0x198] sm:$0xff]
        %v2561 = vld [vmem:[#allocation14 + $0x1a0] sm:$0xff]
        %v2562 = vld [vmem:[#allocation14 + $0x1a8] sm:$0xff]
        %v2563 = vld [vmem:[#allocation14 + $0x1b0] sm:$0xff]
        %v2564 = vld [vmem:[#allocation14 + $0x1b8] sm:$0xff]
        %v2565 = vld [vmem:[#allocation14 + $0x1c0] sm:$0xff]
        %v2566 = vld [vmem:[#allocation14 + $0x1c8] sm:$0xff]
        %v2567 = vld [vmem:[#allocation14 + $0x1d0] sm:$0xff]
        %v2568 = vld [vmem:[#allocation14 + $0x1d8] sm:$0xff]
        %v2569 = vld [vmem:[#allocation14 + $0x1e0] sm:$0xff]
        %v2570 = vld [vmem:[#allocation14 + $0x1e8] sm:$0xff]
        %v2571 = vld [vmem:[#allocation14 + $0x1f0] sm:$0xff]
        %v2572 = vld [vmem:[#allocation14 + $0x1f8] sm:$0xff]
        %v2573 = vld [vmem:[#allocation14 + $0x200] sm:$0xff]
        %v2574 = vld [vmem:[#allocation14 + $0x208] sm:$0xff]
        %v2575 = vld [vmem:[#allocation14 + $0x210] sm:$0xff]
        %v2576 = vld [vmem:[#allocation14 + $0x218] sm:$0xff]
        %v2577 = vld [vmem:[#allocation14 + $0x220] sm:$0xff]
        %v2578 = vld [vmem:[#allocation14 + $0x228] sm:$0xff]
        %v2579 = vld [vmem:[#allocation14 + $0x230] sm:$0xff]
        %v2580 = vld [vmem:[#allocation14 + $0x238] sm:$0xff]
        %v2581 = vld [vmem:[#allocation14 + $0x240] sm:$0xff]
        %v2582 = vld [vmem:[#allocation14 + $0x248] sm:$0xff]
        %v2583 = vld [vmem:[#allocation14 + $0x250] sm:$0xff]
        %v2584 = vld [vmem:[#allocation14 + $0x258] sm:$0xff]
        %v2585 = vld [vmem:[#allocation14 + $0x260] sm:$0xff]
        %v2586 = vld [vmem:[#allocation14 + $0x268] sm:$0xff]
        %v2587 = vld [vmem:[#allocation14 + $0x270] sm:$0xff]
        %v2588 = vld [vmem:[#allocation14 + $0x278] sm:$0xff]
        %v2589 = vld [vmem:[#allocation14 + $0x280] sm:$0xff]
        %v2590 = vld [vmem:[#allocation14 + $0x288] sm:$0xff]
        %v2591 = vld [vmem:[#allocation14 + $0x290] sm:$0xff]
        %v2592 = vld [vmem:[#allocation14 + $0x298] sm:$0xff]
        %v2593 = vld [vmem:[#allocation14 + $0x2a0] sm:$0xff]
        %v2594 = vld [vmem:[#allocation14 + $0x2a8] sm:$0xff]
        %v2595 = vld [vmem:[#allocation14 + $0x2b0] sm:$0xff]
        %v2596 = vld [vmem:[#allocation14 + $0x2b8] sm:$0xff]
        %v2597 = vld [vmem:[#allocation14 + $0x2c0] sm:$0xff]
        %v2598 = vld [vmem:[#allocation14 + $0x2c8] sm:$0xff]
        %v2599 = vld [vmem:[#allocation14 + $0x2d0] sm:$0xff]
        %v2600 = vld [vmem:[#allocation14 + $0x2d8] sm:$0xff]
        %v2601 = vld [vmem:[#allocation14 + $0x2e0] sm:$0xff]
        %v2602 = vld [vmem:[#allocation14 + $0x2e8] sm:$0xff]
        %v2603 = vld [vmem:[#allocation14 + $0x2f0] sm:$0xff]
        %v2604 = vld [vmem:[#allocation14 + $0x2f8] sm:$0xff]
        %2605 = vst [vmem:[#allocation2] sm:$0xff] 0.0
        %2606 = vst [vmem:[#allocation2 + $0x8] sm:$0xff] 0.0
        %2607 = vst [vmem:[#allocation2 + $0x10] sm:$0xff] 0.0
        %2608 = vst [vmem:[#allocation2 + $0x18] sm:$0xff] 0.0
        %2609 = vst [vmem:[#allocation2 + $0x20] sm:$0xff] 0.0
        %2610 = vst [vmem:[#allocation2 + $0x28] sm:$0xff] 0.0
        %2611 = vst [vmem:[#allocation2 + $0x30] sm:$0xff] 0.0
        %2612 = vst [vmem:[#allocation2 + $0x38] sm:$0xff] 0.0
        %2613 = vst [vmem:[#allocation2 + $0x40] sm:$0x3f] 0.0
        %2614 = vst [vmem:[#allocation2 + $0x48] sm:$0x3f] 0.0
        %2615 = vst [vmem:[#allocation2 + $0x50] sm:$0x3f] 0.0
        %2616 = vst [vmem:[#allocation2 + $0x58] sm:$0x3f] 0.0
        %2617 = vst [vmem:[#allocation2 + $0x60] sm:$0xff] 0.0
        %2618 = vst [vmem:[#allocation2 + $0x68] sm:$0xff] 0.0
        %2619 = vst [vmem:[#allocation2 + $0x70] sm:$0xff] 0.0
        %2620 = vst [vmem:[#allocation2 + $0x78] sm:$0xff] 0.0
        %2621 = vst [vmem:[#allocation2 + $0x80] sm:$0xff] 0.0
        %2622 = vst [vmem:[#allocation2 + $0x88] sm:$0xff] 0.0
        %2623 = vst [vmem:[#allocation2 + $0x90] sm:$0xff] 0.0
        %2624 = vst [vmem:[#allocation2 + $0x98] sm:$0xff] 0.0
        %2625 = vst [vmem:[#allocation2 + $0xa0] sm:$0x3f] 0.0
        %2626 = vst [vmem:[#allocation2 + $0xa8] sm:$0x3f] 0.0
        %2627 = vst [vmem:[#allocation2 + $0xb0] sm:$0x3f] 0.0
        %2628 = vst [vmem:[#allocation2 + $0xb8] sm:$0x3f] 0.0
        %2629 = vst [vmem:[#allocation2 + $0xc0] sm:$0xff] 0.0
        %2630 = vst [vmem:[#allocation2 + $0xc8] sm:$0xff] 0.0
        %2631 = vst [vmem:[#allocation2 + $0xd0] sm:$0xff] 0.0
        %2632 = vst [vmem:[#allocation2 + $0xd8] sm:$0xff] 0.0
        %2633 = vst [vmem:[#allocation2 + $0xe0] sm:$0xff] 0.0
        %2634 = vst [vmem:[#allocation2 + $0xe8] sm:$0xff] 0.0
        %2635 = vst [vmem:[#allocation2 + $0xf0] sm:$0xff] 0.0
        %2636 = vst [vmem:[#allocation2 + $0xf8] sm:$0xff] 0.0
        %2637 = vst [vmem:[#allocation2 + $0x100] sm:$0x3f] 0.0
        %2638 = vst [vmem:[#allocation2 + $0x108] sm:$0x3f] 0.0
        %2639 = vst [vmem:[#allocation2 + $0x110] sm:$0x3f] 0.0
        %2640 = vst [vmem:[#allocation2 + $0x118] sm:$0x3f] 0.0
        %2641 = vst [vmem:[#allocation2 + $0x120] sm:$0xff] 0.0
        %2642 = vst [vmem:[#allocation2 + $0x128] sm:$0xff] 0.0
        %2643 = vst [vmem:[#allocation2 + $0x130] sm:$0xff] 0.0
        %2644 = vst [vmem:[#allocation2 + $0x138] sm:$0xff] 0.0
        %2645 = vst [vmem:[#allocation2 + $0x140] sm:$0xff] 0.0
        %2646 = vst [vmem:[#allocation2 + $0x148] sm:$0xff] 0.0
        %2647 = vst [vmem:[#allocation2 + $0x150] sm:$0xff] 0.0
        %2648 = vst [vmem:[#allocation2 + $0x158] sm:$0xff] 0.0
        %2649 = vst [vmem:[#allocation2 + $0x160] sm:$0x3f] 0.0
        %2650 = vst [vmem:[#allocation2 + $0x168] sm:$0x3f] 0.0
        %2651 = vst [vmem:[#allocation2 + $0x170] sm:$0x3f] 0.0
        %2652 = vst [vmem:[#allocation2 + $0x178] sm:$0x3f] 0.0
        %2653 = vst [vmem:[#allocation2 + $0x180] sm:$0xff] 0.0
        %2654 = vst [vmem:[#allocation2 + $0x188] sm:$0xff] 0.0
        %2655 = vst [vmem:[#allocation2 + $0x190] sm:$0xff] 0.0
        %2656 = vst [vmem:[#allocation2 + $0x198] sm:$0xff] 0.0
        %2657 = vst [vmem:[#allocation2 + $0x1a0] sm:$0xff] 0.0
        %2658 = vst [vmem:[#allocation2 + $0x1a8] sm:$0xff] 0.0
        %2659 = vst [vmem:[#allocation2 + $0x1b0] sm:$0xff] 0.0
        %2660 = vst [vmem:[#allocation2 + $0x1b8] sm:$0xff] 0.0
        %2661 = vst [vmem:[#allocation2 + $0x1c0] sm:$0x3f] 0.0
        %2662 = vst [vmem:[#allocation2 + $0x1c8] sm:$0x3f] 0.0
        %2663 = vst [vmem:[#allocation2 + $0x1d0] sm:$0x3f] 0.0
        %2664 = vst [vmem:[#allocation2 + $0x1d8] sm:$0x3f] 0.0
        %2665 = vst [vmem:[#allocation2 + $0x1e0] sm:$0xff] 0.0
        %2666 = vst [vmem:[#allocation2 + $0x1e8] sm:$0xff] 0.0
        %2667 = vst [vmem:[#allocation2 + $0x1f0] sm:$0xff] 0.0
        %2668 = vst [vmem:[#allocation2 + $0x1f8] sm:$0xff] 0.0
        %2669 = vst [vmem:[#allocation2 + $0x200] sm:$0xff] 0.0
        %2670 = vst [vmem:[#allocation2 + $0x208] sm:$0xff] 0.0
        %2671 = vst [vmem:[#allocation2 + $0x210] sm:$0xff] 0.0
        %2672 = vst [vmem:[#allocation2 + $0x218] sm:$0xff] 0.0
        %2673 = vst [vmem:[#allocation2 + $0x220] sm:$0x3f] 0.0
        %2674 = vst [vmem:[#allocation2 + $0x228] sm:$0x3f] 0.0
        %2675 = vst [vmem:[#allocation2 + $0x230] sm:$0x3f] 0.0
        %2676 = vst [vmem:[#allocation2 + $0x238] sm:$0x3f] 0.0
        %2677 = vst [vmem:[#allocation2 + $0x240] sm:$0xff] 0.0
        %2678 = vst [vmem:[#allocation2 + $0x248] sm:$0xff] 0.0
        %2679 = vst [vmem:[#allocation2 + $0x250] sm:$0xff] 0.0
        %2680 = vst [vmem:[#allocation2 + $0x258] sm:$0xff] 0.0
        %2681 = vst [vmem:[#allocation2 + $0x260] sm:$0xff] 0.0
        %2682 = vst [vmem:[#allocation2 + $0x268] sm:$0xff] 0.0
        %2683 = vst [vmem:[#allocation2 + $0x270] sm:$0xff] 0.0
        %2684 = vst [vmem:[#allocation2 + $0x278] sm:$0xff] 0.0
        %2685 = vst [vmem:[#allocation2 + $0x280] sm:$0x3f] 0.0
        %2686 = vst [vmem:[#allocation2 + $0x288] sm:$0x3f] 0.0
        %2687 = vst [vmem:[#allocation2 + $0x290] sm:$0x3f] 0.0
        %2688 = vst [vmem:[#allocation2 + $0x298] sm:$0x3f] 0.0
        %2689 = vst [vmem:[#allocation2 + $0x2a0] sm:$0xff] 0.0
        %2690 = vst [vmem:[#allocation2 + $0x2a8] sm:$0xff] 0.0
        %2691 = vst [vmem:[#allocation2 + $0x2b0] sm:$0xff] 0.0
        %2692 = vst [vmem:[#allocation2 + $0x2b8] sm:$0xff] 0.0
        %2693 = vst [vmem:[#allocation2 + $0x2c0] sm:$0xff] 0.0
        %2694 = vst [vmem:[#allocation2 + $0x2c8] sm:$0xff] 0.0
        %2695 = vst [vmem:[#allocation2 + $0x2d0] sm:$0xff] 0.0
        %2696 = vst [vmem:[#allocation2 + $0x2d8] sm:$0xff] 0.0
        %2697 = vst [vmem:[#allocation2 + $0x2e0] sm:$0x3f] 0.0
        %2698 = vst [vmem:[#allocation2 + $0x2e8] sm:$0x3f] 0.0
        %2699 = vst [vmem:[#allocation2 + $0x2f0] sm:$0x3f] 0.0
        %2700 = vst [vmem:[#allocation2 + $0x2f8] sm:$0x3f] 0.0
        %2701 = vst [vmem:[#allocation2 + $0x300] sm:$0xff] 0.0
        %2702 = vst [vmem:[#allocation2 + $0x308] sm:$0xff] 0.0
        %2703 = vst [vmem:[#allocation2 + $0x310] sm:$0xff] 0.0
        %2704 = vst [vmem:[#allocation2 + $0x318] sm:$0xff] 0.0
        %2705 = vst [vmem:[#allocation2 + $0x320] sm:$0xff] 0.0
        %2706 = vst [vmem:[#allocation2 + $0x328] sm:$0xff] 0.0
        %2707 = vst [vmem:[#allocation2 + $0x330] sm:$0xff] 0.0
        %2708 = vst [vmem:[#allocation2 + $0x338] sm:$0xff] 0.0
        %2709 = vst [vmem:[#allocation2 + $0x340] sm:$0x3f] 0.0
        %2710 = vst [vmem:[#allocation2 + $0x348] sm:$0x3f] 0.0
        %2711 = vst [vmem:[#allocation2 + $0x350] sm:$0x3f] 0.0
        %2712 = vst [vmem:[#allocation2 + $0x358] sm:$0x3f] 0.0
        %2713 = vst [vmem:[#allocation2 + $0x360] sm:$0xff] 0.0
        %2714 = vst [vmem:[#allocation2 + $0x368] sm:$0xff] 0.0
        %2715 = vst [vmem:[#allocation2 + $0x370] sm:$0xff] 0.0
        %2716 = vst [vmem:[#allocation2 + $0x378] sm:$0xff] 0.0
        %2717 = vst [vmem:[#allocation2 + $0x380] sm:$0xff] 0.0
        %2718 = vst [vmem:[#allocation2 + $0x388] sm:$0xff] 0.0
        %2719 = vst [vmem:[#allocation2 + $0x390] sm:$0xff] 0.0
        %2720 = vst [vmem:[#allocation2 + $0x398] sm:$0xff] 0.0
        %2721 = vst [vmem:[#allocation2 + $0x3a0] sm:$0x3f] 0.0
        %2722 = vst [vmem:[#allocation2 + $0x3a8] sm:$0x3f] 0.0
        %2723 = vst [vmem:[#allocation2 + $0x3b0] sm:$0x3f] 0.0
        %2724 = vst [vmem:[#allocation2 + $0x3b8] sm:$0x3f] 0.0
        %2725 = vst [vmem:[#allocation2 + $0x3c0] sm:$0xff] 0.0
        %2726 = vst [vmem:[#allocation2 + $0x3c8] sm:$0xff] 0.0
        %2727 = vst [vmem:[#allocation2 + $0x3d0] sm:$0xff] 0.0
        %2728 = vst [vmem:[#allocation2 + $0x3d8] sm:$0xff] 0.0
        %2729 = vst [vmem:[#allocation2 + $0x3e0] sm:$0xff] 0.0
        %2730 = vst [vmem:[#allocation2 + $0x3e8] sm:$0xff] 0.0
        %2731 = vst [vmem:[#allocation2 + $0x3f0] sm:$0xff] 0.0
        %2732 = vst [vmem:[#allocation2 + $0x3f8] sm:$0xff] 0.0
        %2733 = vst [vmem:[#allocation2 + $0x400] sm:$0x3f] 0.0
        %2734 = vst [vmem:[#allocation2 + $0x408] sm:$0x3f] 0.0
        %2735 = vst [vmem:[#allocation2 + $0x410] sm:$0x3f] 0.0
        %2736 = vst [vmem:[#allocation2 + $0x418] sm:$0x3f] 0.0
        %2737 = vst [vmem:[#allocation2 + $0x420] sm:$0xff] 0.0
        %2738 = vst [vmem:[#allocation2 + $0x428] sm:$0xff] 0.0
        %2739 = vst [vmem:[#allocation2 + $0x430] sm:$0xff] 0.0
        %2740 = vst [vmem:[#allocation2 + $0x438] sm:$0xff] 0.0
        %2741 = vst [vmem:[#allocation2 + $0x440] sm:$0xff] 0.0
        %2742 = vst [vmem:[#allocation2 + $0x448] sm:$0xff] 0.0
        %2743 = vst [vmem:[#allocation2 + $0x450] sm:$0xff] 0.0
        %2744 = vst [vmem:[#allocation2 + $0x458] sm:$0xff] 0.0
        %2745 = vst [vmem:[#allocation2 + $0x460] sm:$0x3f] 0.0
        %2746 = vst [vmem:[#allocation2 + $0x468] sm:$0x3f] 0.0
        %2747 = vst [vmem:[#allocation2 + $0x470] sm:$0x3f] 0.0
        %2748 = vst [vmem:[#allocation2 + $0x478] sm:$0x3f] 0.0
        %2749 = vst [vmem:[#allocation2 + $0x480] sm:$0xff] 0.0
        %2750 = vst [vmem:[#allocation2 + $0x488] sm:$0xff] 0.0
        %2751 = vst [vmem:[#allocation2 + $0x490] sm:$0xff] 0.0
        %2752 = vst [vmem:[#allocation2 + $0x498] sm:$0xff] 0.0
        %2753 = vst [vmem:[#allocation2 + $0x4a0] sm:$0xff] 0.0
        %2754 = vst [vmem:[#allocation2 + $0x4a8] sm:$0xff] 0.0
        %2755 = vst [vmem:[#allocation2 + $0x4b0] sm:$0xff] 0.0
        %2756 = vst [vmem:[#allocation2 + $0x4b8] sm:$0xff] 0.0
        %2757 = vst [vmem:[#allocation2 + $0x4c0] sm:$0x3f] 0.0
        %2758 = vst [vmem:[#allocation2 + $0x4c8] sm:$0x3f] 0.0
        %2759 = vst [vmem:[#allocation2 + $0x4d0] sm:$0x3f] 0.0
        %2760 = vst [vmem:[#allocation2 + $0x4d8] sm:$0x3f] 0.0
        %2761 = vst [vmem:[#allocation2 + $0x4e0] sm:$0xff] 0.0
        %2762 = vst [vmem:[#allocation2 + $0x4e8] sm:$0xff] 0.0
        %2763 = vst [vmem:[#allocation2 + $0x4f0] sm:$0xff] 0.0
        %2764 = vst [vmem:[#allocation2 + $0x4f8] sm:$0xff] 0.0
        %2765 = vst [vmem:[#allocation2 + $0x500] sm:$0xff] 0.0
        %2766 = vst [vmem:[#allocation2 + $0x508] sm:$0xff] 0.0
        %2767 = vst [vmem:[#allocation2 + $0x510] sm:$0xff] 0.0
        %2768 = vst [vmem:[#allocation2 + $0x518] sm:$0xff] 0.0
        %2769 = vst [vmem:[#allocation2 + $0x520] sm:$0x3f] 0.0
        %2770 = vst [vmem:[#allocation2 + $0x528] sm:$0x3f] 0.0
        %2771 = vst [vmem:[#allocation2 + $0x530] sm:$0x3f] 0.0
        %2772 = vst [vmem:[#allocation2 + $0x538] sm:$0x3f] 0.0
        %2773 = vst [vmem:[#allocation2 + $0x540] sm:$0xff] 0.0
        %2774 = vst [vmem:[#allocation2 + $0x548] sm:$0xff] 0.0
        %2775 = vst [vmem:[#allocation2 + $0x550] sm:$0xff] 0.0
        %2776 = vst [vmem:[#allocation2 + $0x558] sm:$0xff] 0.0
        %2777 = vst [vmem:[#allocation2 + $0x560] sm:$0xff] 0.0
        %2778 = vst [vmem:[#allocation2 + $0x568] sm:$0xff] 0.0
        %2779 = vst [vmem:[#allocation2 + $0x570] sm:$0xff] 0.0
        %2780 = vst [vmem:[#allocation2 + $0x578] sm:$0xff] 0.0
        %2781 = vst [vmem:[#allocation2 + $0x580] sm:$0x3f] 0.0
        %2782 = vst [vmem:[#allocation2 + $0x588] sm:$0x3f] 0.0
        %2783 = vst [vmem:[#allocation2 + $0x590] sm:$0x3f] 0.0
        %2784 = vst [vmem:[#allocation2 + $0x598] sm:$0x3f] 0.0
        %2785 = vst [vmem:[#allocation2 + $0x5a0] sm:$0xff] 0.0
        %2786 = vst [vmem:[#allocation2 + $0x5a8] sm:$0xff] 0.0
        %2787 = vst [vmem:[#allocation2 + $0x5b0] sm:$0xff] 0.0
        %2788 = vst [vmem:[#allocation2 + $0x5b8] sm:$0xff] 0.0
        %2789 = vst [vmem:[#allocation2 + $0x5c0] sm:$0xff] 0.0
        %2790 = vst [vmem:[#allocation2 + $0x5c8] sm:$0xff] 0.0
        %2791 = vst [vmem:[#allocation2 + $0x5d0] sm:$0xff] 0.0
        %2792 = vst [vmem:[#allocation2 + $0x5d8] sm:$0xff] 0.0
        %2793 = vst [vmem:[#allocation2 + $0x5e0] sm:$0x3f] 0.0
        %2794 = vst [vmem:[#allocation2 + $0x5e8] sm:$0x3f] 0.0
        %2795 = vst [vmem:[#allocation2 + $0x5f0] sm:$0x3f] 0.0
        %2796 = vst [vmem:[#allocation2 + $0x5f8] sm:$0x3f] 0.0
        %2797 = vst [vmem:[#allocation2 + $0x600] sm:$0xff] 0.0
        %2798 = vst [vmem:[#allocation2 + $0x608] sm:$0xff] 0.0
        %2799 = vst [vmem:[#allocation2 + $0x610] sm:$0xff] 0.0
        %2800 = vst [vmem:[#allocation2 + $0x618] sm:$0xff] 0.0
        %2801 = vst [vmem:[#allocation2 + $0x620] sm:$0xff] 0.0
        %2802 = vst [vmem:[#allocation2 + $0x628] sm:$0xff] 0.0
        %2803 = vst [vmem:[#allocation2 + $0x630] sm:$0xff] 0.0
        %2804 = vst [vmem:[#allocation2 + $0x638] sm:$0xff] 0.0
        %2805 = vst [vmem:[#allocation2 + $0x640] sm:$0x3f] 0.0
        %2806 = vst [vmem:[#allocation2 + $0x648] sm:$0x3f] 0.0
        %2807 = vst [vmem:[#allocation2 + $0x650] sm:$0x3f] 0.0
        %2808 = vst [vmem:[#allocation2 + $0x658] sm:$0x3f] 0.0
        %2809 = vst [vmem:[#allocation2 + $0x660] sm:$0xff] 0.0
        %2810 = vst [vmem:[#allocation2 + $0x668] sm:$0xff] 0.0
        %2811 = vst [vmem:[#allocation2 + $0x670] sm:$0xff] 0.0
        %2812 = vst [vmem:[#allocation2 + $0x678] sm:$0xff] 0.0
        %2813 = vst [vmem:[#allocation2 + $0x680] sm:$0xff] 0.0
        %2814 = vst [vmem:[#allocation2 + $0x688] sm:$0xff] 0.0
        %2815 = vst [vmem:[#allocation2 + $0x690] sm:$0xff] 0.0
        %2816 = vst [vmem:[#allocation2 + $0x698] sm:$0xff] 0.0
        %2817 = vst [vmem:[#allocation2 + $0x6a0] sm:$0x3f] 0.0
        %2818 = vst [vmem:[#allocation2 + $0x6a8] sm:$0x3f] 0.0
        %2819 = vst [vmem:[#allocation2 + $0x6b0] sm:$0x3f] 0.0
        %2820 = vst [vmem:[#allocation2 + $0x6b8] sm:$0x3f] 0.0
        %2821 = vst [vmem:[#allocation2 + $0x6c0] sm:$0xff] 0.0
        %2822 = vst [vmem:[#allocation2 + $0x6c8] sm:$0xff] 0.0
        %2823 = vst [vmem:[#allocation2 + $0x6d0] sm:$0xff] 0.0
        %2824 = vst [vmem:[#allocation2 + $0x6d8] sm:$0xff] 0.0
        %2825 = vst [vmem:[#allocation2 + $0x6e0] sm:$0xff] 0.0
        %2826 = vst [vmem:[#allocation2 + $0x6e8] sm:$0xff] 0.0
        %2827 = vst [vmem:[#allocation2 + $0x6f0] sm:$0xff] 0.0
        %2828 = vst [vmem:[#allocation2 + $0x6f8] sm:$0xff] 0.0
        %2829 = vst [vmem:[#allocation2 + $0x700] sm:$0x3f] 0.0
        %2830 = vst [vmem:[#allocation2 + $0x708] sm:$0x3f] 0.0
        %2831 = vst [vmem:[#allocation2 + $0x710] sm:$0x3f] 0.0
        %2832 = vst [vmem:[#allocation2 + $0x718] sm:$0x3f] 0.0
        %2833 = vst [vmem:[#allocation2 + $0x720] sm:$0xff] 0.0
        %2834 = vst [vmem:[#allocation2 + $0x728] sm:$0xff] 0.0
        %2835 = vst [vmem:[#allocation2 + $0x730] sm:$0xff] 0.0
        %2836 = vst [vmem:[#allocation2 + $0x738] sm:$0xff] 0.0
        %2837 = vst [vmem:[#allocation2 + $0x740] sm:$0xff] 0.0
        %2838 = vst [vmem:[#allocation2 + $0x748] sm:$0xff] 0.0
        %2839 = vst [vmem:[#allocation2 + $0x750] sm:$0xff] 0.0
        %2840 = vst [vmem:[#allocation2 + $0x758] sm:$0xff] 0.0
        %2841 = vst [vmem:[#allocation2 + $0x760] sm:$0x3f] 0.0
        %2842 = vst [vmem:[#allocation2 + $0x768] sm:$0x3f] 0.0
        %2843 = vst [vmem:[#allocation2 + $0x770] sm:$0x3f] 0.0
        %2844 = vst [vmem:[#allocation2 + $0x778] sm:$0x3f] 0.0
        %s2845 = scalar_lea.vmem [#allocation2], 576
        %2846 = vst [vmem:[%s2845 + $0x20] sm:$0xff] %v639
        %2847 = vst [vmem:[%s2845 + $0x28] sm:$0xff] %v640
        %2848 = vst [vmem:[%s2845 + $0x30] sm:$0xff] %v641
        %2849 = vst [vmem:[%s2845 + $0x38] sm:$0xff] %v642
        %2850 = vst [vmem:[%s2845 + $0x80] sm:$0xff] %v643
        %2851 = vst [vmem:[%s2845 + $0x88] sm:$0xff] %v644
        %2852 = vst [vmem:[%s2845 + $0x90] sm:$0xff] %v645
        %2853 = vst [vmem:[%s2845 + $0x98] sm:$0xff] %v646
        %2854 = vst [vmem:[%s2845 + $0xe0] sm:$0xff] %v647
        %2855 = vst [vmem:[%s2845 + $0xe8] sm:$0xff] %v648
        %2856 = vst [vmem:[%s2845 + $0xf0] sm:$0xff] %v649
        %2857 = vst [vmem:[%s2845 + $0xf8] sm:$0xff] %v650
        %2858 = vst [vmem:[%s2845 + $0x140] sm:$0xff] %v651
        %2859 = vst [vmem:[%s2845 + $0x148] sm:$0xff] %v652
        %2860 = vst [vmem:[%s2845 + $0x150] sm:$0xff] %v653
        %2861 = vst [vmem:[%s2845 + $0x158] sm:$0xff] %v654
        %2862 = vst [vmem:[%s2845 + $0x1a0] sm:$0xff] %v655
        %2863 = vst [vmem:[%s2845 + $0x1a8] sm:$0xff] %v656
        %2864 = vst [vmem:[%s2845 + $0x1b0] sm:$0xff] %v657
        %2865 = vst [vmem:[%s2845 + $0x1b8] sm:$0xff] %v658
        %2866 = vst [vmem:[%s2845 + $0x200] sm:$0xff] %v659
        %2867 = vst [vmem:[%s2845 + $0x208] sm:$0xff] %v660
        %2868 = vst [vmem:[%s2845 + $0x210] sm:$0xff] %v661
        %2869 = vst [vmem:[%s2845 + $0x218] sm:$0xff] %v662
        %2870 = vst [vmem:[%s2845 + $0x260] sm:$0xff] %v663
        %2871 = vst [vmem:[%s2845 + $0x268] sm:$0xff] %v664
        %2872 = vst [vmem:[%s2845 + $0x270] sm:$0xff] %v665
        %2873 = vst [vmem:[%s2845 + $0x278] sm:$0xff] %v666
        %2874 = vst [vmem:[%s2845 + $0x2c0] sm:$0xff] %v667
        %2875 = vst [vmem:[%s2845 + $0x2c8] sm:$0xff] %v668
        %2876 = vst [vmem:[%s2845 + $0x2d0] sm:$0xff] %v669
        %2877 = vst [vmem:[%s2845 + $0x2d8] sm:$0xff] %v670
        %v2878 = vld [vmem:[#allocation2] sm:$0xfc]
        %v2879 = vld [vmem:[#allocation2 + $0x8] sm:$0xfc]
        %v2880 = vld [vmem:[#allocation2 + $0x10] sm:$0xfc]
        %v2881 = vld [vmem:[#allocation2 + $0x18] sm:$0xfc]
        %v2882 = vld [vmem:[#allocation2 + $0x20] sm:$0x3]
        %v2883 = vld [vmem:[#allocation2 + $0x28] sm:$0x3]
        %v2884 = vld [vmem:[#allocation2 + $0x30] sm:$0x3]
        %v2885 = vld [vmem:[#allocation2 + $0x38] sm:$0x3]
        %v2886 = vld [vmem:[#allocation2 + $0x60] sm:$0xfc]
        %v2887 = vld [vmem:[#allocation2 + $0x68] sm:$0xfc]
        %v2888 = vld [vmem:[#allocation2 + $0x70] sm:$0xfc]
        %v2889 = vld [vmem:[#allocation2 + $0x78] sm:$0xfc]
        %v2890 = vld [vmem:[#allocation2 + $0x80] sm:$0x3]
        %v2891 = vld [vmem:[#allocation2 + $0x88] sm:$0x3]
        %v2892 = vld [vmem:[#allocation2 + $0x90] sm:$0x3]
        %v2893 = vld [vmem:[#allocation2 + $0x98] sm:$0x3]
        %v2894 = vld [vmem:[#allocation2 + $0xc0] sm:$0xfc]
        %v2895 = vld [vmem:[#allocation2 + $0xc8] sm:$0xfc]
        %v2896 = vld [vmem:[#allocation2 + $0xd0] sm:$0xfc]
        %v2897 = vld [vmem:[#allocation2 + $0xd8] sm:$0xfc]
        %v2898 = vld [vmem:[#allocation2 + $0xe0] sm:$0x3]
        %v2899 = vld [vmem:[#allocation2 + $0xe8] sm:$0x3]
        %v2900 = vld [vmem:[#allocation2 + $0xf0] sm:$0x3]
        %v2901 = vld [vmem:[#allocation2 + $0xf8] sm:$0x3]
        %v2902 = vld [vmem:[#allocation2 + $0x120] sm:$0xfc]
        %v2903 = vld [vmem:[#allocation2 + $0x128] sm:$0xfc]
        %v2904 = vld [vmem:[#allocation2 + $0x130] sm:$0xfc]
        %v2905 = vld [vmem:[#allocation2 + $0x138] sm:$0xfc]
        %v2906 = vld [vmem:[#allocation2 + $0x140] sm:$0x3]
        %v2907 = vld [vmem:[#allocation2 + $0x148] sm:$0x3]
        %v2908 = vld [vmem:[#allocation2 + $0x150] sm:$0x3]
        %v2909 = vld [vmem:[#allocation2 + $0x158] sm:$0x3]
        %v2910 = vld [vmem:[#allocation2 + $0x180] sm:$0xfc]
        %v2911 = vld [vmem:[#allocation2 + $0x188] sm:$0xfc]
        %v2912 = vld [vmem:[#allocation2 + $0x190] sm:$0xfc]
        %v2913 = vld [vmem:[#allocation2 + $0x198] sm:$0xfc]
        %v2914 = vld [vmem:[#allocation2 + $0x1a0] sm:$0x3]
        %v2915 = vld [vmem:[#allocation2 + $0x1a8] sm:$0x3]
        %v2916 = vld [vmem:[#allocation2 + $0x1b0] sm:$0x3]
        %v2917 = vld [vmem:[#allocation2 + $0x1b8] sm:$0x3]
        %v2918 = vld [vmem:[#allocation2 + $0x1e0] sm:$0xfc]
        %v2919 = vld [vmem:[#allocation2 + $0x1e8] sm:$0xfc]
        %v2920 = vld [vmem:[#allocation2 + $0x1f0] sm:$0xfc]
        %v2921 = vld [vmem:[#allocation2 + $0x1f8] sm:$0xfc]
        %v2922 = vld [vmem:[#allocation2 + $0x200] sm:$0x3]
        %v2923 = vld [vmem:[#allocation2 + $0x208] sm:$0x3]
        %v2924 = vld [vmem:[#allocation2 + $0x210] sm:$0x3]
        %v2925 = vld [vmem:[#allocation2 + $0x218] sm:$0x3]
        %v2926 = vld [vmem:[#allocation2 + $0x240] sm:$0xfc]
        %v2927 = vld [vmem:[#allocation2 + $0x248] sm:$0xfc]
        %v2928 = vld [vmem:[#allocation2 + $0x250] sm:$0xfc]
        %v2929 = vld [vmem:[#allocation2 + $0x258] sm:$0xfc]
        %v2930 = vld [vmem:[#allocation2 + $0x260] sm:$0x3]
        %v2931 = vld [vmem:[#allocation2 + $0x268] sm:$0x3]
        %v2932 = vld [vmem:[#allocation2 + $0x270] sm:$0x3]
        %v2933 = vld [vmem:[#allocation2 + $0x278] sm:$0x3]
        %v2934 = vld [vmem:[#allocation2 + $0x2a0] sm:$0xfc]
        %v2935 = vld [vmem:[#allocation2 + $0x2a8] sm:$0xfc]
        %v2936 = vld [vmem:[#allocation2 + $0x2b0] sm:$0xfc]
        %v2937 = vld [vmem:[#allocation2 + $0x2b8] sm:$0xfc]
        %v2938 = vld [vmem:[#allocation2 + $0x2c0] sm:$0x3]
        %v2939 = vld [vmem:[#allocation2 + $0x2c8] sm:$0x3]
        %v2940 = vld [vmem:[#allocation2 + $0x2d0] sm:$0x3]
        %v2941 = vld [vmem:[#allocation2 + $0x2d8] sm:$0x3]
        %vm3006 = vcmask 1045504
        %v3007 = vrot.slane %v2878, 2
        %v3008 = vrot.slane %v2882, 2
        %v3009 = vsel %vm3006, %v3007, %v3008
        %v3010 = vrot.slane %v2879, 2
        %v3011 = vrot.slane %v2883, 2
        %v3012 = vsel %vm3006, %v3010, %v3011
        %v3013 = vrot.slane %v2880, 2
        %v3014 = vrot.slane %v2884, 2
        %v3015 = vsel %vm3006, %v3013, %v3014
        %v3016 = vrot.slane %v2881, 2
        %v3017 = vrot.slane %v2885, 2
        %v3018 = vsel %vm3006, %v3016, %v3017
        %v3019 = vrot.slane %v2886, 2
        %v3020 = vrot.slane %v2890, 2
        %v3021 = vsel %vm3006, %v3019, %v3020
        %v3022 = vrot.slane %v2887, 2
        %v3023 = vrot.slane %v2891, 2
        %v3024 = vsel %vm3006, %v3022, %v3023
        %v3025 = vrot.slane %v2888, 2
        %v3026 = vrot.slane %v2892, 2
        %v3027 = vsel %vm3006, %v3025, %v3026
        %v3028 = vrot.slane %v2889, 2
        %v3029 = vrot.slane %v2893, 2
        %v3030 = vsel %vm3006, %v3028, %v3029
        %v3031 = vrot.slane %v2894, 2
        %v3032 = vrot.slane %v2898, 2
        %v3033 = vsel %vm3006, %v3031, %v3032
        %v3034 = vrot.slane %v2895, 2
        %v3035 = vrot.slane %v2899, 2
        %v3036 = vsel %vm3006, %v3034, %v3035
        %v3037 = vrot.slane %v2896, 2
        %v3038 = vrot.slane %v2900, 2
        %v3039 = vsel %vm3006, %v3037, %v3038
        %v3040 = vrot.slane %v2897, 2
        %v3041 = vrot.slane %v2901, 2
        %v3042 = vsel %vm3006, %v3040, %v3041
        %v3043 = vrot.slane %v2902, 2
        %v3044 = vrot.slane %v2906, 2
        %v3045 = vsel %vm3006, %v3043, %v3044
        %v3046 = vrot.slane %v2903, 2
        %v3047 = vrot.slane %v2907, 2
        %v3048 = vsel %vm3006, %v3046, %v3047
        %v3049 = vrot.slane %v2904, 2
        %v3050 = vrot.slane %v2908, 2
        %v3051 = vsel %vm3006, %v3049, %v3050
        %v3052 = vrot.slane %v2905, 2
        %v3053 = vrot.slane %v2909, 2
        %v3054 = vsel %vm3006, %v3052, %v3053
        %v3055 = vrot.slane %v2910, 2
        %v3056 = vrot.slane %v2914, 2
        %v3057 = vsel %vm3006, %v3055, %v3056
        %v3058 = vrot.slane %v2911, 2
        %v3059 = vrot.slane %v2915, 2
        %v3060 = vsel %vm3006, %v3058, %v3059
        %v3061 = vrot.slane %v2912, 2
        %v3062 = vrot.slane %v2916, 2
        %v3063 = vsel %vm3006, %v3061, %v3062
        %v3064 = vrot.slane %v2913, 2
        %v3065 = vrot.slane %v2917, 2
        %v3066 = vsel %vm3006, %v3064, %v3065
        %v3067 = vrot.slane %v2918, 2
        %v3068 = vrot.slane %v2922, 2
        %v3069 = vsel %vm3006, %v3067, %v3068
        %v3070 = vrot.slane %v2919, 2
        %v3071 = vrot.slane %v2923, 2
        %v3072 = vsel %vm3006, %v3070, %v3071
        %v3073 = vrot.slane %v2920, 2
        %v3074 = vrot.slane %v2924, 2
        %v3075 = vsel %vm3006, %v3073, %v3074
        %v3076 = vrot.slane %v2921, 2
        %v3077 = vrot.slane %v2925, 2
        %v3078 = vsel %vm3006, %v3076, %v3077
        %v3079 = vrot.slane %v2926, 2
        %v3080 = vrot.slane %v2930, 2
        %v3081 = vsel %vm3006, %v3079, %v3080
        %v3082 = vrot.slane %v2927, 2
        %v3083 = vrot.slane %v2931, 2
        %v3084 = vsel %vm3006, %v3082, %v3083
        %v3085 = vrot.slane %v2928, 2
        %v3086 = vrot.slane %v2932, 2
        %v3087 = vsel %vm3006, %v3085, %v3086
        %v3088 = vrot.slane %v2929, 2
        %v3089 = vrot.slane %v2933, 2
        %v3090 = vsel %vm3006, %v3088, %v3089
        %v3091 = vrot.slane %v2934, 2
        %v3092 = vrot.slane %v2938, 2
        %v3093 = vsel %vm3006, %v3091, %v3092
        %v3094 = vrot.slane %v2935, 2
        %v3095 = vrot.slane %v2939, 2
        %v3096 = vsel %vm3006, %v3094, %v3095
        %v3097 = vrot.slane %v2936, 2
        %v3098 = vrot.slane %v2940, 2
        %v3099 = vsel %vm3006, %v3097, %v3098
        %v3100 = vrot.slane %v2937, 2
        %v3101 = vrot.slane %v2941, 2
        %v3102 = vsel %vm3006, %v3100, %v3101
        %v3135 = vpack.c.bf16 %v3021, %v3009
        %v3136 = vpack.c.bf16 %v3024, %v3012
        %v3137 = vpack.c.bf16 %v3027, %v3015
        %v3138 = vpack.c.bf16 %v3030, %v3018
        %v3139 = vpack.c.bf16 %v3045, %v3033
        %v3140 = vpack.c.bf16 %v3048, %v3036
        %v3141 = vpack.c.bf16 %v3051, %v3039
        %v3142 = vpack.c.bf16 %v3054, %v3042
        %v3143 = vpack.c.bf16 %v3069, %v3057
        %v3144 = vpack.c.bf16 %v3072, %v3060
        %v3145 = vpack.c.bf16 %v3075, %v3063
        %v3146 = vpack.c.bf16 %v3078, %v3066
        %v3147 = vpack.c.bf16 %v3093, %v3081
        %v3148 = vpack.c.bf16 %v3096, %v3084
        %v3149 = vpack.c.bf16 %v3099, %v3087
        %v3150 = vpack.c.bf16 %v3102, %v3090
        %v3151 = vld [vmem:[#allocation7] sm:$0xff]
        %v3152 = vld [vmem:[#allocation7 + $0x8] sm:$0xff]
        %v3153 = vld [vmem:[#allocation7 + $0x10] sm:$0xff]
        %v3154 = vld [vmem:[#allocation7 + $0x18] sm:$0xff]
        %v3155 = vld [vmem:[#allocation7 + $0x20] sm:$0xff]
        %v3156 = vld [vmem:[#allocation7 + $0x28] sm:$0xff]
        %v3157 = vld [vmem:[#allocation7 + $0x30] sm:$0xff]
        %v3158 = vld [vmem:[#allocation7 + $0x38] sm:$0xff]
        %v3159 = vld [vmem:[#allocation7 + $0x40] sm:$0xff]
        %v3160 = vld [vmem:[#allocation7 + $0x48] sm:$0xff]
        %v3161 = vld [vmem:[#allocation7 + $0x50] sm:$0xff]
        %v3162 = vld [vmem:[#allocation7 + $0x58] sm:$0xff]
        %v3163 = vld [vmem:[#allocation7 + $0x60] sm:$0xff]
        %v3164 = vld [vmem:[#allocation7 + $0x68] sm:$0xff]
        %v3165 = vld [vmem:[#allocation7 + $0x70] sm:$0xff]
        %v3166 = vld [vmem:[#allocation7 + $0x78] sm:$0xff]
        %v3167 = vld [vmem:[#allocation7 + $0x80] sm:$0xff]
        %v3168 = vld [vmem:[#allocation7 + $0x88] sm:$0xff]
        %v3169 = vld [vmem:[#allocation7 + $0x90] sm:$0xff]
        %v3170 = vld [vmem:[#allocation7 + $0x98] sm:$0xff]
        %v3171 = vld [vmem:[#allocation7 + $0xa0] sm:$0xff]
        %v3172 = vld [vmem:[#allocation7 + $0xa8] sm:$0xff]
        %v3173 = vld [vmem:[#allocation7 + $0xb0] sm:$0xff]
        %v3174 = vld [vmem:[#allocation7 + $0xb8] sm:$0xff]
        %v3175 = vld [vmem:[#allocation7 + $0xc0] sm:$0xff]
        %v3176 = vld [vmem:[#allocation7 + $0xc8] sm:$0xff]
        %v3177 = vld [vmem:[#allocation7 + $0xd0] sm:$0xff]
        %v3178 = vld [vmem:[#allocation7 + $0xd8] sm:$0xff]
        %v3179 = vld [vmem:[#allocation7 + $0xe0] sm:$0xff]
        %v3180 = vld [vmem:[#allocation7 + $0xe8] sm:$0xff]
        %v3181 = vld [vmem:[#allocation7 + $0xf0] sm:$0xff]
        %v3182 = vld [vmem:[#allocation7 + $0xf8] sm:$0xff]
        %v3183 = vld [vmem:[#allocation7 + $0x100] sm:$0xff]
        %v3184 = vld [vmem:[#allocation7 + $0x108] sm:$0xff]
        %v3185 = vld [vmem:[#allocation7 + $0x110] sm:$0xff]
        %v3186 = vld [vmem:[#allocation7 + $0x118] sm:$0xff]
        %v3187 = vld [vmem:[#allocation7 + $0x120] sm:$0xff]
        %v3188 = vld [vmem:[#allocation7 + $0x128] sm:$0xff]
        %v3189 = vld [vmem:[#allocation7 + $0x130] sm:$0xff]
        %v3190 = vld [vmem:[#allocation7 + $0x138] sm:$0xff]
        %v3191 = vld [vmem:[#allocation7 + $0x140] sm:$0xff]
        %v3192 = vld [vmem:[#allocation7 + $0x148] sm:$0xff]
        %v3193 = vld [vmem:[#allocation7 + $0x150] sm:$0xff]
        %v3194 = vld [vmem:[#allocation7 + $0x158] sm:$0xff]
        %v3195 = vld [vmem:[#allocation7 + $0x160] sm:$0xff]
        %v3196 = vld [vmem:[#allocation7 + $0x168] sm:$0xff]
        %v3197 = vld [vmem:[#allocation7 + $0x170] sm:$0xff]
        %v3198 = vld [vmem:[#allocation7 + $0x178] sm:$0xff]
        %v3199 = vld [vmem:[#allocation7 + $0x180] sm:$0xff]
        %v3200 = vld [vmem:[#allocation7 + $0x188] sm:$0xff]
        %v3201 = vld [vmem:[#allocation7 + $0x190] sm:$0xff]
        %v3202 = vld [vmem:[#allocation7 + $0x198] sm:$0xff]
        %v3203 = vld [vmem:[#allocation7 + $0x1a0] sm:$0xff]
        %v3204 = vld [vmem:[#allocation7 + $0x1a8] sm:$0xff]
        %v3205 = vld [vmem:[#allocation7 + $0x1b0] sm:$0xff]
        %v3206 = vld [vmem:[#allocation7 + $0x1b8] sm:$0xff]
        %v3207 = vld [vmem:[#allocation7 + $0x1c0] sm:$0xff]
        %v3208 = vld [vmem:[#allocation7 + $0x1c8] sm:$0xff]
        %v3209 = vld [vmem:[#allocation7 + $0x1d0] sm:$0xff]
        %v3210 = vld [vmem:[#allocation7 + $0x1d8] sm:$0xff]
        %v3211 = vld [vmem:[#allocation7 + $0x1e0] sm:$0xff]
        %v3212 = vld [vmem:[#allocation7 + $0x1e8] sm:$0xff]
        %v3213 = vld [vmem:[#allocation7 + $0x1f0] sm:$0xff]
        %v3214 = vld [vmem:[#allocation7 + $0x1f8] sm:$0xff]
        %v3215 = vld [vmem:[#allocation2 + $0x20] sm:$0xff]
        %v3216 = vld [vmem:[#allocation2 + $0x28] sm:$0xff]
        %v3217 = vld [vmem:[#allocation2 + $0x30] sm:$0xff]
        %v3218 = vld [vmem:[#allocation2 + $0x38] sm:$0xff]
        %v3219 = vld [vmem:[#allocation2 + $0x80] sm:$0xff]
        %v3220 = vld [vmem:[#allocation2 + $0x88] sm:$0xff]
        %v3221 = vld [vmem:[#allocation2 + $0x90] sm:$0xff]
        %v3222 = vld [vmem:[#allocation2 + $0x98] sm:$0xff]
        %v3223 = vld [vmem:[#allocation2 + $0xe0] sm:$0xff]
        %v3224 = vld [vmem:[#allocation2 + $0xe8] sm:$0xff]
        %v3225 = vld [vmem:[#allocation2 + $0xf0] sm:$0xff]
        %v3226 = vld [vmem:[#allocation2 + $0xf8] sm:$0xff]
        %v3227 = vld [vmem:[#allocation2 + $0x140] sm:$0xff]
        %v3228 = vld [vmem:[#allocation2 + $0x148] sm:$0xff]
        %v3229 = vld [vmem:[#allocation2 + $0x150] sm:$0xff]
        %v3230 = vld [vmem:[#allocation2 + $0x158] sm:$0xff]
        %v3231 = vld [vmem:[#allocation2 + $0x1a0] sm:$0xff]
        %v3232 = vld [vmem:[#allocation2 + $0x1a8] sm:$0xff]
        %v3233 = vld [vmem:[#allocation2 + $0x1b0] sm:$0xff]
        %v3234 = vld [vmem:[#allocation2 + $0x1b8] sm:$0xff]
        %v3235 = vld [vmem:[#allocation2 + $0x200] sm:$0xff]
        %v3236 = vld [vmem:[#allocation2 + $0x208] sm:$0xff]
        %v3237 = vld [vmem:[#allocation2 + $0x210] sm:$0xff]
        %v3238 = vld [vmem:[#allocation2 + $0x218] sm:$0xff]
        %v3239 = vld [vmem:[#allocation2 + $0x260] sm:$0xff]
        %v3240 = vld [vmem:[#allocation2 + $0x268] sm:$0xff]
        %v3241 = vld [vmem:[#allocation2 + $0x270] sm:$0xff]
        %v3242 = vld [vmem:[#allocation2 + $0x278] sm:$0xff]
        %v3243 = vld [vmem:[#allocation2 + $0x2c0] sm:$0xff]
        %v3244 = vld [vmem:[#allocation2 + $0x2c8] sm:$0xff]
        %v3245 = vld [vmem:[#allocation2 + $0x2d0] sm:$0xff]
        %v3246 = vld [vmem:[#allocation2 + $0x2d8] sm:$0xff]
        %v3247 = vpack.c.bf16 %v3219, %v3215
        %v3248 = vpack.c.bf16 %v3220, %v3216
        %v3249 = vpack.c.bf16 %v3221, %v3217
        %v3250 = vpack.c.bf16 %v3222, %v3218
        %v3251 = vpack.c.bf16 %v3227, %v3223
        %v3252 = vpack.c.bf16 %v3228, %v3224
        %v3253 = vpack.c.bf16 %v3229, %v3225
        %v3254 = vpack.c.bf16 %v3230, %v3226
        %v3255 = vpack.c.bf16 %v3235, %v3231
        %v3256 = vpack.c.bf16 %v3236, %v3232
        %v3257 = vpack.c.bf16 %v3237, %v3233
        %v3258 = vpack.c.bf16 %v3238, %v3234
        %v3259 = vpack.c.bf16 %v3243, %v3239
        %v3260 = vpack.c.bf16 %v3244, %v3240
        %v3261 = vpack.c.bf16 %v3245, %v3241
        %v3262 = vpack.c.bf16 %v3246, %v3242
        %s3263 = scalar_lea.vmem [#allocation7], 512
        %v3264 = vld [vmem:[%s3263] sm:$0xff]
        %v3265 = vld [vmem:[%s3263 + $0x8] sm:$0xff]
        %v3266 = vld [vmem:[%s3263 + $0x10] sm:$0xff]
        %v3267 = vld [vmem:[%s3263 + $0x18] sm:$0xff]
        %v3268 = vld [vmem:[%s3263 + $0x20] sm:$0xff]
        %v3269 = vld [vmem:[%s3263 + $0x28] sm:$0xff]
        %v3270 = vld [vmem:[%s3263 + $0x30] sm:$0xff]
        %v3271 = vld [vmem:[%s3263 + $0x38] sm:$0xff]
        %v3272 = vld [vmem:[%s3263 + $0x40] sm:$0xff]
        %v3273 = vld [vmem:[%s3263 + $0x48] sm:$0xff]
        %v3274 = vld [vmem:[%s3263 + $0x50] sm:$0xff]
        %v3275 = vld [vmem:[%s3263 + $0x58] sm:$0xff]
        %v3276 = vld [vmem:[%s3263 + $0x60] sm:$0xff]
        %v3277 = vld [vmem:[%s3263 + $0x68] sm:$0xff]
        %v3278 = vld [vmem:[%s3263 + $0x70] sm:$0xff]
        %v3279 = vld [vmem:[%s3263 + $0x78] sm:$0xff]
        %v3280 = vld [vmem:[%s3263 + $0x80] sm:$0xff]
        %v3281 = vld [vmem:[%s3263 + $0x88] sm:$0xff]
        %v3282 = vld [vmem:[%s3263 + $0x90] sm:$0xff]
        %v3283 = vld [vmem:[%s3263 + $0x98] sm:$0xff]
        %v3284 = vld [vmem:[%s3263 + $0xa0] sm:$0xff]
        %v3285 = vld [vmem:[%s3263 + $0xa8] sm:$0xff]
        %v3286 = vld [vmem:[%s3263 + $0xb0] sm:$0xff]
        %v3287 = vld [vmem:[%s3263 + $0xb8] sm:$0xff]
        %v3288 = vld [vmem:[%s3263 + $0xc0] sm:$0xff]
        %v3289 = vld [vmem:[%s3263 + $0xc8] sm:$0xff]
        %v3290 = vld [vmem:[%s3263 + $0xd0] sm:$0xff]
        %v3291 = vld [vmem:[%s3263 + $0xd8] sm:$0xff]
        %v3292 = vld [vmem:[%s3263 + $0xe0] sm:$0xff]
        %v3293 = vld [vmem:[%s3263 + $0xe8] sm:$0xff]
        %v3294 = vld [vmem:[%s3263 + $0xf0] sm:$0xff]
        %v3295 = vld [vmem:[%s3263 + $0xf8] sm:$0xff]
        %v3296 = vld [vmem:[%s3263 + $0x100] sm:$0xff]
        %v3297 = vld [vmem:[%s3263 + $0x108] sm:$0xff]
        %v3298 = vld [vmem:[%s3263 + $0x110] sm:$0xff]
        %v3299 = vld [vmem:[%s3263 + $0x118] sm:$0xff]
        %v3300 = vld [vmem:[%s3263 + $0x120] sm:$0xff]
        %v3301 = vld [vmem:[%s3263 + $0x128] sm:$0xff]
        %v3302 = vld [vmem:[%s3263 + $0x130] sm:$0xff]
        %v3303 = vld [vmem:[%s3263 + $0x138] sm:$0xff]
        %v3304 = vld [vmem:[%s3263 + $0x140] sm:$0xff]
        %v3305 = vld [vmem:[%s3263 + $0x148] sm:$0xff]
        %v3306 = vld [vmem:[%s3263 + $0x150] sm:$0xff]
        %v3307 = vld [vmem:[%s3263 + $0x158] sm:$0xff]
        %v3308 = vld [vmem:[%s3263 + $0x160] sm:$0xff]
        %v3309 = vld [vmem:[%s3263 + $0x168] sm:$0xff]
        %v3310 = vld [vmem:[%s3263 + $0x170] sm:$0xff]
        %v3311 = vld [vmem:[%s3263 + $0x178] sm:$0xff]
        %v3312 = vld [vmem:[%s3263 + $0x180] sm:$0xff]
        %v3313 = vld [vmem:[%s3263 + $0x188] sm:$0xff]
        %v3314 = vld [vmem:[%s3263 + $0x190] sm:$0xff]
        %v3315 = vld [vmem:[%s3263 + $0x198] sm:$0xff]
        %v3316 = vld [vmem:[%s3263 + $0x1a0] sm:$0xff]
        %v3317 = vld [vmem:[%s3263 + $0x1a8] sm:$0xff]
        %v3318 = vld [vmem:[%s3263 + $0x1b0] sm:$0xff]
        %v3319 = vld [vmem:[%s3263 + $0x1b8] sm:$0xff]
        %v3320 = vld [vmem:[%s3263 + $0x1c0] sm:$0xff]
        %v3321 = vld [vmem:[%s3263 + $0x1c8] sm:$0xff]
        %v3322 = vld [vmem:[%s3263 + $0x1d0] sm:$0xff]
        %v3323 = vld [vmem:[%s3263 + $0x1d8] sm:$0xff]
        %v3324 = vld [vmem:[%s3263 + $0x1e0] sm:$0xff]
        %v3325 = vld [vmem:[%s3263 + $0x1e8] sm:$0xff]
        %v3326 = vld [vmem:[%s3263 + $0x1f0] sm:$0xff]
        %v3327 = vld [vmem:[%s3263 + $0x1f8] sm:$0xff]
        %v3392 = vunpack.c.l.b16 %v3264
        %v3393 = vunpack.c.h.b16 %v3264
        %v3394 = vunpack.c.l.b16 %v3265
        %v3395 = vunpack.c.h.b16 %v3265
        %v3396 = vunpack.c.l.b16 %v3266
        %v3397 = vunpack.c.h.b16 %v3266
        %v3398 = vunpack.c.l.b16 %v3267
        %v3399 = vunpack.c.h.b16 %v3267
        %v3400 = vunpack.c.l.b16 %v3268
        %v3401 = vunpack.c.h.b16 %v3268
        %v3402 = vunpack.c.l.b16 %v3269
        %v3403 = vunpack.c.h.b16 %v3269
        %v3404 = vunpack.c.l.b16 %v3270
        %v3405 = vunpack.c.h.b16 %v3270
        %v3406 = vunpack.c.l.b16 %v3271
        %v3407 = vunpack.c.h.b16 %v3271
        %v3408 = vunpack.c.l.b16 %v3272
        %v3409 = vunpack.c.h.b16 %v3272
        %v3410 = vunpack.c.l.b16 %v3273
        %v3411 = vunpack.c.h.b16 %v3273
        %v3412 = vunpack.c.l.b16 %v3274
        %v3413 = vunpack.c.h.b16 %v3274
        %v3414 = vunpack.c.l.b16 %v3275
        %v3415 = vunpack.c.h.b16 %v3275
        %v3416 = vunpack.c.l.b16 %v3276
        %v3417 = vunpack.c.h.b16 %v3276
        %v3418 = vunpack.c.l.b16 %v3277
        %v3419 = vunpack.c.h.b16 %v3277
        %v3420 = vunpack.c.l.b16 %v3278
        %v3421 = vunpack.c.h.b16 %v3278
        %v3422 = vunpack.c.l.b16 %v3279
        %v3423 = vunpack.c.h.b16 %v3279
        %v3424 = vunpack.c.l.b16 %v3280
        %v3425 = vunpack.c.h.b16 %v3280
        %v3426 = vunpack.c.l.b16 %v3281
        %v3427 = vunpack.c.h.b16 %v3281
        %v3428 = vunpack.c.l.b16 %v3282
        %v3429 = vunpack.c.h.b16 %v3282
        %v3430 = vunpack.c.l.b16 %v3283
        %v3431 = vunpack.c.h.b16 %v3283
        %v3432 = vunpack.c.l.b16 %v3284
        %v3433 = vunpack.c.h.b16 %v3284
        %v3434 = vunpack.c.l.b16 %v3285
        %v3435 = vunpack.c.h.b16 %v3285
        %v3436 = vunpack.c.l.b16 %v3286
        %v3437 = vunpack.c.h.b16 %v3286
        %v3438 = vunpack.c.l.b16 %v3287
        %v3439 = vunpack.c.h.b16 %v3287
        %v3440 = vunpack.c.l.b16 %v3288
        %v3441 = vunpack.c.h.b16 %v3288
        %v3442 = vunpack.c.l.b16 %v3289
        %v3443 = vunpack.c.h.b16 %v3289
        %v3444 = vunpack.c.l.b16 %v3290
        %v3445 = vunpack.c.h.b16 %v3290
        %v3446 = vunpack.c.l.b16 %v3291
        %v3447 = vunpack.c.h.b16 %v3291
        %v3448 = vunpack.c.l.b16 %v3292
        %v3449 = vunpack.c.h.b16 %v3292
        %v3450 = vunpack.c.l.b16 %v3293
        %v3451 = vunpack.c.h.b16 %v3293
        %v3452 = vunpack.c.l.b16 %v3294
        %v3453 = vunpack.c.h.b16 %v3294
        %v3454 = vunpack.c.l.b16 %v3295
        %v3455 = vunpack.c.h.b16 %v3295
        %v3456 = vunpack.c.l.b16 %v3296
        %v3457 = vunpack.c.h.b16 %v3296
        %v3458 = vunpack.c.l.b16 %v3297
        %v3459 = vunpack.c.h.b16 %v3297
        %v3460 = vunpack.c.l.b16 %v3298
        %v3461 = vunpack.c.h.b16 %v3298
        %v3462 = vunpack.c.l.b16 %v3299
        %v3463 = vunpack.c.h.b16 %v3299
        %v3464 = vunpack.c.l.b16 %v3300
        %v3465 = vunpack.c.h.b16 %v3300
        %v3466 = vunpack.c.l.b16 %v3301
        %v3467 = vunpack.c.h.b16 %v3301
        %v3468 = vunpack.c.l.b16 %v3302
        %v3469 = vunpack.c.h.b16 %v3302
        %v3470 = vunpack.c.l.b16 %v3303
        %v3471 = vunpack.c.h.b16 %v3303
        %v3472 = vunpack.c.l.b16 %v3304
        %v3473 = vunpack.c.h.b16 %v3304
        %v3474 = vunpack.c.l.b16 %v3305
        %v3475 = vunpack.c.h.b16 %v3305
        %v3476 = vunpack.c.l.b16 %v3306
        %v3477 = vunpack.c.h.b16 %v3306
        %v3478 = vunpack.c.l.b16 %v3307
        %v3479 = vunpack.c.h.b16 %v3307
        %v3480 = vunpack.c.l.b16 %v3308
        %v3481 = vunpack.c.h.b16 %v3308
        %v3482 = vunpack.c.l.b16 %v3309
        %v3483 = vunpack.c.h.b16 %v3309
        %v3484 = vunpack.c.l.b16 %v3310
        %v3485 = vunpack.c.h.b16 %v3310
        %v3486 = vunpack.c.l.b16 %v3311
        %v3487 = vunpack.c.h.b16 %v3311
        %v3488 = vunpack.c.l.b16 %v3312
        %v3489 = vunpack.c.h.b16 %v3312
        %v3490 = vunpack.c.l.b16 %v3313
        %v3491 = vunpack.c.h.b16 %v3313
        %v3492 = vunpack.c.l.b16 %v3314
        %v3493 = vunpack.c.h.b16 %v3314
        %v3494 = vunpack.c.l.b16 %v3315
        %v3495 = vunpack.c.h.b16 %v3315
        %v3496 = vunpack.c.l.b16 %v3316
        %v3497 = vunpack.c.h.b16 %v3316
        %v3498 = vunpack.c.l.b16 %v3317
        %v3499 = vunpack.c.h.b16 %v3317
        %v3500 = vunpack.c.l.b16 %v3318
        %v3501 = vunpack.c.h.b16 %v3318
        %v3502 = vunpack.c.l.b16 %v3319
        %v3503 = vunpack.c.h.b16 %v3319
        %v3504 = vunpack.c.l.b16 %v3320
        %v3505 = vunpack.c.h.b16 %v3320
        %v3506 = vunpack.c.l.b16 %v3321
        %v3507 = vunpack.c.h.b16 %v3321
        %v3508 = vunpack.c.l.b16 %v3322
        %v3509 = vunpack.c.h.b16 %v3322
        %v3510 = vunpack.c.l.b16 %v3323
        %v3511 = vunpack.c.h.b16 %v3323
        %v3512 = vunpack.c.l.b16 %v3324
        %v3513 = vunpack.c.h.b16 %v3324
        %v3514 = vunpack.c.l.b16 %v3325
        %v3515 = vunpack.c.h.b16 %v3325
        %v3516 = vunpack.c.l.b16 %v3326
        %v3517 = vunpack.c.h.b16 %v3326
        %v3518 = vunpack.c.l.b16 %v3327
        %v3519 = vunpack.c.h.b16 %v3327
        %v3520 = vpack.c.b16 %v3394, %v3392
        %v3521 = vpack.c.b16 %v3395, %v3393
        %v3522 = vpack.c.b16 %v3398, %v3396
        %v3523 = vpack.c.b16 %v3399, %v3397
        %v3524 = vpack.c.b16 %v3402, %v3400
        %v3525 = vpack.c.b16 %v3403, %v3401
        %v3526 = vpack.c.b16 %v3406, %v3404
        %v3527 = vpack.c.b16 %v3407, %v3405
        %v3528 = vpack.c.b16 %v3410, %v3408
        %v3529 = vpack.c.b16 %v3411, %v3409
        %v3530 = vpack.c.b16 %v3414, %v3412
        %v3531 = vpack.c.b16 %v3415, %v3413
        %v3532 = vpack.c.b16 %v3418, %v3416
        %v3533 = vpack.c.b16 %v3419, %v3417
        %v3534 = vpack.c.b16 %v3422, %v3420
        %v3535 = vpack.c.b16 %v3423, %v3421
        %v3536 = vpack.c.b16 %v3426, %v3424
        %v3537 = vpack.c.b16 %v3427, %v3425
        %v3538 = vpack.c.b16 %v3430, %v3428
        %v3539 = vpack.c.b16 %v3431, %v3429
        %v3540 = vpack.c.b16 %v3434, %v3432
        %v3541 = vpack.c.b16 %v3435, %v3433
        %v3542 = vpack.c.b16 %v3438, %v3436
        %v3543 = vpack.c.b16 %v3439, %v3437
        %v3544 = vpack.c.b16 %v3442, %v3440
        %v3545 = vpack.c.b16 %v3443, %v3441
        %v3546 = vpack.c.b16 %v3446, %v3444
        %v3547 = vpack.c.b16 %v3447, %v3445
        %v3548 = vpack.c.b16 %v3450, %v3448
        %v3549 = vpack.c.b16 %v3451, %v3449
        %v3550 = vpack.c.b16 %v3454, %v3452
        %v3551 = vpack.c.b16 %v3455, %v3453
        %v3552 = vpack.c.b16 %v3458, %v3456
        %v3553 = vpack.c.b16 %v3459, %v3457
        %v3554 = vpack.c.b16 %v3462, %v3460
        %v3555 = vpack.c.b16 %v3463, %v3461
        %v3556 = vpack.c.b16 %v3466, %v3464
        %v3557 = vpack.c.b16 %v3467, %v3465
        %v3558 = vpack.c.b16 %v3470, %v3468
        %v3559 = vpack.c.b16 %v3471, %v3469
        %v3560 = vpack.c.b16 %v3474, %v3472
        %v3561 = vpack.c.b16 %v3475, %v3473
        %v3562 = vpack.c.b16 %v3478, %v3476
        %v3563 = vpack.c.b16 %v3479, %v3477
        %v3564 = vpack.c.b16 %v3482, %v3480
        %v3565 = vpack.c.b16 %v3483, %v3481
        %v3566 = vpack.c.b16 %v3486, %v3484
        %v3567 = vpack.c.b16 %v3487, %v3485
        %v3568 = vpack.c.b16 %v3490, %v3488
        %v3569 = vpack.c.b16 %v3491, %v3489
        %v3570 = vpack.c.b16 %v3494, %v3492
        %v3571 = vpack.c.b16 %v3495, %v3493
        %v3572 = vpack.c.b16 %v3498, %v3496
        %v3573 = vpack.c.b16 %v3499, %v3497
        %v3574 = vpack.c.b16 %v3502, %v3500
        %v3575 = vpack.c.b16 %v3503, %v3501
        %v3576 = vpack.c.b16 %v3506, %v3504
        %v3577 = vpack.c.b16 %v3507, %v3505
        %v3578 = vpack.c.b16 %v3510, %v3508
        %v3579 = vpack.c.b16 %v3511, %v3509
        %v3580 = vpack.c.b16 %v3514, %v3512
        %v3581 = vpack.c.b16 %v3515, %v3513
        %v3582 = vpack.c.b16 %v3518, %v3516
        %v3583 = vpack.c.b16 %v3519, %v3517
        %3648 = vmatprep.subr.bf16.mxu0 %v3535
        %3649 = vmatpush1.bf16.msra.mxu0 %v3534
        %3650 = vmatprep.subr.bf16.mxu0 %v3533
        %3651 = vmatpush1.bf16.msra.mxu0 %v3532
        %3652 = vmatprep.subr.bf16.mxu0 %v3531
        %3653 = vmatpush1.bf16.msra.mxu0 %v3530
        %3654 = vmatprep.subr.bf16.mxu0 %v3529
        %3655 = vmatpush1.bf16.msra.mxu0 %v3528
        %3656 = vmatprep.subr.bf16.mxu0 %v3527
        %3657 = vmatpush1.bf16.msra.mxu0 %v3526
        %3658 = vmatprep.subr.bf16.mxu0 %v3525
        %3659 = vmatpush1.bf16.msra.mxu0 %v3524
        %3660 = vmatprep.subr.bf16.mxu0 %v3523
        %3661 = vmatpush1.bf16.msra.mxu0 %v3522
        %3662 = vmatprep.subr.bf16.mxu0 %v3521
        %3663 = vmatpush1.bf16.msra.mxu0 %v3520
        %3664 = vmatprep.subr.bf16.mxu0 %v3551
        %3665 = vmatpush2.bf16.msra.mxu0 %v3550
        %3666 = vmatprep.subr.bf16.mxu0 %v3549
        %3667 = vmatpush2.bf16.msra.mxu0 %v3548
        %3668 = vmatprep.subr.bf16.mxu0 %v3547
        %3669 = vmatpush2.bf16.msra.mxu0 %v3546
        %3670 = vmatprep.subr.bf16.mxu0 %v3545
        %3671 = vmatpush2.bf16.msra.mxu0 %v3544
        %3672 = vmatprep.subr.bf16.mxu0 %v3543
        %3673 = vmatpush2.bf16.msra.mxu0 %v3542
        %3674 = vmatprep.subr.bf16.mxu0 %v3541
        %3675 = vmatpush2.bf16.msra.mxu0 %v3540
        %3676 = vmatprep.subr.bf16.mxu0 %v3539
        %3677 = vmatpush2.bf16.msra.mxu0 %v3538
        %3678 = vmatprep.subr.bf16.mxu0 %v3537
        %3679 = vmatpush2.bf16.msra.mxu0 %v3536
        %3680 = vmatprep.mubr.bf16.mxu0 %v3248
        %3681 = vmatmul.mubr.bf16.gmra.mxu0 %v3247
        %v3682 = vpop.f32.mrf.mxu0
        %v3683 = vadd.f32 0.0, %v3682
        %v3684 = vpop.f32.mrf.mxu0
        %v3685 = vadd.f32 0.0, %v3684
        %v3686 = vpop.f32.mrf.mxu0
        %v3687 = vadd.f32 0.0, %v3686
        %v3688 = vpop.f32.mrf.mxu0
        %v3689 = vadd.f32 0.0, %v3688
        %3690 = vmatprep.mubr.bf16.mxu0 %v3252
        %3691 = vmatmul.mubr.bf16.gmra.mxu0 %v3251
        %v3692 = vpop.f32.mrf.mxu0
        %v3693 = vadd.f32 0.0, %v3692
        %v3694 = vpop.f32.mrf.mxu0
        %v3695 = vadd.f32 0.0, %v3694
        %v3696 = vpop.f32.mrf.mxu0
        %v3697 = vadd.f32 0.0, %v3696
        %v3698 = vpop.f32.mrf.mxu0
        %v3699 = vadd.f32 0.0, %v3698
        %3700 = vmatprep.mubr.bf16.mxu0 %v3256
        %3701 = vmatmul.mubr.bf16.gmra.mxu0 %v3255
        %v3702 = vpop.f32.mrf.mxu0
        %v3703 = vadd.f32 0.0, %v3702
        %v3704 = vpop.f32.mrf.mxu0
        %v3705 = vadd.f32 0.0, %v3704
        %v3706 = vpop.f32.mrf.mxu0
        %v3707 = vadd.f32 0.0, %v3706
        %v3708 = vpop.f32.mrf.mxu0
        %v3709 = vadd.f32 0.0, %v3708
        %3710 = vmatprep.mubr.bf16.mxu0 %v3260
        %3711 = vmatmul.mubr.bf16.gmra.mxu0 %v3259
        %v3712 = vpop.f32.mrf.mxu0
        %v3713 = vadd.f32 0.0, %v3712
        %v3714 = vpop.f32.mrf.mxu0
        %v3715 = vadd.f32 0.0, %v3714
        %v3716 = vpop.f32.mrf.mxu0
        %v3717 = vadd.f32 0.0, %v3716
        %v3718 = vpop.f32.mrf.mxu0
        %v3719 = vadd.f32 0.0, %v3718
        %3720 = vdwg.mxu0
        %3721 = vmatprep.subr.bf16.mxu0 %v3567
        %3722 = vmatpush1.bf16.msra.mxu0 %v3566
        %3723 = vmatprep.subr.bf16.mxu0 %v3565
        %3724 = vmatpush1.bf16.msra.mxu0 %v3564
        %3725 = vmatprep.subr.bf16.mxu0 %v3563
        %3726 = vmatpush1.bf16.msra.mxu0 %v3562
        %3727 = vmatprep.subr.bf16.mxu0 %v3561
        %3728 = vmatpush1.bf16.msra.mxu0 %v3560
        %3729 = vmatprep.subr.bf16.mxu0 %v3559
        %3730 = vmatpush1.bf16.msra.mxu0 %v3558
        %3731 = vmatprep.subr.bf16.mxu0 %v3557
        %3732 = vmatpush1.bf16.msra.mxu0 %v3556
        %3733 = vmatprep.subr.bf16.mxu0 %v3555
        %3734 = vmatpush1.bf16.msra.mxu0 %v3554
        %3735 = vmatprep.subr.bf16.mxu0 %v3553
        %3736 = vmatpush1.bf16.msra.mxu0 %v3552
        %3737 = vmatprep.subr.bf16.mxu0 %v3583
        %3738 = vmatpush2.bf16.msra.mxu0 %v3582
        %3739 = vmatprep.subr.bf16.mxu0 %v3581
        %3740 = vmatpush2.bf16.msra.mxu0 %v3580
        %3741 = vmatprep.subr.bf16.mxu0 %v3579
        %3742 = vmatpush2.bf16.msra.mxu0 %v3578
        %3743 = vmatprep.subr.bf16.mxu0 %v3577
        %3744 = vmatpush2.bf16.msra.mxu0 %v3576
        %3745 = vmatprep.subr.bf16.mxu0 %v3575
        %3746 = vmatpush2.bf16.msra.mxu0 %v3574
        %3747 = vmatprep.subr.bf16.mxu0 %v3573
        %3748 = vmatpush2.bf16.msra.mxu0 %v3572
        %3749 = vmatprep.subr.bf16.mxu0 %v3571
        %3750 = vmatpush2.bf16.msra.mxu0 %v3570
        %3751 = vmatprep.subr.bf16.mxu0 %v3569
        %3752 = vmatpush2.bf16.msra.mxu0 %v3568
        %3753 = vmatprep.mubr.bf16.mxu0 %v3250
        %3754 = vmatmul.mubr.bf16.gmra.mxu0 %v3249
        %v3755 = vpop.f32.mrf.mxu0
        %v3756 = vadd.f32 %v3683, %v3755
        %v3757 = vpop.f32.mrf.mxu0
        %v3758 = vadd.f32 %v3685, %v3757
        %v3759 = vpop.f32.mrf.mxu0
        %v3760 = vadd.f32 %v3687, %v3759
        %v3761 = vpop.f32.mrf.mxu0
        %v3762 = vadd.f32 %v3689, %v3761
        %3763 = vmatprep.mubr.bf16.mxu0 %v3254
        %3764 = vmatmul.mubr.bf16.gmra.mxu0 %v3253
        %v3765 = vpop.f32.mrf.mxu0
        %v3766 = vadd.f32 %v3693, %v3765
        %v3767 = vpop.f32.mrf.mxu0
        %v3768 = vadd.f32 %v3695, %v3767
        %v3769 = vpop.f32.mrf.mxu0
        %v3770 = vadd.f32 %v3697, %v3769
        %v3771 = vpop.f32.mrf.mxu0
        %v3772 = vadd.f32 %v3699, %v3771
        %3773 = vmatprep.mubr.bf16.mxu0 %v3258
        %3774 = vmatmul.mubr.bf16.gmra.mxu0 %v3257
        %v3775 = vpop.f32.mrf.mxu0
        %v3776 = vadd.f32 %v3703, %v3775
        %v3777 = vpop.f32.mrf.mxu0
        %v3778 = vadd.f32 %v3705, %v3777
        %v3779 = vpop.f32.mrf.mxu0
        %v3780 = vadd.f32 %v3707, %v3779
        %v3781 = vpop.f32.mrf.mxu0
        %v3782 = vadd.f32 %v3709, %v3781
        %3783 = vmatprep.mubr.bf16.mxu0 %v3262
        %3784 = vmatmul.mubr.bf16.gmra.mxu0 %v3261
        %v3785 = vpop.f32.mrf.mxu0
        %v3786 = vadd.f32 %v3713, %v3785
        %v3787 = vpop.f32.mrf.mxu0
        %v3788 = vadd.f32 %v3715, %v3787
        %v3789 = vpop.f32.mrf.mxu0
        %v3790 = vadd.f32 %v3717, %v3789
        %v3791 = vpop.f32.mrf.mxu0
        %v3792 = vadd.f32 %v3719, %v3791
        %3793 = vdwg.mxu0
        %v3858 = vunpack.c.l.b16 %v3151
        %v3859 = vunpack.c.h.b16 %v3151
        %v3860 = vunpack.c.l.b16 %v3152
        %v3861 = vunpack.c.h.b16 %v3152
        %v3862 = vunpack.c.l.b16 %v3153
        %v3863 = vunpack.c.h.b16 %v3153
        %v3864 = vunpack.c.l.b16 %v3154
        %v3865 = vunpack.c.h.b16 %v3154
        %v3866 = vunpack.c.l.b16 %v3155
        %v3867 = vunpack.c.h.b16 %v3155
        %v3868 = vunpack.c.l.b16 %v3156
        %v3869 = vunpack.c.h.b16 %v3156
        %v3870 = vunpack.c.l.b16 %v3157
        %v3871 = vunpack.c.h.b16 %v3157
        %v3872 = vunpack.c.l.b16 %v3158
        %v3873 = vunpack.c.h.b16 %v3158
        %v3874 = vunpack.c.l.b16 %v3159
        %v3875 = vunpack.c.h.b16 %v3159
        %v3876 = vunpack.c.l.b16 %v3160
        %v3877 = vunpack.c.h.b16 %v3160
        %v3878 = vunpack.c.l.b16 %v3161
        %v3879 = vunpack.c.h.b16 %v3161
        %v3880 = vunpack.c.l.b16 %v3162
        %v3881 = vunpack.c.h.b16 %v3162
        %v3882 = vunpack.c.l.b16 %v3163
        %v3883 = vunpack.c.h.b16 %v3163
        %v3884 = vunpack.c.l.b16 %v3164
        %v3885 = vunpack.c.h.b16 %v3164
        %v3886 = vunpack.c.l.b16 %v3165
        %v3887 = vunpack.c.h.b16 %v3165
        %v3888 = vunpack.c.l.b16 %v3166
        %v3889 = vunpack.c.h.b16 %v3166
        %v3890 = vunpack.c.l.b16 %v3167
        %v3891 = vunpack.c.h.b16 %v3167
        %v3892 = vunpack.c.l.b16 %v3168
        %v3893 = vunpack.c.h.b16 %v3168
        %v3894 = vunpack.c.l.b16 %v3169
        %v3895 = vunpack.c.h.b16 %v3169
        %v3896 = vunpack.c.l.b16 %v3170
        %v3897 = vunpack.c.h.b16 %v3170
        %v3898 = vunpack.c.l.b16 %v3171
        %v3899 = vunpack.c.h.b16 %v3171
        %v3900 = vunpack.c.l.b16 %v3172
        %v3901 = vunpack.c.h.b16 %v3172
        %v3902 = vunpack.c.l.b16 %v3173
        %v3903 = vunpack.c.h.b16 %v3173
        %v3904 = vunpack.c.l.b16 %v3174
        %v3905 = vunpack.c.h.b16 %v3174
        %v3906 = vunpack.c.l.b16 %v3175
        %v3907 = vunpack.c.h.b16 %v3175
        %v3908 = vunpack.c.l.b16 %v3176
        %v3909 = vunpack.c.h.b16 %v3176
        %v3910 = vunpack.c.l.b16 %v3177
        %v3911 = vunpack.c.h.b16 %v3177
        %v3912 = vunpack.c.l.b16 %v3178
        %v3913 = vunpack.c.h.b16 %v3178
        %v3914 = vunpack.c.l.b16 %v3179
        %v3915 = vunpack.c.h.b16 %v3179
        %v3916 = vunpack.c.l.b16 %v3180
        %v3917 = vunpack.c.h.b16 %v3180
        %v3918 = vunpack.c.l.b16 %v3181
        %v3919 = vunpack.c.h.b16 %v3181
        %v3920 = vunpack.c.l.b16 %v3182
        %v3921 = vunpack.c.h.b16 %v3182
        %v3922 = vunpack.c.l.b16 %v3183
        %v3923 = vunpack.c.h.b16 %v3183
        %v3924 = vunpack.c.l.b16 %v3184
        %v3925 = vunpack.c.h.b16 %v3184
        %v3926 = vunpack.c.l.b16 %v3185
        %v3927 = vunpack.c.h.b16 %v3185
        %v3928 = vunpack.c.l.b16 %v3186
        %v3929 = vunpack.c.h.b16 %v3186
        %v3930 = vunpack.c.l.b16 %v3187
        %v3931 = vunpack.c.h.b16 %v3187
        %v3932 = vunpack.c.l.b16 %v3188
        %v3933 = vunpack.c.h.b16 %v3188
        %v3934 = vunpack.c.l.b16 %v3189
        %v3935 = vunpack.c.h.b16 %v3189
        %v3936 = vunpack.c.l.b16 %v3190
        %v3937 = vunpack.c.h.b16 %v3190
        %v3938 = vunpack.c.l.b16 %v3191
        %v3939 = vunpack.c.h.b16 %v3191
        %v3940 = vunpack.c.l.b16 %v3192
        %v3941 = vunpack.c.h.b16 %v3192
        %v3942 = vunpack.c.l.b16 %v3193
        %v3943 = vunpack.c.h.b16 %v3193
        %v3944 = vunpack.c.l.b16 %v3194
        %v3945 = vunpack.c.h.b16 %v3194
        %v3946 = vunpack.c.l.b16 %v3195
        %v3947 = vunpack.c.h.b16 %v3195
        %v3948 = vunpack.c.l.b16 %v3196
        %v3949 = vunpack.c.h.b16 %v3196
        %v3950 = vunpack.c.l.b16 %v3197
        %v3951 = vunpack.c.h.b16 %v3197
        %v3952 = vunpack.c.l.b16 %v3198
        %v3953 = vunpack.c.h.b16 %v3198
        %v3954 = vunpack.c.l.b16 %v3199
        %v3955 = vunpack.c.h.b16 %v3199
        %v3956 = vunpack.c.l.b16 %v3200
        %v3957 = vunpack.c.h.b16 %v3200
        %v3958 = vunpack.c.l.b16 %v3201
        %v3959 = vunpack.c.h.b16 %v3201
        %v3960 = vunpack.c.l.b16 %v3202
        %v3961 = vunpack.c.h.b16 %v3202
        %v3962 = vunpack.c.l.b16 %v3203
        %v3963 = vunpack.c.h.b16 %v3203
        %v3964 = vunpack.c.l.b16 %v3204
        %v3965 = vunpack.c.h.b16 %v3204
        %v3966 = vunpack.c.l.b16 %v3205
        %v3967 = vunpack.c.h.b16 %v3205
        %v3968 = vunpack.c.l.b16 %v3206
        %v3969 = vunpack.c.h.b16 %v3206
        %v3970 = vunpack.c.l.b16 %v3207
        %v3971 = vunpack.c.h.b16 %v3207
        %v3972 = vunpack.c.l.b16 %v3208
        %v3973 = vunpack.c.h.b16 %v3208
        %v3974 = vunpack.c.l.b16 %v3209
        %v3975 = vunpack.c.h.b16 %v3209
        %v3976 = vunpack.c.l.b16 %v3210
        %v3977 = vunpack.c.h.b16 %v3210
        %v3978 = vunpack.c.l.b16 %v3211
        %v3979 = vunpack.c.h.b16 %v3211
        %v3980 = vunpack.c.l.b16 %v3212
        %v3981 = vunpack.c.h.b16 %v3212
        %v3982 = vunpack.c.l.b16 %v3213
        %v3983 = vunpack.c.h.b16 %v3213
        %v3984 = vunpack.c.l.b16 %v3214
        %v3985 = vunpack.c.h.b16 %v3214
        %v3986 = vpack.c.b16 %v3860, %v3858
        %v3987 = vpack.c.b16 %v3861, %v3859
        %v3988 = vpack.c.b16 %v3864, %v3862
        %v3989 = vpack.c.b16 %v3865, %v3863
        %v3990 = vpack.c.b16 %v3868, %v3866
        %v3991 = vpack.c.b16 %v3869, %v3867
        %v3992 = vpack.c.b16 %v3872, %v3870
        %v3993 = vpack.c.b16 %v3873, %v3871
        %v3994 = vpack.c.b16 %v3876, %v3874
        %v3995 = vpack.c.b16 %v3877, %v3875
        %v3996 = vpack.c.b16 %v3880, %v3878
        %v3997 = vpack.c.b16 %v3881, %v3879
        %v3998 = vpack.c.b16 %v3884, %v3882
        %v3999 = vpack.c.b16 %v3885, %v3883
        %v4000 = vpack.c.b16 %v3888, %v3886
        %v4001 = vpack.c.b16 %v3889, %v3887
        %v4002 = vpack.c.b16 %v3892, %v3890
        %v4003 = vpack.c.b16 %v3893, %v3891
        %v4004 = vpack.c.b16 %v3896, %v3894
        %v4005 = vpack.c.b16 %v3897, %v3895
        %v4006 = vpack.c.b16 %v3900, %v3898
        %v4007 = vpack.c.b16 %v3901, %v3899
        %v4008 = vpack.c.b16 %v3904, %v3902
        %v4009 = vpack.c.b16 %v3905, %v3903
        %v4010 = vpack.c.b16 %v3908, %v3906
        %v4011 = vpack.c.b16 %v3909, %v3907
        %v4012 = vpack.c.b16 %v3912, %v3910
        %v4013 = vpack.c.b16 %v3913, %v3911
        %v4014 = vpack.c.b16 %v3916, %v3914
        %v4015 = vpack.c.b16 %v3917, %v3915
        %v4016 = vpack.c.b16 %v3920, %v3918
        %v4017 = vpack.c.b16 %v3921, %v3919
        %v4018 = vpack.c.b16 %v3924, %v3922
        %v4019 = vpack.c.b16 %v3925, %v3923
        %v4020 = vpack.c.b16 %v3928, %v3926
        %v4021 = vpack.c.b16 %v3929, %v3927
        %v4022 = vpack.c.b16 %v3932, %v3930
        %v4023 = vpack.c.b16 %v3933, %v3931
        %v4024 = vpack.c.b16 %v3936, %v3934
        %v4025 = vpack.c.b16 %v3937, %v3935
        %v4026 = vpack.c.b16 %v3940, %v3938
        %v4027 = vpack.c.b16 %v3941, %v3939
        %v4028 = vpack.c.b16 %v3944, %v3942
        %v4029 = vpack.c.b16 %v3945, %v3943
        %v4030 = vpack.c.b16 %v3948, %v3946
        %v4031 = vpack.c.b16 %v3949, %v3947
        %v4032 = vpack.c.b16 %v3952, %v3950
        %v4033 = vpack.c.b16 %v3953, %v3951
        %v4034 = vpack.c.b16 %v3956, %v3954
        %v4035 = vpack.c.b16 %v3957, %v3955
        %v4036 = vpack.c.b16 %v3960, %v3958
        %v4037 = vpack.c.b16 %v3961, %v3959
        %v4038 = vpack.c.b16 %v3964, %v3962
        %v4039 = vpack.c.b16 %v3965, %v3963
        %v4040 = vpack.c.b16 %v3968, %v3966
        %v4041 = vpack.c.b16 %v3969, %v3967
        %v4042 = vpack.c.b16 %v3972, %v3970
        %v4043 = vpack.c.b16 %v3973, %v3971
        %v4044 = vpack.c.b16 %v3976, %v3974
        %v4045 = vpack.c.b16 %v3977, %v3975
        %v4046 = vpack.c.b16 %v3980, %v3978
        %v4047 = vpack.c.b16 %v3981, %v3979
        %v4048 = vpack.c.b16 %v3984, %v3982
        %v4049 = vpack.c.b16 %v3985, %v3983
        %4114 = vmatprep.subr.bf16.mxu0 %v4001
        %4115 = vmatpush1.bf16.msra.mxu0 %v4000
        %4116 = vmatprep.subr.bf16.mxu0 %v3999
        %4117 = vmatpush1.bf16.msra.mxu0 %v3998
        %4118 = vmatprep.subr.bf16.mxu0 %v3997
        %4119 = vmatpush1.bf16.msra.mxu0 %v3996
        %4120 = vmatprep.subr.bf16.mxu0 %v3995
        %4121 = vmatpush1.bf16.msra.mxu0 %v3994
        %4122 = vmatprep.subr.bf16.mxu0 %v3993
        %4123 = vmatpush1.bf16.msra.mxu0 %v3992
        %4124 = vmatprep.subr.bf16.mxu0 %v3991
        %4125 = vmatpush1.bf16.msra.mxu0 %v3990
        %4126 = vmatprep.subr.bf16.mxu0 %v3989
        %4127 = vmatpush1.bf16.msra.mxu0 %v3988
        %4128 = vmatprep.subr.bf16.mxu0 %v3987
        %4129 = vmatpush1.bf16.msra.mxu0 %v3986
        %4130 = vmatprep.subr.bf16.mxu0 %v4017
        %4131 = vmatpush2.bf16.msra.mxu0 %v4016
        %4132 = vmatprep.subr.bf16.mxu0 %v4015
        %4133 = vmatpush2.bf16.msra.mxu0 %v4014
        %4134 = vmatprep.subr.bf16.mxu0 %v4013
        %4135 = vmatpush2.bf16.msra.mxu0 %v4012
        %4136 = vmatprep.subr.bf16.mxu0 %v4011
        %4137 = vmatpush2.bf16.msra.mxu0 %v4010
        %4138 = vmatprep.subr.bf16.mxu0 %v4009
        %4139 = vmatpush2.bf16.msra.mxu0 %v4008
        %4140 = vmatprep.subr.bf16.mxu0 %v4007
        %4141 = vmatpush2.bf16.msra.mxu0 %v4006
        %4142 = vmatprep.subr.bf16.mxu0 %v4005
        %4143 = vmatpush2.bf16.msra.mxu0 %v4004
        %4144 = vmatprep.subr.bf16.mxu0 %v4003
        %4145 = vmatpush2.bf16.msra.mxu0 %v4002
        %4146 = vmatprep.mubr.bf16.mxu0 %v3136
        %4147 = vmatmul.mubr.bf16.gmra.mxu0 %v3135
        %v4148 = vpop.f32.mrf.mxu0
        %v4149 = vadd.f32 %v3756, %v4148
        %v4150 = vpop.f32.mrf.mxu0
        %v4151 = vadd.f32 %v3758, %v4150
        %v4152 = vpop.f32.mrf.mxu0
        %v4153 = vadd.f32 %v3760, %v4152
        %v4154 = vpop.f32.mrf.mxu0
        %v4155 = vadd.f32 %v3762, %v4154
        %4156 = vmatprep.mubr.bf16.mxu0 %v3140
        %4157 = vmatmul.mubr.bf16.gmra.mxu0 %v3139
        %v4158 = vpop.f32.mrf.mxu0
        %v4159 = vadd.f32 %v3766, %v4158
        %v4160 = vpop.f32.mrf.mxu0
        %v4161 = vadd.f32 %v3768, %v4160
        %v4162 = vpop.f32.mrf.mxu0
        %v4163 = vadd.f32 %v3770, %v4162
        %v4164 = vpop.f32.mrf.mxu0
        %v4165 = vadd.f32 %v3772, %v4164
        %4166 = vmatprep.mubr.bf16.mxu0 %v3144
        %4167 = vmatmul.mubr.bf16.gmra.mxu0 %v3143
        %v4168 = vpop.f32.mrf.mxu0
        %v4169 = vadd.f32 %v3776, %v4168
        %v4170 = vpop.f32.mrf.mxu0
        %v4171 = vadd.f32 %v3778, %v4170
        %v4172 = vpop.f32.mrf.mxu0
        %v4173 = vadd.f32 %v3780, %v4172
        %v4174 = vpop.f32.mrf.mxu0
        %v4175 = vadd.f32 %v3782, %v4174
        %4176 = vmatprep.mubr.bf16.mxu0 %v3148
        %4177 = vmatmul.mubr.bf16.gmra.mxu0 %v3147
        %v4178 = vpop.f32.mrf.mxu0
        %v4179 = vadd.f32 %v3786, %v4178
        %v4180 = vpop.f32.mrf.mxu0
        %v4181 = vadd.f32 %v3788, %v4180
        %v4182 = vpop.f32.mrf.mxu0
        %v4183 = vadd.f32 %v3790, %v4182
        %v4184 = vpop.f32.mrf.mxu0
        %v4185 = vadd.f32 %v3792, %v4184
        %4186 = vdwg.mxu0
        %4187 = vmatprep.subr.bf16.mxu0 %v4033
        %4188 = vmatpush1.bf16.msra.mxu0 %v4032
        %4189 = vmatprep.subr.bf16.mxu0 %v4031
        %4190 = vmatpush1.bf16.msra.mxu0 %v4030
        %4191 = vmatprep.subr.bf16.mxu0 %v4029
        %4192 = vmatpush1.bf16.msra.mxu0 %v4028
        %4193 = vmatprep.subr.bf16.mxu0 %v4027
        %4194 = vmatpush1.bf16.msra.mxu0 %v4026
        %4195 = vmatprep.subr.bf16.mxu0 %v4025
        %4196 = vmatpush1.bf16.msra.mxu0 %v4024
        %4197 = vmatprep.subr.bf16.mxu0 %v4023
        %4198 = vmatpush1.bf16.msra.mxu0 %v4022
        %4199 = vmatprep.subr.bf16.mxu0 %v4021
        %4200 = vmatpush1.bf16.msra.mxu0 %v4020
        %4201 = vmatprep.subr.bf16.mxu0 %v4019
        %4202 = vmatpush1.bf16.msra.mxu0 %v4018
        %4203 = vmatprep.subr.bf16.mxu0 %v4049
        %4204 = vmatpush2.bf16.msra.mxu0 %v4048
        %4205 = vmatprep.subr.bf16.mxu0 %v4047
        %4206 = vmatpush2.bf16.msra.mxu0 %v4046
        %4207 = vmatprep.subr.bf16.mxu0 %v4045
        %4208 = vmatpush2.bf16.msra.mxu0 %v4044
        %4209 = vmatprep.subr.bf16.mxu0 %v4043
        %4210 = vmatpush2.bf16.msra.mxu0 %v4042
        %4211 = vmatprep.subr.bf16.mxu0 %v4041
        %4212 = vmatpush2.bf16.msra.mxu0 %v4040
        %4213 = vmatprep.subr.bf16.mxu0 %v4039
        %4214 = vmatpush2.bf16.msra.mxu0 %v4038
        %4215 = vmatprep.subr.bf16.mxu0 %v4037
        %4216 = vmatpush2.bf16.msra.mxu0 %v4036
        %4217 = vmatprep.subr.bf16.mxu0 %v4035
        %4218 = vmatpush2.bf16.msra.mxu0 %v4034
        %4219 = vmatprep.mubr.bf16.mxu0 %v3138
        %4220 = vmatmul.mubr.bf16.gmra.mxu0 %v3137
        %v4221 = vpop.f32.mrf.mxu0
        %v4222 = vadd.f32 %v4149, %v4221
        %v4223 = vpop.f32.mrf.mxu0
        %v4224 = vadd.f32 %v4151, %v4223
        %v4225 = vpop.f32.mrf.mxu0
        %v4226 = vadd.f32 %v4153, %v4225
        %v4227 = vpop.f32.mrf.mxu0
        %v4228 = vadd.f32 %v4155, %v4227
        %4229 = vmatprep.mubr.bf16.mxu0 %v3142
        %4230 = vmatmul.mubr.bf16.gmra.mxu0 %v3141
        %v4231 = vpop.f32.mrf.mxu0
        %v4232 = vadd.f32 %v4159, %v4231
        %v4233 = vpop.f32.mrf.mxu0
        %v4234 = vadd.f32 %v4161, %v4233
        %v4235 = vpop.f32.mrf.mxu0
        %v4236 = vadd.f32 %v4163, %v4235
        %v4237 = vpop.f32.mrf.mxu0
        %v4238 = vadd.f32 %v4165, %v4237
        %4239 = vmatprep.mubr.bf16.mxu0 %v3146
        %4240 = vmatmul.mubr.bf16.gmra.mxu0 %v3145
        %v4241 = vpop.f32.mrf.mxu0
        %v4242 = vadd.f32 %v4169, %v4241
        %v4243 = vpop.f32.mrf.mxu0
        %v4244 = vadd.f32 %v4171, %v4243
        %v4245 = vpop.f32.mrf.mxu0
        %v4246 = vadd.f32 %v4173, %v4245
        %v4247 = vpop.f32.mrf.mxu0
        %v4248 = vadd.f32 %v4175, %v4247
        %4249 = vmatprep.mubr.bf16.mxu0 %v3150
        %4250 = vmatmul.mubr.bf16.gmra.mxu0 %v3149
        %v4251 = vpop.f32.mrf.mxu0
        %v4252 = vadd.f32 %v4179, %v4251
        %v4253 = vpop.f32.mrf.mxu0
        %v4254 = vadd.f32 %v4181, %v4253
        %v4255 = vpop.f32.mrf.mxu0
        %v4256 = vadd.f32 %v4183, %v4255
        %v4257 = vpop.f32.mrf.mxu0
        %v4258 = vadd.f32 %v4185, %v4257
        %4259 = vdwg.mxu0
        %v4260 = vld [vmem:[#allocation2 + $0x20] sm:$0xc0]
        %v4261 = vld [vmem:[#allocation2 + $0x28] sm:$0xc0]
        %v4262 = vld [vmem:[#allocation2 + $0x30] sm:$0xc0]
        %v4263 = vld [vmem:[#allocation2 + $0x38] sm:$0xc0]
        %v4264 = vld [vmem:[#allocation2 + $0x40] sm:$0x3f]
        %v4265 = vld [vmem:[#allocation2 + $0x48] sm:$0x3f]
        %v4266 = vld [vmem:[#allocation2 + $0x50] sm:$0x3f]
        %v4267 = vld [vmem:[#allocation2 + $0x58] sm:$0x3f]
        %v4268 = vld [vmem:[#allocation2 + $0x80] sm:$0xc0]
        %v4269 = vld [vmem:[#allocation2 + $0x88] sm:$0xc0]
        %v4270 = vld [vmem:[#allocation2 + $0x90] sm:$0xc0]
        %v4271 = vld [vmem:[#allocation2 + $0x98] sm:$0xc0]
        %v4272 = vld [vmem:[#allocation2 + $0xa0] sm:$0x3f]
        %v4273 = vld [vmem:[#allocation2 + $0xa8] sm:$0x3f]
        %v4274 = vld [vmem:[#allocation2 + $0xb0] sm:$0x3f]
        %v4275 = vld [vmem:[#allocation2 + $0xb8] sm:$0x3f]
        %v4276 = vld [vmem:[#allocation2 + $0xe0] sm:$0xc0]
        %v4277 = vld [vmem:[#allocation2 + $0xe8] sm:$0xc0]
        %v4278 = vld [vmem:[#allocation2 + $0xf0] sm:$0xc0]
        %v4279 = vld [vmem:[#allocation2 + $0xf8] sm:$0xc0]
        %v4280 = vld [vmem:[#allocation2 + $0x100] sm:$0x3f]
        %v4281 = vld [vmem:[#allocation2 + $0x108] sm:$0x3f]
        %v4282 = vld [vmem:[#allocation2 + $0x110] sm:$0x3f]
        %v4283 = vld [vmem:[#allocation2 + $0x118] sm:$0x3f]
        %v4284 = vld [vmem:[#allocation2 + $0x140] sm:$0xc0]
        %v4285 = vld [vmem:[#allocation2 + $0x148] sm:$0xc0]
        %v4286 = vld [vmem:[#allocation2 + $0x150] sm:$0xc0]
        %v4287 = vld [vmem:[#allocation2 + $0x158] sm:$0xc0]
        %v4288 = vld [vmem:[#allocation2 + $0x160] sm:$0x3f]
        %v4289 = vld [vmem:[#allocation2 + $0x168] sm:$0x3f]
        %v4290 = vld [vmem:[#allocation2 + $0x170] sm:$0x3f]
        %v4291 = vld [vmem:[#allocation2 + $0x178] sm:$0x3f]
        %v4292 = vld [vmem:[#allocation2 + $0x1a0] sm:$0xc0]
        %v4293 = vld [vmem:[#allocation2 + $0x1a8] sm:$0xc0]
        %v4294 = vld [vmem:[#allocation2 + $0x1b0] sm:$0xc0]
        %v4295 = vld [vmem:[#allocation2 + $0x1b8] sm:$0xc0]
        %v4296 = vld [vmem:[#allocation2 + $0x1c0] sm:$0x3f]
        %v4297 = vld [vmem:[#allocation2 + $0x1c8] sm:$0x3f]
        %v4298 = vld [vmem:[#allocation2 + $0x1d0] sm:$0x3f]
        %v4299 = vld [vmem:[#allocation2 + $0x1d8] sm:$0x3f]
        %v4300 = vld [vmem:[#allocation2 + $0x200] sm:$0xc0]
        %v4301 = vld [vmem:[#allocation2 + $0x208] sm:$0xc0]
        %v4302 = vld [vmem:[#allocation2 + $0x210] sm:$0xc0]
        %v4303 = vld [vmem:[#allocation2 + $0x218] sm:$0xc0]
        %v4304 = vld [vmem:[#allocation2 + $0x220] sm:$0x3f]
        %v4305 = vld [vmem:[#allocation2 + $0x228] sm:$0x3f]
        %v4306 = vld [vmem:[#allocation2 + $0x230] sm:$0x3f]
        %v4307 = vld [vmem:[#allocation2 + $0x238] sm:$0x3f]
        %v4308 = vld [vmem:[#allocation2 + $0x260] sm:$0xc0]
        %v4309 = vld [vmem:[#allocation2 + $0x268] sm:$0xc0]
        %v4310 = vld [vmem:[#allocation2 + $0x270] sm:$0xc0]
        %v4311 = vld [vmem:[#allocation2 + $0x278] sm:$0xc0]
        %v4312 = vld [vmem:[#allocation2 + $0x280] sm:$0x3f]
        %v4313 = vld [vmem:[#allocation2 + $0x288] sm:$0x3f]
        %v4314 = vld [vmem:[#allocation2 + $0x290] sm:$0x3f]
        %v4315 = vld [vmem:[#allocation2 + $0x298] sm:$0x3f]
        %v4316 = vld [vmem:[#allocation2 + $0x2c0] sm:$0xc0]
        %v4317 = vld [vmem:[#allocation2 + $0x2c8] sm:$0xc0]
        %v4318 = vld [vmem:[#allocation2 + $0x2d0] sm:$0xc0]
        %v4319 = vld [vmem:[#allocation2 + $0x2d8] sm:$0xc0]
        %v4320 = vld [vmem:[#allocation2 + $0x2e0] sm:$0x3f]
        %v4321 = vld [vmem:[#allocation2 + $0x2e8] sm:$0x3f]
        %v4322 = vld [vmem:[#allocation2 + $0x2f0] sm:$0x3f]
        %v4323 = vld [vmem:[#allocation2 + $0x2f8] sm:$0x3f]
        %vm4388 = vcmask 1041408
        %v4389 = vrot.slane %v4260, 6
        %v4390 = vrot.slane %v4264, 6
        %v4391 = vsel %vm4388, %v4389, %v4390
        %v4392 = vrot.slane %v4261, 6
        %v4393 = vrot.slane %v4265, 6
        %v4394 = vsel %vm4388, %v4392, %v4393
        %v4395 = vrot.slane %v4262, 6
        %v4396 = vrot.slane %v4266, 6
        %v4397 = vsel %vm4388, %v4395, %v4396
        %v4398 = vrot.slane %v4263, 6
        %v4399 = vrot.slane %v4267, 6
        %v4400 = vsel %vm4388, %v4398, %v4399
        %v4401 = vrot.slane %v4268, 6
        %v4402 = vrot.slane %v4272, 6
        %v4403 = vsel %vm4388, %v4401, %v4402
        %v4404 = vrot.slane %v4269, 6
        %v4405 = vrot.slane %v4273, 6
        %v4406 = vsel %vm4388, %v4404, %v4405
        %v4407 = vrot.slane %v4270, 6
        %v4408 = vrot.slane %v4274, 6
        %v4409 = vsel %vm4388, %v4407, %v4408
        %v4410 = vrot.slane %v4271, 6
        %v4411 = vrot.slane %v4275, 6
        %v4412 = vsel %vm4388, %v4410, %v4411
        %v4413 = vrot.slane %v4276, 6
        %v4414 = vrot.slane %v4280, 6
        %v4415 = vsel %vm4388, %v4413, %v4414
        %v4416 = vrot.slane %v4277, 6
        %v4417 = vrot.slane %v4281, 6
        %v4418 = vsel %vm4388, %v4416, %v4417
        %v4419 = vrot.slane %v4278, 6
        %v4420 = vrot.slane %v4282, 6
        %v4421 = vsel %vm4388, %v4419, %v4420
        %v4422 = vrot.slane %v4279, 6
        %v4423 = vrot.slane %v4283, 6
        %v4424 = vsel %vm4388, %v4422, %v4423
        %v4425 = vrot.slane %v4284, 6
        %v4426 = vrot.slane %v4288, 6
        %v4427 = vsel %vm4388, %v4425, %v4426
        %v4428 = vrot.slane %v4285, 6
        %v4429 = vrot.slane %v4289, 6
        %v4430 = vsel %vm4388, %v4428, %v4429
        %v4431 = vrot.slane %v4286, 6
        %v4432 = vrot.slane %v4290, 6
        %v4433 = vsel %vm4388, %v4431, %v4432
        %v4434 = vrot.slane %v4287, 6
        %v4435 = vrot.slane %v4291, 6
        %v4436 = vsel %vm4388, %v4434, %v4435
        %v4437 = vrot.slane %v4292, 6
        %v4438 = vrot.slane %v4296, 6
        %v4439 = vsel %vm4388, %v4437, %v4438
        %v4440 = vrot.slane %v4293, 6
        %v4441 = vrot.slane %v4297, 6
        %v4442 = vsel %vm4388, %v4440, %v4441
        %v4443 = vrot.slane %v4294, 6
        %v4444 = vrot.slane %v4298, 6
        %v4445 = vsel %vm4388, %v4443, %v4444
        %v4446 = vrot.slane %v4295, 6
        %v4447 = vrot.slane %v4299, 6
        %v4448 = vsel %vm4388, %v4446, %v4447
        %v4449 = vrot.slane %v4300, 6
        %v4450 = vrot.slane %v4304, 6
        %v4451 = vsel %vm4388, %v4449, %v4450
        %v4452 = vrot.slane %v4301, 6
        %v4453 = vrot.slane %v4305, 6
        %v4454 = vsel %vm4388, %v4452, %v4453
        %v4455 = vrot.slane %v4302, 6
        %v4456 = vrot.slane %v4306, 6
        %v4457 = vsel %vm4388, %v4455, %v4456
        %v4458 = vrot.slane %v4303, 6
        %v4459 = vrot.slane %v4307, 6
        %v4460 = vsel %vm4388, %v4458, %v4459
        %v4461 = vrot.slane %v4308, 6
        %v4462 = vrot.slane %v4312, 6
        %v4463 = vsel %vm4388, %v4461, %v4462
        %v4464 = vrot.slane %v4309, 6
        %v4465 = vrot.slane %v4313, 6
        %v4466 = vsel %vm4388, %v4464, %v4465
        %v4467 = vrot.slane %v4310, 6
        %v4468 = vrot.slane %v4314, 6
        %v4469 = vsel %vm4388, %v4467, %v4468
        %v4470 = vrot.slane %v4311, 6
        %v4471 = vrot.slane %v4315, 6
        %v4472 = vsel %vm4388, %v4470, %v4471
        %v4473 = vrot.slane %v4316, 6
        %v4474 = vrot.slane %v4320, 6
        %v4475 = vsel %vm4388, %v4473, %v4474
        %v4476 = vrot.slane %v4317, 6
        %v4477 = vrot.slane %v4321, 6
        %v4478 = vsel %vm4388, %v4476, %v4477
        %v4479 = vrot.slane %v4318, 6
        %v4480 = vrot.slane %v4322, 6
        %v4481 = vsel %vm4388, %v4479, %v4480
        %v4482 = vrot.slane %v4319, 6
        %v4483 = vrot.slane %v4323, 6
        %v4484 = vsel %vm4388, %v4482, %v4483
        %v4517 = vpack.c.bf16 %v4403, %v4391
        %v4518 = vpack.c.bf16 %v4406, %v4394
        %v4519 = vpack.c.bf16 %v4409, %v4397
        %v4520 = vpack.c.bf16 %v4412, %v4400
        %v4521 = vpack.c.bf16 %v4427, %v4415
        %v4522 = vpack.c.bf16 %v4430, %v4418
        %v4523 = vpack.c.bf16 %v4433, %v4421
        %v4524 = vpack.c.bf16 %v4436, %v4424
        %v4525 = vpack.c.bf16 %v4451, %v4439
        %v4526 = vpack.c.bf16 %v4454, %v4442
        %v4527 = vpack.c.bf16 %v4457, %v4445
        %v4528 = vpack.c.bf16 %v4460, %v4448
        %v4529 = vpack.c.bf16 %v4475, %v4463
        %v4530 = vpack.c.bf16 %v4478, %v4466
        %v4531 = vpack.c.bf16 %v4481, %v4469
        %v4532 = vpack.c.bf16 %v4484, %v4472
        %s4533 = scalar_lea.vmem [#allocation7], 1024
        %v4534 = vld [vmem:[%s4533] sm:$0xff]
        %v4535 = vld [vmem:[%s4533 + $0x8] sm:$0xff]
        %v4536 = vld [vmem:[%s4533 + $0x10] sm:$0xff]
        %v4537 = vld [vmem:[%s4533 + $0x18] sm:$0xff]
        %v4538 = vld [vmem:[%s4533 + $0x20] sm:$0xff]
        %v4539 = vld [vmem:[%s4533 + $0x28] sm:$0xff]
        %v4540 = vld [vmem:[%s4533 + $0x30] sm:$0xff]
        %v4541 = vld [vmem:[%s4533 + $0x38] sm:$0xff]
        %v4542 = vld [vmem:[%s4533 + $0x40] sm:$0xff]
        %v4543 = vld [vmem:[%s4533 + $0x48] sm:$0xff]
        %v4544 = vld [vmem:[%s4533 + $0x50] sm:$0xff]
        %v4545 = vld [vmem:[%s4533 + $0x58] sm:$0xff]
        %v4546 = vld [vmem:[%s4533 + $0x60] sm:$0xff]
        %v4547 = vld [vmem:[%s4533 + $0x68] sm:$0xff]
        %v4548 = vld [vmem:[%s4533 + $0x70] sm:$0xff]
        %v4549 = vld [vmem:[%s4533 + $0x78] sm:$0xff]
        %v4550 = vld [vmem:[%s4533 + $0x80] sm:$0xff]
        %v4551 = vld [vmem:[%s4533 + $0x88] sm:$0xff]
        %v4552 = vld [vmem:[%s4533 + $0x90] sm:$0xff]
        %v4553 = vld [vmem:[%s4533 + $0x98] sm:$0xff]
        %v4554 = vld [vmem:[%s4533 + $0xa0] sm:$0xff]
        %v4555 = vld [vmem:[%s4533 + $0xa8] sm:$0xff]
        %v4556 = vld [vmem:[%s4533 + $0xb0] sm:$0xff]
        %v4557 = vld [vmem:[%s4533 + $0xb8] sm:$0xff]
        %v4558 = vld [vmem:[%s4533 + $0xc0] sm:$0xff]
        %v4559 = vld [vmem:[%s4533 + $0xc8] sm:$0xff]
        %v4560 = vld [vmem:[%s4533 + $0xd0] sm:$0xff]
        %v4561 = vld [vmem:[%s4533 + $0xd8] sm:$0xff]
        %v4562 = vld [vmem:[%s4533 + $0xe0] sm:$0xff]
        %v4563 = vld [vmem:[%s4533 + $0xe8] sm:$0xff]
        %v4564 = vld [vmem:[%s4533 + $0xf0] sm:$0xff]
        %v4565 = vld [vmem:[%s4533 + $0xf8] sm:$0xff]
        %v4566 = vld [vmem:[%s4533 + $0x100] sm:$0xff]
        %v4567 = vld [vmem:[%s4533 + $0x108] sm:$0xff]
        %v4568 = vld [vmem:[%s4533 + $0x110] sm:$0xff]
        %v4569 = vld [vmem:[%s4533 + $0x118] sm:$0xff]
        %v4570 = vld [vmem:[%s4533 + $0x120] sm:$0xff]
        %v4571 = vld [vmem:[%s4533 + $0x128] sm:$0xff]
        %v4572 = vld [vmem:[%s4533 + $0x130] sm:$0xff]
        %v4573 = vld [vmem:[%s4533 + $0x138] sm:$0xff]
        %v4574 = vld [vmem:[%s4533 + $0x140] sm:$0xff]
        %v4575 = vld [vmem:[%s4533 + $0x148] sm:$0xff]
        %v4576 = vld [vmem:[%s4533 + $0x150] sm:$0xff]
        %v4577 = vld [vmem:[%s4533 + $0x158] sm:$0xff]
        %v4578 = vld [vmem:[%s4533 + $0x160] sm:$0xff]
        %v4579 = vld [vmem:[%s4533 + $0x168] sm:$0xff]
        %v4580 = vld [vmem:[%s4533 + $0x170] sm:$0xff]
        %v4581 = vld [vmem:[%s4533 + $0x178] sm:$0xff]
        %v4582 = vld [vmem:[%s4533 + $0x180] sm:$0xff]
        %v4583 = vld [vmem:[%s4533 + $0x188] sm:$0xff]
        %v4584 = vld [vmem:[%s4533 + $0x190] sm:$0xff]
        %v4585 = vld [vmem:[%s4533 + $0x198] sm:$0xff]
        %v4586 = vld [vmem:[%s4533 + $0x1a0] sm:$0xff]
        %v4587 = vld [vmem:[%s4533 + $0x1a8] sm:$0xff]
        %v4588 = vld [vmem:[%s4533 + $0x1b0] sm:$0xff]
        %v4589 = vld [vmem:[%s4533 + $0x1b8] sm:$0xff]
        %v4590 = vld [vmem:[%s4533 + $0x1c0] sm:$0xff]
        %v4591 = vld [vmem:[%s4533 + $0x1c8] sm:$0xff]
        %v4592 = vld [vmem:[%s4533 + $0x1d0] sm:$0xff]
        %v4593 = vld [vmem:[%s4533 + $0x1d8] sm:$0xff]
        %v4594 = vld [vmem:[%s4533 + $0x1e0] sm:$0xff]
        %v4595 = vld [vmem:[%s4533 + $0x1e8] sm:$0xff]
        %v4596 = vld [vmem:[%s4533 + $0x1f0] sm:$0xff]
        %v4597 = vld [vmem:[%s4533 + $0x1f8] sm:$0xff]
        %v4662 = vunpack.c.l.b16 %v4534
        %v4663 = vunpack.c.h.b16 %v4534
        %v4664 = vunpack.c.l.b16 %v4535
        %v4665 = vunpack.c.h.b16 %v4535
        %v4666 = vunpack.c.l.b16 %v4536
        %v4667 = vunpack.c.h.b16 %v4536
        %v4668 = vunpack.c.l.b16 %v4537
        %v4669 = vunpack.c.h.b16 %v4537
        %v4670 = vunpack.c.l.b16 %v4538
        %v4671 = vunpack.c.h.b16 %v4538
        %v4672 = vunpack.c.l.b16 %v4539
        %v4673 = vunpack.c.h.b16 %v4539
        %v4674 = vunpack.c.l.b16 %v4540
        %v4675 = vunpack.c.h.b16 %v4540
        %v4676 = vunpack.c.l.b16 %v4541
        %v4677 = vunpack.c.h.b16 %v4541
        %v4678 = vunpack.c.l.b16 %v4542
        %v4679 = vunpack.c.h.b16 %v4542
        %v4680 = vunpack.c.l.b16 %v4543
        %v4681 = vunpack.c.h.b16 %v4543
        %v4682 = vunpack.c.l.b16 %v4544
        %v4683 = vunpack.c.h.b16 %v4544
        %v4684 = vunpack.c.l.b16 %v4545
        %v4685 = vunpack.c.h.b16 %v4545
        %v4686 = vunpack.c.l.b16 %v4546
        %v4687 = vunpack.c.h.b16 %v4546
        %v4688 = vunpack.c.l.b16 %v4547
        %v4689 = vunpack.c.h.b16 %v4547
        %v4690 = vunpack.c.l.b16 %v4548
        %v4691 = vunpack.c.h.b16 %v4548
        %v4692 = vunpack.c.l.b16 %v4549
        %v4693 = vunpack.c.h.b16 %v4549
        %v4694 = vunpack.c.l.b16 %v4550
        %v4695 = vunpack.c.h.b16 %v4550
        %v4696 = vunpack.c.l.b16 %v4551
        %v4697 = vunpack.c.h.b16 %v4551
        %v4698 = vunpack.c.l.b16 %v4552
        %v4699 = vunpack.c.h.b16 %v4552
        %v4700 = vunpack.c.l.b16 %v4553
        %v4701 = vunpack.c.h.b16 %v4553
        %v4702 = vunpack.c.l.b16 %v4554
        %v4703 = vunpack.c.h.b16 %v4554
        %v4704 = vunpack.c.l.b16 %v4555
        %v4705 = vunpack.c.h.b16 %v4555
        %v4706 = vunpack.c.l.b16 %v4556
        %v4707 = vunpack.c.h.b16 %v4556
        %v4708 = vunpack.c.l.b16 %v4557
        %v4709 = vunpack.c.h.b16 %v4557
        %v4710 = vunpack.c.l.b16 %v4558
        %v4711 = vunpack.c.h.b16 %v4558
        %v4712 = vunpack.c.l.b16 %v4559
        %v4713 = vunpack.c.h.b16 %v4559
        %v4714 = vunpack.c.l.b16 %v4560
        %v4715 = vunpack.c.h.b16 %v4560
        %v4716 = vunpack.c.l.b16 %v4561
        %v4717 = vunpack.c.h.b16 %v4561
        %v4718 = vunpack.c.l.b16 %v4562
        %v4719 = vunpack.c.h.b16 %v4562
        %v4720 = vunpack.c.l.b16 %v4563
        %v4721 = vunpack.c.h.b16 %v4563
        %v4722 = vunpack.c.l.b16 %v4564
        %v4723 = vunpack.c.h.b16 %v4564
        %v4724 = vunpack.c.l.b16 %v4565
        %v4725 = vunpack.c.h.b16 %v4565
        %v4726 = vunpack.c.l.b16 %v4566
        %v4727 = vunpack.c.h.b16 %v4566
        %v4728 = vunpack.c.l.b16 %v4567
        %v4729 = vunpack.c.h.b16 %v4567
        %v4730 = vunpack.c.l.b16 %v4568
        %v4731 = vunpack.c.h.b16 %v4568
        %v4732 = vunpack.c.l.b16 %v4569
        %v4733 = vunpack.c.h.b16 %v4569
        %v4734 = vunpack.c.l.b16 %v4570
        %v4735 = vunpack.c.h.b16 %v4570
        %v4736 = vunpack.c.l.b16 %v4571
        %v4737 = vunpack.c.h.b16 %v4571
        %v4738 = vunpack.c.l.b16 %v4572
        %v4739 = vunpack.c.h.b16 %v4572
        %v4740 = vunpack.c.l.b16 %v4573
        %v4741 = vunpack.c.h.b16 %v4573
        %v4742 = vunpack.c.l.b16 %v4574
        %v4743 = vunpack.c.h.b16 %v4574
        %v4744 = vunpack.c.l.b16 %v4575
        %v4745 = vunpack.c.h.b16 %v4575
        %v4746 = vunpack.c.l.b16 %v4576
        %v4747 = vunpack.c.h.b16 %v4576
        %v4748 = vunpack.c.l.b16 %v4577
        %v4749 = vunpack.c.h.b16 %v4577
        %v4750 = vunpack.c.l.b16 %v4578
        %v4751 = vunpack.c.h.b16 %v4578
        %v4752 = vunpack.c.l.b16 %v4579
        %v4753 = vunpack.c.h.b16 %v4579
        %v4754 = vunpack.c.l.b16 %v4580
        %v4755 = vunpack.c.h.b16 %v4580
        %v4756 = vunpack.c.l.b16 %v4581
        %v4757 = vunpack.c.h.b16 %v4581
        %v4758 = vunpack.c.l.b16 %v4582
        %v4759 = vunpack.c.h.b16 %v4582
        %v4760 = vunpack.c.l.b16 %v4583
        %v4761 = vunpack.c.h.b16 %v4583
        %v4762 = vunpack.c.l.b16 %v4584
        %v4763 = vunpack.c.h.b16 %v4584
        %v4764 = vunpack.c.l.b16 %v4585
        %v4765 = vunpack.c.h.b16 %v4585
        %v4766 = vunpack.c.l.b16 %v4586
        %v4767 = vunpack.c.h.b16 %v4586
        %v4768 = vunpack.c.l.b16 %v4587
        %v4769 = vunpack.c.h.b16 %v4587
        %v4770 = vunpack.c.l.b16 %v4588
        %v4771 = vunpack.c.h.b16 %v4588
        %v4772 = vunpack.c.l.b16 %v4589
        %v4773 = vunpack.c.h.b16 %v4589
        %v4774 = vunpack.c.l.b16 %v4590
        %v4775 = vunpack.c.h.b16 %v4590
        %v4776 = vunpack.c.l.b16 %v4591
        %v4777 = vunpack.c.h.b16 %v4591
        %v4778 = vunpack.c.l.b16 %v4592
        %v4779 = vunpack.c.h.b16 %v4592
        %v4780 = vunpack.c.l.b16 %v4593
        %v4781 = vunpack.c.h.b16 %v4593
        %v4782 = vunpack.c.l.b16 %v4594
        %v4783 = vunpack.c.h.b16 %v4594
        %v4784 = vunpack.c.l.b16 %v4595
        %v4785 = vunpack.c.h.b16 %v4595
        %v4786 = vunpack.c.l.b16 %v4596
        %v4787 = vunpack.c.h.b16 %v4596
        %v4788 = vunpack.c.l.b16 %v4597
        %v4789 = vunpack.c.h.b16 %v4597
        %v4790 = vpack.c.b16 %v4664, %v4662
        %v4791 = vpack.c.b16 %v4665, %v4663
        %v4792 = vpack.c.b16 %v4668, %v4666
        %v4793 = vpack.c.b16 %v4669, %v4667
        %v4794 = vpack.c.b16 %v4672, %v4670
        %v4795 = vpack.c.b16 %v4673, %v4671
        %v4796 = vpack.c.b16 %v4676, %v4674
        %v4797 = vpack.c.b16 %v4677, %v4675
        %v4798 = vpack.c.b16 %v4680, %v4678
        %v4799 = vpack.c.b16 %v4681, %v4679
        %v4800 = vpack.c.b16 %v4684, %v4682
        %v4801 = vpack.c.b16 %v4685, %v4683
        %v4802 = vpack.c.b16 %v4688, %v4686
        %v4803 = vpack.c.b16 %v4689, %v4687
        %v4804 = vpack.c.b16 %v4692, %v4690
        %v4805 = vpack.c.b16 %v4693, %v4691
        %v4806 = vpack.c.b16 %v4696, %v4694
        %v4807 = vpack.c.b16 %v4697, %v4695
        %v4808 = vpack.c.b16 %v4700, %v4698
        %v4809 = vpack.c.b16 %v4701, %v4699
        %v4810 = vpack.c.b16 %v4704, %v4702
        %v4811 = vpack.c.b16 %v4705, %v4703
        %v4812 = vpack.c.b16 %v4708, %v4706
        %v4813 = vpack.c.b16 %v4709, %v4707
        %v4814 = vpack.c.b16 %v4712, %v4710
        %v4815 = vpack.c.b16 %v4713, %v4711
        %v4816 = vpack.c.b16 %v4716, %v4714
        %v4817 = vpack.c.b16 %v4717, %v4715
        %v4818 = vpack.c.b16 %v4720, %v4718
        %v4819 = vpack.c.b16 %v4721, %v4719
        %v4820 = vpack.c.b16 %v4724, %v4722
        %v4821 = vpack.c.b16 %v4725, %v4723
        %v4822 = vpack.c.b16 %v4728, %v4726
        %v4823 = vpack.c.b16 %v4729, %v4727
        %v4824 = vpack.c.b16 %v4732, %v4730
        %v4825 = vpack.c.b16 %v4733, %v4731
        %v4826 = vpack.c.b16 %v4736, %v4734
        %v4827 = vpack.c.b16 %v4737, %v4735
        %v4828 = vpack.c.b16 %v4740, %v4738
        %v4829 = vpack.c.b16 %v4741, %v4739
        %v4830 = vpack.c.b16 %v4744, %v4742
        %v4831 = vpack.c.b16 %v4745, %v4743
        %v4832 = vpack.c.b16 %v4748, %v4746
        %v4833 = vpack.c.b16 %v4749, %v4747
        %v4834 = vpack.c.b16 %v4752, %v4750
        %v4835 = vpack.c.b16 %v4753, %v4751
        %v4836 = vpack.c.b16 %v4756, %v4754
        %v4837 = vpack.c.b16 %v4757, %v4755
        %v4838 = vpack.c.b16 %v4760, %v4758
        %v4839 = vpack.c.b16 %v4761, %v4759
        %v4840 = vpack.c.b16 %v4764, %v4762
        %v4841 = vpack.c.b16 %v4765, %v4763
        %v4842 = vpack.c.b16 %v4768, %v4766
        %v4843 = vpack.c.b16 %v4769, %v4767
        %v4844 = vpack.c.b16 %v4772, %v4770
        %v4845 = vpack.c.b16 %v4773, %v4771
        %v4846 = vpack.c.b16 %v4776, %v4774
        %v4847 = vpack.c.b16 %v4777, %v4775
        %v4848 = vpack.c.b16 %v4780, %v4778
        %v4849 = vpack.c.b16 %v4781, %v4779
        %v4850 = vpack.c.b16 %v4784, %v4782
        %v4851 = vpack.c.b16 %v4785, %v4783
        %v4852 = vpack.c.b16 %v4788, %v4786
        %v4853 = vpack.c.b16 %v4789, %v4787
        %4918 = vmatprep.subr.bf16.mxu0 %v4805
        %4919 = vmatpush1.bf16.msra.mxu0 %v4804
        %4920 = vmatprep.subr.bf16.mxu0 %v4803
        %4921 = vmatpush1.bf16.msra.mxu0 %v4802
        %4922 = vmatprep.subr.bf16.mxu0 %v4801
        %4923 = vmatpush1.bf16.msra.mxu0 %v4800
        %4924 = vmatprep.subr.bf16.mxu0 %v4799
        %4925 = vmatpush1.bf16.msra.mxu0 %v4798
        %4926 = vmatprep.subr.bf16.mxu0 %v4797
        %4927 = vmatpush1.bf16.msra.mxu0 %v4796
        %4928 = vmatprep.subr.bf16.mxu0 %v4795
        %4929 = vmatpush1.bf16.msra.mxu0 %v4794
        %4930 = vmatprep.subr.bf16.mxu0 %v4793
        %4931 = vmatpush1.bf16.msra.mxu0 %v4792
        %4932 = vmatprep.subr.bf16.mxu0 %v4791
        %4933 = vmatpush1.bf16.msra.mxu0 %v4790
        %4934 = vmatprep.subr.bf16.mxu0 %v4821
        %4935 = vmatpush2.bf16.msra.mxu0 %v4820
        %4936 = vmatprep.subr.bf16.mxu0 %v4819
        %4937 = vmatpush2.bf16.msra.mxu0 %v4818
        %4938 = vmatprep.subr.bf16.mxu0 %v4817
        %4939 = vmatpush2.bf16.msra.mxu0 %v4816
        %4940 = vmatprep.subr.bf16.mxu0 %v4815
        %4941 = vmatpush2.bf16.msra.mxu0 %v4814
        %4942 = vmatprep.subr.bf16.mxu0 %v4813
        %4943 = vmatpush2.bf16.msra.mxu0 %v4812
        %4944 = vmatprep.subr.bf16.mxu0 %v4811
        %4945 = vmatpush2.bf16.msra.mxu0 %v4810
        %4946 = vmatprep.subr.bf16.mxu0 %v4809
        %4947 = vmatpush2.bf16.msra.mxu0 %v4808
        %4948 = vmatprep.subr.bf16.mxu0 %v4807
        %4949 = vmatpush2.bf16.msra.mxu0 %v4806
        %4950 = vmatprep.mubr.bf16.mxu0 %v4518
        %4951 = vmatmul.mubr.bf16.gmra.mxu0 %v4517
        %v4952 = vpop.f32.mrf.mxu0
        %v4953 = vadd.f32 0.0, %v4952
        %v4954 = vpop.f32.mrf.mxu0
        %v4955 = vadd.f32 0.0, %v4954
        %v4956 = vpop.f32.mrf.mxu0
        %v4957 = vadd.f32 0.0, %v4956
        %v4958 = vpop.f32.mrf.mxu0
        %v4959 = vadd.f32 0.0, %v4958
        %4960 = vmatprep.mubr.bf16.mxu0 %v4522
        %4961 = vmatmul.mubr.bf16.gmra.mxu0 %v4521
        %v4962 = vpop.f32.mrf.mxu0
        %v4963 = vadd.f32 0.0, %v4962
        %v4964 = vpop.f32.mrf.mxu0
        %v4965 = vadd.f32 0.0, %v4964
        %v4966 = vpop.f32.mrf.mxu0
        %v4967 = vadd.f32 0.0, %v4966
        %v4968 = vpop.f32.mrf.mxu0
        %v4969 = vadd.f32 0.0, %v4968
        %4970 = vmatprep.mubr.bf16.mxu0 %v4526
        %4971 = vmatmul.mubr.bf16.gmra.mxu0 %v4525
        %v4972 = vpop.f32.mrf.mxu0
        %v4973 = vadd.f32 0.0, %v4972
        %v4974 = vpop.f32.mrf.mxu0
        %v4975 = vadd.f32 0.0, %v4974
        %v4976 = vpop.f32.mrf.mxu0
        %v4977 = vadd.f32 0.0, %v4976
        %v4978 = vpop.f32.mrf.mxu0
        %v4979 = vadd.f32 0.0, %v4978
        %4980 = vmatprep.mubr.bf16.mxu0 %v4530
        %4981 = vmatmul.mubr.bf16.gmra.mxu0 %v4529
        %v4982 = vpop.f32.mrf.mxu0
        %v4983 = vadd.f32 0.0, %v4982
        %v4984 = vpop.f32.mrf.mxu0
        %v4985 = vadd.f32 0.0, %v4984
        %v4986 = vpop.f32.mrf.mxu0
        %v4987 = vadd.f32 0.0, %v4986
        %v4988 = vpop.f32.mrf.mxu0
        %v4989 = vadd.f32 0.0, %v4988
        %4990 = vdwg.mxu0
        %4991 = vmatprep.subr.bf16.mxu0 %v4837
        %4992 = vmatpush1.bf16.msra.mxu0 %v4836
        %4993 = vmatprep.subr.bf16.mxu0 %v4835
        %4994 = vmatpush1.bf16.msra.mxu0 %v4834
        %4995 = vmatprep.subr.bf16.mxu0 %v4833
        %4996 = vmatpush1.bf16.msra.mxu0 %v4832
        %4997 = vmatprep.subr.bf16.mxu0 %v4831
        %4998 = vmatpush1.bf16.msra.mxu0 %v4830
        %4999 = vmatprep.subr.bf16.mxu0 %v4829
        %5000 = vmatpush1.bf16.msra.mxu0 %v4828
        %5001 = vmatprep.subr.bf16.mxu0 %v4827
        %5002 = vmatpush1.bf16.msra.mxu0 %v4826
        %5003 = vmatprep.subr.bf16.mxu0 %v4825
        %5004 = vmatpush1.bf16.msra.mxu0 %v4824
        %5005 = vmatprep.subr.bf16.mxu0 %v4823
        %5006 = vmatpush1.bf16.msra.mxu0 %v4822
        %5007 = vmatprep.subr.bf16.mxu0 %v4853
        %5008 = vmatpush2.bf16.msra.mxu0 %v4852
        %5009 = vmatprep.subr.bf16.mxu0 %v4851
        %5010 = vmatpush2.bf16.msra.mxu0 %v4850
        %5011 = vmatprep.subr.bf16.mxu0 %v4849
        %5012 = vmatpush2.bf16.msra.mxu0 %v4848
        %5013 = vmatprep.subr.bf16.mxu0 %v4847
        %5014 = vmatpush2.bf16.msra.mxu0 %v4846
        %5015 = vmatprep.subr.bf16.mxu0 %v4845
        %5016 = vmatpush2.bf16.msra.mxu0 %v4844
        %5017 = vmatprep.subr.bf16.mxu0 %v4843
        %5018 = vmatpush2.bf16.msra.mxu0 %v4842
        %5019 = vmatprep.subr.bf16.mxu0 %v4841
        %5020 = vmatpush2.bf16.msra.mxu0 %v4840
        %5021 = vmatprep.subr.bf16.mxu0 %v4839
        %5022 = vmatpush2.bf16.msra.mxu0 %v4838
        %5023 = vmatprep.mubr.bf16.mxu0 %v4520
        %5024 = vmatmul.mubr.bf16.gmra.mxu0 %v4519
        %v5025 = vpop.f32.mrf.mxu0
        %v5026 = vadd.f32 %v4953, %v5025
        %v5027 = vpop.f32.mrf.mxu0
        %v5028 = vadd.f32 %v4955, %v5027
        %v5029 = vpop.f32.mrf.mxu0
        %v5030 = vadd.f32 %v4957, %v5029
        %v5031 = vpop.f32.mrf.mxu0
        %v5032 = vadd.f32 %v4959, %v5031
        %5033 = vmatprep.mubr.bf16.mxu0 %v4524
        %5034 = vmatmul.mubr.bf16.gmra.mxu0 %v4523
        %v5035 = vpop.f32.mrf.mxu0
        %v5036 = vadd.f32 %v4963, %v5035
        %v5037 = vpop.f32.mrf.mxu0
        %v5038 = vadd.f32 %v4965, %v5037
        %v5039 = vpop.f32.mrf.mxu0
        %v5040 = vadd.f32 %v4967, %v5039
        %v5041 = vpop.f32.mrf.mxu0
        %v5042 = vadd.f32 %v4969, %v5041
        %5043 = vmatprep.mubr.bf16.mxu0 %v4528
        %5044 = vmatmul.mubr.bf16.gmra.mxu0 %v4527
        %v5045 = vpop.f32.mrf.mxu0
        %v5046 = vadd.f32 %v4973, %v5045
        %v5047 = vpop.f32.mrf.mxu0
        %v5048 = vadd.f32 %v4975, %v5047
        %v5049 = vpop.f32.mrf.mxu0
        %v5050 = vadd.f32 %v4977, %v5049
        %v5051 = vpop.f32.mrf.mxu0
        %v5052 = vadd.f32 %v4979, %v5051
        %5053 = vmatprep.mubr.bf16.mxu0 %v4532
        %5054 = vmatmul.mubr.bf16.gmra.mxu0 %v4531
        %v5055 = vpop.f32.mrf.mxu0
        %v5056 = vadd.f32 %v4983, %v5055
        %v5057 = vpop.f32.mrf.mxu0
        %v5058 = vadd.f32 %v4985, %v5057
        %v5059 = vpop.f32.mrf.mxu0
        %v5060 = vadd.f32 %v4987, %v5059
        %v5061 = vpop.f32.mrf.mxu0
        %v5062 = vadd.f32 %v4989, %v5061
        %5063 = vdwg.mxu0
        %v5064 = vadd.f32 %v4222, %v5026
        %v5065 = vadd.f32 %v4224, %v5028
        %v5066 = vadd.f32 %v4226, %v5030
        %v5067 = vadd.f32 %v4228, %v5032
        %v5068 = vadd.f32 %v4232, %v5036
        %v5069 = vadd.f32 %v4234, %v5038
        %v5070 = vadd.f32 %v4236, %v5040
        %v5071 = vadd.f32 %v4238, %v5042
        %v5072 = vadd.f32 %v4242, %v5046
        %v5073 = vadd.f32 %v4244, %v5048
        %v5074 = vadd.f32 %v4246, %v5050
        %v5075 = vadd.f32 %v4248, %v5052
        %v5076 = vadd.f32 %v4252, %v5056
        %v5077 = vadd.f32 %v4254, %v5058
        %v5078 = vadd.f32 %v4256, %v5060
        %v5079 = vadd.f32 %v4258, %v5062
        %v5080 = vld [vmem:[%s2845] sm:$0xfc]
        %v5081 = vld [vmem:[%s2845 + $0x8] sm:$0xfc]
        %v5082 = vld [vmem:[%s2845 + $0x10] sm:$0xfc]
        %v5083 = vld [vmem:[%s2845 + $0x18] sm:$0xfc]
        %v5084 = vld [vmem:[%s2845 + $0x20] sm:$0x3]
        %v5085 = vld [vmem:[%s2845 + $0x28] sm:$0x3]
        %v5086 = vld [vmem:[%s2845 + $0x30] sm:$0x3]
        %v5087 = vld [vmem:[%s2845 + $0x38] sm:$0x3]
        %v5088 = vld [vmem:[%s2845 + $0x60] sm:$0xfc]
        %v5089 = vld [vmem:[%s2845 + $0x68] sm:$0xfc]
        %v5090 = vld [vmem:[%s2845 + $0x70] sm:$0xfc]
        %v5091 = vld [vmem:[%s2845 + $0x78] sm:$0xfc]
        %v5092 = vld [vmem:[%s2845 + $0x80] sm:$0x3]
        %v5093 = vld [vmem:[%s2845 + $0x88] sm:$0x3]
        %v5094 = vld [vmem:[%s2845 + $0x90] sm:$0x3]
        %v5095 = vld [vmem:[%s2845 + $0x98] sm:$0x3]
        %v5096 = vld [vmem:[%s2845 + $0xc0] sm:$0xfc]
        %v5097 = vld [vmem:[%s2845 + $0xc8] sm:$0xfc]
        %v5098 = vld [vmem:[%s2845 + $0xd0] sm:$0xfc]
        %v5099 = vld [vmem:[%s2845 + $0xd8] sm:$0xfc]
        %v5100 = vld [vmem:[%s2845 + $0xe0] sm:$0x3]
        %v5101 = vld [vmem:[%s2845 + $0xe8] sm:$0x3]
        %v5102 = vld [vmem:[%s2845 + $0xf0] sm:$0x3]
        %v5103 = vld [vmem:[%s2845 + $0xf8] sm:$0x3]
        %v5104 = vld [vmem:[%s2845 + $0x120] sm:$0xfc]
        %v5105 = vld [vmem:[%s2845 + $0x128] sm:$0xfc]
        %v5106 = vld [vmem:[%s2845 + $0x130] sm:$0xfc]
        %v5107 = vld [vmem:[%s2845 + $0x138] sm:$0xfc]
        %v5108 = vld [vmem:[%s2845 + $0x140] sm:$0x3]
        %v5109 = vld [vmem:[%s2845 + $0x148] sm:$0x3]
        %v5110 = vld [vmem:[%s2845 + $0x150] sm:$0x3]
        %v5111 = vld [vmem:[%s2845 + $0x158] sm:$0x3]
        %v5112 = vld [vmem:[%s2845 + $0x180] sm:$0xfc]
        %v5113 = vld [vmem:[%s2845 + $0x188] sm:$0xfc]
        %v5114 = vld [vmem:[%s2845 + $0x190] sm:$0xfc]
        %v5115 = vld [vmem:[%s2845 + $0x198] sm:$0xfc]
        %v5116 = vld [vmem:[%s2845 + $0x1a0] sm:$0x3]
        %v5117 = vld [vmem:[%s2845 + $0x1a8] sm:$0x3]
        %v5118 = vld [vmem:[%s2845 + $0x1b0] sm:$0x3]
        %v5119 = vld [vmem:[%s2845 + $0x1b8] sm:$0x3]
        %v5120 = vld [vmem:[%s2845 + $0x1e0] sm:$0xfc]
        %v5121 = vld [vmem:[%s2845 + $0x1e8] sm:$0xfc]
        %v5122 = vld [vmem:[%s2845 + $0x1f0] sm:$0xfc]
        %v5123 = vld [vmem:[%s2845 + $0x1f8] sm:$0xfc]
        %v5124 = vld [vmem:[%s2845 + $0x200] sm:$0x3]
        %v5125 = vld [vmem:[%s2845 + $0x208] sm:$0x3]
        %v5126 = vld [vmem:[%s2845 + $0x210] sm:$0x3]
        %v5127 = vld [vmem:[%s2845 + $0x218] sm:$0x3]
        %v5128 = vld [vmem:[%s2845 + $0x240] sm:$0xfc]
        %v5129 = vld [vmem:[%s2845 + $0x248] sm:$0xfc]
        %v5130 = vld [vmem:[%s2845 + $0x250] sm:$0xfc]
        %v5131 = vld [vmem:[%s2845 + $0x258] sm:$0xfc]
        %v5132 = vld [vmem:[%s2845 + $0x260] sm:$0x3]
        %v5133 = vld [vmem:[%s2845 + $0x268] sm:$0x3]
        %v5134 = vld [vmem:[%s2845 + $0x270] sm:$0x3]
        %v5135 = vld [vmem:[%s2845 + $0x278] sm:$0x3]
        %v5136 = vld [vmem:[%s2845 + $0x2a0] sm:$0xfc]
        %v5137 = vld [vmem:[%s2845 + $0x2a8] sm:$0xfc]
        %v5138 = vld [vmem:[%s2845 + $0x2b0] sm:$0xfc]
        %v5139 = vld [vmem:[%s2845 + $0x2b8] sm:$0xfc]
        %v5140 = vld [vmem:[%s2845 + $0x2c0] sm:$0x3]
        %v5141 = vld [vmem:[%s2845 + $0x2c8] sm:$0x3]
        %v5142 = vld [vmem:[%s2845 + $0x2d0] sm:$0x3]
        %v5143 = vld [vmem:[%s2845 + $0x2d8] sm:$0x3]
        %v5208 = vrot.slane %v5080, 2
        %v5209 = vrot.slane %v5084, 2
        %v5210 = vsel %vm3006, %v5208, %v5209
        %v5211 = vrot.slane %v5081, 2
        %v5212 = vrot.slane %v5085, 2
        %v5213 = vsel %vm3006, %v5211, %v5212
        %v5214 = vrot.slane %v5082, 2
        %v5215 = vrot.slane %v5086, 2
        %v5216 = vsel %vm3006, %v5214, %v5215
        %v5217 = vrot.slane %v5083, 2
        %v5218 = vrot.slane %v5087, 2
        %v5219 = vsel %vm3006, %v5217, %v5218
        %v5220 = vrot.slane %v5088, 2
        %v5221 = vrot.slane %v5092, 2
        %v5222 = vsel %vm3006, %v5220, %v5221
        %v5223 = vrot.slane %v5089, 2
        %v5224 = vrot.slane %v5093, 2
        %v5225 = vsel %vm3006, %v5223, %v5224
        %v5226 = vrot.slane %v5090, 2
        %v5227 = vrot.slane %v5094, 2
        %v5228 = vsel %vm3006, %v5226, %v5227
        %v5229 = vrot.slane %v5091, 2
        %v5230 = vrot.slane %v5095, 2
        %v5231 = vsel %vm3006, %v5229, %v5230
        %v5232 = vrot.slane %v5096, 2
        %v5233 = vrot.slane %v5100, 2
        %v5234 = vsel %vm3006, %v5232, %v5233
        %v5235 = vrot.slane %v5097, 2
        %v5236 = vrot.slane %v5101, 2
        %v5237 = vsel %vm3006, %v5235, %v5236
        %v5238 = vrot.slane %v5098, 2
        %v5239 = vrot.slane %v5102, 2
        %v5240 = vsel %vm3006, %v5238, %v5239
        %v5241 = vrot.slane %v5099, 2
        %v5242 = vrot.slane %v5103, 2
        %v5243 = vsel %vm3006, %v5241, %v5242
        %v5244 = vrot.slane %v5104, 2
        %v5245 = vrot.slane %v5108, 2
        %v5246 = vsel %vm3006, %v5244, %v5245
        %v5247 = vrot.slane %v5105, 2
        %v5248 = vrot.slane %v5109, 2
        %v5249 = vsel %vm3006, %v5247, %v5248
        %v5250 = vrot.slane %v5106, 2
        %v5251 = vrot.slane %v5110, 2
        %v5252 = vsel %vm3006, %v5250, %v5251
        %v5253 = vrot.slane %v5107, 2
        %v5254 = vrot.slane %v5111, 2
        %v5255 = vsel %vm3006, %v5253, %v5254
        %v5256 = vrot.slane %v5112, 2
        %v5257 = vrot.slane %v5116, 2
        %v5258 = vsel %vm3006, %v5256, %v5257
        %v5259 = vrot.slane %v5113, 2
        %v5260 = vrot.slane %v5117, 2
        %v5261 = vsel %vm3006, %v5259, %v5260
        %v5262 = vrot.slane %v5114, 2
        %v5263 = vrot.slane %v5118, 2
        %v5264 = vsel %vm3006, %v5262, %v5263
        %v5265 = vrot.slane %v5115, 2
        %v5266 = vrot.slane %v5119, 2
        %v5267 = vsel %vm3006, %v5265, %v5266
        %v5268 = vrot.slane %v5120, 2
        %v5269 = vrot.slane %v5124, 2
        %v5270 = vsel %vm3006, %v5268, %v5269
        %v5271 = vrot.slane %v5121, 2
        %v5272 = vrot.slane %v5125, 2
        %v5273 = vsel %vm3006, %v5271, %v5272
        %v5274 = vrot.slane %v5122, 2
        %v5275 = vrot.slane %v5126, 2
        %v5276 = vsel %vm3006, %v5274, %v5275
        %v5277 = vrot.slane %v5123, 2
        %v5278 = vrot.slane %v5127, 2
        %v5279 = vsel %vm3006, %v5277, %v5278
        %v5280 = vrot.slane %v5128, 2
        %v5281 = vrot.slane %v5132, 2
        %v5282 = vsel %vm3006, %v5280, %v5281
        %v5283 = vrot.slane %v5129, 2
        %v5284 = vrot.slane %v5133, 2
        %v5285 = vsel %vm3006, %v5283, %v5284
        %v5286 = vrot.slane %v5130, 2
        %v5287 = vrot.slane %v5134, 2
        %v5288 = vsel %vm3006, %v5286, %v5287
        %v5289 = vrot.slane %v5131, 2
        %v5290 = vrot.slane %v5135, 2
        %v5291 = vsel %vm3006, %v5289, %v5290
        %v5292 = vrot.slane %v5136, 2
        %v5293 = vrot.slane %v5140, 2
        %v5294 = vsel %vm3006, %v5292, %v5293
        %v5295 = vrot.slane %v5137, 2
        %v5296 = vrot.slane %v5141, 2
        %v5297 = vsel %vm3006, %v5295, %v5296
        %v5298 = vrot.slane %v5138, 2
        %v5299 = vrot.slane %v5142, 2
        %v5300 = vsel %vm3006, %v5298, %v5299
        %v5301 = vrot.slane %v5139, 2
        %v5302 = vrot.slane %v5143, 2
        %v5303 = vsel %vm3006, %v5301, %v5302
        %v5336 = vpack.c.bf16 %v5222, %v5210
        %v5337 = vpack.c.bf16 %v5225, %v5213
        %v5338 = vpack.c.bf16 %v5228, %v5216
        %v5339 = vpack.c.bf16 %v5231, %v5219
        %v5340 = vpack.c.bf16 %v5246, %v5234
        %v5341 = vpack.c.bf16 %v5249, %v5237
        %v5342 = vpack.c.bf16 %v5252, %v5240
        %v5343 = vpack.c.bf16 %v5255, %v5243
        %v5344 = vpack.c.bf16 %v5270, %v5258
        %v5345 = vpack.c.bf16 %v5273, %v5261
        %v5346 = vpack.c.bf16 %v5276, %v5264
        %v5347 = vpack.c.bf16 %v5279, %v5267
        %v5348 = vpack.c.bf16 %v5294, %v5282
        %v5349 = vpack.c.bf16 %v5297, %v5285
        %v5350 = vpack.c.bf16 %v5300, %v5288
        %v5351 = vpack.c.bf16 %v5303, %v5291
        %s5352 = scalar_lea.vmem [#allocation7], 1536
        %v5353 = vld [vmem:[%s5352] sm:$0xff]
        %v5354 = vld [vmem:[%s5352 + $0x8] sm:$0xff]
        %v5355 = vld [vmem:[%s5352 + $0x10] sm:$0xff]
        %v5356 = vld [vmem:[%s5352 + $0x18] sm:$0xff]
        %v5357 = vld [vmem:[%s5352 + $0x20] sm:$0xff]
        %v5358 = vld [vmem:[%s5352 + $0x28] sm:$0xff]
        %v5359 = vld [vmem:[%s5352 + $0x30] sm:$0xff]
        %v5360 = vld [vmem:[%s5352 + $0x38] sm:$0xff]
        %v5361 = vld [vmem:[%s5352 + $0x40] sm:$0xff]
        %v5362 = vld [vmem:[%s5352 + $0x48] sm:$0xff]
        %v5363 = vld [vmem:[%s5352 + $0x50] sm:$0xff]
        %v5364 = vld [vmem:[%s5352 + $0x58] sm:$0xff]
        %v5365 = vld [vmem:[%s5352 + $0x60] sm:$0xff]
        %v5366 = vld [vmem:[%s5352 + $0x68] sm:$0xff]
        %v5367 = vld [vmem:[%s5352 + $0x70] sm:$0xff]
        %v5368 = vld [vmem:[%s5352 + $0x78] sm:$0xff]
        %v5369 = vld [vmem:[%s5352 + $0x80] sm:$0xff]
        %v5370 = vld [vmem:[%s5352 + $0x88] sm:$0xff]
        %v5371 = vld [vmem:[%s5352 + $0x90] sm:$0xff]
        %v5372 = vld [vmem:[%s5352 + $0x98] sm:$0xff]
        %v5373 = vld [vmem:[%s5352 + $0xa0] sm:$0xff]
        %v5374 = vld [vmem:[%s5352 + $0xa8] sm:$0xff]
        %v5375 = vld [vmem:[%s5352 + $0xb0] sm:$0xff]
        %v5376 = vld [vmem:[%s5352 + $0xb8] sm:$0xff]
        %v5377 = vld [vmem:[%s5352 + $0xc0] sm:$0xff]
        %v5378 = vld [vmem:[%s5352 + $0xc8] sm:$0xff]
        %v5379 = vld [vmem:[%s5352 + $0xd0] sm:$0xff]
        %v5380 = vld [vmem:[%s5352 + $0xd8] sm:$0xff]
        %v5381 = vld [vmem:[%s5352 + $0xe0] sm:$0xff]
        %v5382 = vld [vmem:[%s5352 + $0xe8] sm:$0xff]
        %v5383 = vld [vmem:[%s5352 + $0xf0] sm:$0xff]
        %v5384 = vld [vmem:[%s5352 + $0xf8] sm:$0xff]
        %v5385 = vld [vmem:[%s5352 + $0x100] sm:$0xff]
        %v5386 = vld [vmem:[%s5352 + $0x108] sm:$0xff]
        %v5387 = vld [vmem:[%s5352 + $0x110] sm:$0xff]
        %v5388 = vld [vmem:[%s5352 + $0x118] sm:$0xff]
        %v5389 = vld [vmem:[%s5352 + $0x120] sm:$0xff]
        %v5390 = vld [vmem:[%s5352 + $0x128] sm:$0xff]
        %v5391 = vld [vmem:[%s5352 + $0x130] sm:$0xff]
        %v5392 = vld [vmem:[%s5352 + $0x138] sm:$0xff]
        %v5393 = vld [vmem:[%s5352 + $0x140] sm:$0xff]
        %v5394 = vld [vmem:[%s5352 + $0x148] sm:$0xff]
        %v5395 = vld [vmem:[%s5352 + $0x150] sm:$0xff]
        %v5396 = vld [vmem:[%s5352 + $0x158] sm:$0xff]
        %v5397 = vld [vmem:[%s5352 + $0x160] sm:$0xff]
        %v5398 = vld [vmem:[%s5352 + $0x168] sm:$0xff]
        %v5399 = vld [vmem:[%s5352 + $0x170] sm:$0xff]
        %v5400 = vld [vmem:[%s5352 + $0x178] sm:$0xff]
        %v5401 = vld [vmem:[%s5352 + $0x180] sm:$0xff]
        %v5402 = vld [vmem:[%s5352 + $0x188] sm:$0xff]
        %v5403 = vld [vmem:[%s5352 + $0x190] sm:$0xff]
        %v5404 = vld [vmem:[%s5352 + $0x198] sm:$0xff]
        %v5405 = vld [vmem:[%s5352 + $0x1a0] sm:$0xff]
        %v5406 = vld [vmem:[%s5352 + $0x1a8] sm:$0xff]
        %v5407 = vld [vmem:[%s5352 + $0x1b0] sm:$0xff]
        %v5408 = vld [vmem:[%s5352 + $0x1b8] sm:$0xff]
        %v5409 = vld [vmem:[%s5352 + $0x1c0] sm:$0xff]
        %v5410 = vld [vmem:[%s5352 + $0x1c8] sm:$0xff]
        %v5411 = vld [vmem:[%s5352 + $0x1d0] sm:$0xff]
        %v5412 = vld [vmem:[%s5352 + $0x1d8] sm:$0xff]
        %v5413 = vld [vmem:[%s5352 + $0x1e0] sm:$0xff]
        %v5414 = vld [vmem:[%s5352 + $0x1e8] sm:$0xff]
        %v5415 = vld [vmem:[%s5352 + $0x1f0] sm:$0xff]
        %v5416 = vld [vmem:[%s5352 + $0x1f8] sm:$0xff]
        %v5481 = vunpack.c.l.b16 %v5353
        %v5482 = vunpack.c.h.b16 %v5353
        %v5483 = vunpack.c.l.b16 %v5354
        %v5484 = vunpack.c.h.b16 %v5354
        %v5485 = vunpack.c.l.b16 %v5355
        %v5486 = vunpack.c.h.b16 %v5355
        %v5487 = vunpack.c.l.b16 %v5356
        %v5488 = vunpack.c.h.b16 %v5356
        %v5489 = vunpack.c.l.b16 %v5357
        %v5490 = vunpack.c.h.b16 %v5357
        %v5491 = vunpack.c.l.b16 %v5358
        %v5492 = vunpack.c.h.b16 %v5358
        %v5493 = vunpack.c.l.b16 %v5359
        %v5494 = vunpack.c.h.b16 %v5359
        %v5495 = vunpack.c.l.b16 %v5360
        %v5496 = vunpack.c.h.b16 %v5360
        %v5497 = vunpack.c.l.b16 %v5361
        %v5498 = vunpack.c.h.b16 %v5361
        %v5499 = vunpack.c.l.b16 %v5362
        %v5500 = vunpack.c.h.b16 %v5362
        %v5501 = vunpack.c.l.b16 %v5363
        %v5502 = vunpack.c.h.b16 %v5363
        %v5503 = vunpack.c.l.b16 %v5364
        %v5504 = vunpack.c.h.b16 %v5364
        %v5505 = vunpack.c.l.b16 %v5365
        %v5506 = vunpack.c.h.b16 %v5365
        %v5507 = vunpack.c.l.b16 %v5366
        %v5508 = vunpack.c.h.b16 %v5366
        %v5509 = vunpack.c.l.b16 %v5367
        %v5510 = vunpack.c.h.b16 %v5367
        %v5511 = vunpack.c.l.b16 %v5368
        %v5512 = vunpack.c.h.b16 %v5368
        %v5513 = vunpack.c.l.b16 %v5369
        %v5514 = vunpack.c.h.b16 %v5369
        %v5515 = vunpack.c.l.b16 %v5370
        %v5516 = vunpack.c.h.b16 %v5370
        %v5517 = vunpack.c.l.b16 %v5371
        %v5518 = vunpack.c.h.b16 %v5371
        %v5519 = vunpack.c.l.b16 %v5372
        %v5520 = vunpack.c.h.b16 %v5372
        %v5521 = vunpack.c.l.b16 %v5373
        %v5522 = vunpack.c.h.b16 %v5373
        %v5523 = vunpack.c.l.b16 %v5374
        %v5524 = vunpack.c.h.b16 %v5374
        %v5525 = vunpack.c.l.b16 %v5375
        %v5526 = vunpack.c.h.b16 %v5375
        %v5527 = vunpack.c.l.b16 %v5376
        %v5528 = vunpack.c.h.b16 %v5376
        %v5529 = vunpack.c.l.b16 %v5377
        %v5530 = vunpack.c.h.b16 %v5377
        %v5531 = vunpack.c.l.b16 %v5378
        %v5532 = vunpack.c.h.b16 %v5378
        %v5533 = vunpack.c.l.b16 %v5379
        %v5534 = vunpack.c.h.b16 %v5379
        %v5535 = vunpack.c.l.b16 %v5380
        %v5536 = vunpack.c.h.b16 %v5380
        %v5537 = vunpack.c.l.b16 %v5381
        %v5538 = vunpack.c.h.b16 %v5381
        %v5539 = vunpack.c.l.b16 %v5382
        %v5540 = vunpack.c.h.b16 %v5382
        %v5541 = vunpack.c.l.b16 %v5383
        %v5542 = vunpack.c.h.b16 %v5383
        %v5543 = vunpack.c.l.b16 %v5384
        %v5544 = vunpack.c.h.b16 %v5384
        %v5545 = vunpack.c.l.b16 %v5385
        %v5546 = vunpack.c.h.b16 %v5385
        %v5547 = vunpack.c.l.b16 %v5386
        %v5548 = vunpack.c.h.b16 %v5386
        %v5549 = vunpack.c.l.b16 %v5387
        %v5550 = vunpack.c.h.b16 %v5387
        %v5551 = vunpack.c.l.b16 %v5388
        %v5552 = vunpack.c.h.b16 %v5388
        %v5553 = vunpack.c.l.b16 %v5389
        %v5554 = vunpack.c.h.b16 %v5389
        %v5555 = vunpack.c.l.b16 %v5390
        %v5556 = vunpack.c.h.b16 %v5390
        %v5557 = vunpack.c.l.b16 %v5391
        %v5558 = vunpack.c.h.b16 %v5391
        %v5559 = vunpack.c.l.b16 %v5392
        %v5560 = vunpack.c.h.b16 %v5392
        %v5561 = vunpack.c.l.b16 %v5393
        %v5562 = vunpack.c.h.b16 %v5393
        %v5563 = vunpack.c.l.b16 %v5394
        %v5564 = vunpack.c.h.b16 %v5394
        %v5565 = vunpack.c.l.b16 %v5395
        %v5566 = vunpack.c.h.b16 %v5395
        %v5567 = vunpack.c.l.b16 %v5396
        %v5568 = vunpack.c.h.b16 %v5396
        %v5569 = vunpack.c.l.b16 %v5397
        %v5570 = vunpack.c.h.b16 %v5397
        %v5571 = vunpack.c.l.b16 %v5398
        %v5572 = vunpack.c.h.b16 %v5398
        %v5573 = vunpack.c.l.b16 %v5399
        %v5574 = vunpack.c.h.b16 %v5399
        %v5575 = vunpack.c.l.b16 %v5400
        %v5576 = vunpack.c.h.b16 %v5400
        %v5577 = vunpack.c.l.b16 %v5401
        %v5578 = vunpack.c.h.b16 %v5401
        %v5579 = vunpack.c.l.b16 %v5402
        %v5580 = vunpack.c.h.b16 %v5402
        %v5581 = vunpack.c.l.b16 %v5403
        %v5582 = vunpack.c.h.b16 %v5403
        %v5583 = vunpack.c.l.b16 %v5404
        %v5584 = vunpack.c.h.b16 %v5404
        %v5585 = vunpack.c.l.b16 %v5405
        %v5586 = vunpack.c.h.b16 %v5405
        %v5587 = vunpack.c.l.b16 %v5406
        %v5588 = vunpack.c.h.b16 %v5406
        %v5589 = vunpack.c.l.b16 %v5407
        %v5590 = vunpack.c.h.b16 %v5407
        %v5591 = vunpack.c.l.b16 %v5408
        %v5592 = vunpack.c.h.b16 %v5408
        %v5593 = vunpack.c.l.b16 %v5409
        %v5594 = vunpack.c.h.b16 %v5409
        %v5595 = vunpack.c.l.b16 %v5410
        %v5596 = vunpack.c.h.b16 %v5410
        %v5597 = vunpack.c.l.b16 %v5411
        %v5598 = vunpack.c.h.b16 %v5411
        %v5599 = vunpack.c.l.b16 %v5412
        %v5600 = vunpack.c.h.b16 %v5412
        %v5601 = vunpack.c.l.b16 %v5413
        %v5602 = vunpack.c.h.b16 %v5413
        %v5603 = vunpack.c.l.b16 %v5414
        %v5604 = vunpack.c.h.b16 %v5414
        %v5605 = vunpack.c.l.b16 %v5415
        %v5606 = vunpack.c.h.b16 %v5415
        %v5607 = vunpack.c.l.b16 %v5416
        %v5608 = vunpack.c.h.b16 %v5416
        %v5609 = vpack.c.b16 %v5483, %v5481
        %v5610 = vpack.c.b16 %v5484, %v5482
        %v5611 = vpack.c.b16 %v5487, %v5485
        %v5612 = vpack.c.b16 %v5488, %v5486
        %v5613 = vpack.c.b16 %v5491, %v5489
        %v5614 = vpack.c.b16 %v5492, %v5490
        %v5615 = vpack.c.b16 %v5495, %v5493
        %v5616 = vpack.c.b16 %v5496, %v5494
        %v5617 = vpack.c.b16 %v5499, %v5497
        %v5618 = vpack.c.b16 %v5500, %v5498
        %v5619 = vpack.c.b16 %v5503, %v5501
        %v5620 = vpack.c.b16 %v5504, %v5502
        %v5621 = vpack.c.b16 %v5507, %v5505
        %v5622 = vpack.c.b16 %v5508, %v5506
        %v5623 = vpack.c.b16 %v5511, %v5509
        %v5624 = vpack.c.b16 %v5512, %v5510
        %v5625 = vpack.c.b16 %v5515, %v5513
        %v5626 = vpack.c.b16 %v5516, %v5514
        %v5627 = vpack.c.b16 %v5519, %v5517
        %v5628 = vpack.c.b16 %v5520, %v5518
        %v5629 = vpack.c.b16 %v5523, %v5521
        %v5630 = vpack.c.b16 %v5524, %v5522
        %v5631 = vpack.c.b16 %v5527, %v5525
        %v5632 = vpack.c.b16 %v5528, %v5526
        %v5633 = vpack.c.b16 %v5531, %v5529
        %v5634 = vpack.c.b16 %v5532, %v5530
        %v5635 = vpack.c.b16 %v5535, %v5533
        %v5636 = vpack.c.b16 %v5536, %v5534
        %v5637 = vpack.c.b16 %v5539, %v5537
        %v5638 = vpack.c.b16 %v5540, %v5538
        %v5639 = vpack.c.b16 %v5543, %v5541
        %v5640 = vpack.c.b16 %v5544, %v5542
        %v5641 = vpack.c.b16 %v5547, %v5545
        %v5642 = vpack.c.b16 %v5548, %v5546
        %v5643 = vpack.c.b16 %v5551, %v5549
        %v5644 = vpack.c.b16 %v5552, %v5550
        %v5645 = vpack.c.b16 %v5555, %v5553
        %v5646 = vpack.c.b16 %v5556, %v5554
        %v5647 = vpack.c.b16 %v5559, %v5557
        %v5648 = vpack.c.b16 %v5560, %v5558
        %v5649 = vpack.c.b16 %v5563, %v5561
        %v5650 = vpack.c.b16 %v5564, %v5562
        %v5651 = vpack.c.b16 %v5567, %v5565
        %v5652 = vpack.c.b16 %v5568, %v5566
        %v5653 = vpack.c.b16 %v5571, %v5569
        %v5654 = vpack.c.b16 %v5572, %v5570
        %v5655 = vpack.c.b16 %v5575, %v5573
        %v5656 = vpack.c.b16 %v5576, %v5574
        %v5657 = vpack.c.b16 %v5579, %v5577
        %v5658 = vpack.c.b16 %v5580, %v5578
        %v5659 = vpack.c.b16 %v5583, %v5581
        %v5660 = vpack.c.b16 %v5584, %v5582
        %v5661 = vpack.c.b16 %v5587, %v5585
        %v5662 = vpack.c.b16 %v5588, %v5586
        %v5663 = vpack.c.b16 %v5591, %v5589
        %v5664 = vpack.c.b16 %v5592, %v5590
        %v5665 = vpack.c.b16 %v5595, %v5593
        %v5666 = vpack.c.b16 %v5596, %v5594
        %v5667 = vpack.c.b16 %v5599, %v5597
        %v5668 = vpack.c.b16 %v5600, %v5598
        %v5669 = vpack.c.b16 %v5603, %v5601
        %v5670 = vpack.c.b16 %v5604, %v5602
        %v5671 = vpack.c.b16 %v5607, %v5605
        %v5672 = vpack.c.b16 %v5608, %v5606
        %5737 = vmatprep.subr.bf16.mxu0 %v5624
        %5738 = vmatpush1.bf16.msra.mxu0 %v5623
        %5739 = vmatprep.subr.bf16.mxu0 %v5622
        %5740 = vmatpush1.bf16.msra.mxu0 %v5621
        %5741 = vmatprep.subr.bf16.mxu0 %v5620
        %5742 = vmatpush1.bf16.msra.mxu0 %v5619
        %5743 = vmatprep.subr.bf16.mxu0 %v5618
        %5744 = vmatpush1.bf16.msra.mxu0 %v5617
        %5745 = vmatprep.subr.bf16.mxu0 %v5616
        %5746 = vmatpush1.bf16.msra.mxu0 %v5615
        %5747 = vmatprep.subr.bf16.mxu0 %v5614
        %5748 = vmatpush1.bf16.msra.mxu0 %v5613
        %5749 = vmatprep.subr.bf16.mxu0 %v5612
        %5750 = vmatpush1.bf16.msra.mxu0 %v5611
        %5751 = vmatprep.subr.bf16.mxu0 %v5610
        %5752 = vmatpush1.bf16.msra.mxu0 %v5609
        %5753 = vmatprep.subr.bf16.mxu0 %v5640
        %5754 = vmatpush2.bf16.msra.mxu0 %v5639
        %5755 = vmatprep.subr.bf16.mxu0 %v5638
        %5756 = vmatpush2.bf16.msra.mxu0 %v5637
        %5757 = vmatprep.subr.bf16.mxu0 %v5636
        %5758 = vmatpush2.bf16.msra.mxu0 %v5635
        %5759 = vmatprep.subr.bf16.mxu0 %v5634
        %5760 = vmatpush2.bf16.msra.mxu0 %v5633
        %5761 = vmatprep.subr.bf16.mxu0 %v5632
        %5762 = vmatpush2.bf16.msra.mxu0 %v5631
        %5763 = vmatprep.subr.bf16.mxu0 %v5630
        %5764 = vmatpush2.bf16.msra.mxu0 %v5629
        %5765 = vmatprep.subr.bf16.mxu0 %v5628
        %5766 = vmatpush2.bf16.msra.mxu0 %v5627
        %5767 = vmatprep.subr.bf16.mxu0 %v5626
        %5768 = vmatpush2.bf16.msra.mxu0 %v5625
        %5769 = vmatprep.mubr.bf16.mxu0 %v5337
        %5770 = vmatmul.mubr.bf16.gmra.mxu0 %v5336
        %v5771 = vpop.f32.mrf.mxu0
        %v5772 = vadd.f32 0.0, %v5771
        %v5773 = vpop.f32.mrf.mxu0
        %v5774 = vadd.f32 0.0, %v5773
        %v5775 = vpop.f32.mrf.mxu0
        %v5776 = vadd.f32 0.0, %v5775
        %v5777 = vpop.f32.mrf.mxu0
        %v5778 = vadd.f32 0.0, %v5777
        %5779 = vmatprep.mubr.bf16.mxu0 %v5341
        %5780 = vmatmul.mubr.bf16.gmra.mxu0 %v5340
        %v5781 = vpop.f32.mrf.mxu0
        %v5782 = vadd.f32 0.0, %v5781
        %v5783 = vpop.f32.mrf.mxu0
        %v5784 = vadd.f32 0.0, %v5783
        %v5785 = vpop.f32.mrf.mxu0
        %v5786 = vadd.f32 0.0, %v5785
        %v5787 = vpop.f32.mrf.mxu0
        %v5788 = vadd.f32 0.0, %v5787
        %5789 = vmatprep.mubr.bf16.mxu0 %v5345
        %5790 = vmatmul.mubr.bf16.gmra.mxu0 %v5344
        %v5791 = vpop.f32.mrf.mxu0
        %v5792 = vadd.f32 0.0, %v5791
        %v5793 = vpop.f32.mrf.mxu0
        %v5794 = vadd.f32 0.0, %v5793
        %v5795 = vpop.f32.mrf.mxu0
        %v5796 = vadd.f32 0.0, %v5795
        %v5797 = vpop.f32.mrf.mxu0
        %v5798 = vadd.f32 0.0, %v5797
        %5799 = vmatprep.mubr.bf16.mxu0 %v5349
        %5800 = vmatmul.mubr.bf16.gmra.mxu0 %v5348
        %v5801 = vpop.f32.mrf.mxu0
        %v5802 = vadd.f32 0.0, %v5801
        %v5803 = vpop.f32.mrf.mxu0
        %v5804 = vadd.f32 0.0, %v5803
        %v5805 = vpop.f32.mrf.mxu0
        %v5806 = vadd.f32 0.0, %v5805
        %v5807 = vpop.f32.mrf.mxu0
        %v5808 = vadd.f32 0.0, %v5807
        %5809 = vdwg.mxu0
        %5810 = vmatprep.subr.bf16.mxu0 %v5656
        %5811 = vmatpush1.bf16.msra.mxu0 %v5655
        %5812 = vmatprep.subr.bf16.mxu0 %v5654
        %5813 = vmatpush1.bf16.msra.mxu0 %v5653
        %5814 = vmatprep.subr.bf16.mxu0 %v5652
        %5815 = vmatpush1.bf16.msra.mxu0 %v5651
        %5816 = vmatprep.subr.bf16.mxu0 %v5650
        %5817 = vmatpush1.bf16.msra.mxu0 %v5649
        %5818 = vmatprep.subr.bf16.mxu0 %v5648
        %5819 = vmatpush1.bf16.msra.mxu0 %v5647
        %5820 = vmatprep.subr.bf16.mxu0 %v5646
        %5821 = vmatpush1.bf16.msra.mxu0 %v5645
        %5822 = vmatprep.subr.bf16.mxu0 %v5644
        %5823 = vmatpush1.bf16.msra.mxu0 %v5643
        %5824 = vmatprep.subr.bf16.mxu0 %v5642
        %5825 = vmatpush1.bf16.msra.mxu0 %v5641
        %5826 = vmatprep.subr.bf16.mxu0 %v5672
        %5827 = vmatpush2.bf16.msra.mxu0 %v5671
        %5828 = vmatprep.subr.bf16.mxu0 %v5670
        %5829 = vmatpush2.bf16.msra.mxu0 %v5669
        %5830 = vmatprep.subr.bf16.mxu0 %v5668
        %5831 = vmatpush2.bf16.msra.mxu0 %v5667
        %5832 = vmatprep.subr.bf16.mxu0 %v5666
        %5833 = vmatpush2.bf16.msra.mxu0 %v5665
        %5834 = vmatprep.subr.bf16.mxu0 %v5664
        %5835 = vmatpush2.bf16.msra.mxu0 %v5663
        %5836 = vmatprep.subr.bf16.mxu0 %v5662
        %5837 = vmatpush2.bf16.msra.mxu0 %v5661
        %5838 = vmatprep.subr.bf16.mxu0 %v5660
        %5839 = vmatpush2.bf16.msra.mxu0 %v5659
        %5840 = vmatprep.subr.bf16.mxu0 %v5658
        %5841 = vmatpush2.bf16.msra.mxu0 %v5657
        %5842 = vmatprep.mubr.bf16.mxu0 %v5339
        %5843 = vmatmul.mubr.bf16.gmra.mxu0 %v5338
        %v5844 = vpop.f32.mrf.mxu0
        %v5845 = vadd.f32 %v5772, %v5844
        %v5846 = vpop.f32.mrf.mxu0
        %v5847 = vadd.f32 %v5774, %v5846
        %v5848 = vpop.f32.mrf.mxu0
        %v5849 = vadd.f32 %v5776, %v5848
        %v5850 = vpop.f32.mrf.mxu0
        %v5851 = vadd.f32 %v5778, %v5850
        %5852 = vmatprep.mubr.bf16.mxu0 %v5343
        %5853 = vmatmul.mubr.bf16.gmra.mxu0 %v5342
        %v5854 = vpop.f32.mrf.mxu0
        %v5855 = vadd.f32 %v5782, %v5854
        %v5856 = vpop.f32.mrf.mxu0
        %v5857 = vadd.f32 %v5784, %v5856
        %v5858 = vpop.f32.mrf.mxu0
        %v5859 = vadd.f32 %v5786, %v5858
        %v5860 = vpop.f32.mrf.mxu0
        %v5861 = vadd.f32 %v5788, %v5860
        %5862 = vmatprep.mubr.bf16.mxu0 %v5347
        %5863 = vmatmul.mubr.bf16.gmra.mxu0 %v5346
        %v5864 = vpop.f32.mrf.mxu0
        %v5865 = vadd.f32 %v5792, %v5864
        %v5866 = vpop.f32.mrf.mxu0
        %v5867 = vadd.f32 %v5794, %v5866
        %v5868 = vpop.f32.mrf.mxu0
        %v5869 = vadd.f32 %v5796, %v5868
        %v5870 = vpop.f32.mrf.mxu0
        %v5871 = vadd.f32 %v5798, %v5870
        %5872 = vmatprep.mubr.bf16.mxu0 %v5351
        %5873 = vmatmul.mubr.bf16.gmra.mxu0 %v5350
        %v5874 = vpop.f32.mrf.mxu0
        %v5875 = vadd.f32 %v5802, %v5874
        %v5876 = vpop.f32.mrf.mxu0
        %v5877 = vadd.f32 %v5804, %v5876
        %v5878 = vpop.f32.mrf.mxu0
        %v5879 = vadd.f32 %v5806, %v5878
        %v5880 = vpop.f32.mrf.mxu0
        %v5881 = vadd.f32 %v5808, %v5880
        %5882 = vdwg.mxu0
        %v5883 = vadd.f32 %v5064, %v5845
        %v5884 = vadd.f32 %v5065, %v5847
        %v5885 = vadd.f32 %v5066, %v5849
        %v5886 = vadd.f32 %v5067, %v5851
        %v5887 = vadd.f32 %v5068, %v5855
        %v5888 = vadd.f32 %v5069, %v5857
        %v5889 = vadd.f32 %v5070, %v5859
        %v5890 = vadd.f32 %v5071, %v5861
        %v5891 = vadd.f32 %v5072, %v5865
        %v5892 = vadd.f32 %v5073, %v5867
        %v5893 = vadd.f32 %v5074, %v5869
        %v5894 = vadd.f32 %v5075, %v5871
        %v5895 = vadd.f32 %v5076, %v5875
        %v5896 = vadd.f32 %v5077, %v5877
        %v5897 = vadd.f32 %v5078, %v5879
        %v5898 = vadd.f32 %v5079, %v5881
        %s5899 = scalar_lea.vmem [#allocation7], 2048
        %v5900 = vld [vmem:[%s5899] sm:$0xff]
        %v5901 = vld [vmem:[%s5899 + $0x8] sm:$0xff]
        %v5902 = vld [vmem:[%s5899 + $0x10] sm:$0xff]
        %v5903 = vld [vmem:[%s5899 + $0x18] sm:$0xff]
        %v5904 = vld [vmem:[%s5899 + $0x20] sm:$0xff]
        %v5905 = vld [vmem:[%s5899 + $0x28] sm:$0xff]
        %v5906 = vld [vmem:[%s5899 + $0x30] sm:$0xff]
        %v5907 = vld [vmem:[%s5899 + $0x38] sm:$0xff]
        %v5908 = vld [vmem:[%s5899 + $0x40] sm:$0xff]
        %v5909 = vld [vmem:[%s5899 + $0x48] sm:$0xff]
        %v5910 = vld [vmem:[%s5899 + $0x50] sm:$0xff]
        %v5911 = vld [vmem:[%s5899 + $0x58] sm:$0xff]
        %v5912 = vld [vmem:[%s5899 + $0x60] sm:$0xff]
        %v5913 = vld [vmem:[%s5899 + $0x68] sm:$0xff]
        %v5914 = vld [vmem:[%s5899 + $0x70] sm:$0xff]
        %v5915 = vld [vmem:[%s5899 + $0x78] sm:$0xff]
        %v5916 = vld [vmem:[%s5899 + $0x80] sm:$0xff]
        %v5917 = vld [vmem:[%s5899 + $0x88] sm:$0xff]
        %v5918 = vld [vmem:[%s5899 + $0x90] sm:$0xff]
        %v5919 = vld [vmem:[%s5899 + $0x98] sm:$0xff]
        %v5920 = vld [vmem:[%s5899 + $0xa0] sm:$0xff]
        %v5921 = vld [vmem:[%s5899 + $0xa8] sm:$0xff]
        %v5922 = vld [vmem:[%s5899 + $0xb0] sm:$0xff]
        %v5923 = vld [vmem:[%s5899 + $0xb8] sm:$0xff]
        %v5924 = vld [vmem:[%s5899 + $0xc0] sm:$0xff]
        %v5925 = vld [vmem:[%s5899 + $0xc8] sm:$0xff]
        %v5926 = vld [vmem:[%s5899 + $0xd0] sm:$0xff]
        %v5927 = vld [vmem:[%s5899 + $0xd8] sm:$0xff]
        %v5928 = vld [vmem:[%s5899 + $0xe0] sm:$0xff]
        %v5929 = vld [vmem:[%s5899 + $0xe8] sm:$0xff]
        %v5930 = vld [vmem:[%s5899 + $0xf0] sm:$0xff]
        %v5931 = vld [vmem:[%s5899 + $0xf8] sm:$0xff]
        %v5932 = vld [vmem:[%s5899 + $0x100] sm:$0xff]
        %v5933 = vld [vmem:[%s5899 + $0x108] sm:$0xff]
        %v5934 = vld [vmem:[%s5899 + $0x110] sm:$0xff]
        %v5935 = vld [vmem:[%s5899 + $0x118] sm:$0xff]
        %v5936 = vld [vmem:[%s5899 + $0x120] sm:$0xff]
        %v5937 = vld [vmem:[%s5899 + $0x128] sm:$0xff]
        %v5938 = vld [vmem:[%s5899 + $0x130] sm:$0xff]
        %v5939 = vld [vmem:[%s5899 + $0x138] sm:$0xff]
        %v5940 = vld [vmem:[%s5899 + $0x140] sm:$0xff]
        %v5941 = vld [vmem:[%s5899 + $0x148] sm:$0xff]
        %v5942 = vld [vmem:[%s5899 + $0x150] sm:$0xff]
        %v5943 = vld [vmem:[%s5899 + $0x158] sm:$0xff]
        %v5944 = vld [vmem:[%s5899 + $0x160] sm:$0xff]
        %v5945 = vld [vmem:[%s5899 + $0x168] sm:$0xff]
        %v5946 = vld [vmem:[%s5899 + $0x170] sm:$0xff]
        %v5947 = vld [vmem:[%s5899 + $0x178] sm:$0xff]
        %v5948 = vld [vmem:[%s5899 + $0x180] sm:$0xff]
        %v5949 = vld [vmem:[%s5899 + $0x188] sm:$0xff]
        %v5950 = vld [vmem:[%s5899 + $0x190] sm:$0xff]
        %v5951 = vld [vmem:[%s5899 + $0x198] sm:$0xff]
        %v5952 = vld [vmem:[%s5899 + $0x1a0] sm:$0xff]
        %v5953 = vld [vmem:[%s5899 + $0x1a8] sm:$0xff]
        %v5954 = vld [vmem:[%s5899 + $0x1b0] sm:$0xff]
        %v5955 = vld [vmem:[%s5899 + $0x1b8] sm:$0xff]
        %v5956 = vld [vmem:[%s5899 + $0x1c0] sm:$0xff]
        %v5957 = vld [vmem:[%s5899 + $0x1c8] sm:$0xff]
        %v5958 = vld [vmem:[%s5899 + $0x1d0] sm:$0xff]
        %v5959 = vld [vmem:[%s5899 + $0x1d8] sm:$0xff]
        %v5960 = vld [vmem:[%s5899 + $0x1e0] sm:$0xff]
        %v5961 = vld [vmem:[%s5899 + $0x1e8] sm:$0xff]
        %v5962 = vld [vmem:[%s5899 + $0x1f0] sm:$0xff]
        %v5963 = vld [vmem:[%s5899 + $0x1f8] sm:$0xff]
        %v6028 = vunpack.c.l.b16 %v5900
        %v6029 = vunpack.c.h.b16 %v5900
        %v6030 = vunpack.c.l.b16 %v5901
        %v6031 = vunpack.c.h.b16 %v5901
        %v6032 = vunpack.c.l.b16 %v5902
        %v6033 = vunpack.c.h.b16 %v5902
        %v6034 = vunpack.c.l.b16 %v5903
        %v6035 = vunpack.c.h.b16 %v5903
        %v6036 = vunpack.c.l.b16 %v5904
        %v6037 = vunpack.c.h.b16 %v5904
        %v6038 = vunpack.c.l.b16 %v5905
        %v6039 = vunpack.c.h.b16 %v5905
        %v6040 = vunpack.c.l.b16 %v5906
        %v6041 = vunpack.c.h.b16 %v5906
        %v6042 = vunpack.c.l.b16 %v5907
        %v6043 = vunpack.c.h.b16 %v5907
        %v6044 = vunpack.c.l.b16 %v5908
        %v6045 = vunpack.c.h.b16 %v5908
        %v6046 = vunpack.c.l.b16 %v5909
        %v6047 = vunpack.c.h.b16 %v5909
        %v6048 = vunpack.c.l.b16 %v5910
        %v6049 = vunpack.c.h.b16 %v5910
        %v6050 = vunpack.c.l.b16 %v5911
        %v6051 = vunpack.c.h.b16 %v5911
        %v6052 = vunpack.c.l.b16 %v5912
        %v6053 = vunpack.c.h.b16 %v5912
        %v6054 = vunpack.c.l.b16 %v5913
        %v6055 = vunpack.c.h.b16 %v5913
        %v6056 = vunpack.c.l.b16 %v5914
        %v6057 = vunpack.c.h.b16 %v5914
        %v6058 = vunpack.c.l.b16 %v5915
        %v6059 = vunpack.c.h.b16 %v5915
        %v6060 = vunpack.c.l.b16 %v5916
        %v6061 = vunpack.c.h.b16 %v5916
        %v6062 = vunpack.c.l.b16 %v5917
        %v6063 = vunpack.c.h.b16 %v5917
        %v6064 = vunpack.c.l.b16 %v5918
        %v6065 = vunpack.c.h.b16 %v5918
        %v6066 = vunpack.c.l.b16 %v5919
        %v6067 = vunpack.c.h.b16 %v5919
        %v6068 = vunpack.c.l.b16 %v5920
        %v6069 = vunpack.c.h.b16 %v5920
        %v6070 = vunpack.c.l.b16 %v5921
        %v6071 = vunpack.c.h.b16 %v5921
        %v6072 = vunpack.c.l.b16 %v5922
        %v6073 = vunpack.c.h.b16 %v5922
        %v6074 = vunpack.c.l.b16 %v5923
        %v6075 = vunpack.c.h.b16 %v5923
        %v6076 = vunpack.c.l.b16 %v5924
        %v6077 = vunpack.c.h.b16 %v5924
        %v6078 = vunpack.c.l.b16 %v5925
        %v6079 = vunpack.c.h.b16 %v5925
        %v6080 = vunpack.c.l.b16 %v5926
        %v6081 = vunpack.c.h.b16 %v5926
        %v6082 = vunpack.c.l.b16 %v5927
        %v6083 = vunpack.c.h.b16 %v5927
        %v6084 = vunpack.c.l.b16 %v5928
        %v6085 = vunpack.c.h.b16 %v5928
        %v6086 = vunpack.c.l.b16 %v5929
        %v6087 = vunpack.c.h.b16 %v5929
        %v6088 = vunpack.c.l.b16 %v5930
        %v6089 = vunpack.c.h.b16 %v5930
        %v6090 = vunpack.c.l.b16 %v5931
        %v6091 = vunpack.c.h.b16 %v5931
        %v6092 = vunpack.c.l.b16 %v5932
        %v6093 = vunpack.c.h.b16 %v5932
        %v6094 = vunpack.c.l.b16 %v5933
        %v6095 = vunpack.c.h.b16 %v5933
        %v6096 = vunpack.c.l.b16 %v5934
        %v6097 = vunpack.c.h.b16 %v5934
        %v6098 = vunpack.c.l.b16 %v5935
        %v6099 = vunpack.c.h.b16 %v5935
        %v6100 = vunpack.c.l.b16 %v5936
        %v6101 = vunpack.c.h.b16 %v5936
        %v6102 = vunpack.c.l.b16 %v5937
        %v6103 = vunpack.c.h.b16 %v5937
        %v6104 = vunpack.c.l.b16 %v5938
        %v6105 = vunpack.c.h.b16 %v5938
        %v6106 = vunpack.c.l.b16 %v5939
        %v6107 = vunpack.c.h.b16 %v5939
        %v6108 = vunpack.c.l.b16 %v5940
        %v6109 = vunpack.c.h.b16 %v5940
        %v6110 = vunpack.c.l.b16 %v5941
        %v6111 = vunpack.c.h.b16 %v5941
        %v6112 = vunpack.c.l.b16 %v5942
        %v6113 = vunpack.c.h.b16 %v5942
        %v6114 = vunpack.c.l.b16 %v5943
        %v6115 = vunpack.c.h.b16 %v5943
        %v6116 = vunpack.c.l.b16 %v5944
        %v6117 = vunpack.c.h.b16 %v5944
        %v6118 = vunpack.c.l.b16 %v5945
        %v6119 = vunpack.c.h.b16 %v5945
        %v6120 = vunpack.c.l.b16 %v5946
        %v6121 = vunpack.c.h.b16 %v5946
        %v6122 = vunpack.c.l.b16 %v5947
        %v6123 = vunpack.c.h.b16 %v5947
        %v6124 = vunpack.c.l.b16 %v5948
        %v6125 = vunpack.c.h.b16 %v5948
        %v6126 = vunpack.c.l.b16 %v5949
        %v6127 = vunpack.c.h.b16 %v5949
        %v6128 = vunpack.c.l.b16 %v5950
        %v6129 = vunpack.c.h.b16 %v5950
        %v6130 = vunpack.c.l.b16 %v5951
        %v6131 = vunpack.c.h.b16 %v5951
        %v6132 = vunpack.c.l.b16 %v5952
        %v6133 = vunpack.c.h.b16 %v5952
        %v6134 = vunpack.c.l.b16 %v5953
        %v6135 = vunpack.c.h.b16 %v5953
        %v6136 = vunpack.c.l.b16 %v5954
        %v6137 = vunpack.c.h.b16 %v5954
        %v6138 = vunpack.c.l.b16 %v5955
        %v6139 = vunpack.c.h.b16 %v5955
        %v6140 = vunpack.c.l.b16 %v5956
        %v6141 = vunpack.c.h.b16 %v5956
        %v6142 = vunpack.c.l.b16 %v5957
        %v6143 = vunpack.c.h.b16 %v5957
        %v6144 = vunpack.c.l.b16 %v5958
        %v6145 = vunpack.c.h.b16 %v5958
        %v6146 = vunpack.c.l.b16 %v5959
        %v6147 = vunpack.c.h.b16 %v5959
        %v6148 = vunpack.c.l.b16 %v5960
        %v6149 = vunpack.c.h.b16 %v5960
        %v6150 = vunpack.c.l.b16 %v5961
        %v6151 = vunpack.c.h.b16 %v5961
        %v6152 = vunpack.c.l.b16 %v5962
        %v6153 = vunpack.c.h.b16 %v5962
        %v6154 = vunpack.c.l.b16 %v5963
        %v6155 = vunpack.c.h.b16 %v5963
        %v6156 = vpack.c.b16 %v6030, %v6028
        %v6157 = vpack.c.b16 %v6031, %v6029
        %v6158 = vpack.c.b16 %v6034, %v6032
        %v6159 = vpack.c.b16 %v6035, %v6033
        %v6160 = vpack.c.b16 %v6038, %v6036
        %v6161 = vpack.c.b16 %v6039, %v6037
        %v6162 = vpack.c.b16 %v6042, %v6040
        %v6163 = vpack.c.b16 %v6043, %v6041
        %v6164 = vpack.c.b16 %v6046, %v6044
        %v6165 = vpack.c.b16 %v6047, %v6045
        %v6166 = vpack.c.b16 %v6050, %v6048
        %v6167 = vpack.c.b16 %v6051, %v6049
        %v6168 = vpack.c.b16 %v6054, %v6052
        %v6169 = vpack.c.b16 %v6055, %v6053
        %v6170 = vpack.c.b16 %v6058, %v6056
        %v6171 = vpack.c.b16 %v6059, %v6057
        %v6172 = vpack.c.b16 %v6062, %v6060
        %v6173 = vpack.c.b16 %v6063, %v6061
        %v6174 = vpack.c.b16 %v6066, %v6064
        %v6175 = vpack.c.b16 %v6067, %v6065
        %v6176 = vpack.c.b16 %v6070, %v6068
        %v6177 = vpack.c.b16 %v6071, %v6069
        %v6178 = vpack.c.b16 %v6074, %v6072
        %v6179 = vpack.c.b16 %v6075, %v6073
        %v6180 = vpack.c.b16 %v6078, %v6076
        %v6181 = vpack.c.b16 %v6079, %v6077
        %v6182 = vpack.c.b16 %v6082, %v6080
        %v6183 = vpack.c.b16 %v6083, %v6081
        %v6184 = vpack.c.b16 %v6086, %v6084
        %v6185 = vpack.c.b16 %v6087, %v6085
        %v6186 = vpack.c.b16 %v6090, %v6088
        %v6187 = vpack.c.b16 %v6091, %v6089
        %v6188 = vpack.c.b16 %v6094, %v6092
        %v6189 = vpack.c.b16 %v6095, %v6093
        %v6190 = vpack.c.b16 %v6098, %v6096
        %v6191 = vpack.c.b16 %v6099, %v6097
        %v6192 = vpack.c.b16 %v6102, %v6100
        %v6193 = vpack.c.b16 %v6103, %v6101
        %v6194 = vpack.c.b16 %v6106, %v6104
        %v6195 = vpack.c.b16 %v6107, %v6105
        %v6196 = vpack.c.b16 %v6110, %v6108
        %v6197 = vpack.c.b16 %v6111, %v6109
        %v6198 = vpack.c.b16 %v6114, %v6112
        %v6199 = vpack.c.b16 %v6115, %v6113
        %v6200 = vpack.c.b16 %v6118, %v6116
        %v6201 = vpack.c.b16 %v6119, %v6117
        %v6202 = vpack.c.b16 %v6122, %v6120
        %v6203 = vpack.c.b16 %v6123, %v6121
        %v6204 = vpack.c.b16 %v6126, %v6124
        %v6205 = vpack.c.b16 %v6127, %v6125
        %v6206 = vpack.c.b16 %v6130, %v6128
        %v6207 = vpack.c.b16 %v6131, %v6129
        %v6208 = vpack.c.b16 %v6134, %v6132
        %v6209 = vpack.c.b16 %v6135, %v6133
        %v6210 = vpack.c.b16 %v6138, %v6136
        %v6211 = vpack.c.b16 %v6139, %v6137
        %v6212 = vpack.c.b16 %v6142, %v6140
        %v6213 = vpack.c.b16 %v6143, %v6141
        %v6214 = vpack.c.b16 %v6146, %v6144
        %v6215 = vpack.c.b16 %v6147, %v6145
        %v6216 = vpack.c.b16 %v6150, %v6148
        %v6217 = vpack.c.b16 %v6151, %v6149
        %v6218 = vpack.c.b16 %v6154, %v6152
        %v6219 = vpack.c.b16 %v6155, %v6153
        %6284 = vmatprep.subr.bf16.mxu0 %v6171
        %6285 = vmatpush1.bf16.msra.mxu0 %v6170
        %6286 = vmatprep.subr.bf16.mxu0 %v6169
        %6287 = vmatpush1.bf16.msra.mxu0 %v6168
        %6288 = vmatprep.subr.bf16.mxu0 %v6167
        %6289 = vmatpush1.bf16.msra.mxu0 %v6166
        %6290 = vmatprep.subr.bf16.mxu0 %v6165
        %6291 = vmatpush1.bf16.msra.mxu0 %v6164
        %6292 = vmatprep.subr.bf16.mxu0 %v6163
        %6293 = vmatpush1.bf16.msra.mxu0 %v6162
        %6294 = vmatprep.subr.bf16.mxu0 %v6161
        %6295 = vmatpush1.bf16.msra.mxu0 %v6160
        %6296 = vmatprep.subr.bf16.mxu0 %v6159
        %6297 = vmatpush1.bf16.msra.mxu0 %v6158
        %6298 = vmatprep.subr.bf16.mxu0 %v6157
        %6299 = vmatpush1.bf16.msra.mxu0 %v6156
        %6300 = vmatprep.subr.bf16.mxu0 %v6187
        %6301 = vmatpush2.bf16.msra.mxu0 %v6186
        %6302 = vmatprep.subr.bf16.mxu0 %v6185
        %6303 = vmatpush2.bf16.msra.mxu0 %v6184
        %6304 = vmatprep.subr.bf16.mxu0 %v6183
        %6305 = vmatpush2.bf16.msra.mxu0 %v6182
        %6306 = vmatprep.subr.bf16.mxu0 %v6181
        %6307 = vmatpush2.bf16.msra.mxu0 %v6180
        %6308 = vmatprep.subr.bf16.mxu0 %v6179
        %6309 = vmatpush2.bf16.msra.mxu0 %v6178
        %6310 = vmatprep.subr.bf16.mxu0 %v6177
        %6311 = vmatpush2.bf16.msra.mxu0 %v6176
        %6312 = vmatprep.subr.bf16.mxu0 %v6175
        %6313 = vmatpush2.bf16.msra.mxu0 %v6174
        %6314 = vmatprep.subr.bf16.mxu0 %v6173
        %6315 = vmatpush2.bf16.msra.mxu0 %v6172
        %6316 = vmatprep.mubr.bf16.mxu0 %v672
        %6317 = vmatmul.mubr.bf16.gmra.mxu0 %v671
        %v6318 = vpop.f32.mrf.mxu0
        %v6319 = vadd.f32 0.0, %v6318
        %v6320 = vpop.f32.mrf.mxu0
        %v6321 = vadd.f32 0.0, %v6320
        %v6322 = vpop.f32.mrf.mxu0
        %v6323 = vadd.f32 0.0, %v6322
        %v6324 = vpop.f32.mrf.mxu0
        %v6325 = vadd.f32 0.0, %v6324
        %6326 = vmatprep.mubr.bf16.mxu0 %v676
        %6327 = vmatmul.mubr.bf16.gmra.mxu0 %v675
        %v6328 = vpop.f32.mrf.mxu0
        %v6329 = vadd.f32 0.0, %v6328
        %v6330 = vpop.f32.mrf.mxu0
        %v6331 = vadd.f32 0.0, %v6330
        %v6332 = vpop.f32.mrf.mxu0
        %v6333 = vadd.f32 0.0, %v6332
        %v6334 = vpop.f32.mrf.mxu0
        %v6335 = vadd.f32 0.0, %v6334
        %6336 = vmatprep.mubr.bf16.mxu0 %v680
        %6337 = vmatmul.mubr.bf16.gmra.mxu0 %v679
        %v6338 = vpop.f32.mrf.mxu0
        %v6339 = vadd.f32 0.0, %v6338
        %v6340 = vpop.f32.mrf.mxu0
        %v6341 = vadd.f32 0.0, %v6340
        %v6342 = vpop.f32.mrf.mxu0
        %v6343 = vadd.f32 0.0, %v6342
        %v6344 = vpop.f32.mrf.mxu0
        %v6345 = vadd.f32 0.0, %v6344
        %6346 = vmatprep.mubr.bf16.mxu0 %v684
        %6347 = vmatmul.mubr.bf16.gmra.mxu0 %v683
        %v6348 = vpop.f32.mrf.mxu0
        %v6349 = vadd.f32 0.0, %v6348
        %v6350 = vpop.f32.mrf.mxu0
        %v6351 = vadd.f32 0.0, %v6350
        %v6352 = vpop.f32.mrf.mxu0
        %v6353 = vadd.f32 0.0, %v6352
        %v6354 = vpop.f32.mrf.mxu0
        %v6355 = vadd.f32 0.0, %v6354
        %6356 = vdwg.mxu0
        %6357 = vmatprep.subr.bf16.mxu0 %v6203
        %6358 = vmatpush1.bf16.msra.mxu0 %v6202
        %6359 = vmatprep.subr.bf16.mxu0 %v6201
        %6360 = vmatpush1.bf16.msra.mxu0 %v6200
        %6361 = vmatprep.subr.bf16.mxu0 %v6199
        %6362 = vmatpush1.bf16.msra.mxu0 %v6198
        %6363 = vmatprep.subr.bf16.mxu0 %v6197
        %6364 = vmatpush1.bf16.msra.mxu0 %v6196
        %6365 = vmatprep.subr.bf16.mxu0 %v6195
        %6366 = vmatpush1.bf16.msra.mxu0 %v6194
        %6367 = vmatprep.subr.bf16.mxu0 %v6193
        %6368 = vmatpush1.bf16.msra.mxu0 %v6192
        %6369 = vmatprep.subr.bf16.mxu0 %v6191
        %6370 = vmatpush1.bf16.msra.mxu0 %v6190
        %6371 = vmatprep.subr.bf16.mxu0 %v6189
        %6372 = vmatpush1.bf16.msra.mxu0 %v6188
        %6373 = vmatprep.subr.bf16.mxu0 %v6219
        %6374 = vmatpush2.bf16.msra.mxu0 %v6218
        %6375 = vmatprep.subr.bf16.mxu0 %v6217
        %6376 = vmatpush2.bf16.msra.mxu0 %v6216
        %6377 = vmatprep.subr.bf16.mxu0 %v6215
        %6378 = vmatpush2.bf16.msra.mxu0 %v6214
        %6379 = vmatprep.subr.bf16.mxu0 %v6213
        %6380 = vmatpush2.bf16.msra.mxu0 %v6212
        %6381 = vmatprep.subr.bf16.mxu0 %v6211
        %6382 = vmatpush2.bf16.msra.mxu0 %v6210
        %6383 = vmatprep.subr.bf16.mxu0 %v6209
        %6384 = vmatpush2.bf16.msra.mxu0 %v6208
        %6385 = vmatprep.subr.bf16.mxu0 %v6207
        %6386 = vmatpush2.bf16.msra.mxu0 %v6206
        %6387 = vmatprep.subr.bf16.mxu0 %v6205
        %6388 = vmatpush2.bf16.msra.mxu0 %v6204
        %6389 = vmatprep.mubr.bf16.mxu0 %v674
        %6390 = vmatmul.mubr.bf16.gmra.mxu0 %v673
        %v6391 = vpop.f32.mrf.mxu0
        %v6392 = vadd.f32 %v6319, %v6391
        %v6393 = vpop.f32.mrf.mxu0
        %v6394 = vadd.f32 %v6321, %v6393
        %v6395 = vpop.f32.mrf.mxu0
        %v6396 = vadd.f32 %v6323, %v6395
        %v6397 = vpop.f32.mrf.mxu0
        %v6398 = vadd.f32 %v6325, %v6397
        %6399 = vmatprep.mubr.bf16.mxu0 %v678
        %6400 = vmatmul.mubr.bf16.gmra.mxu0 %v677
        %v6401 = vpop.f32.mrf.mxu0
        %v6402 = vadd.f32 %v6329, %v6401
        %v6403 = vpop.f32.mrf.mxu0
        %v6404 = vadd.f32 %v6331, %v6403
        %v6405 = vpop.f32.mrf.mxu0
        %v6406 = vadd.f32 %v6333, %v6405
        %v6407 = vpop.f32.mrf.mxu0
        %v6408 = vadd.f32 %v6335, %v6407
        %6409 = vmatprep.mubr.bf16.mxu0 %v682
        %6410 = vmatmul.mubr.bf16.gmra.mxu0 %v681
        %v6411 = vpop.f32.mrf.mxu0
        %v6412 = vadd.f32 %v6339, %v6411
        %v6413 = vpop.f32.mrf.mxu0
        %v6414 = vadd.f32 %v6341, %v6413
        %v6415 = vpop.f32.mrf.mxu0
        %v6416 = vadd.f32 %v6343, %v6415
        %v6417 = vpop.f32.mrf.mxu0
        %v6418 = vadd.f32 %v6345, %v6417
        %6419 = vmatprep.mubr.bf16.mxu0 %v686
        %6420 = vmatmul.mubr.bf16.gmra.mxu0 %v685
        %v6421 = vpop.f32.mrf.mxu0
        %v6422 = vadd.f32 %v6349, %v6421
        %v6423 = vpop.f32.mrf.mxu0
        %v6424 = vadd.f32 %v6351, %v6423
        %v6425 = vpop.f32.mrf.mxu0
        %v6426 = vadd.f32 %v6353, %v6425
        %v6427 = vpop.f32.mrf.mxu0
        %v6428 = vadd.f32 %v6355, %v6427
        %6429 = vdwg.mxu0
        %v6430 = vadd.f32 %v5883, %v6392
        %v6431 = vadd.f32 %v5884, %v6394
        %v6432 = vadd.f32 %v5885, %v6396
        %v6433 = vadd.f32 %v5886, %v6398
        %v6434 = vadd.f32 %v5887, %v6402
        %v6435 = vadd.f32 %v5888, %v6404
        %v6436 = vadd.f32 %v5889, %v6406
        %v6437 = vadd.f32 %v5890, %v6408
        %v6438 = vadd.f32 %v5891, %v6412
        %v6439 = vadd.f32 %v5892, %v6414
        %v6440 = vadd.f32 %v5893, %v6416
        %v6441 = vadd.f32 %v5894, %v6418
        %v6442 = vadd.f32 %v5895, %v6422
        %v6443 = vadd.f32 %v5896, %v6424
        %v6444 = vadd.f32 %v5897, %v6426
        %v6445 = vadd.f32 %v5898, %v6428
        %v6446 = vld [vmem:[%s2845 + $0x20] sm:$0xc0]
        %v6447 = vld [vmem:[%s2845 + $0x28] sm:$0xc0]
        %v6448 = vld [vmem:[%s2845 + $0x30] sm:$0xc0]
        %v6449 = vld [vmem:[%s2845 + $0x38] sm:$0xc0]
        %v6450 = vld [vmem:[%s2845 + $0x40] sm:$0x3f]
        %v6451 = vld [vmem:[%s2845 + $0x48] sm:$0x3f]
        %v6452 = vld [vmem:[%s2845 + $0x50] sm:$0x3f]
        %v6453 = vld [vmem:[%s2845 + $0x58] sm:$0x3f]
        %v6454 = vld [vmem:[%s2845 + $0x80] sm:$0xc0]
        %v6455 = vld [vmem:[%s2845 + $0x88] sm:$0xc0]
        %v6456 = vld [vmem:[%s2845 + $0x90] sm:$0xc0]
        %v6457 = vld [vmem:[%s2845 + $0x98] sm:$0xc0]
        %v6458 = vld [vmem:[%s2845 + $0xa0] sm:$0x3f]
        %v6459 = vld [vmem:[%s2845 + $0xa8] sm:$0x3f]
        %v6460 = vld [vmem:[%s2845 + $0xb0] sm:$0x3f]
        %v6461 = vld [vmem:[%s2845 + $0xb8] sm:$0x3f]
        %v6462 = vld [vmem:[%s2845 + $0xe0] sm:$0xc0]
        %v6463 = vld [vmem:[%s2845 + $0xe8] sm:$0xc0]
        %v6464 = vld [vmem:[%s2845 + $0xf0] sm:$0xc0]
        %v6465 = vld [vmem:[%s2845 + $0xf8] sm:$0xc0]
        %v6466 = vld [vmem:[%s2845 + $0x100] sm:$0x3f]
        %v6467 = vld [vmem:[%s2845 + $0x108] sm:$0x3f]
        %v6468 = vld [vmem:[%s2845 + $0x110] sm:$0x3f]
        %v6469 = vld [vmem:[%s2845 + $0x118] sm:$0x3f]
        %v6470 = vld [vmem:[%s2845 + $0x140] sm:$0xc0]
        %v6471 = vld [vmem:[%s2845 + $0x148] sm:$0xc0]
        %v6472 = vld [vmem:[%s2845 + $0x150] sm:$0xc0]
        %v6473 = vld [vmem:[%s2845 + $0x158] sm:$0xc0]
        %v6474 = vld [vmem:[%s2845 + $0x160] sm:$0x3f]
        %v6475 = vld [vmem:[%s2845 + $0x168] sm:$0x3f]
        %v6476 = vld [vmem:[%s2845 + $0x170] sm:$0x3f]
        %v6477 = vld [vmem:[%s2845 + $0x178] sm:$0x3f]
        %v6478 = vld [vmem:[%s2845 + $0x1a0] sm:$0xc0]
        %v6479 = vld [vmem:[%s2845 + $0x1a8] sm:$0xc0]
        %v6480 = vld [vmem:[%s2845 + $0x1b0] sm:$0xc0]
        %v6481 = vld [vmem:[%s2845 + $0x1b8] sm:$0xc0]
        %v6482 = vld [vmem:[%s2845 + $0x1c0] sm:$0x3f]
        %v6483 = vld [vmem:[%s2845 + $0x1c8] sm:$0x3f]
        %v6484 = vld [vmem:[%s2845 + $0x1d0] sm:$0x3f]
        %v6485 = vld [vmem:[%s2845 + $0x1d8] sm:$0x3f]
        %v6486 = vld [vmem:[%s2845 + $0x200] sm:$0xc0]
        %v6487 = vld [vmem:[%s2845 + $0x208] sm:$0xc0]
        %v6488 = vld [vmem:[%s2845 + $0x210] sm:$0xc0]
        %v6489 = vld [vmem:[%s2845 + $0x218] sm:$0xc0]
        %v6490 = vld [vmem:[%s2845 + $0x220] sm:$0x3f]
        %v6491 = vld [vmem:[%s2845 + $0x228] sm:$0x3f]
        %v6492 = vld [vmem:[%s2845 + $0x230] sm:$0x3f]
        %v6493 = vld [vmem:[%s2845 + $0x238] sm:$0x3f]
        %v6494 = vld [vmem:[%s2845 + $0x260] sm:$0xc0]
        %v6495 = vld [vmem:[%s2845 + $0x268] sm:$0xc0]
        %v6496 = vld [vmem:[%s2845 + $0x270] sm:$0xc0]
        %v6497 = vld [vmem:[%s2845 + $0x278] sm:$0xc0]
        %v6498 = vld [vmem:[%s2845 + $0x280] sm:$0x3f]
        %v6499 = vld [vmem:[%s2845 + $0x288] sm:$0x3f]
        %v6500 = vld [vmem:[%s2845 + $0x290] sm:$0x3f]
        %v6501 = vld [vmem:[%s2845 + $0x298] sm:$0x3f]
        %v6502 = vld [vmem:[%s2845 + $0x2c0] sm:$0xc0]
        %v6503 = vld [vmem:[%s2845 + $0x2c8] sm:$0xc0]
        %v6504 = vld [vmem:[%s2845 + $0x2d0] sm:$0xc0]
        %v6505 = vld [vmem:[%s2845 + $0x2d8] sm:$0xc0]
        %v6506 = vld [vmem:[%s2845 + $0x2e0] sm:$0x3f]
        %v6507 = vld [vmem:[%s2845 + $0x2e8] sm:$0x3f]
        %v6508 = vld [vmem:[%s2845 + $0x2f0] sm:$0x3f]
        %v6509 = vld [vmem:[%s2845 + $0x2f8] sm:$0x3f]
        %v6574 = vrot.slane %v6446, 6
        %v6575 = vrot.slane %v6450, 6
        %v6576 = vsel %vm4388, %v6574, %v6575
        %v6577 = vrot.slane %v6447, 6
        %v6578 = vrot.slane %v6451, 6
        %v6579 = vsel %vm4388, %v6577, %v6578
        %v6580 = vrot.slane %v6448, 6
        %v6581 = vrot.slane %v6452, 6
        %v6582 = vsel %vm4388, %v6580, %v6581
        %v6583 = vrot.slane %v6449, 6
        %v6584 = vrot.slane %v6453, 6
        %v6585 = vsel %vm4388, %v6583, %v6584
        %v6586 = vrot.slane %v6454, 6
        %v6587 = vrot.slane %v6458, 6
        %v6588 = vsel %vm4388, %v6586, %v6587
        %v6589 = vrot.slane %v6455, 6
        %v6590 = vrot.slane %v6459, 6
        %v6591 = vsel %vm4388, %v6589, %v6590
        %v6592 = vrot.slane %v6456, 6
        %v6593 = vrot.slane %v6460, 6
        %v6594 = vsel %vm4388, %v6592, %v6593
        %v6595 = vrot.slane %v6457, 6
        %v6596 = vrot.slane %v6461, 6
        %v6597 = vsel %vm4388, %v6595, %v6596
        %v6598 = vrot.slane %v6462, 6
        %v6599 = vrot.slane %v6466, 6
        %v6600 = vsel %vm4388, %v6598, %v6599
        %v6601 = vrot.slane %v6463, 6
        %v6602 = vrot.slane %v6467, 6
        %v6603 = vsel %vm4388, %v6601, %v6602
        %v6604 = vrot.slane %v6464, 6
        %v6605 = vrot.slane %v6468, 6
        %v6606 = vsel %vm4388, %v6604, %v6605
        %v6607 = vrot.slane %v6465, 6
        %v6608 = vrot.slane %v6469, 6
        %v6609 = vsel %vm4388, %v6607, %v6608
        %v6610 = vrot.slane %v6470, 6
        %v6611 = vrot.slane %v6474, 6
        %v6612 = vsel %vm4388, %v6610, %v6611
        %v6613 = vrot.slane %v6471, 6
        %v6614 = vrot.slane %v6475, 6
        %v6615 = vsel %vm4388, %v6613, %v6614
        %v6616 = vrot.slane %v6472, 6
        %v6617 = vrot.slane %v6476, 6
        %v6618 = vsel %vm4388, %v6616, %v6617
        %v6619 = vrot.slane %v6473, 6
        %v6620 = vrot.slane %v6477, 6
        %v6621 = vsel %vm4388, %v6619, %v6620
        %v6622 = vrot.slane %v6478, 6
        %v6623 = vrot.slane %v6482, 6
        %v6624 = vsel %vm4388, %v6622, %v6623
        %v6625 = vrot.slane %v6479, 6
        %v6626 = vrot.slane %v6483, 6
        %v6627 = vsel %vm4388, %v6625, %v6626
        %v6628 = vrot.slane %v6480, 6
        %v6629 = vrot.slane %v6484, 6
        %v6630 = vsel %vm4388, %v6628, %v6629
        %v6631 = vrot.slane %v6481, 6
        %v6632 = vrot.slane %v6485, 6
        %v6633 = vsel %vm4388, %v6631, %v6632
        %v6634 = vrot.slane %v6486, 6
        %v6635 = vrot.slane %v6490, 6
        %v6636 = vsel %vm4388, %v6634, %v6635
        %v6637 = vrot.slane %v6487, 6
        %v6638 = vrot.slane %v6491, 6
        %v6639 = vsel %vm4388, %v6637, %v6638
        %v6640 = vrot.slane %v6488, 6
        %v6641 = vrot.slane %v6492, 6
        %v6642 = vsel %vm4388, %v6640, %v6641
        %v6643 = vrot.slane %v6489, 6
        %v6644 = vrot.slane %v6493, 6
        %v6645 = vsel %vm4388, %v6643, %v6644
        %v6646 = vrot.slane %v6494, 6
        %v6647 = vrot.slane %v6498, 6
        %v6648 = vsel %vm4388, %v6646, %v6647
        %v6649 = vrot.slane %v6495, 6
        %v6650 = vrot.slane %v6499, 6
        %v6651 = vsel %vm4388, %v6649, %v6650
        %v6652 = vrot.slane %v6496, 6
        %v6653 = vrot.slane %v6500, 6
        %v6654 = vsel %vm4388, %v6652, %v6653
        %v6655 = vrot.slane %v6497, 6
        %v6656 = vrot.slane %v6501, 6
        %v6657 = vsel %vm4388, %v6655, %v6656
        %v6658 = vrot.slane %v6502, 6
        %v6659 = vrot.slane %v6506, 6
        %v6660 = vsel %vm4388, %v6658, %v6659
        %v6661 = vrot.slane %v6503, 6
        %v6662 = vrot.slane %v6507, 6
        %v6663 = vsel %vm4388, %v6661, %v6662
        %v6664 = vrot.slane %v6504, 6
        %v6665 = vrot.slane %v6508, 6
        %v6666 = vsel %vm4388, %v6664, %v6665
        %v6667 = vrot.slane %v6505, 6
        %v6668 = vrot.slane %v6509, 6
        %v6669 = vsel %vm4388, %v6667, %v6668
        %v6702 = vpack.c.bf16 %v6588, %v6576
        %v6703 = vpack.c.bf16 %v6591, %v6579
        %v6704 = vpack.c.bf16 %v6594, %v6582
        %v6705 = vpack.c.bf16 %v6597, %v6585
        %v6706 = vpack.c.bf16 %v6612, %v6600
        %v6707 = vpack.c.bf16 %v6615, %v6603
        %v6708 = vpack.c.bf16 %v6618, %v6606
        %v6709 = vpack.c.bf16 %v6621, %v6609
        %v6710 = vpack.c.bf16 %v6636, %v6624
        %v6711 = vpack.c.bf16 %v6639, %v6627
        %v6712 = vpack.c.bf16 %v6642, %v6630
        %v6713 = vpack.c.bf16 %v6645, %v6633
        %v6714 = vpack.c.bf16 %v6660, %v6648
        %v6715 = vpack.c.bf16 %v6663, %v6651
        %v6716 = vpack.c.bf16 %v6666, %v6654
        %v6717 = vpack.c.bf16 %v6669, %v6657
        %s6718 = scalar_lea.vmem [#allocation7], 2560
        %v6719 = vld [vmem:[%s6718] sm:$0xff]
        %v6720 = vld [vmem:[%s6718 + $0x8] sm:$0xff]
        %v6721 = vld [vmem:[%s6718 + $0x10] sm:$0xff]
        %v6722 = vld [vmem:[%s6718 + $0x18] sm:$0xff]
        %v6723 = vld [vmem:[%s6718 + $0x20] sm:$0xff]
        %v6724 = vld [vmem:[%s6718 + $0x28] sm:$0xff]
        %v6725 = vld [vmem:[%s6718 + $0x30] sm:$0xff]
        %v6726 = vld [vmem:[%s6718 + $0x38] sm:$0xff]
        %v6727 = vld [vmem:[%s6718 + $0x40] sm:$0xff]
        %v6728 = vld [vmem:[%s6718 + $0x48] sm:$0xff]
        %v6729 = vld [vmem:[%s6718 + $0x50] sm:$0xff]
        %v6730 = vld [vmem:[%s6718 + $0x58] sm:$0xff]
        %v6731 = vld [vmem:[%s6718 + $0x60] sm:$0xff]
        %v6732 = vld [vmem:[%s6718 + $0x68] sm:$0xff]
        %v6733 = vld [vmem:[%s6718 + $0x70] sm:$0xff]
        %v6734 = vld [vmem:[%s6718 + $0x78] sm:$0xff]
        %v6735 = vld [vmem:[%s6718 + $0x80] sm:$0xff]
        %v6736 = vld [vmem:[%s6718 + $0x88] sm:$0xff]
        %v6737 = vld [vmem:[%s6718 + $0x90] sm:$0xff]
        %v6738 = vld [vmem:[%s6718 + $0x98] sm:$0xff]
        %v6739 = vld [vmem:[%s6718 + $0xa0] sm:$0xff]
        %v6740 = vld [vmem:[%s6718 + $0xa8] sm:$0xff]
        %v6741 = vld [vmem:[%s6718 + $0xb0] sm:$0xff]
        %v6742 = vld [vmem:[%s6718 + $0xb8] sm:$0xff]
        %v6743 = vld [vmem:[%s6718 + $0xc0] sm:$0xff]
        %v6744 = vld [vmem:[%s6718 + $0xc8] sm:$0xff]
        %v6745 = vld [vmem:[%s6718 + $0xd0] sm:$0xff]
        %v6746 = vld [vmem:[%s6718 + $0xd8] sm:$0xff]
        %v6747 = vld [vmem:[%s6718 + $0xe0] sm:$0xff]
        %v6748 = vld [vmem:[%s6718 + $0xe8] sm:$0xff]
        %v6749 = vld [vmem:[%s6718 + $0xf0] sm:$0xff]
        %v6750 = vld [vmem:[%s6718 + $0xf8] sm:$0xff]
        %v6751 = vld [vmem:[%s6718 + $0x100] sm:$0xff]
        %v6752 = vld [vmem:[%s6718 + $0x108] sm:$0xff]
        %v6753 = vld [vmem:[%s6718 + $0x110] sm:$0xff]
        %v6754 = vld [vmem:[%s6718 + $0x118] sm:$0xff]
        %v6755 = vld [vmem:[%s6718 + $0x120] sm:$0xff]
        %v6756 = vld [vmem:[%s6718 + $0x128] sm:$0xff]
        %v6757 = vld [vmem:[%s6718 + $0x130] sm:$0xff]
        %v6758 = vld [vmem:[%s6718 + $0x138] sm:$0xff]
        %v6759 = vld [vmem:[%s6718 + $0x140] sm:$0xff]
        %v6760 = vld [vmem:[%s6718 + $0x148] sm:$0xff]
        %v6761 = vld [vmem:[%s6718 + $0x150] sm:$0xff]
        %v6762 = vld [vmem:[%s6718 + $0x158] sm:$0xff]
        %v6763 = vld [vmem:[%s6718 + $0x160] sm:$0xff]
        %v6764 = vld [vmem:[%s6718 + $0x168] sm:$0xff]
        %v6765 = vld [vmem:[%s6718 + $0x170] sm:$0xff]
        %v6766 = vld [vmem:[%s6718 + $0x178] sm:$0xff]
        %v6767 = vld [vmem:[%s6718 + $0x180] sm:$0xff]
        %v6768 = vld [vmem:[%s6718 + $0x188] sm:$0xff]
        %v6769 = vld [vmem:[%s6718 + $0x190] sm:$0xff]
        %v6770 = vld [vmem:[%s6718 + $0x198] sm:$0xff]
        %v6771 = vld [vmem:[%s6718 + $0x1a0] sm:$0xff]
        %v6772 = vld [vmem:[%s6718 + $0x1a8] sm:$0xff]
        %v6773 = vld [vmem:[%s6718 + $0x1b0] sm:$0xff]
        %v6774 = vld [vmem:[%s6718 + $0x1b8] sm:$0xff]
        %v6775 = vld [vmem:[%s6718 + $0x1c0] sm:$0xff]
        %v6776 = vld [vmem:[%s6718 + $0x1c8] sm:$0xff]
        %v6777 = vld [vmem:[%s6718 + $0x1d0] sm:$0xff]
        %v6778 = vld [vmem:[%s6718 + $0x1d8] sm:$0xff]
        %v6779 = vld [vmem:[%s6718 + $0x1e0] sm:$0xff]
        %v6780 = vld [vmem:[%s6718 + $0x1e8] sm:$0xff]
        %v6781 = vld [vmem:[%s6718 + $0x1f0] sm:$0xff]
        %v6782 = vld [vmem:[%s6718 + $0x1f8] sm:$0xff]
        %v6847 = vunpack.c.l.b16 %v6719
        %v6848 = vunpack.c.h.b16 %v6719
        %v6849 = vunpack.c.l.b16 %v6720
        %v6850 = vunpack.c.h.b16 %v6720
        %v6851 = vunpack.c.l.b16 %v6721
        %v6852 = vunpack.c.h.b16 %v6721
        %v6853 = vunpack.c.l.b16 %v6722
        %v6854 = vunpack.c.h.b16 %v6722
        %v6855 = vunpack.c.l.b16 %v6723
        %v6856 = vunpack.c.h.b16 %v6723
        %v6857 = vunpack.c.l.b16 %v6724
        %v6858 = vunpack.c.h.b16 %v6724
        %v6859 = vunpack.c.l.b16 %v6725
        %v6860 = vunpack.c.h.b16 %v6725
        %v6861 = vunpack.c.l.b16 %v6726
        %v6862 = vunpack.c.h.b16 %v6726
        %v6863 = vunpack.c.l.b16 %v6727
        %v6864 = vunpack.c.h.b16 %v6727
        %v6865 = vunpack.c.l.b16 %v6728
        %v6866 = vunpack.c.h.b16 %v6728
        %v6867 = vunpack.c.l.b16 %v6729
        %v6868 = vunpack.c.h.b16 %v6729
        %v6869 = vunpack.c.l.b16 %v6730
        %v6870 = vunpack.c.h.b16 %v6730
        %v6871 = vunpack.c.l.b16 %v6731
        %v6872 = vunpack.c.h.b16 %v6731
        %v6873 = vunpack.c.l.b16 %v6732
        %v6874 = vunpack.c.h.b16 %v6732
        %v6875 = vunpack.c.l.b16 %v6733
        %v6876 = vunpack.c.h.b16 %v6733
        %v6877 = vunpack.c.l.b16 %v6734
        %v6878 = vunpack.c.h.b16 %v6734
        %v6879 = vunpack.c.l.b16 %v6735
        %v6880 = vunpack.c.h.b16 %v6735
        %v6881 = vunpack.c.l.b16 %v6736
        %v6882 = vunpack.c.h.b16 %v6736
        %v6883 = vunpack.c.l.b16 %v6737
        %v6884 = vunpack.c.h.b16 %v6737
        %v6885 = vunpack.c.l.b16 %v6738
        %v6886 = vunpack.c.h.b16 %v6738
        %v6887 = vunpack.c.l.b16 %v6739
        %v6888 = vunpack.c.h.b16 %v6739
        %v6889 = vunpack.c.l.b16 %v6740
        %v6890 = vunpack.c.h.b16 %v6740
        %v6891 = vunpack.c.l.b16 %v6741
        %v6892 = vunpack.c.h.b16 %v6741
        %v6893 = vunpack.c.l.b16 %v6742
        %v6894 = vunpack.c.h.b16 %v6742
        %v6895 = vunpack.c.l.b16 %v6743
        %v6896 = vunpack.c.h.b16 %v6743
        %v6897 = vunpack.c.l.b16 %v6744
        %v6898 = vunpack.c.h.b16 %v6744
        %v6899 = vunpack.c.l.b16 %v6745
        %v6900 = vunpack.c.h.b16 %v6745
        %v6901 = vunpack.c.l.b16 %v6746
        %v6902 = vunpack.c.h.b16 %v6746
        %v6903 = vunpack.c.l.b16 %v6747
        %v6904 = vunpack.c.h.b16 %v6747
        %v6905 = vunpack.c.l.b16 %v6748
        %v6906 = vunpack.c.h.b16 %v6748
        %v6907 = vunpack.c.l.b16 %v6749
        %v6908 = vunpack.c.h.b16 %v6749
        %v6909 = vunpack.c.l.b16 %v6750
        %v6910 = vunpack.c.h.b16 %v6750
        %v6911 = vunpack.c.l.b16 %v6751
        %v6912 = vunpack.c.h.b16 %v6751
        %v6913 = vunpack.c.l.b16 %v6752
        %v6914 = vunpack.c.h.b16 %v6752
        %v6915 = vunpack.c.l.b16 %v6753
        %v6916 = vunpack.c.h.b16 %v6753
        %v6917 = vunpack.c.l.b16 %v6754
        %v6918 = vunpack.c.h.b16 %v6754
        %v6919 = vunpack.c.l.b16 %v6755
        %v6920 = vunpack.c.h.b16 %v6755
        %v6921 = vunpack.c.l.b16 %v6756
        %v6922 = vunpack.c.h.b16 %v6756
        %v6923 = vunpack.c.l.b16 %v6757
        %v6924 = vunpack.c.h.b16 %v6757
        %v6925 = vunpack.c.l.b16 %v6758
        %v6926 = vunpack.c.h.b16 %v6758
        %v6927 = vunpack.c.l.b16 %v6759
        %v6928 = vunpack.c.h.b16 %v6759
        %v6929 = vunpack.c.l.b16 %v6760
        %v6930 = vunpack.c.h.b16 %v6760
        %v6931 = vunpack.c.l.b16 %v6761
        %v6932 = vunpack.c.h.b16 %v6761
        %v6933 = vunpack.c.l.b16 %v6762
        %v6934 = vunpack.c.h.b16 %v6762
        %v6935 = vunpack.c.l.b16 %v6763
        %v6936 = vunpack.c.h.b16 %v6763
        %v6937 = vunpack.c.l.b16 %v6764
        %v6938 = vunpack.c.h.b16 %v6764
        %v6939 = vunpack.c.l.b16 %v6765
        %v6940 = vunpack.c.h.b16 %v6765
        %v6941 = vunpack.c.l.b16 %v6766
        %v6942 = vunpack.c.h.b16 %v6766
        %v6943 = vunpack.c.l.b16 %v6767
        %v6944 = vunpack.c.h.b16 %v6767
        %v6945 = vunpack.c.l.b16 %v6768
        %v6946 = vunpack.c.h.b16 %v6768
        %v6947 = vunpack.c.l.b16 %v6769
        %v6948 = vunpack.c.h.b16 %v6769
        %v6949 = vunpack.c.l.b16 %v6770
        %v6950 = vunpack.c.h.b16 %v6770
        %v6951 = vunpack.c.l.b16 %v6771
        %v6952 = vunpack.c.h.b16 %v6771
        %v6953 = vunpack.c.l.b16 %v6772
        %v6954 = vunpack.c.h.b16 %v6772
        %v6955 = vunpack.c.l.b16 %v6773
        %v6956 = vunpack.c.h.b16 %v6773
        %v6957 = vunpack.c.l.b16 %v6774
        %v6958 = vunpack.c.h.b16 %v6774
        %v6959 = vunpack.c.l.b16 %v6775
        %v6960 = vunpack.c.h.b16 %v6775
        %v6961 = vunpack.c.l.b16 %v6776
        %v6962 = vunpack.c.h.b16 %v6776
        %v6963 = vunpack.c.l.b16 %v6777
        %v6964 = vunpack.c.h.b16 %v6777
        %v6965 = vunpack.c.l.b16 %v6778
        %v6966 = vunpack.c.h.b16 %v6778
        %v6967 = vunpack.c.l.b16 %v6779
        %v6968 = vunpack.c.h.b16 %v6779
        %v6969 = vunpack.c.l.b16 %v6780
        %v6970 = vunpack.c.h.b16 %v6780
        %v6971 = vunpack.c.l.b16 %v6781
        %v6972 = vunpack.c.h.b16 %v6781
        %v6973 = vunpack.c.l.b16 %v6782
        %v6974 = vunpack.c.h.b16 %v6782
        %v6975 = vpack.c.b16 %v6849, %v6847
        %v6976 = vpack.c.b16 %v6850, %v6848
        %v6977 = vpack.c.b16 %v6853, %v6851
        %v6978 = vpack.c.b16 %v6854, %v6852
        %v6979 = vpack.c.b16 %v6857, %v6855
        %v6980 = vpack.c.b16 %v6858, %v6856
        %v6981 = vpack.c.b16 %v6861, %v6859
        %v6982 = vpack.c.b16 %v6862, %v6860
        %v6983 = vpack.c.b16 %v6865, %v6863
        %v6984 = vpack.c.b16 %v6866, %v6864
        %v6985 = vpack.c.b16 %v6869, %v6867
        %v6986 = vpack.c.b16 %v6870, %v6868
        %v6987 = vpack.c.b16 %v6873, %v6871
        %v6988 = vpack.c.b16 %v6874, %v6872
        %v6989 = vpack.c.b16 %v6877, %v6875
        %v6990 = vpack.c.b16 %v6878, %v6876
        %v6991 = vpack.c.b16 %v6881, %v6879
        %v6992 = vpack.c.b16 %v6882, %v6880
        %v6993 = vpack.c.b16 %v6885, %v6883
        %v6994 = vpack.c.b16 %v6886, %v6884
        %v6995 = vpack.c.b16 %v6889, %v6887
        %v6996 = vpack.c.b16 %v6890, %v6888
        %v6997 = vpack.c.b16 %v6893, %v6891
        %v6998 = vpack.c.b16 %v6894, %v6892
        %v6999 = vpack.c.b16 %v6897, %v6895
        %v7000 = vpack.c.b16 %v6898, %v6896
        %v7001 = vpack.c.b16 %v6901, %v6899
        %v7002 = vpack.c.b16 %v6902, %v6900
        %v7003 = vpack.c.b16 %v6905, %v6903
        %v7004 = vpack.c.b16 %v6906, %v6904
        %v7005 = vpack.c.b16 %v6909, %v6907
        %v7006 = vpack.c.b16 %v6910, %v6908
        %v7007 = vpack.c.b16 %v6913, %v6911
        %v7008 = vpack.c.b16 %v6914, %v6912
        %v7009 = vpack.c.b16 %v6917, %v6915
        %v7010 = vpack.c.b16 %v6918, %v6916
        %v7011 = vpack.c.b16 %v6921, %v6919
        %v7012 = vpack.c.b16 %v6922, %v6920
        %v7013 = vpack.c.b16 %v6925, %v6923
        %v7014 = vpack.c.b16 %v6926, %v6924
        %v7015 = vpack.c.b16 %v6929, %v6927
        %v7016 = vpack.c.b16 %v6930, %v6928
        %v7017 = vpack.c.b16 %v6933, %v6931
        %v7018 = vpack.c.b16 %v6934, %v6932
        %v7019 = vpack.c.b16 %v6937, %v6935
        %v7020 = vpack.c.b16 %v6938, %v6936
        %v7021 = vpack.c.b16 %v6941, %v6939
        %v7022 = vpack.c.b16 %v6942, %v6940
        %v7023 = vpack.c.b16 %v6945, %v6943
        %v7024 = vpack.c.b16 %v6946, %v6944
        %v7025 = vpack.c.b16 %v6949, %v6947
        %v7026 = vpack.c.b16 %v6950, %v6948
        %v7027 = vpack.c.b16 %v6953, %v6951
        %v7028 = vpack.c.b16 %v6954, %v6952
        %v7029 = vpack.c.b16 %v6957, %v6955
        %v7030 = vpack.c.b16 %v6958, %v6956
        %v7031 = vpack.c.b16 %v6961, %v6959
        %v7032 = vpack.c.b16 %v6962, %v6960
        %v7033 = vpack.c.b16 %v6965, %v6963
        %v7034 = vpack.c.b16 %v6966, %v6964
        %v7035 = vpack.c.b16 %v6969, %v6967
        %v7036 = vpack.c.b16 %v6970, %v6968
        %v7037 = vpack.c.b16 %v6973, %v6971
        %v7038 = vpack.c.b16 %v6974, %v6972
        %7103 = vmatprep.subr.bf16.mxu0 %v6990
        %7104 = vmatpush1.bf16.msra.mxu0 %v6989
        %7105 = vmatprep.subr.bf16.mxu0 %v6988
        %7106 = vmatpush1.bf16.msra.mxu0 %v6987
        %7107 = vmatprep.subr.bf16.mxu0 %v6986
        %7108 = vmatpush1.bf16.msra.mxu0 %v6985
        %7109 = vmatprep.subr.bf16.mxu0 %v6984
        %7110 = vmatpush1.bf16.msra.mxu0 %v6983
        %7111 = vmatprep.subr.bf16.mxu0 %v6982
        %7112 = vmatpush1.bf16.msra.mxu0 %v6981
        %7113 = vmatprep.subr.bf16.mxu0 %v6980
        %7114 = vmatpush1.bf16.msra.mxu0 %v6979
        %7115 = vmatprep.subr.bf16.mxu0 %v6978
        %7116 = vmatpush1.bf16.msra.mxu0 %v6977
        %7117 = vmatprep.subr.bf16.mxu0 %v6976
        %7118 = vmatpush1.bf16.msra.mxu0 %v6975
        %7119 = vmatprep.subr.bf16.mxu0 %v7006
        %7120 = vmatpush2.bf16.msra.mxu0 %v7005
        %7121 = vmatprep.subr.bf16.mxu0 %v7004
        %7122 = vmatpush2.bf16.msra.mxu0 %v7003
        %7123 = vmatprep.subr.bf16.mxu0 %v7002
        %7124 = vmatpush2.bf16.msra.mxu0 %v7001
        %7125 = vmatprep.subr.bf16.mxu0 %v7000
        %7126 = vmatpush2.bf16.msra.mxu0 %v6999
        %7127 = vmatprep.subr.bf16.mxu0 %v6998
        %7128 = vmatpush2.bf16.msra.mxu0 %v6997
        %7129 = vmatprep.subr.bf16.mxu0 %v6996
        %7130 = vmatpush2.bf16.msra.mxu0 %v6995
        %7131 = vmatprep.subr.bf16.mxu0 %v6994
        %7132 = vmatpush2.bf16.msra.mxu0 %v6993
        %7133 = vmatprep.subr.bf16.mxu0 %v6992
        %7134 = vmatpush2.bf16.msra.mxu0 %v6991
        %7135 = vmatprep.mubr.bf16.mxu0 %v6703
        %7136 = vmatmul.mubr.bf16.gmra.mxu0 %v6702
        %v7137 = vpop.f32.mrf.mxu0
        %v7138 = vadd.f32 0.0, %v7137
        %v7139 = vpop.f32.mrf.mxu0
        %v7140 = vadd.f32 0.0, %v7139
        %v7141 = vpop.f32.mrf.mxu0
        %v7142 = vadd.f32 0.0, %v7141
        %v7143 = vpop.f32.mrf.mxu0
        %v7144 = vadd.f32 0.0, %v7143
        %7145 = vmatprep.mubr.bf16.mxu0 %v6707
        %7146 = vmatmul.mubr.bf16.gmra.mxu0 %v6706
        %v7147 = vpop.f32.mrf.mxu0
        %v7148 = vadd.f32 0.0, %v7147
        %v7149 = vpop.f32.mrf.mxu0
        %v7150 = vadd.f32 0.0, %v7149
        %v7151 = vpop.f32.mrf.mxu0
        %v7152 = vadd.f32 0.0, %v7151
        %v7153 = vpop.f32.mrf.mxu0
        %v7154 = vadd.f32 0.0, %v7153
        %7155 = vmatprep.mubr.bf16.mxu0 %v6711
        %7156 = vmatmul.mubr.bf16.gmra.mxu0 %v6710
        %v7157 = vpop.f32.mrf.mxu0
        %v7158 = vadd.f32 0.0, %v7157
        %v7159 = vpop.f32.mrf.mxu0
        %v7160 = vadd.f32 0.0, %v7159
        %v7161 = vpop.f32.mrf.mxu0
        %v7162 = vadd.f32 0.0, %v7161
        %v7163 = vpop.f32.mrf.mxu0
        %v7164 = vadd.f32 0.0, %v7163
        %7165 = vmatprep.mubr.bf16.mxu0 %v6715
        %7166 = vmatmul.mubr.bf16.gmra.mxu0 %v6714
        %v7167 = vpop.f32.mrf.mxu0
        %v7168 = vadd.f32 0.0, %v7167
        %v7169 = vpop.f32.mrf.mxu0
        %v7170 = vadd.f32 0.0, %v7169
        %v7171 = vpop.f32.mrf.mxu0
        %v7172 = vadd.f32 0.0, %v7171
        %v7173 = vpop.f32.mrf.mxu0
        %v7174 = vadd.f32 0.0, %v7173
        %7175 = vdwg.mxu0
        %7176 = vmatprep.subr.bf16.mxu0 %v7022
        %7177 = vmatpush1.bf16.msra.mxu0 %v7021
        %7178 = vmatprep.subr.bf16.mxu0 %v7020
        %7179 = vmatpush1.bf16.msra.mxu0 %v7019
        %7180 = vmatprep.subr.bf16.mxu0 %v7018
        %7181 = vmatpush1.bf16.msra.mxu0 %v7017
        %7182 = vmatprep.subr.bf16.mxu0 %v7016
        %7183 = vmatpush1.bf16.msra.mxu0 %v7015
        %7184 = vmatprep.subr.bf16.mxu0 %v7014
        %7185 = vmatpush1.bf16.msra.mxu0 %v7013
        %7186 = vmatprep.subr.bf16.mxu0 %v7012
        %7187 = vmatpush1.bf16.msra.mxu0 %v7011
        %7188 = vmatprep.subr.bf16.mxu0 %v7010
        %7189 = vmatpush1.bf16.msra.mxu0 %v7009
        %7190 = vmatprep.subr.bf16.mxu0 %v7008
        %7191 = vmatpush1.bf16.msra.mxu0 %v7007
        %7192 = vmatprep.subr.bf16.mxu0 %v7038
        %7193 = vmatpush2.bf16.msra.mxu0 %v7037
        %7194 = vmatprep.subr.bf16.mxu0 %v7036
        %7195 = vmatpush2.bf16.msra.mxu0 %v7035
        %7196 = vmatprep.subr.bf16.mxu0 %v7034
        %7197 = vmatpush2.bf16.msra.mxu0 %v7033
        %7198 = vmatprep.subr.bf16.mxu0 %v7032
        %7199 = vmatpush2.bf16.msra.mxu0 %v7031
        %7200 = vmatprep.subr.bf16.mxu0 %v7030
        %7201 = vmatpush2.bf16.msra.mxu0 %v7029
        %7202 = vmatprep.subr.bf16.mxu0 %v7028
        %7203 = vmatpush2.bf16.msra.mxu0 %v7027
        %7204 = vmatprep.subr.bf16.mxu0 %v7026
        %7205 = vmatpush2.bf16.msra.mxu0 %v7025
        %7206 = vmatprep.subr.bf16.mxu0 %v7024
        %7207 = vmatpush2.bf16.msra.mxu0 %v7023
        %7208 = vmatprep.mubr.bf16.mxu0 %v6705
        %7209 = vmatmul.mubr.bf16.gmra.mxu0 %v6704
        %v7210 = vpop.f32.mrf.mxu0
        %v7211 = vadd.f32 %v7138, %v7210
        %v7212 = vpop.f32.mrf.mxu0
        %v7213 = vadd.f32 %v7140, %v7212
        %v7214 = vpop.f32.mrf.mxu0
        %v7215 = vadd.f32 %v7142, %v7214
        %v7216 = vpop.f32.mrf.mxu0
        %v7217 = vadd.f32 %v7144, %v7216
        %7218 = vmatprep.mubr.bf16.mxu0 %v6709
        %7219 = vmatmul.mubr.bf16.gmra.mxu0 %v6708
        %v7220 = vpop.f32.mrf.mxu0
        %v7221 = vadd.f32 %v7148, %v7220
        %v7222 = vpop.f32.mrf.mxu0
        %v7223 = vadd.f32 %v7150, %v7222
        %v7224 = vpop.f32.mrf.mxu0
        %v7225 = vadd.f32 %v7152, %v7224
        %v7226 = vpop.f32.mrf.mxu0
        %v7227 = vadd.f32 %v7154, %v7226
        %7228 = vmatprep.mubr.bf16.mxu0 %v6713
        %7229 = vmatmul.mubr.bf16.gmra.mxu0 %v6712
        %v7230 = vpop.f32.mrf.mxu0
        %v7231 = vadd.f32 %v7158, %v7230
        %v7232 = vpop.f32.mrf.mxu0
        %v7233 = vadd.f32 %v7160, %v7232
        %v7234 = vpop.f32.mrf.mxu0
        %v7235 = vadd.f32 %v7162, %v7234
        %v7236 = vpop.f32.mrf.mxu0
        %v7237 = vadd.f32 %v7164, %v7236
        %7238 = vmatprep.mubr.bf16.mxu0 %v6717
        %7239 = vmatmul.mubr.bf16.gmra.mxu0 %v6716
        %v7240 = vpop.f32.mrf.mxu0
        %v7241 = vadd.f32 %v7168, %v7240
        %v7242 = vpop.f32.mrf.mxu0
        %v7243 = vadd.f32 %v7170, %v7242
        %v7244 = vpop.f32.mrf.mxu0
        %v7245 = vadd.f32 %v7172, %v7244
        %v7246 = vpop.f32.mrf.mxu0
        %v7247 = vadd.f32 %v7174, %v7246
        %7248 = vdwg.mxu0
        %v7249 = vadd.f32 %v6430, %v7211
        %v7250 = vadd.f32 %v6431, %v7213
        %v7251 = vadd.f32 %v6432, %v7215
        %v7252 = vadd.f32 %v6433, %v7217
        %v7253 = vadd.f32 %v6434, %v7221
        %v7254 = vadd.f32 %v6435, %v7223
        %v7255 = vadd.f32 %v6436, %v7225
        %v7256 = vadd.f32 %v6437, %v7227
        %v7257 = vadd.f32 %v6438, %v7231
        %v7258 = vadd.f32 %v6439, %v7233
        %v7259 = vadd.f32 %v6440, %v7235
        %v7260 = vadd.f32 %v6441, %v7237
        %v7261 = vadd.f32 %v6442, %v7241
        %v7262 = vadd.f32 %v6443, %v7243
        %v7263 = vadd.f32 %v6444, %v7245
        %v7264 = vadd.f32 %v6445, %v7247
        %s7265 = scalar_lea.vmem [#allocation2], 1152
        %v7266 = vld [vmem:[%s7265] sm:$0xfc]
        %v7267 = vld [vmem:[%s7265 + $0x8] sm:$0xfc]
        %v7268 = vld [vmem:[%s7265 + $0x10] sm:$0xfc]
        %v7269 = vld [vmem:[%s7265 + $0x18] sm:$0xfc]
        %v7270 = vld [vmem:[%s7265 + $0x20] sm:$0x3]
        %v7271 = vld [vmem:[%s7265 + $0x28] sm:$0x3]
        %v7272 = vld [vmem:[%s7265 + $0x30] sm:$0x3]
        %v7273 = vld [vmem:[%s7265 + $0x38] sm:$0x3]
        %v7274 = vld [vmem:[%s7265 + $0x60] sm:$0xfc]
        %v7275 = vld [vmem:[%s7265 + $0x68] sm:$0xfc]
        %v7276 = vld [vmem:[%s7265 + $0x70] sm:$0xfc]
        %v7277 = vld [vmem:[%s7265 + $0x78] sm:$0xfc]
        %v7278 = vld [vmem:[%s7265 + $0x80] sm:$0x3]
        %v7279 = vld [vmem:[%s7265 + $0x88] sm:$0x3]
        %v7280 = vld [vmem:[%s7265 + $0x90] sm:$0x3]
        %v7281 = vld [vmem:[%s7265 + $0x98] sm:$0x3]
        %v7282 = vld [vmem:[%s7265 + $0xc0] sm:$0xfc]
        %v7283 = vld [vmem:[%s7265 + $0xc8] sm:$0xfc]
        %v7284 = vld [vmem:[%s7265 + $0xd0] sm:$0xfc]
        %v7285 = vld [vmem:[%s7265 + $0xd8] sm:$0xfc]
        %v7286 = vld [vmem:[%s7265 + $0xe0] sm:$0x3]
        %v7287 = vld [vmem:[%s7265 + $0xe8] sm:$0x3]
        %v7288 = vld [vmem:[%s7265 + $0xf0] sm:$0x3]
        %v7289 = vld [vmem:[%s7265 + $0xf8] sm:$0x3]
        %v7290 = vld [vmem:[%s7265 + $0x120] sm:$0xfc]
        %v7291 = vld [vmem:[%s7265 + $0x128] sm:$0xfc]
        %v7292 = vld [vmem:[%s7265 + $0x130] sm:$0xfc]
        %v7293 = vld [vmem:[%s7265 + $0x138] sm:$0xfc]
        %v7294 = vld [vmem:[%s7265 + $0x140] sm:$0x3]
        %v7295 = vld [vmem:[%s7265 + $0x148] sm:$0x3]
        %v7296 = vld [vmem:[%s7265 + $0x150] sm:$0x3]
        %v7297 = vld [vmem:[%s7265 + $0x158] sm:$0x3]
        %v7298 = vld [vmem:[%s7265 + $0x180] sm:$0xfc]
        %v7299 = vld [vmem:[%s7265 + $0x188] sm:$0xfc]
        %v7300 = vld [vmem:[%s7265 + $0x190] sm:$0xfc]
        %v7301 = vld [vmem:[%s7265 + $0x198] sm:$0xfc]
        %v7302 = vld [vmem:[%s7265 + $0x1a0] sm:$0x3]
        %v7303 = vld [vmem:[%s7265 + $0x1a8] sm:$0x3]
        %v7304 = vld [vmem:[%s7265 + $0x1b0] sm:$0x3]
        %v7305 = vld [vmem:[%s7265 + $0x1b8] sm:$0x3]
        %v7306 = vld [vmem:[%s7265 + $0x1e0] sm:$0xfc]
        %v7307 = vld [vmem:[%s7265 + $0x1e8] sm:$0xfc]
        %v7308 = vld [vmem:[%s7265 + $0x1f0] sm:$0xfc]
        %v7309 = vld [vmem:[%s7265 + $0x1f8] sm:$0xfc]
        %v7310 = vld [vmem:[%s7265 + $0x200] sm:$0x3]
        %v7311 = vld [vmem:[%s7265 + $0x208] sm:$0x3]
        %v7312 = vld [vmem:[%s7265 + $0x210] sm:$0x3]
        %v7313 = vld [vmem:[%s7265 + $0x218] sm:$0x3]
        %v7314 = vld [vmem:[%s7265 + $0x240] sm:$0xfc]
        %v7315 = vld [vmem:[%s7265 + $0x248] sm:$0xfc]
        %v7316 = vld [vmem:[%s7265 + $0x250] sm:$0xfc]
        %v7317 = vld [vmem:[%s7265 + $0x258] sm:$0xfc]
        %v7318 = vld [vmem:[%s7265 + $0x260] sm:$0x3]
        %v7319 = vld [vmem:[%s7265 + $0x268] sm:$0x3]
        %v7320 = vld [vmem:[%s7265 + $0x270] sm:$0x3]
        %v7321 = vld [vmem:[%s7265 + $0x278] sm:$0x3]
        %v7322 = vld [vmem:[%s7265 + $0x2a0] sm:$0xfc]
        %v7323 = vld [vmem:[%s7265 + $0x2a8] sm:$0xfc]
        %v7324 = vld [vmem:[%s7265 + $0x2b0] sm:$0xfc]
        %v7325 = vld [vmem:[%s7265 + $0x2b8] sm:$0xfc]
        %v7326 = vld [vmem:[%s7265 + $0x2c0] sm:$0x3]
        %v7327 = vld [vmem:[%s7265 + $0x2c8] sm:$0x3]
        %v7328 = vld [vmem:[%s7265 + $0x2d0] sm:$0x3]
        %v7329 = vld [vmem:[%s7265 + $0x2d8] sm:$0x3]
        %v7394 = vrot.slane %v7266, 2
        %v7395 = vrot.slane %v7270, 2
        %v7396 = vsel %vm3006, %v7394, %v7395
        %v7397 = vrot.slane %v7267, 2
        %v7398 = vrot.slane %v7271, 2
        %v7399 = vsel %vm3006, %v7397, %v7398
        %v7400 = vrot.slane %v7268, 2
        %v7401 = vrot.slane %v7272, 2
        %v7402 = vsel %vm3006, %v7400, %v7401
        %v7403 = vrot.slane %v7269, 2
        %v7404 = vrot.slane %v7273, 2
        %v7405 = vsel %vm3006, %v7403, %v7404
        %v7406 = vrot.slane %v7274, 2
        %v7407 = vrot.slane %v7278, 2
        %v7408 = vsel %vm3006, %v7406, %v7407
        %v7409 = vrot.slane %v7275, 2
        %v7410 = vrot.slane %v7279, 2
        %v7411 = vsel %vm3006, %v7409, %v7410
        %v7412 = vrot.slane %v7276, 2
        %v7413 = vrot.slane %v7280, 2
        %v7414 = vsel %vm3006, %v7412, %v7413
        %v7415 = vrot.slane %v7277, 2
        %v7416 = vrot.slane %v7281, 2
        %v7417 = vsel %vm3006, %v7415, %v7416
        %v7418 = vrot.slane %v7282, 2
        %v7419 = vrot.slane %v7286, 2
        %v7420 = vsel %vm3006, %v7418, %v7419
        %v7421 = vrot.slane %v7283, 2
        %v7422 = vrot.slane %v7287, 2
        %v7423 = vsel %vm3006, %v7421, %v7422
        %v7424 = vrot.slane %v7284, 2
        %v7425 = vrot.slane %v7288, 2
        %v7426 = vsel %vm3006, %v7424, %v7425
        %v7427 = vrot.slane %v7285, 2
        %v7428 = vrot.slane %v7289, 2
        %v7429 = vsel %vm3006, %v7427, %v7428
        %v7430 = vrot.slane %v7290, 2
        %v7431 = vrot.slane %v7294, 2
        %v7432 = vsel %vm3006, %v7430, %v7431
        %v7433 = vrot.slane %v7291, 2
        %v7434 = vrot.slane %v7295, 2
        %v7435 = vsel %vm3006, %v7433, %v7434
        %v7436 = vrot.slane %v7292, 2
        %v7437 = vrot.slane %v7296, 2
        %v7438 = vsel %vm3006, %v7436, %v7437
        %v7439 = vrot.slane %v7293, 2
        %v7440 = vrot.slane %v7297, 2
        %v7441 = vsel %vm3006, %v7439, %v7440
        %v7442 = vrot.slane %v7298, 2
        %v7443 = vrot.slane %v7302, 2
        %v7444 = vsel %vm3006, %v7442, %v7443
        %v7445 = vrot.slane %v7299, 2
        %v7446 = vrot.slane %v7303, 2
        %v7447 = vsel %vm3006, %v7445, %v7446
        %v7448 = vrot.slane %v7300, 2
        %v7449 = vrot.slane %v7304, 2
        %v7450 = vsel %vm3006, %v7448, %v7449
        %v7451 = vrot.slane %v7301, 2
        %v7452 = vrot.slane %v7305, 2
        %v7453 = vsel %vm3006, %v7451, %v7452
        %v7454 = vrot.slane %v7306, 2
        %v7455 = vrot.slane %v7310, 2
        %v7456 = vsel %vm3006, %v7454, %v7455
        %v7457 = vrot.slane %v7307, 2
        %v7458 = vrot.slane %v7311, 2
        %v7459 = vsel %vm3006, %v7457, %v7458
        %v7460 = vrot.slane %v7308, 2
        %v7461 = vrot.slane %v7312, 2
        %v7462 = vsel %vm3006, %v7460, %v7461
        %v7463 = vrot.slane %v7309, 2
        %v7464 = vrot.slane %v7313, 2
        %v7465 = vsel %vm3006, %v7463, %v7464
        %v7466 = vrot.slane %v7314, 2
        %v7467 = vrot.slane %v7318, 2
        %v7468 = vsel %vm3006, %v7466, %v7467
        %v7469 = vrot.slane %v7315, 2
        %v7470 = vrot.slane %v7319, 2
        %v7471 = vsel %vm3006, %v7469, %v7470
        %v7472 = vrot.slane %v7316, 2
        %v7473 = vrot.slane %v7320, 2
        %v7474 = vsel %vm3006, %v7472, %v7473
        %v7475 = vrot.slane %v7317, 2
        %v7476 = vrot.slane %v7321, 2
        %v7477 = vsel %vm3006, %v7475, %v7476
        %v7478 = vrot.slane %v7322, 2
        %v7479 = vrot.slane %v7326, 2
        %v7480 = vsel %vm3006, %v7478, %v7479
        %v7481 = vrot.slane %v7323, 2
        %v7482 = vrot.slane %v7327, 2
        %v7483 = vsel %vm3006, %v7481, %v7482
        %v7484 = vrot.slane %v7324, 2
        %v7485 = vrot.slane %v7328, 2
        %v7486 = vsel %vm3006, %v7484, %v7485
        %v7487 = vrot.slane %v7325, 2
        %v7488 = vrot.slane %v7329, 2
        %v7489 = vsel %vm3006, %v7487, %v7488
        %v7522 = vpack.c.bf16 %v7408, %v7396
        %v7523 = vpack.c.bf16 %v7411, %v7399
        %v7524 = vpack.c.bf16 %v7414, %v7402
        %v7525 = vpack.c.bf16 %v7417, %v7405
        %v7526 = vpack.c.bf16 %v7432, %v7420
        %v7527 = vpack.c.bf16 %v7435, %v7423
        %v7528 = vpack.c.bf16 %v7438, %v7426
        %v7529 = vpack.c.bf16 %v7441, %v7429
        %v7530 = vpack.c.bf16 %v7456, %v7444
        %v7531 = vpack.c.bf16 %v7459, %v7447
        %v7532 = vpack.c.bf16 %v7462, %v7450
        %v7533 = vpack.c.bf16 %v7465, %v7453
        %v7534 = vpack.c.bf16 %v7480, %v7468
        %v7535 = vpack.c.bf16 %v7483, %v7471
        %v7536 = vpack.c.bf16 %v7486, %v7474
        %v7537 = vpack.c.bf16 %v7489, %v7477
        %s7538 = scalar_lea.vmem [#allocation7], 3072
        %v7539 = vld [vmem:[%s7538] sm:$0xff]
        %v7540 = vld [vmem:[%s7538 + $0x8] sm:$0xff]
        %v7541 = vld [vmem:[%s7538 + $0x10] sm:$0xff]
        %v7542 = vld [vmem:[%s7538 + $0x18] sm:$0xff]
        %v7543 = vld [vmem:[%s7538 + $0x20] sm:$0xff]
        %v7544 = vld [vmem:[%s7538 + $0x28] sm:$0xff]
        %v7545 = vld [vmem:[%s7538 + $0x30] sm:$0xff]
        %v7546 = vld [vmem:[%s7538 + $0x38] sm:$0xff]
        %v7547 = vld [vmem:[%s7538 + $0x40] sm:$0xff]
        %v7548 = vld [vmem:[%s7538 + $0x48] sm:$0xff]
        %v7549 = vld [vmem:[%s7538 + $0x50] sm:$0xff]
        %v7550 = vld [vmem:[%s7538 + $0x58] sm:$0xff]
        %v7551 = vld [vmem:[%s7538 + $0x60] sm:$0xff]
        %v7552 = vld [vmem:[%s7538 + $0x68] sm:$0xff]
        %v7553 = vld [vmem:[%s7538 + $0x70] sm:$0xff]
        %v7554 = vld [vmem:[%s7538 + $0x78] sm:$0xff]
        %v7555 = vld [vmem:[%s7538 + $0x80] sm:$0xff]
        %v7556 = vld [vmem:[%s7538 + $0x88] sm:$0xff]
        %v7557 = vld [vmem:[%s7538 + $0x90] sm:$0xff]
        %v7558 = vld [vmem:[%s7538 + $0x98] sm:$0xff]
        %v7559 = vld [vmem:[%s7538 + $0xa0] sm:$0xff]
        %v7560 = vld [vmem:[%s7538 + $0xa8] sm:$0xff]
        %v7561 = vld [vmem:[%s7538 + $0xb0] sm:$0xff]
        %v7562 = vld [vmem:[%s7538 + $0xb8] sm:$0xff]
        %v7563 = vld [vmem:[%s7538 + $0xc0] sm:$0xff]
        %v7564 = vld [vmem:[%s7538 + $0xc8] sm:$0xff]
        %v7565 = vld [vmem:[%s7538 + $0xd0] sm:$0xff]
        %v7566 = vld [vmem:[%s7538 + $0xd8] sm:$0xff]
        %v7567 = vld [vmem:[%s7538 + $0xe0] sm:$0xff]
        %v7568 = vld [vmem:[%s7538 + $0xe8] sm:$0xff]
        %v7569 = vld [vmem:[%s7538 + $0xf0] sm:$0xff]
        %v7570 = vld [vmem:[%s7538 + $0xf8] sm:$0xff]
        %v7571 = vld [vmem:[%s7538 + $0x100] sm:$0xff]
        %v7572 = vld [vmem:[%s7538 + $0x108] sm:$0xff]
        %v7573 = vld [vmem:[%s7538 + $0x110] sm:$0xff]
        %v7574 = vld [vmem:[%s7538 + $0x118] sm:$0xff]
        %v7575 = vld [vmem:[%s7538 + $0x120] sm:$0xff]
        %v7576 = vld [vmem:[%s7538 + $0x128] sm:$0xff]
        %v7577 = vld [vmem:[%s7538 + $0x130] sm:$0xff]
        %v7578 = vld [vmem:[%s7538 + $0x138] sm:$0xff]
        %v7579 = vld [vmem:[%s7538 + $0x140] sm:$0xff]
        %v7580 = vld [vmem:[%s7538 + $0x148] sm:$0xff]
        %v7581 = vld [vmem:[%s7538 + $0x150] sm:$0xff]
        %v7582 = vld [vmem:[%s7538 + $0x158] sm:$0xff]
        %v7583 = vld [vmem:[%s7538 + $0x160] sm:$0xff]
        %v7584 = vld [vmem:[%s7538 + $0x168] sm:$0xff]
        %v7585 = vld [vmem:[%s7538 + $0x170] sm:$0xff]
        %v7586 = vld [vmem:[%s7538 + $0x178] sm:$0xff]
        %v7587 = vld [vmem:[%s7538 + $0x180] sm:$0xff]
        %v7588 = vld [vmem:[%s7538 + $0x188] sm:$0xff]
        %v7589 = vld [vmem:[%s7538 + $0x190] sm:$0xff]
        %v7590 = vld [vmem:[%s7538 + $0x198] sm:$0xff]
        %v7591 = vld [vmem:[%s7538 + $0x1a0] sm:$0xff]
        %v7592 = vld [vmem:[%s7538 + $0x1a8] sm:$0xff]
        %v7593 = vld [vmem:[%s7538 + $0x1b0] sm:$0xff]
        %v7594 = vld [vmem:[%s7538 + $0x1b8] sm:$0xff]
        %v7595 = vld [vmem:[%s7538 + $0x1c0] sm:$0xff]
        %v7596 = vld [vmem:[%s7538 + $0x1c8] sm:$0xff]
        %v7597 = vld [vmem:[%s7538 + $0x1d0] sm:$0xff]
        %v7598 = vld [vmem:[%s7538 + $0x1d8] sm:$0xff]
        %v7599 = vld [vmem:[%s7538 + $0x1e0] sm:$0xff]
        %v7600 = vld [vmem:[%s7538 + $0x1e8] sm:$0xff]
        %v7601 = vld [vmem:[%s7538 + $0x1f0] sm:$0xff]
        %v7602 = vld [vmem:[%s7538 + $0x1f8] sm:$0xff]
        %v7667 = vunpack.c.l.b16 %v7539
        %v7668 = vunpack.c.h.b16 %v7539
        %v7669 = vunpack.c.l.b16 %v7540
        %v7670 = vunpack.c.h.b16 %v7540
        %v7671 = vunpack.c.l.b16 %v7541
        %v7672 = vunpack.c.h.b16 %v7541
        %v7673 = vunpack.c.l.b16 %v7542
        %v7674 = vunpack.c.h.b16 %v7542
        %v7675 = vunpack.c.l.b16 %v7543
        %v7676 = vunpack.c.h.b16 %v7543
        %v7677 = vunpack.c.l.b16 %v7544
        %v7678 = vunpack.c.h.b16 %v7544
        %v7679 = vunpack.c.l.b16 %v7545
        %v7680 = vunpack.c.h.b16 %v7545
        %v7681 = vunpack.c.l.b16 %v7546
        %v7682 = vunpack.c.h.b16 %v7546
        %v7683 = vunpack.c.l.b16 %v7547
        %v7684 = vunpack.c.h.b16 %v7547
        %v7685 = vunpack.c.l.b16 %v7548
        %v7686 = vunpack.c.h.b16 %v7548
        %v7687 = vunpack.c.l.b16 %v7549
        %v7688 = vunpack.c.h.b16 %v7549
        %v7689 = vunpack.c.l.b16 %v7550
        %v7690 = vunpack.c.h.b16 %v7550
        %v7691 = vunpack.c.l.b16 %v7551
        %v7692 = vunpack.c.h.b16 %v7551
        %v7693 = vunpack.c.l.b16 %v7552
        %v7694 = vunpack.c.h.b16 %v7552
        %v7695 = vunpack.c.l.b16 %v7553
        %v7696 = vunpack.c.h.b16 %v7553
        %v7697 = vunpack.c.l.b16 %v7554
        %v7698 = vunpack.c.h.b16 %v7554
        %v7699 = vunpack.c.l.b16 %v7555
        %v7700 = vunpack.c.h.b16 %v7555
        %v7701 = vunpack.c.l.b16 %v7556
        %v7702 = vunpack.c.h.b16 %v7556
        %v7703 = vunpack.c.l.b16 %v7557
        %v7704 = vunpack.c.h.b16 %v7557
        %v7705 = vunpack.c.l.b16 %v7558
        %v7706 = vunpack.c.h.b16 %v7558
        %v7707 = vunpack.c.l.b16 %v7559
        %v7708 = vunpack.c.h.b16 %v7559
        %v7709 = vunpack.c.l.b16 %v7560
        %v7710 = vunpack.c.h.b16 %v7560
        %v7711 = vunpack.c.l.b16 %v7561
        %v7712 = vunpack.c.h.b16 %v7561
        %v7713 = vunpack.c.l.b16 %v7562
        %v7714 = vunpack.c.h.b16 %v7562
        %v7715 = vunpack.c.l.b16 %v7563
        %v7716 = vunpack.c.h.b16 %v7563
        %v7717 = vunpack.c.l.b16 %v7564
        %v7718 = vunpack.c.h.b16 %v7564
        %v7719 = vunpack.c.l.b16 %v7565
        %v7720 = vunpack.c.h.b16 %v7565
        %v7721 = vunpack.c.l.b16 %v7566
        %v7722 = vunpack.c.h.b16 %v7566
        %v7723 = vunpack.c.l.b16 %v7567
        %v7724 = vunpack.c.h.b16 %v7567
        %v7725 = vunpack.c.l.b16 %v7568
        %v7726 = vunpack.c.h.b16 %v7568
        %v7727 = vunpack.c.l.b16 %v7569
        %v7728 = vunpack.c.h.b16 %v7569
        %v7729 = vunpack.c.l.b16 %v7570
        %v7730 = vunpack.c.h.b16 %v7570
        %v7731 = vunpack.c.l.b16 %v7571
        %v7732 = vunpack.c.h.b16 %v7571
        %v7733 = vunpack.c.l.b16 %v7572
        %v7734 = vunpack.c.h.b16 %v7572
        %v7735 = vunpack.c.l.b16 %v7573
        %v7736 = vunpack.c.h.b16 %v7573
        %v7737 = vunpack.c.l.b16 %v7574
        %v7738 = vunpack.c.h.b16 %v7574
        %v7739 = vunpack.c.l.b16 %v7575
        %v7740 = vunpack.c.h.b16 %v7575
        %v7741 = vunpack.c.l.b16 %v7576
        %v7742 = vunpack.c.h.b16 %v7576
        %v7743 = vunpack.c.l.b16 %v7577
        %v7744 = vunpack.c.h.b16 %v7577
        %v7745 = vunpack.c.l.b16 %v7578
        %v7746 = vunpack.c.h.b16 %v7578
        %v7747 = vunpack.c.l.b16 %v7579
        %v7748 = vunpack.c.h.b16 %v7579
        %v7749 = vunpack.c.l.b16 %v7580
        %v7750 = vunpack.c.h.b16 %v7580
        %v7751 = vunpack.c.l.b16 %v7581
        %v7752 = vunpack.c.h.b16 %v7581
        %v7753 = vunpack.c.l.b16 %v7582
        %v7754 = vunpack.c.h.b16 %v7582
        %v7755 = vunpack.c.l.b16 %v7583
        %v7756 = vunpack.c.h.b16 %v7583
        %v7757 = vunpack.c.l.b16 %v7584
        %v7758 = vunpack.c.h.b16 %v7584
        %v7759 = vunpack.c.l.b16 %v7585
        %v7760 = vunpack.c.h.b16 %v7585
        %v7761 = vunpack.c.l.b16 %v7586
        %v7762 = vunpack.c.h.b16 %v7586
        %v7763 = vunpack.c.l.b16 %v7587
        %v7764 = vunpack.c.h.b16 %v7587
        %v7765 = vunpack.c.l.b16 %v7588
        %v7766 = vunpack.c.h.b16 %v7588
        %v7767 = vunpack.c.l.b16 %v7589
        %v7768 = vunpack.c.h.b16 %v7589
        %v7769 = vunpack.c.l.b16 %v7590
        %v7770 = vunpack.c.h.b16 %v7590
        %v7771 = vunpack.c.l.b16 %v7591
        %v7772 = vunpack.c.h.b16 %v7591
        %v7773 = vunpack.c.l.b16 %v7592
        %v7774 = vunpack.c.h.b16 %v7592
        %v7775 = vunpack.c.l.b16 %v7593
        %v7776 = vunpack.c.h.b16 %v7593
        %v7777 = vunpack.c.l.b16 %v7594
        %v7778 = vunpack.c.h.b16 %v7594
        %v7779 = vunpack.c.l.b16 %v7595
        %v7780 = vunpack.c.h.b16 %v7595
        %v7781 = vunpack.c.l.b16 %v7596
        %v7782 = vunpack.c.h.b16 %v7596
        %v7783 = vunpack.c.l.b16 %v7597
        %v7784 = vunpack.c.h.b16 %v7597
        %v7785 = vunpack.c.l.b16 %v7598
        %v7786 = vunpack.c.h.b16 %v7598
        %v7787 = vunpack.c.l.b16 %v7599
        %v7788 = vunpack.c.h.b16 %v7599
        %v7789 = vunpack.c.l.b16 %v7600
        %v7790 = vunpack.c.h.b16 %v7600
        %v7791 = vunpack.c.l.b16 %v7601
        %v7792 = vunpack.c.h.b16 %v7601
        %v7793 = vunpack.c.l.b16 %v7602
        %v7794 = vunpack.c.h.b16 %v7602
        %v7795 = vpack.c.b16 %v7669, %v7667
        %v7796 = vpack.c.b16 %v7670, %v7668
        %v7797 = vpack.c.b16 %v7673, %v7671
        %v7798 = vpack.c.b16 %v7674, %v7672
        %v7799 = vpack.c.b16 %v7677, %v7675
        %v7800 = vpack.c.b16 %v7678, %v7676
        %v7801 = vpack.c.b16 %v7681, %v7679
        %v7802 = vpack.c.b16 %v7682, %v7680
        %v7803 = vpack.c.b16 %v7685, %v7683
        %v7804 = vpack.c.b16 %v7686, %v7684
        %v7805 = vpack.c.b16 %v7689, %v7687
        %v7806 = vpack.c.b16 %v7690, %v7688
        %v7807 = vpack.c.b16 %v7693, %v7691
        %v7808 = vpack.c.b16 %v7694, %v7692
        %v7809 = vpack.c.b16 %v7697, %v7695
        %v7810 = vpack.c.b16 %v7698, %v7696
        %v7811 = vpack.c.b16 %v7701, %v7699
        %v7812 = vpack.c.b16 %v7702, %v7700
        %v7813 = vpack.c.b16 %v7705, %v7703
        %v7814 = vpack.c.b16 %v7706, %v7704
        %v7815 = vpack.c.b16 %v7709, %v7707
        %v7816 = vpack.c.b16 %v7710, %v7708
        %v7817 = vpack.c.b16 %v7713, %v7711
        %v7818 = vpack.c.b16 %v7714, %v7712
        %v7819 = vpack.c.b16 %v7717, %v7715
        %v7820 = vpack.c.b16 %v7718, %v7716
        %v7821 = vpack.c.b16 %v7721, %v7719
        %v7822 = vpack.c.b16 %v7722, %v7720
        %v7823 = vpack.c.b16 %v7725, %v7723
        %v7824 = vpack.c.b16 %v7726, %v7724
        %v7825 = vpack.c.b16 %v7729, %v7727
        %v7826 = vpack.c.b16 %v7730, %v7728
        %v7827 = vpack.c.b16 %v7733, %v7731
        %v7828 = vpack.c.b16 %v7734, %v7732
        %v7829 = vpack.c.b16 %v7737, %v7735
        %v7830 = vpack.c.b16 %v7738, %v7736
        %v7831 = vpack.c.b16 %v7741, %v7739
        %v7832 = vpack.c.b16 %v7742, %v7740
        %v7833 = vpack.c.b16 %v7745, %v7743
        %v7834 = vpack.c.b16 %v7746, %v7744
        %v7835 = vpack.c.b16 %v7749, %v7747
        %v7836 = vpack.c.b16 %v7750, %v7748
        %v7837 = vpack.c.b16 %v7753, %v7751
        %v7838 = vpack.c.b16 %v7754, %v7752
        %v7839 = vpack.c.b16 %v7757, %v7755
        %v7840 = vpack.c.b16 %v7758, %v7756
        %v7841 = vpack.c.b16 %v7761, %v7759
        %v7842 = vpack.c.b16 %v7762, %v7760
        %v7843 = vpack.c.b16 %v7765, %v7763
        %v7844 = vpack.c.b16 %v7766, %v7764
        %v7845 = vpack.c.b16 %v7769, %v7767
        %v7846 = vpack.c.b16 %v7770, %v7768
        %v7847 = vpack.c.b16 %v7773, %v7771
        %v7848 = vpack.c.b16 %v7774, %v7772
        %v7849 = vpack.c.b16 %v7777, %v7775
        %v7850 = vpack.c.b16 %v7778, %v7776
        %v7851 = vpack.c.b16 %v7781, %v7779
        %v7852 = vpack.c.b16 %v7782, %v7780
        %v7853 = vpack.c.b16 %v7785, %v7783
        %v7854 = vpack.c.b16 %v7786, %v7784
        %v7855 = vpack.c.b16 %v7789, %v7787
        %v7856 = vpack.c.b16 %v7790, %v7788
        %v7857 = vpack.c.b16 %v7793, %v7791
        %v7858 = vpack.c.b16 %v7794, %v7792
        %7923 = vmatprep.subr.bf16.mxu0 %v7810
        %7924 = vmatpush1.bf16.msra.mxu0 %v7809
        %7925 = vmatprep.subr.bf16.mxu0 %v7808
        %7926 = vmatpush1.bf16.msra.mxu0 %v7807
        %7927 = vmatprep.subr.bf16.mxu0 %v7806
        %7928 = vmatpush1.bf16.msra.mxu0 %v7805
        %7929 = vmatprep.subr.bf16.mxu0 %v7804
        %7930 = vmatpush1.bf16.msra.mxu0 %v7803
        %7931 = vmatprep.subr.bf16.mxu0 %v7802
        %7932 = vmatpush1.bf16.msra.mxu0 %v7801
        %7933 = vmatprep.subr.bf16.mxu0 %v7800
        %7934 = vmatpush1.bf16.msra.mxu0 %v7799
        %7935 = vmatprep.subr.bf16.mxu0 %v7798
        %7936 = vmatpush1.bf16.msra.mxu0 %v7797
        %7937 = vmatprep.subr.bf16.mxu0 %v7796
        %7938 = vmatpush1.bf16.msra.mxu0 %v7795
        %7939 = vmatprep.subr.bf16.mxu0 %v7826
        %7940 = vmatpush2.bf16.msra.mxu0 %v7825
        %7941 = vmatprep.subr.bf16.mxu0 %v7824
        %7942 = vmatpush2.bf16.msra.mxu0 %v7823
        %7943 = vmatprep.subr.bf16.mxu0 %v7822
        %7944 = vmatpush2.bf16.msra.mxu0 %v7821
        %7945 = vmatprep.subr.bf16.mxu0 %v7820
        %7946 = vmatpush2.bf16.msra.mxu0 %v7819
        %7947 = vmatprep.subr.bf16.mxu0 %v7818
        %7948 = vmatpush2.bf16.msra.mxu0 %v7817
        %7949 = vmatprep.subr.bf16.mxu0 %v7816
        %7950 = vmatpush2.bf16.msra.mxu0 %v7815
        %7951 = vmatprep.subr.bf16.mxu0 %v7814
        %7952 = vmatpush2.bf16.msra.mxu0 %v7813
        %7953 = vmatprep.subr.bf16.mxu0 %v7812
        %7954 = vmatpush2.bf16.msra.mxu0 %v7811
        %7955 = vmatprep.mubr.bf16.mxu0 %v7523
        %7956 = vmatmul.mubr.bf16.gmra.mxu0 %v7522
        %v7957 = vpop.f32.mrf.mxu0
        %v7958 = vadd.f32 0.0, %v7957
        %v7959 = vpop.f32.mrf.mxu0
        %v7960 = vadd.f32 0.0, %v7959
        %v7961 = vpop.f32.mrf.mxu0
        %v7962 = vadd.f32 0.0, %v7961
        %v7963 = vpop.f32.mrf.mxu0
        %v7964 = vadd.f32 0.0, %v7963
        %7965 = vmatprep.mubr.bf16.mxu0 %v7527
        %7966 = vmatmul.mubr.bf16.gmra.mxu0 %v7526
        %v7967 = vpop.f32.mrf.mxu0
        %v7968 = vadd.f32 0.0, %v7967
        %v7969 = vpop.f32.mrf.mxu0
        %v7970 = vadd.f32 0.0, %v7969
        %v7971 = vpop.f32.mrf.mxu0
        %v7972 = vadd.f32 0.0, %v7971
        %v7973 = vpop.f32.mrf.mxu0
        %v7974 = vadd.f32 0.0, %v7973
        %7975 = vmatprep.mubr.bf16.mxu0 %v7531
        %7976 = vmatmul.mubr.bf16.gmra.mxu0 %v7530
        %v7977 = vpop.f32.mrf.mxu0
        %v7978 = vadd.f32 0.0, %v7977
        %v7979 = vpop.f32.mrf.mxu0
        %v7980 = vadd.f32 0.0, %v7979
        %v7981 = vpop.f32.mrf.mxu0
        %v7982 = vadd.f32 0.0, %v7981
        %v7983 = vpop.f32.mrf.mxu0
        %v7984 = vadd.f32 0.0, %v7983
        %7985 = vmatprep.mubr.bf16.mxu0 %v7535
        %7986 = vmatmul.mubr.bf16.gmra.mxu0 %v7534
        %v7987 = vpop.f32.mrf.mxu0
        %v7988 = vadd.f32 0.0, %v7987
        %v7989 = vpop.f32.mrf.mxu0
        %v7990 = vadd.f32 0.0, %v7989
        %v7991 = vpop.f32.mrf.mxu0
        %v7992 = vadd.f32 0.0, %v7991
        %v7993 = vpop.f32.mrf.mxu0
        %v7994 = vadd.f32 0.0, %v7993
        %7995 = vdwg.mxu0
        %7996 = vmatprep.subr.bf16.mxu0 %v7842
        %7997 = vmatpush1.bf16.msra.mxu0 %v7841
        %7998 = vmatprep.subr.bf16.mxu0 %v7840
        %7999 = vmatpush1.bf16.msra.mxu0 %v7839
        %8000 = vmatprep.subr.bf16.mxu0 %v7838
        %8001 = vmatpush1.bf16.msra.mxu0 %v7837
        %8002 = vmatprep.subr.bf16.mxu0 %v7836
        %8003 = vmatpush1.bf16.msra.mxu0 %v7835
        %8004 = vmatprep.subr.bf16.mxu0 %v7834
        %8005 = vmatpush1.bf16.msra.mxu0 %v7833
        %8006 = vmatprep.subr.bf16.mxu0 %v7832
        %8007 = vmatpush1.bf16.msra.mxu0 %v7831
        %8008 = vmatprep.subr.bf16.mxu0 %v7830
        %8009 = vmatpush1.bf16.msra.mxu0 %v7829
        %8010 = vmatprep.subr.bf16.mxu0 %v7828
        %8011 = vmatpush1.bf16.msra.mxu0 %v7827
        %8012 = vmatprep.subr.bf16.mxu0 %v7858
        %8013 = vmatpush2.bf16.msra.mxu0 %v7857
        %8014 = vmatprep.subr.bf16.mxu0 %v7856
        %8015 = vmatpush2.bf16.msra.mxu0 %v7855
        %8016 = vmatprep.subr.bf16.mxu0 %v7854
        %8017 = vmatpush2.bf16.msra.mxu0 %v7853
        %8018 = vmatprep.subr.bf16.mxu0 %v7852
        %8019 = vmatpush2.bf16.msra.mxu0 %v7851
        %8020 = vmatprep.subr.bf16.mxu0 %v7850
        %8021 = vmatpush2.bf16.msra.mxu0 %v7849
        %8022 = vmatprep.subr.bf16.mxu0 %v7848
        %8023 = vmatpush2.bf16.msra.mxu0 %v7847
        %8024 = vmatprep.subr.bf16.mxu0 %v7846
        %8025 = vmatpush2.bf16.msra.mxu0 %v7845
        %8026 = vmatprep.subr.bf16.mxu0 %v7844
        %8027 = vmatpush2.bf16.msra.mxu0 %v7843
        %8028 = vmatprep.mubr.bf16.mxu0 %v7525
        %8029 = vmatmul.mubr.bf16.gmra.mxu0 %v7524
        %v8030 = vpop.f32.mrf.mxu0
        %v8031 = vadd.f32 %v7958, %v8030
        %v8032 = vpop.f32.mrf.mxu0
        %v8033 = vadd.f32 %v7960, %v8032
        %v8034 = vpop.f32.mrf.mxu0
        %v8035 = vadd.f32 %v7962, %v8034
        %v8036 = vpop.f32.mrf.mxu0
        %v8037 = vadd.f32 %v7964, %v8036
        %8038 = vmatprep.mubr.bf16.mxu0 %v7529
        %8039 = vmatmul.mubr.bf16.gmra.mxu0 %v7528
        %v8040 = vpop.f32.mrf.mxu0
        %v8041 = vadd.f32 %v7968, %v8040
        %v8042 = vpop.f32.mrf.mxu0
        %v8043 = vadd.f32 %v7970, %v8042
        %v8044 = vpop.f32.mrf.mxu0
        %v8045 = vadd.f32 %v7972, %v8044
        %v8046 = vpop.f32.mrf.mxu0
        %v8047 = vadd.f32 %v7974, %v8046
        %8048 = vmatprep.mubr.bf16.mxu0 %v7533
        %8049 = vmatmul.mubr.bf16.gmra.mxu0 %v7532
        %v8050 = vpop.f32.mrf.mxu0
        %v8051 = vadd.f32 %v7978, %v8050
        %v8052 = vpop.f32.mrf.mxu0
        %v8053 = vadd.f32 %v7980, %v8052
        %v8054 = vpop.f32.mrf.mxu0
        %v8055 = vadd.f32 %v7982, %v8054
        %v8056 = vpop.f32.mrf.mxu0
        %v8057 = vadd.f32 %v7984, %v8056
        %8058 = vmatprep.mubr.bf16.mxu0 %v7537
        %8059 = vmatmul.mubr.bf16.gmra.mxu0 %v7536
        %v8060 = vpop.f32.mrf.mxu0
        %v8061 = vadd.f32 %v7988, %v8060
        %v8062 = vpop.f32.mrf.mxu0
        %v8063 = vadd.f32 %v7990, %v8062
        %v8064 = vpop.f32.mrf.mxu0
        %v8065 = vadd.f32 %v7992, %v8064
        %v8066 = vpop.f32.mrf.mxu0
        %v8067 = vadd.f32 %v7994, %v8066
        %8068 = vdwg.mxu0
        %v8069 = vadd.f32 %v7249, %v8031
        %v8070 = vadd.f32 %v7250, %v8033
        %v8071 = vadd.f32 %v7251, %v8035
        %v8072 = vadd.f32 %v7252, %v8037
        %v8073 = vadd.f32 %v7253, %v8041
        %v8074 = vadd.f32 %v7254, %v8043
        %v8075 = vadd.f32 %v7255, %v8045
        %v8076 = vadd.f32 %v7256, %v8047
        %v8077 = vadd.f32 %v7257, %v8051
        %v8078 = vadd.f32 %v7258, %v8053
        %v8079 = vadd.f32 %v7259, %v8055
        %v8080 = vadd.f32 %v7260, %v8057
        %v8081 = vadd.f32 %v7261, %v8061
        %v8082 = vadd.f32 %v7262, %v8063
        %v8083 = vadd.f32 %v7263, %v8065
        %v8084 = vadd.f32 %v7264, %v8067
        %v8085 = vld [vmem:[%s7265 + $0x20] sm:$0xff]
        %v8086 = vld [vmem:[%s7265 + $0x28] sm:$0xff]
        %v8087 = vld [vmem:[%s7265 + $0x30] sm:$0xff]
        %v8088 = vld [vmem:[%s7265 + $0x38] sm:$0xff]
        %v8089 = vld [vmem:[%s7265 + $0x80] sm:$0xff]
        %v8090 = vld [vmem:[%s7265 + $0x88] sm:$0xff]
        %v8091 = vld [vmem:[%s7265 + $0x90] sm:$0xff]
        %v8092 = vld [vmem:[%s7265 + $0x98] sm:$0xff]
        %v8093 = vld [vmem:[%s7265 + $0xe0] sm:$0xff]
        %v8094 = vld [vmem:[%s7265 + $0xe8] sm:$0xff]
        %v8095 = vld [vmem:[%s7265 + $0xf0] sm:$0xff]
        %v8096 = vld [vmem:[%s7265 + $0xf8] sm:$0xff]
        %v8097 = vld [vmem:[%s7265 + $0x140] sm:$0xff]
        %v8098 = vld [vmem:[%s7265 + $0x148] sm:$0xff]
        %v8099 = vld [vmem:[%s7265 + $0x150] sm:$0xff]
        %v8100 = vld [vmem:[%s7265 + $0x158] sm:$0xff]
        %v8101 = vld [vmem:[%s7265 + $0x1a0] sm:$0xff]
        %v8102 = vld [vmem:[%s7265 + $0x1a8] sm:$0xff]
        %v8103 = vld [vmem:[%s7265 + $0x1b0] sm:$0xff]
        %v8104 = vld [vmem:[%s7265 + $0x1b8] sm:$0xff]
        %v8105 = vld [vmem:[%s7265 + $0x200] sm:$0xff]
        %v8106 = vld [vmem:[%s7265 + $0x208] sm:$0xff]
        %v8107 = vld [vmem:[%s7265 + $0x210] sm:$0xff]
        %v8108 = vld [vmem:[%s7265 + $0x218] sm:$0xff]
        %v8109 = vld [vmem:[%s7265 + $0x260] sm:$0xff]
        %v8110 = vld [vmem:[%s7265 + $0x268] sm:$0xff]
        %v8111 = vld [vmem:[%s7265 + $0x270] sm:$0xff]
        %v8112 = vld [vmem:[%s7265 + $0x278] sm:$0xff]
        %v8113 = vld [vmem:[%s7265 + $0x2c0] sm:$0xff]
        %v8114 = vld [vmem:[%s7265 + $0x2c8] sm:$0xff]
        %v8115 = vld [vmem:[%s7265 + $0x2d0] sm:$0xff]
        %v8116 = vld [vmem:[%s7265 + $0x2d8] sm:$0xff]
        %v8117 = vpack.c.bf16 %v8089, %v8085
        %v8118 = vpack.c.bf16 %v8090, %v8086
        %v8119 = vpack.c.bf16 %v8091, %v8087
        %v8120 = vpack.c.bf16 %v8092, %v8088
        %v8121 = vpack.c.bf16 %v8097, %v8093
        %v8122 = vpack.c.bf16 %v8098, %v8094
        %v8123 = vpack.c.bf16 %v8099, %v8095
        %v8124 = vpack.c.bf16 %v8100, %v8096
        %v8125 = vpack.c.bf16 %v8105, %v8101
        %v8126 = vpack.c.bf16 %v8106, %v8102
        %v8127 = vpack.c.bf16 %v8107, %v8103
        %v8128 = vpack.c.bf16 %v8108, %v8104
        %v8129 = vpack.c.bf16 %v8113, %v8109
        %v8130 = vpack.c.bf16 %v8114, %v8110
        %v8131 = vpack.c.bf16 %v8115, %v8111
        %v8132 = vpack.c.bf16 %v8116, %v8112
        %s8133 = scalar_lea.vmem [#allocation7], 3584
        %v8134 = vld [vmem:[%s8133] sm:$0xff]
        %v8135 = vld [vmem:[%s8133 + $0x8] sm:$0xff]
        %v8136 = vld [vmem:[%s8133 + $0x10] sm:$0xff]
        %v8137 = vld [vmem:[%s8133 + $0x18] sm:$0xff]
        %v8138 = vld [vmem:[%s8133 + $0x20] sm:$0xff]
        %v8139 = vld [vmem:[%s8133 + $0x28] sm:$0xff]
        %v8140 = vld [vmem:[%s8133 + $0x30] sm:$0xff]
        %v8141 = vld [vmem:[%s8133 + $0x38] sm:$0xff]
        %v8142 = vld [vmem:[%s8133 + $0x40] sm:$0xff]
        %v8143 = vld [vmem:[%s8133 + $0x48] sm:$0xff]
        %v8144 = vld [vmem:[%s8133 + $0x50] sm:$0xff]
        %v8145 = vld [vmem:[%s8133 + $0x58] sm:$0xff]
        %v8146 = vld [vmem:[%s8133 + $0x60] sm:$0xff]
        %v8147 = vld [vmem:[%s8133 + $0x68] sm:$0xff]
        %v8148 = vld [vmem:[%s8133 + $0x70] sm:$0xff]
        %v8149 = vld [vmem:[%s8133 + $0x78] sm:$0xff]
        %v8150 = vld [vmem:[%s8133 + $0x80] sm:$0xff]
        %v8151 = vld [vmem:[%s8133 + $0x88] sm:$0xff]
        %v8152 = vld [vmem:[%s8133 + $0x90] sm:$0xff]
        %v8153 = vld [vmem:[%s8133 + $0x98] sm:$0xff]
        %v8154 = vld [vmem:[%s8133 + $0xa0] sm:$0xff]
        %v8155 = vld [vmem:[%s8133 + $0xa8] sm:$0xff]
        %v8156 = vld [vmem:[%s8133 + $0xb0] sm:$0xff]
        %v8157 = vld [vmem:[%s8133 + $0xb8] sm:$0xff]
        %v8158 = vld [vmem:[%s8133 + $0xc0] sm:$0xff]
        %v8159 = vld [vmem:[%s8133 + $0xc8] sm:$0xff]
        %v8160 = vld [vmem:[%s8133 + $0xd0] sm:$0xff]
        %v8161 = vld [vmem:[%s8133 + $0xd8] sm:$0xff]
        %v8162 = vld [vmem:[%s8133 + $0xe0] sm:$0xff]
        %v8163 = vld [vmem:[%s8133 + $0xe8] sm:$0xff]
        %v8164 = vld [vmem:[%s8133 + $0xf0] sm:$0xff]
        %v8165 = vld [vmem:[%s8133 + $0xf8] sm:$0xff]
        %v8166 = vld [vmem:[%s8133 + $0x100] sm:$0xff]
        %v8167 = vld [vmem:[%s8133 + $0x108] sm:$0xff]
        %v8168 = vld [vmem:[%s8133 + $0x110] sm:$0xff]
        %v8169 = vld [vmem:[%s8133 + $0x118] sm:$0xff]
        %v8170 = vld [vmem:[%s8133 + $0x120] sm:$0xff]
        %v8171 = vld [vmem:[%s8133 + $0x128] sm:$0xff]
        %v8172 = vld [vmem:[%s8133 + $0x130] sm:$0xff]
        %v8173 = vld [vmem:[%s8133 + $0x138] sm:$0xff]
        %v8174 = vld [vmem:[%s8133 + $0x140] sm:$0xff]
        %v8175 = vld [vmem:[%s8133 + $0x148] sm:$0xff]
        %v8176 = vld [vmem:[%s8133 + $0x150] sm:$0xff]
        %v8177 = vld [vmem:[%s8133 + $0x158] sm:$0xff]
        %v8178 = vld [vmem:[%s8133 + $0x160] sm:$0xff]
        %v8179 = vld [vmem:[%s8133 + $0x168] sm:$0xff]
        %v8180 = vld [vmem:[%s8133 + $0x170] sm:$0xff]
        %v8181 = vld [vmem:[%s8133 + $0x178] sm:$0xff]
        %v8182 = vld [vmem:[%s8133 + $0x180] sm:$0xff]
        %v8183 = vld [vmem:[%s8133 + $0x188] sm:$0xff]
        %v8184 = vld [vmem:[%s8133 + $0x190] sm:$0xff]
        %v8185 = vld [vmem:[%s8133 + $0x198] sm:$0xff]
        %v8186 = vld [vmem:[%s8133 + $0x1a0] sm:$0xff]
        %v8187 = vld [vmem:[%s8133 + $0x1a8] sm:$0xff]
        %v8188 = vld [vmem:[%s8133 + $0x1b0] sm:$0xff]
        %v8189 = vld [vmem:[%s8133 + $0x1b8] sm:$0xff]
        %v8190 = vld [vmem:[%s8133 + $0x1c0] sm:$0xff]
        %v8191 = vld [vmem:[%s8133 + $0x1c8] sm:$0xff]
        %v8192 = vld [vmem:[%s8133 + $0x1d0] sm:$0xff]
        %v8193 = vld [vmem:[%s8133 + $0x1d8] sm:$0xff]
        %v8194 = vld [vmem:[%s8133 + $0x1e0] sm:$0xff]
        %v8195 = vld [vmem:[%s8133 + $0x1e8] sm:$0xff]
        %v8196 = vld [vmem:[%s8133 + $0x1f0] sm:$0xff]
        %v8197 = vld [vmem:[%s8133 + $0x1f8] sm:$0xff]
        %v8262 = vunpack.c.l.b16 %v8134
        %v8263 = vunpack.c.h.b16 %v8134
        %v8264 = vunpack.c.l.b16 %v8135
        %v8265 = vunpack.c.h.b16 %v8135
        %v8266 = vunpack.c.l.b16 %v8136
        %v8267 = vunpack.c.h.b16 %v8136
        %v8268 = vunpack.c.l.b16 %v8137
        %v8269 = vunpack.c.h.b16 %v8137
        %v8270 = vunpack.c.l.b16 %v8138
        %v8271 = vunpack.c.h.b16 %v8138
        %v8272 = vunpack.c.l.b16 %v8139
        %v8273 = vunpack.c.h.b16 %v8139
        %v8274 = vunpack.c.l.b16 %v8140
        %v8275 = vunpack.c.h.b16 %v8140
        %v8276 = vunpack.c.l.b16 %v8141
        %v8277 = vunpack.c.h.b16 %v8141
        %v8278 = vunpack.c.l.b16 %v8142
        %v8279 = vunpack.c.h.b16 %v8142
        %v8280 = vunpack.c.l.b16 %v8143
        %v8281 = vunpack.c.h.b16 %v8143
        %v8282 = vunpack.c.l.b16 %v8144
        %v8283 = vunpack.c.h.b16 %v8144
        %v8284 = vunpack.c.l.b16 %v8145
        %v8285 = vunpack.c.h.b16 %v8145
        %v8286 = vunpack.c.l.b16 %v8146
        %v8287 = vunpack.c.h.b16 %v8146
        %v8288 = vunpack.c.l.b16 %v8147
        %v8289 = vunpack.c.h.b16 %v8147
        %v8290 = vunpack.c.l.b16 %v8148
        %v8291 = vunpack.c.h.b16 %v8148
        %v8292 = vunpack.c.l.b16 %v8149
        %v8293 = vunpack.c.h.b16 %v8149
        %v8294 = vunpack.c.l.b16 %v8150
        %v8295 = vunpack.c.h.b16 %v8150
        %v8296 = vunpack.c.l.b16 %v8151
        %v8297 = vunpack.c.h.b16 %v8151
        %v8298 = vunpack.c.l.b16 %v8152
        %v8299 = vunpack.c.h.b16 %v8152
        %v8300 = vunpack.c.l.b16 %v8153
        %v8301 = vunpack.c.h.b16 %v8153
        %v8302 = vunpack.c.l.b16 %v8154
        %v8303 = vunpack.c.h.b16 %v8154
        %v8304 = vunpack.c.l.b16 %v8155
        %v8305 = vunpack.c.h.b16 %v8155
        %v8306 = vunpack.c.l.b16 %v8156
        %v8307 = vunpack.c.h.b16 %v8156
        %v8308 = vunpack.c.l.b16 %v8157
        %v8309 = vunpack.c.h.b16 %v8157
        %v8310 = vunpack.c.l.b16 %v8158
        %v8311 = vunpack.c.h.b16 %v8158
        %v8312 = vunpack.c.l.b16 %v8159
        %v8313 = vunpack.c.h.b16 %v8159
        %v8314 = vunpack.c.l.b16 %v8160
        %v8315 = vunpack.c.h.b16 %v8160
        %v8316 = vunpack.c.l.b16 %v8161
        %v8317 = vunpack.c.h.b16 %v8161
        %v8318 = vunpack.c.l.b16 %v8162
        %v8319 = vunpack.c.h.b16 %v8162
        %v8320 = vunpack.c.l.b16 %v8163
        %v8321 = vunpack.c.h.b16 %v8163
        %v8322 = vunpack.c.l.b16 %v8164
        %v8323 = vunpack.c.h.b16 %v8164
        %v8324 = vunpack.c.l.b16 %v8165
        %v8325 = vunpack.c.h.b16 %v8165
        %v8326 = vunpack.c.l.b16 %v8166
        %v8327 = vunpack.c.h.b16 %v8166
        %v8328 = vunpack.c.l.b16 %v8167
        %v8329 = vunpack.c.h.b16 %v8167
        %v8330 = vunpack.c.l.b16 %v8168
        %v8331 = vunpack.c.h.b16 %v8168
        %v8332 = vunpack.c.l.b16 %v8169
        %v8333 = vunpack.c.h.b16 %v8169
        %v8334 = vunpack.c.l.b16 %v8170
        %v8335 = vunpack.c.h.b16 %v8170
        %v8336 = vunpack.c.l.b16 %v8171
        %v8337 = vunpack.c.h.b16 %v8171
        %v8338 = vunpack.c.l.b16 %v8172
        %v8339 = vunpack.c.h.b16 %v8172
        %v8340 = vunpack.c.l.b16 %v8173
        %v8341 = vunpack.c.h.b16 %v8173
        %v8342 = vunpack.c.l.b16 %v8174
        %v8343 = vunpack.c.h.b16 %v8174
        %v8344 = vunpack.c.l.b16 %v8175
        %v8345 = vunpack.c.h.b16 %v8175
        %v8346 = vunpack.c.l.b16 %v8176
        %v8347 = vunpack.c.h.b16 %v8176
        %v8348 = vunpack.c.l.b16 %v8177
        %v8349 = vunpack.c.h.b16 %v8177
        %v8350 = vunpack.c.l.b16 %v8178
        %v8351 = vunpack.c.h.b16 %v8178
        %v8352 = vunpack.c.l.b16 %v8179
        %v8353 = vunpack.c.h.b16 %v8179
        %v8354 = vunpack.c.l.b16 %v8180
        %v8355 = vunpack.c.h.b16 %v8180
        %v8356 = vunpack.c.l.b16 %v8181
        %v8357 = vunpack.c.h.b16 %v8181
        %v8358 = vunpack.c.l.b16 %v8182
        %v8359 = vunpack.c.h.b16 %v8182
        %v8360 = vunpack.c.l.b16 %v8183
        %v8361 = vunpack.c.h.b16 %v8183
        %v8362 = vunpack.c.l.b16 %v8184
        %v8363 = vunpack.c.h.b16 %v8184
        %v8364 = vunpack.c.l.b16 %v8185
        %v8365 = vunpack.c.h.b16 %v8185
        %v8366 = vunpack.c.l.b16 %v8186
        %v8367 = vunpack.c.h.b16 %v8186
        %v8368 = vunpack.c.l.b16 %v8187
        %v8369 = vunpack.c.h.b16 %v8187
        %v8370 = vunpack.c.l.b16 %v8188
        %v8371 = vunpack.c.h.b16 %v8188
        %v8372 = vunpack.c.l.b16 %v8189
        %v8373 = vunpack.c.h.b16 %v8189
        %v8374 = vunpack.c.l.b16 %v8190
        %v8375 = vunpack.c.h.b16 %v8190
        %v8376 = vunpack.c.l.b16 %v8191
        %v8377 = vunpack.c.h.b16 %v8191
        %v8378 = vunpack.c.l.b16 %v8192
        %v8379 = vunpack.c.h.b16 %v8192
        %v8380 = vunpack.c.l.b16 %v8193
        %v8381 = vunpack.c.h.b16 %v8193
        %v8382 = vunpack.c.l.b16 %v8194
        %v8383 = vunpack.c.h.b16 %v8194
        %v8384 = vunpack.c.l.b16 %v8195
        %v8385 = vunpack.c.h.b16 %v8195
        %v8386 = vunpack.c.l.b16 %v8196
        %v8387 = vunpack.c.h.b16 %v8196
        %v8388 = vunpack.c.l.b16 %v8197
        %v8389 = vunpack.c.h.b16 %v8197
        %v8390 = vpack.c.b16 %v8264, %v8262
        %v8391 = vpack.c.b16 %v8265, %v8263
        %v8392 = vpack.c.b16 %v8268, %v8266
        %v8393 = vpack.c.b16 %v8269, %v8267
        %v8394 = vpack.c.b16 %v8272, %v8270
        %v8395 = vpack.c.b16 %v8273, %v8271
        %v8396 = vpack.c.b16 %v8276, %v8274
        %v8397 = vpack.c.b16 %v8277, %v8275
        %v8398 = vpack.c.b16 %v8280, %v8278
        %v8399 = vpack.c.b16 %v8281, %v8279
        %v8400 = vpack.c.b16 %v8284, %v8282
        %v8401 = vpack.c.b16 %v8285, %v8283
        %v8402 = vpack.c.b16 %v8288, %v8286
        %v8403 = vpack.c.b16 %v8289, %v8287
        %v8404 = vpack.c.b16 %v8292, %v8290
        %v8405 = vpack.c.b16 %v8293, %v8291
        %v8406 = vpack.c.b16 %v8296, %v8294
        %v8407 = vpack.c.b16 %v8297, %v8295
        %v8408 = vpack.c.b16 %v8300, %v8298
        %v8409 = vpack.c.b16 %v8301, %v8299
        %v8410 = vpack.c.b16 %v8304, %v8302
        %v8411 = vpack.c.b16 %v8305, %v8303
        %v8412 = vpack.c.b16 %v8308, %v8306
        %v8413 = vpack.c.b16 %v8309, %v8307
        %v8414 = vpack.c.b16 %v8312, %v8310
        %v8415 = vpack.c.b16 %v8313, %v8311
        %v8416 = vpack.c.b16 %v8316, %v8314
        %v8417 = vpack.c.b16 %v8317, %v8315
        %v8418 = vpack.c.b16 %v8320, %v8318
        %v8419 = vpack.c.b16 %v8321, %v8319
        %v8420 = vpack.c.b16 %v8324, %v8322
        %v8421 = vpack.c.b16 %v8325, %v8323
        %v8422 = vpack.c.b16 %v8328, %v8326
        %v8423 = vpack.c.b16 %v8329, %v8327
        %v8424 = vpack.c.b16 %v8332, %v8330
        %v8425 = vpack.c.b16 %v8333, %v8331
        %v8426 = vpack.c.b16 %v8336, %v8334
        %v8427 = vpack.c.b16 %v8337, %v8335
        %v8428 = vpack.c.b16 %v8340, %v8338
        %v8429 = vpack.c.b16 %v8341, %v8339
        %v8430 = vpack.c.b16 %v8344, %v8342
        %v8431 = vpack.c.b16 %v8345, %v8343
        %v8432 = vpack.c.b16 %v8348, %v8346
        %v8433 = vpack.c.b16 %v8349, %v8347
        %v8434 = vpack.c.b16 %v8352, %v8350
        %v8435 = vpack.c.b16 %v8353, %v8351
        %v8436 = vpack.c.b16 %v8356, %v8354
        %v8437 = vpack.c.b16 %v8357, %v8355
        %v8438 = vpack.c.b16 %v8360, %v8358
        %v8439 = vpack.c.b16 %v8361, %v8359
        %v8440 = vpack.c.b16 %v8364, %v8362
        %v8441 = vpack.c.b16 %v8365, %v8363
        %v8442 = vpack.c.b16 %v8368, %v8366
        %v8443 = vpack.c.b16 %v8369, %v8367
        %v8444 = vpack.c.b16 %v8372, %v8370
        %v8445 = vpack.c.b16 %v8373, %v8371
        %v8446 = vpack.c.b16 %v8376, %v8374
        %v8447 = vpack.c.b16 %v8377, %v8375
        %v8448 = vpack.c.b16 %v8380, %v8378
        %v8449 = vpack.c.b16 %v8381, %v8379
        %v8450 = vpack.c.b16 %v8384, %v8382
        %v8451 = vpack.c.b16 %v8385, %v8383
        %v8452 = vpack.c.b16 %v8388, %v8386
        %v8453 = vpack.c.b16 %v8389, %v8387
        %8518 = vmatprep.subr.bf16.mxu0 %v8405
        %8519 = vmatpush1.bf16.msra.mxu0 %v8404
        %8520 = vmatprep.subr.bf16.mxu0 %v8403
        %8521 = vmatpush1.bf16.msra.mxu0 %v8402
        %8522 = vmatprep.subr.bf16.mxu0 %v8401
        %8523 = vmatpush1.bf16.msra.mxu0 %v8400
        %8524 = vmatprep.subr.bf16.mxu0 %v8399
        %8525 = vmatpush1.bf16.msra.mxu0 %v8398
        %8526 = vmatprep.subr.bf16.mxu0 %v8397
        %8527 = vmatpush1.bf16.msra.mxu0 %v8396
        %8528 = vmatprep.subr.bf16.mxu0 %v8395
        %8529 = vmatpush1.bf16.msra.mxu0 %v8394
        %8530 = vmatprep.subr.bf16.mxu0 %v8393
        %8531 = vmatpush1.bf16.msra.mxu0 %v8392
        %8532 = vmatprep.subr.bf16.mxu0 %v8391
        %8533 = vmatpush1.bf16.msra.mxu0 %v8390
        %8534 = vmatprep.subr.bf16.mxu0 %v8421
        %8535 = vmatpush2.bf16.msra.mxu0 %v8420
        %8536 = vmatprep.subr.bf16.mxu0 %v8419
        %8537 = vmatpush2.bf16.msra.mxu0 %v8418
        %8538 = vmatprep.subr.bf16.mxu0 %v8417
        %8539 = vmatpush2.bf16.msra.mxu0 %v8416
        %8540 = vmatprep.subr.bf16.mxu0 %v8415
        %8541 = vmatpush2.bf16.msra.mxu0 %v8414
        %8542 = vmatprep.subr.bf16.mxu0 %v8413
        %8543 = vmatpush2.bf16.msra.mxu0 %v8412
        %8544 = vmatprep.subr.bf16.mxu0 %v8411
        %8545 = vmatpush2.bf16.msra.mxu0 %v8410
        %8546 = vmatprep.subr.bf16.mxu0 %v8409
        %8547 = vmatpush2.bf16.msra.mxu0 %v8408
        %8548 = vmatprep.subr.bf16.mxu0 %v8407
        %8549 = vmatpush2.bf16.msra.mxu0 %v8406
        %8550 = vmatprep.mubr.bf16.mxu0 %v8118
        %8551 = vmatmul.mubr.bf16.gmra.mxu0 %v8117
        %v8552 = vpop.f32.mrf.mxu0
        %v8553 = vadd.f32 0.0, %v8552
        %v8554 = vpop.f32.mrf.mxu0
        %v8555 = vadd.f32 0.0, %v8554
        %v8556 = vpop.f32.mrf.mxu0
        %v8557 = vadd.f32 0.0, %v8556
        %v8558 = vpop.f32.mrf.mxu0
        %v8559 = vadd.f32 0.0, %v8558
        %8560 = vmatprep.mubr.bf16.mxu0 %v8122
        %8561 = vmatmul.mubr.bf16.gmra.mxu0 %v8121
        %v8562 = vpop.f32.mrf.mxu0
        %v8563 = vadd.f32 0.0, %v8562
        %v8564 = vpop.f32.mrf.mxu0
        %v8565 = vadd.f32 0.0, %v8564
        %v8566 = vpop.f32.mrf.mxu0
        %v8567 = vadd.f32 0.0, %v8566
        %v8568 = vpop.f32.mrf.mxu0
        %v8569 = vadd.f32 0.0, %v8568
        %8570 = vmatprep.mubr.bf16.mxu0 %v8126
        %8571 = vmatmul.mubr.bf16.gmra.mxu0 %v8125
        %v8572 = vpop.f32.mrf.mxu0
        %v8573 = vadd.f32 0.0, %v8572
        %v8574 = vpop.f32.mrf.mxu0
        %v8575 = vadd.f32 0.0, %v8574
        %v8576 = vpop.f32.mrf.mxu0
        %v8577 = vadd.f32 0.0, %v8576
        %v8578 = vpop.f32.mrf.mxu0
        %v8579 = vadd.f32 0.0, %v8578
        %8580 = vmatprep.mubr.bf16.mxu0 %v8130
        %8581 = vmatmul.mubr.bf16.gmra.mxu0 %v8129
        %v8582 = vpop.f32.mrf.mxu0
        %v8583 = vadd.f32 0.0, %v8582
        %v8584 = vpop.f32.mrf.mxu0
        %v8585 = vadd.f32 0.0, %v8584
        %v8586 = vpop.f32.mrf.mxu0
        %v8587 = vadd.f32 0.0, %v8586
        %v8588 = vpop.f32.mrf.mxu0
        %v8589 = vadd.f32 0.0, %v8588
        %8590 = vdwg.mxu0
        %8591 = vmatprep.subr.bf16.mxu0 %v8437
        %8592 = vmatpush1.bf16.msra.mxu0 %v8436
        %8593 = vmatprep.subr.bf16.mxu0 %v8435
        %8594 = vmatpush1.bf16.msra.mxu0 %v8434
        %8595 = vmatprep.subr.bf16.mxu0 %v8433
        %8596 = vmatpush1.bf16.msra.mxu0 %v8432
        %8597 = vmatprep.subr.bf16.mxu0 %v8431
        %8598 = vmatpush1.bf16.msra.mxu0 %v8430
        %8599 = vmatprep.subr.bf16.mxu0 %v8429
        %8600 = vmatpush1.bf16.msra.mxu0 %v8428
        %8601 = vmatprep.subr.bf16.mxu0 %v8427
        %8602 = vmatpush1.bf16.msra.mxu0 %v8426
        %8603 = vmatprep.subr.bf16.mxu0 %v8425
        %8604 = vmatpush1.bf16.msra.mxu0 %v8424
        %8605 = vmatprep.subr.bf16.mxu0 %v8423
        %8606 = vmatpush1.bf16.msra.mxu0 %v8422
        %8607 = vmatprep.subr.bf16.mxu0 %v8453
        %8608 = vmatpush2.bf16.msra.mxu0 %v8452
        %8609 = vmatprep.subr.bf16.mxu0 %v8451
        %8610 = vmatpush2.bf16.msra.mxu0 %v8450
        %8611 = vmatprep.subr.bf16.mxu0 %v8449
        %8612 = vmatpush2.bf16.msra.mxu0 %v8448
        %8613 = vmatprep.subr.bf16.mxu0 %v8447
        %8614 = vmatpush2.bf16.msra.mxu0 %v8446
        %8615 = vmatprep.subr.bf16.mxu0 %v8445
        %8616 = vmatpush2.bf16.msra.mxu0 %v8444
        %8617 = vmatprep.subr.bf16.mxu0 %v8443
        %8618 = vmatpush2.bf16.msra.mxu0 %v8442
        %8619 = vmatprep.subr.bf16.mxu0 %v8441
        %8620 = vmatpush2.bf16.msra.mxu0 %v8440
        %8621 = vmatprep.subr.bf16.mxu0 %v8439
        %8622 = vmatpush2.bf16.msra.mxu0 %v8438
        %8623 = vmatprep.mubr.bf16.mxu0 %v8120
        %8624 = vmatmul.mubr.bf16.gmra.mxu0 %v8119
        %v8625 = vpop.f32.mrf.mxu0
        %v8626 = vadd.f32 %v8553, %v8625
        %v8627 = vpop.f32.mrf.mxu0
        %v8628 = vadd.f32 %v8555, %v8627
        %v8629 = vpop.f32.mrf.mxu0
        %v8630 = vadd.f32 %v8557, %v8629
        %v8631 = vpop.f32.mrf.mxu0
        %v8632 = vadd.f32 %v8559, %v8631
        %8633 = vmatprep.mubr.bf16.mxu0 %v8124
        %8634 = vmatmul.mubr.bf16.gmra.mxu0 %v8123
        %v8635 = vpop.f32.mrf.mxu0
        %v8636 = vadd.f32 %v8563, %v8635
        %v8637 = vpop.f32.mrf.mxu0
        %v8638 = vadd.f32 %v8565, %v8637
        %v8639 = vpop.f32.mrf.mxu0
        %v8640 = vadd.f32 %v8567, %v8639
        %v8641 = vpop.f32.mrf.mxu0
        %v8642 = vadd.f32 %v8569, %v8641
        %8643 = vmatprep.mubr.bf16.mxu0 %v8128
        %8644 = vmatmul.mubr.bf16.gmra.mxu0 %v8127
        %v8645 = vpop.f32.mrf.mxu0
        %v8646 = vadd.f32 %v8573, %v8645
        %v8647 = vpop.f32.mrf.mxu0
        %v8648 = vadd.f32 %v8575, %v8647
        %v8649 = vpop.f32.mrf.mxu0
        %v8650 = vadd.f32 %v8577, %v8649
        %v8651 = vpop.f32.mrf.mxu0
        %v8652 = vadd.f32 %v8579, %v8651
        %8653 = vmatprep.mubr.bf16.mxu0 %v8132
        %8654 = vmatmul.mubr.bf16.gmra.mxu0 %v8131
        %v8655 = vpop.f32.mrf.mxu0
        %v8656 = vadd.f32 %v8583, %v8655
        %v8657 = vpop.f32.mrf.mxu0
        %v8658 = vadd.f32 %v8585, %v8657
        %v8659 = vpop.f32.mrf.mxu0
        %v8660 = vadd.f32 %v8587, %v8659
        %v8661 = vpop.f32.mrf.mxu0
        %v8662 = vadd.f32 %v8589, %v8661
        %8663 = vdwg.mxu0
        %v8664 = vadd.f32 %v8069, %v8626
        %v8665 = vadd.f32 %v8070, %v8628
        %v8666 = vadd.f32 %v8071, %v8630
        %v8667 = vadd.f32 %v8072, %v8632
        %v8668 = vadd.f32 %v8073, %v8636
        %v8669 = vadd.f32 %v8074, %v8638
        %v8670 = vadd.f32 %v8075, %v8640
        %v8671 = vadd.f32 %v8076, %v8642
        %v8672 = vadd.f32 %v8077, %v8646
        %v8673 = vadd.f32 %v8078, %v8648
        %v8674 = vadd.f32 %v8079, %v8650
        %v8675 = vadd.f32 %v8080, %v8652
        %v8676 = vadd.f32 %v8081, %v8656
        %v8677 = vadd.f32 %v8082, %v8658
        %v8678 = vadd.f32 %v8083, %v8660
        %v8679 = vadd.f32 %v8084, %v8662
        %v8680 = vld [vmem:[%s7265 + $0x20] sm:$0xc0]
        %v8681 = vld [vmem:[%s7265 + $0x28] sm:$0xc0]
        %v8682 = vld [vmem:[%s7265 + $0x30] sm:$0xc0]
        %v8683 = vld [vmem:[%s7265 + $0x38] sm:$0xc0]
        %v8684 = vld [vmem:[%s7265 + $0x40] sm:$0x3f]
        %v8685 = vld [vmem:[%s7265 + $0x48] sm:$0x3f]
        %v8686 = vld [vmem:[%s7265 + $0x50] sm:$0x3f]
        %v8687 = vld [vmem:[%s7265 + $0x58] sm:$0x3f]
        %v8688 = vld [vmem:[%s7265 + $0x80] sm:$0xc0]
        %v8689 = vld [vmem:[%s7265 + $0x88] sm:$0xc0]
        %v8690 = vld [vmem:[%s7265 + $0x90] sm:$0xc0]
        %v8691 = vld [vmem:[%s7265 + $0x98] sm:$0xc0]
        %v8692 = vld [vmem:[%s7265 + $0xa0] sm:$0x3f]
        %v8693 = vld [vmem:[%s7265 + $0xa8] sm:$0x3f]
        %v8694 = vld [vmem:[%s7265 + $0xb0] sm:$0x3f]
        %v8695 = vld [vmem:[%s7265 + $0xb8] sm:$0x3f]
        %v8696 = vld [vmem:[%s7265 + $0xe0] sm:$0xc0]
        %v8697 = vld [vmem:[%s7265 + $0xe8] sm:$0xc0]
        %v8698 = vld [vmem:[%s7265 + $0xf0] sm:$0xc0]
        %v8699 = vld [vmem:[%s7265 + $0xf8] sm:$0xc0]
        %v8700 = vld [vmem:[%s7265 + $0x100] sm:$0x3f]
        %v8701 = vld [vmem:[%s7265 + $0x108] sm:$0x3f]
        %v8702 = vld [vmem:[%s7265 + $0x110] sm:$0x3f]
        %v8703 = vld [vmem:[%s7265 + $0x118] sm:$0x3f]
        %v8704 = vld [vmem:[%s7265 + $0x140] sm:$0xc0]
        %v8705 = vld [vmem:[%s7265 + $0x148] sm:$0xc0]
        %v8706 = vld [vmem:[%s7265 + $0x150] sm:$0xc0]
        %v8707 = vld [vmem:[%s7265 + $0x158] sm:$0xc0]
        %v8708 = vld [vmem:[%s7265 + $0x160] sm:$0x3f]
        %v8709 = vld [vmem:[%s7265 + $0x168] sm:$0x3f]
        %v8710 = vld [vmem:[%s7265 + $0x170] sm:$0x3f]
        %v8711 = vld [vmem:[%s7265 + $0x178] sm:$0x3f]
        %v8712 = vld [vmem:[%s7265 + $0x1a0] sm:$0xc0]
        %v8713 = vld [vmem:[%s7265 + $0x1a8] sm:$0xc0]
        %v8714 = vld [vmem:[%s7265 + $0x1b0] sm:$0xc0]
        %v8715 = vld [vmem:[%s7265 + $0x1b8] sm:$0xc0]
        %v8716 = vld [vmem:[%s7265 + $0x1c0] sm:$0x3f]
        %v8717 = vld [vmem:[%s7265 + $0x1c8] sm:$0x3f]
        %v8718 = vld [vmem:[%s7265 + $0x1d0] sm:$0x3f]
        %v8719 = vld [vmem:[%s7265 + $0x1d8] sm:$0x3f]
        %v8720 = vld [vmem:[%s7265 + $0x200] sm:$0xc0]
        %v8721 = vld [vmem:[%s7265 + $0x208] sm:$0xc0]
        %v8722 = vld [vmem:[%s7265 + $0x210] sm:$0xc0]
        %v8723 = vld [vmem:[%s7265 + $0x218] sm:$0xc0]
        %v8724 = vld [vmem:[%s7265 + $0x220] sm:$0x3f]
        %v8725 = vld [vmem:[%s7265 + $0x228] sm:$0x3f]
        %v8726 = vld [vmem:[%s7265 + $0x230] sm:$0x3f]
        %v8727 = vld [vmem:[%s7265 + $0x238] sm:$0x3f]
        %v8728 = vld [vmem:[%s7265 + $0x260] sm:$0xc0]
        %v8729 = vld [vmem:[%s7265 + $0x268] sm:$0xc0]
        %v8730 = vld [vmem:[%s7265 + $0x270] sm:$0xc0]
        %v8731 = vld [vmem:[%s7265 + $0x278] sm:$0xc0]
        %v8732 = vld [vmem:[%s7265 + $0x280] sm:$0x3f]
        %v8733 = vld [vmem:[%s7265 + $0x288] sm:$0x3f]
        %v8734 = vld [vmem:[%s7265 + $0x290] sm:$0x3f]
        %v8735 = vld [vmem:[%s7265 + $0x298] sm:$0x3f]
        %v8736 = vld [vmem:[%s7265 + $0x2c0] sm:$0xc0]
        %v8737 = vld [vmem:[%s7265 + $0x2c8] sm:$0xc0]
        %v8738 = vld [vmem:[%s7265 + $0x2d0] sm:$0xc0]
        %v8739 = vld [vmem:[%s7265 + $0x2d8] sm:$0xc0]
        %v8740 = vld [vmem:[%s7265 + $0x2e0] sm:$0x3f]
        %v8741 = vld [vmem:[%s7265 + $0x2e8] sm:$0x3f]
        %v8742 = vld [vmem:[%s7265 + $0x2f0] sm:$0x3f]
        %v8743 = vld [vmem:[%s7265 + $0x2f8] sm:$0x3f]
        %v8808 = vrot.slane %v8680, 6
        %v8809 = vrot.slane %v8684, 6
        %v8810 = vsel %vm4388, %v8808, %v8809
        %v8811 = vrot.slane %v8681, 6
        %v8812 = vrot.slane %v8685, 6
        %v8813 = vsel %vm4388, %v8811, %v8812
        %v8814 = vrot.slane %v8682, 6
        %v8815 = vrot.slane %v8686, 6
        %v8816 = vsel %vm4388, %v8814, %v8815
        %v8817 = vrot.slane %v8683, 6
        %v8818 = vrot.slane %v8687, 6
        %v8819 = vsel %vm4388, %v8817, %v8818
        %v8820 = vrot.slane %v8688, 6
        %v8821 = vrot.slane %v8692, 6
        %v8822 = vsel %vm4388, %v8820, %v8821
        %v8823 = vrot.slane %v8689, 6
        %v8824 = vrot.slane %v8693, 6
        %v8825 = vsel %vm4388, %v8823, %v8824
        %v8826 = vrot.slane %v8690, 6
        %v8827 = vrot.slane %v8694, 6
        %v8828 = vsel %vm4388, %v8826, %v8827
        %v8829 = vrot.slane %v8691, 6
        %v8830 = vrot.slane %v8695, 6
        %v8831 = vsel %vm4388, %v8829, %v8830
        %v8832 = vrot.slane %v8696, 6
        %v8833 = vrot.slane %v8700, 6
        %v8834 = vsel %vm4388, %v8832, %v8833
        %v8835 = vrot.slane %v8697, 6
        %v8836 = vrot.slane %v8701, 6
        %v8837 = vsel %vm4388, %v8835, %v8836
        %v8838 = vrot.slane %v8698, 6
        %v8839 = vrot.slane %v8702, 6
        %v8840 = vsel %vm4388, %v8838, %v8839
        %v8841 = vrot.slane %v8699, 6
        %v8842 = vrot.slane %v8703, 6
        %v8843 = vsel %vm4388, %v8841, %v8842
        %v8844 = vrot.slane %v8704, 6
        %v8845 = vrot.slane %v8708, 6
        %v8846 = vsel %vm4388, %v8844, %v8845
        %v8847 = vrot.slane %v8705, 6
        %v8848 = vrot.slane %v8709, 6
        %v8849 = vsel %vm4388, %v8847, %v8848
        %v8850 = vrot.slane %v8706, 6
        %v8851 = vrot.slane %v8710, 6
        %v8852 = vsel %vm4388, %v8850, %v8851
        %v8853 = vrot.slane %v8707, 6
        %v8854 = vrot.slane %v8711, 6
        %v8855 = vsel %vm4388, %v8853, %v8854
        %v8856 = vrot.slane %v8712, 6
        %v8857 = vrot.slane %v8716, 6
        %v8858 = vsel %vm4388, %v8856, %v8857
        %v8859 = vrot.slane %v8713, 6
        %v8860 = vrot.slane %v8717, 6
        %v8861 = vsel %vm4388, %v8859, %v8860
        %v8862 = vrot.slane %v8714, 6
        %v8863 = vrot.slane %v8718, 6
        %v8864 = vsel %vm4388, %v8862, %v8863
        %v8865 = vrot.slane %v8715, 6
        %v8866 = vrot.slane %v8719, 6
        %v8867 = vsel %vm4388, %v8865, %v8866
        %v8868 = vrot.slane %v8720, 6
        %v8869 = vrot.slane %v8724, 6
        %v8870 = vsel %vm4388, %v8868, %v8869
        %v8871 = vrot.slane %v8721, 6
        %v8872 = vrot.slane %v8725, 6
        %v8873 = vsel %vm4388, %v8871, %v8872
        %v8874 = vrot.slane %v8722, 6
        %v8875 = vrot.slane %v8726, 6
        %v8876 = vsel %vm4388, %v8874, %v8875
        %v8877 = vrot.slane %v8723, 6
        %v8878 = vrot.slane %v8727, 6
        %v8879 = vsel %vm4388, %v8877, %v8878
        %v8880 = vrot.slane %v8728, 6
        %v8881 = vrot.slane %v8732, 6
        %v8882 = vsel %vm4388, %v8880, %v8881
        %v8883 = vrot.slane %v8729, 6
        %v8884 = vrot.slane %v8733, 6
        %v8885 = vsel %vm4388, %v8883, %v8884
        %v8886 = vrot.slane %v8730, 6
        %v8887 = vrot.slane %v8734, 6
        %v8888 = vsel %vm4388, %v8886, %v8887
        %v8889 = vrot.slane %v8731, 6
        %v8890 = vrot.slane %v8735, 6
        %v8891 = vsel %vm4388, %v8889, %v8890
        %v8892 = vrot.slane %v8736, 6
        %v8893 = vrot.slane %v8740, 6
        %v8894 = vsel %vm4388, %v8892, %v8893
        %v8895 = vrot.slane %v8737, 6
        %v8896 = vrot.slane %v8741, 6
        %v8897 = vsel %vm4388, %v8895, %v8896
        %v8898 = vrot.slane %v8738, 6
        %v8899 = vrot.slane %v8742, 6
        %v8900 = vsel %vm4388, %v8898, %v8899
        %v8901 = vrot.slane %v8739, 6
        %v8902 = vrot.slane %v8743, 6
        %v8903 = vsel %vm4388, %v8901, %v8902
        %v8936 = vpack.c.bf16 %v8822, %v8810
        %v8937 = vpack.c.bf16 %v8825, %v8813
        %v8938 = vpack.c.bf16 %v8828, %v8816
        %v8939 = vpack.c.bf16 %v8831, %v8819
        %v8940 = vpack.c.bf16 %v8846, %v8834
        %v8941 = vpack.c.bf16 %v8849, %v8837
        %v8942 = vpack.c.bf16 %v8852, %v8840
        %v8943 = vpack.c.bf16 %v8855, %v8843
        %v8944 = vpack.c.bf16 %v8870, %v8858
        %v8945 = vpack.c.bf16 %v8873, %v8861
        %v8946 = vpack.c.bf16 %v8876, %v8864
        %v8947 = vpack.c.bf16 %v8879, %v8867
        %v8948 = vpack.c.bf16 %v8894, %v8882
        %v8949 = vpack.c.bf16 %v8897, %v8885
        %v8950 = vpack.c.bf16 %v8900, %v8888
        %v8951 = vpack.c.bf16 %v8903, %v8891
        %s8952 = scalar_lea.vmem [#allocation7], 4096
        %v8953 = vld [vmem:[%s8952] sm:$0xff]
        %v8954 = vld [vmem:[%s8952 + $0x8] sm:$0xff]
        %v8955 = vld [vmem:[%s8952 + $0x10] sm:$0xff]
        %v8956 = vld [vmem:[%s8952 + $0x18] sm:$0xff]
        %v8957 = vld [vmem:[%s8952 + $0x20] sm:$0xff]
        %v8958 = vld [vmem:[%s8952 + $0x28] sm:$0xff]
        %v8959 = vld [vmem:[%s8952 + $0x30] sm:$0xff]
        %v8960 = vld [vmem:[%s8952 + $0x38] sm:$0xff]
        %v8961 = vld [vmem:[%s8952 + $0x40] sm:$0xff]
        %v8962 = vld [vmem:[%s8952 + $0x48] sm:$0xff]
        %v8963 = vld [vmem:[%s8952 + $0x50] sm:$0xff]
        %v8964 = vld [vmem:[%s8952 + $0x58] sm:$0xff]
        %v8965 = vld [vmem:[%s8952 + $0x60] sm:$0xff]
        %v8966 = vld [vmem:[%s8952 + $0x68] sm:$0xff]
        %v8967 = vld [vmem:[%s8952 + $0x70] sm:$0xff]
        %v8968 = vld [vmem:[%s8952 + $0x78] sm:$0xff]
        %v8969 = vld [vmem:[%s8952 + $0x80] sm:$0xff]
        %v8970 = vld [vmem:[%s8952 + $0x88] sm:$0xff]
        %v8971 = vld [vmem:[%s8952 + $0x90] sm:$0xff]
        %v8972 = vld [vmem:[%s8952 + $0x98] sm:$0xff]
        %v8973 = vld [vmem:[%s8952 + $0xa0] sm:$0xff]
        %v8974 = vld [vmem:[%s8952 + $0xa8] sm:$0xff]
        %v8975 = vld [vmem:[%s8952 + $0xb0] sm:$0xff]
        %v8976 = vld [vmem:[%s8952 + $0xb8] sm:$0xff]
        %v8977 = vld [vmem:[%s8952 + $0xc0] sm:$0xff]
        %v8978 = vld [vmem:[%s8952 + $0xc8] sm:$0xff]
        %v8979 = vld [vmem:[%s8952 + $0xd0] sm:$0xff]
        %v8980 = vld [vmem:[%s8952 + $0xd8] sm:$0xff]
        %v8981 = vld [vmem:[%s8952 + $0xe0] sm:$0xff]
        %v8982 = vld [vmem:[%s8952 + $0xe8] sm:$0xff]
        %v8983 = vld [vmem:[%s8952 + $0xf0] sm:$0xff]
        %v8984 = vld [vmem:[%s8952 + $0xf8] sm:$0xff]
        %v8985 = vld [vmem:[%s8952 + $0x100] sm:$0xff]
        %v8986 = vld [vmem:[%s8952 + $0x108] sm:$0xff]
        %v8987 = vld [vmem:[%s8952 + $0x110] sm:$0xff]
        %v8988 = vld [vmem:[%s8952 + $0x118] sm:$0xff]
        %v8989 = vld [vmem:[%s8952 + $0x120] sm:$0xff]
        %v8990 = vld [vmem:[%s8952 + $0x128] sm:$0xff]
        %v8991 = vld [vmem:[%s8952 + $0x130] sm:$0xff]
        %v8992 = vld [vmem:[%s8952 + $0x138] sm:$0xff]
        %v8993 = vld [vmem:[%s8952 + $0x140] sm:$0xff]
        %v8994 = vld [vmem:[%s8952 + $0x148] sm:$0xff]
        %v8995 = vld [vmem:[%s8952 + $0x150] sm:$0xff]
        %v8996 = vld [vmem:[%s8952 + $0x158] sm:$0xff]
        %v8997 = vld [vmem:[%s8952 + $0x160] sm:$0xff]
        %v8998 = vld [vmem:[%s8952 + $0x168] sm:$0xff]
        %v8999 = vld [vmem:[%s8952 + $0x170] sm:$0xff]
        %v9000 = vld [vmem:[%s8952 + $0x178] sm:$0xff]
        %v9001 = vld [vmem:[%s8952 + $0x180] sm:$0xff]
        %v9002 = vld [vmem:[%s8952 + $0x188] sm:$0xff]
        %v9003 = vld [vmem:[%s8952 + $0x190] sm:$0xff]
        %v9004 = vld [vmem:[%s8952 + $0x198] sm:$0xff]
        %v9005 = vld [vmem:[%s8952 + $0x1a0] sm:$0xff]
        %v9006 = vld [vmem:[%s8952 + $0x1a8] sm:$0xff]
        %v9007 = vld [vmem:[%s8952 + $0x1b0] sm:$0xff]
        %v9008 = vld [vmem:[%s8952 + $0x1b8] sm:$0xff]
        %v9009 = vld [vmem:[%s8952 + $0x1c0] sm:$0xff]
        %v9010 = vld [vmem:[%s8952 + $0x1c8] sm:$0xff]
        %v9011 = vld [vmem:[%s8952 + $0x1d0] sm:$0xff]
        %v9012 = vld [vmem:[%s8952 + $0x1d8] sm:$0xff]
        %v9013 = vld [vmem:[%s8952 + $0x1e0] sm:$0xff]
        %v9014 = vld [vmem:[%s8952 + $0x1e8] sm:$0xff]
        %v9015 = vld [vmem:[%s8952 + $0x1f0] sm:$0xff]
        %v9016 = vld [vmem:[%s8952 + $0x1f8] sm:$0xff]
        %v9081 = vunpack.c.l.b16 %v8953
        %v9082 = vunpack.c.h.b16 %v8953
        %v9083 = vunpack.c.l.b16 %v8954
        %v9084 = vunpack.c.h.b16 %v8954
        %v9085 = vunpack.c.l.b16 %v8955
        %v9086 = vunpack.c.h.b16 %v8955
        %v9087 = vunpack.c.l.b16 %v8956
        %v9088 = vunpack.c.h.b16 %v8956
        %v9089 = vunpack.c.l.b16 %v8957
        %v9090 = vunpack.c.h.b16 %v8957
        %v9091 = vunpack.c.l.b16 %v8958
        %v9092 = vunpack.c.h.b16 %v8958
        %v9093 = vunpack.c.l.b16 %v8959
        %v9094 = vunpack.c.h.b16 %v8959
        %v9095 = vunpack.c.l.b16 %v8960
        %v9096 = vunpack.c.h.b16 %v8960
        %v9097 = vunpack.c.l.b16 %v8961
        %v9098 = vunpack.c.h.b16 %v8961
        %v9099 = vunpack.c.l.b16 %v8962
        %v9100 = vunpack.c.h.b16 %v8962
        %v9101 = vunpack.c.l.b16 %v8963
        %v9102 = vunpack.c.h.b16 %v8963
        %v9103 = vunpack.c.l.b16 %v8964
        %v9104 = vunpack.c.h.b16 %v8964
        %v9105 = vunpack.c.l.b16 %v8965
        %v9106 = vunpack.c.h.b16 %v8965
        %v9107 = vunpack.c.l.b16 %v8966
        %v9108 = vunpack.c.h.b16 %v8966
        %v9109 = vunpack.c.l.b16 %v8967
        %v9110 = vunpack.c.h.b16 %v8967
        %v9111 = vunpack.c.l.b16 %v8968
        %v9112 = vunpack.c.h.b16 %v8968
        %v9113 = vunpack.c.l.b16 %v8969
        %v9114 = vunpack.c.h.b16 %v8969
        %v9115 = vunpack.c.l.b16 %v8970
        %v9116 = vunpack.c.h.b16 %v8970
        %v9117 = vunpack.c.l.b16 %v8971
        %v9118 = vunpack.c.h.b16 %v8971
        %v9119 = vunpack.c.l.b16 %v8972
        %v9120 = vunpack.c.h.b16 %v8972
        %v9121 = vunpack.c.l.b16 %v8973
        %v9122 = vunpack.c.h.b16 %v8973
        %v9123 = vunpack.c.l.b16 %v8974
        %v9124 = vunpack.c.h.b16 %v8974
        %v9125 = vunpack.c.l.b16 %v8975
        %v9126 = vunpack.c.h.b16 %v8975
        %v9127 = vunpack.c.l.b16 %v8976
        %v9128 = vunpack.c.h.b16 %v8976
        %v9129 = vunpack.c.l.b16 %v8977
        %v9130 = vunpack.c.h.b16 %v8977
        %v9131 = vunpack.c.l.b16 %v8978
        %v9132 = vunpack.c.h.b16 %v8978
        %v9133 = vunpack.c.l.b16 %v8979
        %v9134 = vunpack.c.h.b16 %v8979
        %v9135 = vunpack.c.l.b16 %v8980
        %v9136 = vunpack.c.h.b16 %v8980
        %v9137 = vunpack.c.l.b16 %v8981
        %v9138 = vunpack.c.h.b16 %v8981
        %v9139 = vunpack.c.l.b16 %v8982
        %v9140 = vunpack.c.h.b16 %v8982
        %v9141 = vunpack.c.l.b16 %v8983
        %v9142 = vunpack.c.h.b16 %v8983
        %v9143 = vunpack.c.l.b16 %v8984
        %v9144 = vunpack.c.h.b16 %v8984
        %v9145 = vunpack.c.l.b16 %v8985
        %v9146 = vunpack.c.h.b16 %v8985
        %v9147 = vunpack.c.l.b16 %v8986
        %v9148 = vunpack.c.h.b16 %v8986
        %v9149 = vunpack.c.l.b16 %v8987
        %v9150 = vunpack.c.h.b16 %v8987
        %v9151 = vunpack.c.l.b16 %v8988
        %v9152 = vunpack.c.h.b16 %v8988
        %v9153 = vunpack.c.l.b16 %v8989
        %v9154 = vunpack.c.h.b16 %v8989
        %v9155 = vunpack.c.l.b16 %v8990
        %v9156 = vunpack.c.h.b16 %v8990
        %v9157 = vunpack.c.l.b16 %v8991
        %v9158 = vunpack.c.h.b16 %v8991
        %v9159 = vunpack.c.l.b16 %v8992
        %v9160 = vunpack.c.h.b16 %v8992
        %v9161 = vunpack.c.l.b16 %v8993
        %v9162 = vunpack.c.h.b16 %v8993
        %v9163 = vunpack.c.l.b16 %v8994
        %v9164 = vunpack.c.h.b16 %v8994
        %v9165 = vunpack.c.l.b16 %v8995
        %v9166 = vunpack.c.h.b16 %v8995
        %v9167 = vunpack.c.l.b16 %v8996
        %v9168 = vunpack.c.h.b16 %v8996
        %v9169 = vunpack.c.l.b16 %v8997
        %v9170 = vunpack.c.h.b16 %v8997
        %v9171 = vunpack.c.l.b16 %v8998
        %v9172 = vunpack.c.h.b16 %v8998
        %v9173 = vunpack.c.l.b16 %v8999
        %v9174 = vunpack.c.h.b16 %v8999
        %v9175 = vunpack.c.l.b16 %v9000
        %v9176 = vunpack.c.h.b16 %v9000
        %v9177 = vunpack.c.l.b16 %v9001
        %v9178 = vunpack.c.h.b16 %v9001
        %v9179 = vunpack.c.l.b16 %v9002
        %v9180 = vunpack.c.h.b16 %v9002
        %v9181 = vunpack.c.l.b16 %v9003
        %v9182 = vunpack.c.h.b16 %v9003
        %v9183 = vunpack.c.l.b16 %v9004
        %v9184 = vunpack.c.h.b16 %v9004
        %v9185 = vunpack.c.l.b16 %v9005
        %v9186 = vunpack.c.h.b16 %v9005
        %v9187 = vunpack.c.l.b16 %v9006
        %v9188 = vunpack.c.h.b16 %v9006
        %v9189 = vunpack.c.l.b16 %v9007
        %v9190 = vunpack.c.h.b16 %v9007
        %v9191 = vunpack.c.l.b16 %v9008
        %v9192 = vunpack.c.h.b16 %v9008
        %v9193 = vunpack.c.l.b16 %v9009
        %v9194 = vunpack.c.h.b16 %v9009
        %v9195 = vunpack.c.l.b16 %v9010
        %v9196 = vunpack.c.h.b16 %v9010
        %v9197 = vunpack.c.l.b16 %v9011
        %v9198 = vunpack.c.h.b16 %v9011
        %v9199 = vunpack.c.l.b16 %v9012
        %v9200 = vunpack.c.h.b16 %v9012
        %v9201 = vunpack.c.l.b16 %v9013
        %v9202 = vunpack.c.h.b16 %v9013
        %v9203 = vunpack.c.l.b16 %v9014
        %v9204 = vunpack.c.h.b16 %v9014
        %v9205 = vunpack.c.l.b16 %v9015
        %v9206 = vunpack.c.h.b16 %v9015
        %v9207 = vunpack.c.l.b16 %v9016
        %v9208 = vunpack.c.h.b16 %v9016
        %v9209 = vpack.c.b16 %v9083, %v9081
        %v9210 = vpack.c.b16 %v9084, %v9082
        %v9211 = vpack.c.b16 %v9087, %v9085
        %v9212 = vpack.c.b16 %v9088, %v9086
        %v9213 = vpack.c.b16 %v9091, %v9089
        %v9214 = vpack.c.b16 %v9092, %v9090
        %v9215 = vpack.c.b16 %v9095, %v9093
        %v9216 = vpack.c.b16 %v9096, %v9094
        %v9217 = vpack.c.b16 %v9099, %v9097
        %v9218 = vpack.c.b16 %v9100, %v9098
        %v9219 = vpack.c.b16 %v9103, %v9101
        %v9220 = vpack.c.b16 %v9104, %v9102
        %v9221 = vpack.c.b16 %v9107, %v9105
        %v9222 = vpack.c.b16 %v9108, %v9106
        %v9223 = vpack.c.b16 %v9111, %v9109
        %v9224 = vpack.c.b16 %v9112, %v9110
        %v9225 = vpack.c.b16 %v9115, %v9113
        %v9226 = vpack.c.b16 %v9116, %v9114
        %v9227 = vpack.c.b16 %v9119, %v9117
        %v9228 = vpack.c.b16 %v9120, %v9118
        %v9229 = vpack.c.b16 %v9123, %v9121
        %v9230 = vpack.c.b16 %v9124, %v9122
        %v9231 = vpack.c.b16 %v9127, %v9125
        %v9232 = vpack.c.b16 %v9128, %v9126
        %v9233 = vpack.c.b16 %v9131, %v9129
        %v9234 = vpack.c.b16 %v9132, %v9130
        %v9235 = vpack.c.b16 %v9135, %v9133
        %v9236 = vpack.c.b16 %v9136, %v9134
        %v9237 = vpack.c.b16 %v9139, %v9137
        %v9238 = vpack.c.b16 %v9140, %v9138
        %v9239 = vpack.c.b16 %v9143, %v9141
        %v9240 = vpack.c.b16 %v9144, %v9142
        %v9241 = vpack.c.b16 %v9147, %v9145
        %v9242 = vpack.c.b16 %v9148, %v9146
        %v9243 = vpack.c.b16 %v9151, %v9149
        %v9244 = vpack.c.b16 %v9152, %v9150
        %v9245 = vpack.c.b16 %v9155, %v9153
        %v9246 = vpack.c.b16 %v9156, %v9154
        %v9247 = vpack.c.b16 %v9159, %v9157
        %v9248 = vpack.c.b16 %v9160, %v9158
        %v9249 = vpack.c.b16 %v9163, %v9161
        %v9250 = vpack.c.b16 %v9164, %v9162
        %v9251 = vpack.c.b16 %v9167, %v9165
        %v9252 = vpack.c.b16 %v9168, %v9166
        %v9253 = vpack.c.b16 %v9171, %v9169
        %v9254 = vpack.c.b16 %v9172, %v9170
        %v9255 = vpack.c.b16 %v9175, %v9173
        %v9256 = vpack.c.b16 %v9176, %v9174
        %v9257 = vpack.c.b16 %v9179, %v9177
        %v9258 = vpack.c.b16 %v9180, %v9178
        %v9259 = vpack.c.b16 %v9183, %v9181
        %v9260 = vpack.c.b16 %v9184, %v9182
        %v9261 = vpack.c.b16 %v9187, %v9185
        %v9262 = vpack.c.b16 %v9188, %v9186
        %v9263 = vpack.c.b16 %v9191, %v9189
        %v9264 = vpack.c.b16 %v9192, %v9190
        %v9265 = vpack.c.b16 %v9195, %v9193
        %v9266 = vpack.c.b16 %v9196, %v9194
        %v9267 = vpack.c.b16 %v9199, %v9197
        %v9268 = vpack.c.b16 %v9200, %v9198
        %v9269 = vpack.c.b16 %v9203, %v9201
        %v9270 = vpack.c.b16 %v9204, %v9202
        %v9271 = vpack.c.b16 %v9207, %v9205
        %v9272 = vpack.c.b16 %v9208, %v9206
        %9337 = vmatprep.subr.bf16.mxu0 %v9224
        %9338 = vmatpush1.bf16.msra.mxu0 %v9223
        %9339 = vmatprep.subr.bf16.mxu0 %v9222
        %9340 = vmatpush1.bf16.msra.mxu0 %v9221
        %9341 = vmatprep.subr.bf16.mxu0 %v9220
        %9342 = vmatpush1.bf16.msra.mxu0 %v9219
        %9343 = vmatprep.subr.bf16.mxu0 %v9218
        %9344 = vmatpush1.bf16.msra.mxu0 %v9217
        %9345 = vmatprep.subr.bf16.mxu0 %v9216
        %9346 = vmatpush1.bf16.msra.mxu0 %v9215
        %9347 = vmatprep.subr.bf16.mxu0 %v9214
        %9348 = vmatpush1.bf16.msra.mxu0 %v9213
        %9349 = vmatprep.subr.bf16.mxu0 %v9212
        %9350 = vmatpush1.bf16.msra.mxu0 %v9211
        %9351 = vmatprep.subr.bf16.mxu0 %v9210
        %9352 = vmatpush1.bf16.msra.mxu0 %v9209
        %9353 = vmatprep.subr.bf16.mxu0 %v9240
        %9354 = vmatpush2.bf16.msra.mxu0 %v9239
        %9355 = vmatprep.subr.bf16.mxu0 %v9238
        %9356 = vmatpush2.bf16.msra.mxu0 %v9237
        %9357 = vmatprep.subr.bf16.mxu0 %v9236
        %9358 = vmatpush2.bf16.msra.mxu0 %v9235
        %9359 = vmatprep.subr.bf16.mxu0 %v9234
        %9360 = vmatpush2.bf16.msra.mxu0 %v9233
        %9361 = vmatprep.subr.bf16.mxu0 %v9232
        %9362 = vmatpush2.bf16.msra.mxu0 %v9231
        %9363 = vmatprep.subr.bf16.mxu0 %v9230
        %9364 = vmatpush2.bf16.msra.mxu0 %v9229
        %9365 = vmatprep.subr.bf16.mxu0 %v9228
        %9366 = vmatpush2.bf16.msra.mxu0 %v9227
        %9367 = vmatprep.subr.bf16.mxu0 %v9226
        %9368 = vmatpush2.bf16.msra.mxu0 %v9225
        %9369 = vmatprep.mubr.bf16.mxu0 %v8937
        %9370 = vmatmul.mubr.bf16.gmra.mxu0 %v8936
        %v9371 = vpop.f32.mrf.mxu0
        %v9372 = vadd.f32 0.0, %v9371
        %v9373 = vpop.f32.mrf.mxu0
        %v9374 = vadd.f32 0.0, %v9373
        %v9375 = vpop.f32.mrf.mxu0
        %v9376 = vadd.f32 0.0, %v9375
        %v9377 = vpop.f32.mrf.mxu0
        %v9378 = vadd.f32 0.0, %v9377
        %9379 = vmatprep.mubr.bf16.mxu0 %v8941
        %9380 = vmatmul.mubr.bf16.gmra.mxu0 %v8940
        %v9381 = vpop.f32.mrf.mxu0
        %v9382 = vadd.f32 0.0, %v9381
        %v9383 = vpop.f32.mrf.mxu0
        %v9384 = vadd.f32 0.0, %v9383
        %v9385 = vpop.f32.mrf.mxu0
        %v9386 = vadd.f32 0.0, %v9385
        %v9387 = vpop.f32.mrf.mxu0
        %v9388 = vadd.f32 0.0, %v9387
        %9389 = vmatprep.mubr.bf16.mxu0 %v8945
        %9390 = vmatmul.mubr.bf16.gmra.mxu0 %v8944
        %v9391 = vpop.f32.mrf.mxu0
        %v9392 = vadd.f32 0.0, %v9391
        %v9393 = vpop.f32.mrf.mxu0
        %v9394 = vadd.f32 0.0, %v9393
        %v9395 = vpop.f32.mrf.mxu0
        %v9396 = vadd.f32 0.0, %v9395
        %v9397 = vpop.f32.mrf.mxu0
        %v9398 = vadd.f32 0.0, %v9397
        %9399 = vmatprep.mubr.bf16.mxu0 %v8949
        %9400 = vmatmul.mubr.bf16.gmra.mxu0 %v8948
        %v9401 = vpop.f32.mrf.mxu0
        %v9402 = vadd.f32 0.0, %v9401
        %v9403 = vpop.f32.mrf.mxu0
        %v9404 = vadd.f32 0.0, %v9403
        %v9405 = vpop.f32.mrf.mxu0
        %v9406 = vadd.f32 0.0, %v9405
        %v9407 = vpop.f32.mrf.mxu0
        %v9408 = vadd.f32 0.0, %v9407
        %9409 = vdwg.mxu0
        %9410 = vmatprep.subr.bf16.mxu0 %v9256
        %9411 = vmatpush1.bf16.msra.mxu0 %v9255
        %9412 = vmatprep.subr.bf16.mxu0 %v9254
        %9413 = vmatpush1.bf16.msra.mxu0 %v9253
        %9414 = vmatprep.subr.bf16.mxu0 %v9252
        %9415 = vmatpush1.bf16.msra.mxu0 %v9251
        %9416 = vmatprep.subr.bf16.mxu0 %v9250
        %9417 = vmatpush1.bf16.msra.mxu0 %v9249
        %9418 = vmatprep.subr.bf16.mxu0 %v9248
        %9419 = vmatpush1.bf16.msra.mxu0 %v9247
        %9420 = vmatprep.subr.bf16.mxu0 %v9246
        %9421 = vmatpush1.bf16.msra.mxu0 %v9245
        %9422 = vmatprep.subr.bf16.mxu0 %v9244
        %9423 = vmatpush1.bf16.msra.mxu0 %v9243
        %9424 = vmatprep.subr.bf16.mxu0 %v9242
        %9425 = vmatpush1.bf16.msra.mxu0 %v9241
        %9426 = vmatprep.subr.bf16.mxu0 %v9272
        %9427 = vmatpush2.bf16.msra.mxu0 %v9271
        %9428 = vmatprep.subr.bf16.mxu0 %v9270
        %9429 = vmatpush2.bf16.msra.mxu0 %v9269
        %9430 = vmatprep.subr.bf16.mxu0 %v9268
        %9431 = vmatpush2.bf16.msra.mxu0 %v9267
        %9432 = vmatprep.subr.bf16.mxu0 %v9266
        %9433 = vmatpush2.bf16.msra.mxu0 %v9265
        %9434 = vmatprep.subr.bf16.mxu0 %v9264
        %9435 = vmatpush2.bf16.msra.mxu0 %v9263
        %9436 = vmatprep.subr.bf16.mxu0 %v9262
        %9437 = vmatpush2.bf16.msra.mxu0 %v9261
        %9438 = vmatprep.subr.bf16.mxu0 %v9260
        %9439 = vmatpush2.bf16.msra.mxu0 %v9259
        %9440 = vmatprep.subr.bf16.mxu0 %v9258
        %9441 = vmatpush2.bf16.msra.mxu0 %v9257
        %9442 = vmatprep.mubr.bf16.mxu0 %v8939
        %9443 = vmatmul.mubr.bf16.gmra.mxu0 %v8938
        %v9444 = vpop.f32.mrf.mxu0
        %v9445 = vadd.f32 %v9372, %v9444
        %v9446 = vpop.f32.mrf.mxu0
        %v9447 = vadd.f32 %v9374, %v9446
        %v9448 = vpop.f32.mrf.mxu0
        %v9449 = vadd.f32 %v9376, %v9448
        %v9450 = vpop.f32.mrf.mxu0
        %v9451 = vadd.f32 %v9378, %v9450
        %9452 = vmatprep.mubr.bf16.mxu0 %v8943
        %9453 = vmatmul.mubr.bf16.gmra.mxu0 %v8942
        %v9454 = vpop.f32.mrf.mxu0
        %v9455 = vadd.f32 %v9382, %v9454
        %v9456 = vpop.f32.mrf.mxu0
        %v9457 = vadd.f32 %v9384, %v9456
        %v9458 = vpop.f32.mrf.mxu0
        %v9459 = vadd.f32 %v9386, %v9458
        %v9460 = vpop.f32.mrf.mxu0
        %v9461 = vadd.f32 %v9388, %v9460
        %9462 = vmatprep.mubr.bf16.mxu0 %v8947
        %9463 = vmatmul.mubr.bf16.gmra.mxu0 %v8946
        %v9464 = vpop.f32.mrf.mxu0
        %v9465 = vadd.f32 %v9392, %v9464
        %v9466 = vpop.f32.mrf.mxu0
        %v9467 = vadd.f32 %v9394, %v9466
        %v9468 = vpop.f32.mrf.mxu0
        %v9469 = vadd.f32 %v9396, %v9468
        %v9470 = vpop.f32.mrf.mxu0
        %v9471 = vadd.f32 %v9398, %v9470
        %9472 = vmatprep.mubr.bf16.mxu0 %v8951
        %9473 = vmatmul.mubr.bf16.gmra.mxu0 %v8950
        %v9474 = vpop.f32.mrf.mxu0
        %v9475 = vadd.f32 %v9402, %v9474
        %v9476 = vpop.f32.mrf.mxu0
        %v9477 = vadd.f32 %v9404, %v9476
        %v9478 = vpop.f32.mrf.mxu0
        %v9479 = vadd.f32 %v9406, %v9478
        %v9480 = vpop.f32.mrf.mxu0
        %v9481 = vadd.f32 %v9408, %v9480
        %9482 = vdwg.mxu0
        %v9483 = vadd.f32 %v8664, %v9445
        %v9484 = vadd.f32 %v8665, %v9447
        %v9485 = vadd.f32 %v8666, %v9449
        %v9486 = vadd.f32 %v8667, %v9451
        %v9487 = vadd.f32 %v8668, %v9455
        %v9488 = vadd.f32 %v8669, %v9457
        %v9489 = vadd.f32 %v8670, %v9459
        %v9490 = vadd.f32 %v8671, %v9461
        %v9491 = vadd.f32 %v8672, %v9465
        %v9492 = vadd.f32 %v8673, %v9467
        %v9493 = vadd.f32 %v8674, %v9469
        %v9494 = vadd.f32 %v8675, %v9471
        %v9495 = vadd.f32 %v8676, %v9475
        %v9496 = vadd.f32 %v8677, %v9477
        %v9497 = vadd.f32 %v8678, %v9479
        %v9498 = vadd.f32 %v8679, %v9481
        %v9499 = vld [vmem:[#allocation11] sm:$0x3]
        %v9501 = vlaneseq
        %v9502 = vshrl.u32 %v9501, 7
        %v9503 = vsub.s32 0, %v9502
        %v9504 = vrot.slane %v9499, %v9503
        %v9505 = vlaneseq
        %v9506 = vshrl.u32 %v9505, 7
        %v9507 = vsub.s32 1, %v9506
        %v9508 = vrot.slane %v9499, %v9507
        %v9511 = vmul.f32 %v9483, %v9504
        %v9512 = vmul.f32 %v9484, %v9508
        %v9513 = vmul.f32 %v9485, %v9504
        %v9514 = vmul.f32 %v9486, %v9508
        %v9515 = vmul.f32 %v9487, %v9504
        %v9516 = vmul.f32 %v9488, %v9508
        %v9517 = vmul.f32 %v9489, %v9504
        %v9518 = vmul.f32 %v9490, %v9508
        %v9519 = vmul.f32 %v9491, %v9504
        %v9520 = vmul.f32 %v9492, %v9508
        %v9521 = vmul.f32 %v9493, %v9504
        %v9522 = vmul.f32 %v9494, %v9508
        %v9523 = vmul.f32 %v9495, %v9504
        %v9524 = vmul.f32 %v9496, %v9508
        %v9525 = vmul.f32 %v9497, %v9504
        %v9526 = vmul.f32 %v9498, %v9508
        %v9527 = vld [vmem:[#allocation13] sm:$0x3]
        %v9529 = vlaneseq
        %v9530 = vshrl.u32 %v9529, 7
        %v9531 = vsub.s32 0, %v9530
        %v9532 = vrot.slane %v9527, %v9531
        %v9533 = vlaneseq
        %v9534 = vshrl.u32 %v9533, 7
        %v9535 = vsub.s32 1, %v9534
        %v9536 = vrot.slane %v9527, %v9535
        %v9539 = vadd.f32 %v9511, %v9532
        %v9540 = vadd.f32 %v9512, %v9536
        %v9541 = vadd.f32 %v9513, %v9532
        %v9542 = vadd.f32 %v9514, %v9536
        %v9543 = vadd.f32 %v9515, %v9532
        %v9544 = vadd.f32 %v9516, %v9536
        %v9545 = vadd.f32 %v9517, %v9532
        %v9546 = vadd.f32 %v9518, %v9536
        %v9547 = vadd.f32 %v9519, %v9532
        %v9548 = vadd.f32 %v9520, %v9536
        %v9549 = vadd.f32 %v9521, %v9532
        %v9550 = vadd.f32 %v9522, %v9536
        %v9551 = vadd.f32 %v9523, %v9532
        %v9552 = vadd.f32 %v9524, %v9536
        %v9553 = vadd.f32 %v9525, %v9532
        %v9554 = vadd.f32 %v9526, %v9536
        %v9555 = vmax.f32 %v9539, 0.0
        %v9556 = vmax.f32 %v9540, 0.0
        %v9557 = vmax.f32 %v9541, 0.0
        %v9558 = vmax.f32 %v9542, 0.0
        %v9559 = vmax.f32 %v9543, 0.0
        %v9560 = vmax.f32 %v9544, 0.0
        %v9561 = vmax.f32 %v9545, 0.0
        %v9562 = vmax.f32 %v9546, 0.0
        %v9563 = vmax.f32 %v9547, 0.0
        %v9564 = vmax.f32 %v9548, 0.0
        %v9565 = vmax.f32 %v9549, 0.0
        %v9566 = vmax.f32 %v9550, 0.0
        %v9567 = vmax.f32 %v9551, 0.0
        %v9568 = vmax.f32 %v9552, 0.0
        %v9569 = vmax.f32 %v9553, 0.0
        %v9570 = vmax.f32 %v9554, 0.0
        %v9571 = vpack.c.bf16 %v9557, %v9555
        %v9572 = vpack.c.bf16 %v9558, %v9556
        %v9573 = vpack.c.bf16 %v9561, %v9559
        %v9574 = vpack.c.bf16 %v9562, %v9560
        %v9575 = vpack.c.bf16 %v9565, %v9563
        %v9576 = vpack.c.bf16 %v9566, %v9564
        %v9577 = vpack.c.bf16 %v9569, %v9567
        %v9578 = vpack.c.bf16 %v9570, %v9568
        %v9579 = vld [vmem:[#allocation16] sm:$0xff]
        %v9580 = vld [vmem:[#allocation16 + $0x8] sm:$0xff]
        %v9581 = vld [vmem:[#allocation16 + $0x10] sm:$0xff]
        %v9582 = vld [vmem:[#allocation16 + $0x18] sm:$0xff]
        %v9583 = vld [vmem:[#allocation16 + $0x20] sm:$0xff]
        %v9584 = vld [vmem:[#allocation16 + $0x28] sm:$0xff]
        %v9585 = vld [vmem:[#allocation16 + $0x30] sm:$0xff]
        %v9586 = vld [vmem:[#allocation16 + $0x38] sm:$0xff]
        %v9587 = vld [vmem:[#allocation16 + $0x40] sm:$0xff]
        %v9588 = vld [vmem:[#allocation16 + $0x48] sm:$0xff]
        %v9589 = vld [vmem:[#allocation16 + $0x50] sm:$0xff]
        %v9590 = vld [vmem:[#allocation16 + $0x58] sm:$0xff]
        %v9591 = vld [vmem:[#allocation16 + $0x60] sm:$0xff]
        %v9592 = vld [vmem:[#allocation16 + $0x68] sm:$0xff]
        %v9593 = vld [vmem:[#allocation16 + $0x70] sm:$0xff]
        %v9594 = vld [vmem:[#allocation16 + $0x78] sm:$0xff]
        %v9595 = vld [vmem:[#allocation16 + $0x80] sm:$0xff]
        %v9596 = vld [vmem:[#allocation16 + $0x88] sm:$0xff]
        %v9597 = vld [vmem:[#allocation16 + $0x90] sm:$0xff]
        %v9598 = vld [vmem:[#allocation16 + $0x98] sm:$0xff]
        %v9599 = vld [vmem:[#allocation16 + $0xa0] sm:$0xff]
        %v9600 = vld [vmem:[#allocation16 + $0xa8] sm:$0xff]
        %v9601 = vld [vmem:[#allocation16 + $0xb0] sm:$0xff]
        %v9602 = vld [vmem:[#allocation16 + $0xb8] sm:$0xff]
        %v9603 = vld [vmem:[#allocation16 + $0xc0] sm:$0xff]
        %v9604 = vld [vmem:[#allocation16 + $0xc8] sm:$0xff]
        %v9605 = vld [vmem:[#allocation16 + $0xd0] sm:$0xff]
        %v9606 = vld [vmem:[#allocation16 + $0xd8] sm:$0xff]
        %v9607 = vld [vmem:[#allocation16 + $0xe0] sm:$0xff]
        %v9608 = vld [vmem:[#allocation16 + $0xe8] sm:$0xff]
        %v9609 = vld [vmem:[#allocation16 + $0xf0] sm:$0xff]
        %v9610 = vld [vmem:[#allocation16 + $0xf8] sm:$0xff]
        %v9643 = vunpack.c.l.b16 %v9579
        %v9644 = vunpack.c.h.b16 %v9579
        %v9645 = vunpack.c.l.b16 %v9580
        %v9646 = vunpack.c.h.b16 %v9580
        %v9647 = vunpack.c.l.b16 %v9581
        %v9648 = vunpack.c.h.b16 %v9581
        %v9649 = vunpack.c.l.b16 %v9582
        %v9650 = vunpack.c.h.b16 %v9582
        %v9651 = vunpack.c.l.b16 %v9583
        %v9652 = vunpack.c.h.b16 %v9583
        %v9653 = vunpack.c.l.b16 %v9584
        %v9654 = vunpack.c.h.b16 %v9584
        %v9655 = vunpack.c.l.b16 %v9585
        %v9656 = vunpack.c.h.b16 %v9585
        %v9657 = vunpack.c.l.b16 %v9586
        %v9658 = vunpack.c.h.b16 %v9586
        %v9659 = vunpack.c.l.b16 %v9587
        %v9660 = vunpack.c.h.b16 %v9587
        %v9661 = vunpack.c.l.b16 %v9588
        %v9662 = vunpack.c.h.b16 %v9588
        %v9663 = vunpack.c.l.b16 %v9589
        %v9664 = vunpack.c.h.b16 %v9589
        %v9665 = vunpack.c.l.b16 %v9590
        %v9666 = vunpack.c.h.b16 %v9590
        %v9667 = vunpack.c.l.b16 %v9591
        %v9668 = vunpack.c.h.b16 %v9591
        %v9669 = vunpack.c.l.b16 %v9592
        %v9670 = vunpack.c.h.b16 %v9592
        %v9671 = vunpack.c.l.b16 %v9593
        %v9672 = vunpack.c.h.b16 %v9593
        %v9673 = vunpack.c.l.b16 %v9594
        %v9674 = vunpack.c.h.b16 %v9594
        %v9675 = vunpack.c.l.b16 %v9595
        %v9676 = vunpack.c.h.b16 %v9595
        %v9677 = vunpack.c.l.b16 %v9596
        %v9678 = vunpack.c.h.b16 %v9596
        %v9679 = vunpack.c.l.b16 %v9597
        %v9680 = vunpack.c.h.b16 %v9597
        %v9681 = vunpack.c.l.b16 %v9598
        %v9682 = vunpack.c.h.b16 %v9598
        %v9683 = vunpack.c.l.b16 %v9599
        %v9684 = vunpack.c.h.b16 %v9599
        %v9685 = vunpack.c.l.b16 %v9600
        %v9686 = vunpack.c.h.b16 %v9600
        %v9687 = vunpack.c.l.b16 %v9601
        %v9688 = vunpack.c.h.b16 %v9601
        %v9689 = vunpack.c.l.b16 %v9602
        %v9690 = vunpack.c.h.b16 %v9602
        %v9691 = vunpack.c.l.b16 %v9603
        %v9692 = vunpack.c.h.b16 %v9603
        %v9693 = vunpack.c.l.b16 %v9604
        %v9694 = vunpack.c.h.b16 %v9604
        %v9695 = vunpack.c.l.b16 %v9605
        %v9696 = vunpack.c.h.b16 %v9605
        %v9697 = vunpack.c.l.b16 %v9606
        %v9698 = vunpack.c.h.b16 %v9606
        %v9699 = vunpack.c.l.b16 %v9607
        %v9700 = vunpack.c.h.b16 %v9607
        %v9701 = vunpack.c.l.b16 %v9608
        %v9702 = vunpack.c.h.b16 %v9608
        %v9703 = vunpack.c.l.b16 %v9609
        %v9704 = vunpack.c.h.b16 %v9609
        %v9705 = vunpack.c.l.b16 %v9610
        %v9706 = vunpack.c.h.b16 %v9610
        %v9707 = vpack.c.b16 %v9645, %v9643
        %v9708 = vpack.c.b16 %v9646, %v9644
        %v9709 = vpack.c.b16 %v9649, %v9647
        %v9710 = vpack.c.b16 %v9650, %v9648
        %v9711 = vpack.c.b16 %v9653, %v9651
        %v9712 = vpack.c.b16 %v9654, %v9652
        %v9713 = vpack.c.b16 %v9657, %v9655
        %v9714 = vpack.c.b16 %v9658, %v9656
        %v9715 = vpack.c.b16 %v9661, %v9659
        %v9716 = vpack.c.b16 %v9662, %v9660
        %v9717 = vpack.c.b16 %v9665, %v9663
        %v9718 = vpack.c.b16 %v9666, %v9664
        %v9719 = vpack.c.b16 %v9669, %v9667
        %v9720 = vpack.c.b16 %v9670, %v9668
        %v9721 = vpack.c.b16 %v9673, %v9671
        %v9722 = vpack.c.b16 %v9674, %v9672
        %v9723 = vpack.c.b16 %v9677, %v9675
        %v9724 = vpack.c.b16 %v9678, %v9676
        %v9725 = vpack.c.b16 %v9681, %v9679
        %v9726 = vpack.c.b16 %v9682, %v9680
        %v9727 = vpack.c.b16 %v9685, %v9683
        %v9728 = vpack.c.b16 %v9686, %v9684
        %v9729 = vpack.c.b16 %v9689, %v9687
        %v9730 = vpack.c.b16 %v9690, %v9688
        %v9731 = vpack.c.b16 %v9693, %v9691
        %v9732 = vpack.c.b16 %v9694, %v9692
        %v9733 = vpack.c.b16 %v9697, %v9695
        %v9734 = vpack.c.b16 %v9698, %v9696
        %v9735 = vpack.c.b16 %v9701, %v9699
        %v9736 = vpack.c.b16 %v9702, %v9700
        %v9737 = vpack.c.b16 %v9705, %v9703
        %v9738 = vpack.c.b16 %v9706, %v9704
        %9771 = vmatprep.subr.bf16.mxu0 %v9722
        %9772 = vmatpush1.bf16.msra.mxu0 %v9721
        %9773 = vmatprep.subr.bf16.mxu0 %v9720
        %9774 = vmatpush1.bf16.msra.mxu0 %v9719
        %9775 = vmatprep.subr.bf16.mxu0 %v9718
        %9776 = vmatpush1.bf16.msra.mxu0 %v9717
        %9777 = vmatprep.subr.bf16.mxu0 %v9716
        %9778 = vmatpush1.bf16.msra.mxu0 %v9715
        %9779 = vmatprep.subr.bf16.mxu0 %v9714
        %9780 = vmatpush1.bf16.msra.mxu0 %v9713
        %9781 = vmatprep.subr.bf16.mxu0 %v9712
        %9782 = vmatpush1.bf16.msra.mxu0 %v9711
        %9783 = vmatprep.subr.bf16.mxu0 %v9710
        %9784 = vmatpush1.bf16.msra.mxu0 %v9709
        %9785 = vmatprep.subr.bf16.mxu0 %v9708
        %9786 = vmatpush1.bf16.msra.mxu0 %v9707
        %9787 = vmatprep.subr.bf16.mxu0 %v9738
        %9788 = vmatpush2.bf16.msra.mxu0 %v9737
        %9789 = vmatprep.subr.bf16.mxu0 %v9736
        %9790 = vmatpush2.bf16.msra.mxu0 %v9735
        %9791 = vmatprep.subr.bf16.mxu0 %v9734
        %9792 = vmatpush2.bf16.msra.mxu0 %v9733
        %9793 = vmatprep.subr.bf16.mxu0 %v9732
        %9794 = vmatpush2.bf16.msra.mxu0 %v9731
        %9795 = vmatprep.subr.bf16.mxu0 %v9730
        %9796 = vmatpush2.bf16.msra.mxu0 %v9729
        %9797 = vmatprep.subr.bf16.mxu0 %v9728
        %9798 = vmatpush2.bf16.msra.mxu0 %v9727
        %9799 = vmatprep.subr.bf16.mxu0 %v9726
        %9800 = vmatpush2.bf16.msra.mxu0 %v9725
        %9801 = vmatprep.subr.bf16.mxu0 %v9724
        %9802 = vmatpush2.bf16.msra.mxu0 %v9723
        %9803 = vmatprep.mubr.bf16.mxu0 %v9572
        %9804 = vmatmul.mubr.bf16.gmra.mxu0 %v9571
        %v9805 = vpop.f32.mrf.mxu0
        %v9806 = vadd.f32 0.0, %v9805
        %v9807 = vpop.f32.mrf.mxu0
        %v9808 = vadd.f32 0.0, %v9807
        %v9809 = vpop.f32.mrf.mxu0
        %v9810 = vadd.f32 0.0, %v9809
        %v9811 = vpop.f32.mrf.mxu0
        %v9812 = vadd.f32 0.0, %v9811
        %9813 = vmatprep.mubr.bf16.mxu0 %v9574
        %9814 = vmatmul.mubr.bf16.gmra.mxu0 %v9573
        %v9815 = vpop.f32.mrf.mxu0
        %v9816 = vadd.f32 0.0, %v9815
        %v9817 = vpop.f32.mrf.mxu0
        %v9818 = vadd.f32 0.0, %v9817
        %v9819 = vpop.f32.mrf.mxu0
        %v9820 = vadd.f32 0.0, %v9819
        %v9821 = vpop.f32.mrf.mxu0
        %v9822 = vadd.f32 0.0, %v9821
        %9823 = vmatprep.mubr.bf16.mxu0 %v9576
        %9824 = vmatmul.mubr.bf16.gmra.mxu0 %v9575
        %v9825 = vpop.f32.mrf.mxu0
        %v9826 = vadd.f32 0.0, %v9825
        %v9827 = vpop.f32.mrf.mxu0
        %v9828 = vadd.f32 0.0, %v9827
        %v9829 = vpop.f32.mrf.mxu0
        %v9830 = vadd.f32 0.0, %v9829
        %v9831 = vpop.f32.mrf.mxu0
        %v9832 = vadd.f32 0.0, %v9831
        %9833 = vmatprep.mubr.bf16.mxu0 %v9578
        %9834 = vmatmul.mubr.bf16.gmra.mxu0 %v9577
        %v9835 = vpop.f32.mrf.mxu0
        %v9836 = vadd.f32 0.0, %v9835
        %v9837 = vpop.f32.mrf.mxu0
        %v9838 = vadd.f32 0.0, %v9837
        %v9839 = vpop.f32.mrf.mxu0
        %v9840 = vadd.f32 0.0, %v9839
        %v9841 = vpop.f32.mrf.mxu0
        %v9842 = vadd.f32 0.0, %v9841
        %9843 = vdwg.mxu0
        %v9940 = vunpack.c.l.b16 %v2509
        %v9941 = vunpack.c.h.b16 %v2509
        %v9942 = vunpack.c.l.b16 %v2510
        %v9943 = vunpack.c.h.b16 %v2510
        %v9944 = vunpack.c.l.b16 %v2511
        %v9945 = vunpack.c.h.b16 %v2511
        %v9946 = vunpack.c.l.b16 %v2512
        %v9947 = vunpack.c.h.b16 %v2512
        %v9948 = vunpack.c.l.b16 %v2513
        %v9949 = vunpack.c.h.b16 %v2513
        %v9950 = vunpack.c.l.b16 %v2514
        %v9951 = vunpack.c.h.b16 %v2514
        %v9952 = vunpack.c.l.b16 %v2515
        %v9953 = vunpack.c.h.b16 %v2515
        %v9954 = vunpack.c.l.b16 %v2516
        %v9955 = vunpack.c.h.b16 %v2516
        %v9956 = vunpack.c.l.b16 %v2517
        %v9957 = vunpack.c.h.b16 %v2517
        %v9958 = vunpack.c.l.b16 %v2518
        %v9959 = vunpack.c.h.b16 %v2518
        %v9960 = vunpack.c.l.b16 %v2519
        %v9961 = vunpack.c.h.b16 %v2519
        %v9962 = vunpack.c.l.b16 %v2520
        %v9963 = vunpack.c.h.b16 %v2520
        %v9964 = vunpack.c.l.b16 %v2521
        %v9965 = vunpack.c.h.b16 %v2521
        %v9966 = vunpack.c.l.b16 %v2522
        %v9967 = vunpack.c.h.b16 %v2522
        %v9968 = vunpack.c.l.b16 %v2523
        %v9969 = vunpack.c.h.b16 %v2523
        %v9970 = vunpack.c.l.b16 %v2524
        %v9971 = vunpack.c.h.b16 %v2524
        %v9972 = vunpack.c.l.b16 %v2525
        %v9973 = vunpack.c.h.b16 %v2525
        %v9974 = vunpack.c.l.b16 %v2526
        %v9975 = vunpack.c.h.b16 %v2526
        %v9976 = vunpack.c.l.b16 %v2527
        %v9977 = vunpack.c.h.b16 %v2527
        %v9978 = vunpack.c.l.b16 %v2528
        %v9979 = vunpack.c.h.b16 %v2528
        %v9980 = vunpack.c.l.b16 %v2529
        %v9981 = vunpack.c.h.b16 %v2529
        %v9982 = vunpack.c.l.b16 %v2530
        %v9983 = vunpack.c.h.b16 %v2530
        %v9984 = vunpack.c.l.b16 %v2531
        %v9985 = vunpack.c.h.b16 %v2531
        %v9986 = vunpack.c.l.b16 %v2532
        %v9987 = vunpack.c.h.b16 %v2532
        %v9988 = vunpack.c.l.b16 %v2533
        %v9989 = vunpack.c.h.b16 %v2533
        %v9990 = vunpack.c.l.b16 %v2534
        %v9991 = vunpack.c.h.b16 %v2534
        %v9992 = vunpack.c.l.b16 %v2535
        %v9993 = vunpack.c.h.b16 %v2535
        %v9994 = vunpack.c.l.b16 %v2536
        %v9995 = vunpack.c.h.b16 %v2536
        %v9996 = vunpack.c.l.b16 %v2537
        %v9997 = vunpack.c.h.b16 %v2537
        %v9998 = vunpack.c.l.b16 %v2538
        %v9999 = vunpack.c.h.b16 %v2538
        %v10000 = vunpack.c.l.b16 %v2539
        %v10001 = vunpack.c.h.b16 %v2539
        %v10002 = vunpack.c.l.b16 %v2540
        %v10003 = vunpack.c.h.b16 %v2540
        %v10004 = vunpack.c.l.b16 %v2541
        %v10005 = vunpack.c.h.b16 %v2541
        %v10006 = vunpack.c.l.b16 %v2542
        %v10007 = vunpack.c.h.b16 %v2542
        %v10008 = vunpack.c.l.b16 %v2543
        %v10009 = vunpack.c.h.b16 %v2543
        %v10010 = vunpack.c.l.b16 %v2544
        %v10011 = vunpack.c.h.b16 %v2544
        %v10012 = vunpack.c.l.b16 %v2545
        %v10013 = vunpack.c.h.b16 %v2545
        %v10014 = vunpack.c.l.b16 %v2546
        %v10015 = vunpack.c.h.b16 %v2546
        %v10016 = vunpack.c.l.b16 %v2547
        %v10017 = vunpack.c.h.b16 %v2547
        %v10018 = vunpack.c.l.b16 %v2548
        %v10019 = vunpack.c.h.b16 %v2548
        %v10020 = vunpack.c.l.b16 %v2549
        %v10021 = vunpack.c.h.b16 %v2549
        %v10022 = vunpack.c.l.b16 %v2550
        %v10023 = vunpack.c.h.b16 %v2550
        %v10024 = vunpack.c.l.b16 %v2551
        %v10025 = vunpack.c.h.b16 %v2551
        %v10026 = vunpack.c.l.b16 %v2552
        %v10027 = vunpack.c.h.b16 %v2552
        %v10028 = vunpack.c.l.b16 %v2553
        %v10029 = vunpack.c.h.b16 %v2553
        %v10030 = vunpack.c.l.b16 %v2554
        %v10031 = vunpack.c.h.b16 %v2554
        %v10032 = vunpack.c.l.b16 %v2555
        %v10033 = vunpack.c.h.b16 %v2555
        %v10034 = vunpack.c.l.b16 %v2556
        %v10035 = vunpack.c.h.b16 %v2556
        %v10036 = vunpack.c.l.b16 %v2557
        %v10037 = vunpack.c.h.b16 %v2557
        %v10038 = vunpack.c.l.b16 %v2558
        %v10039 = vunpack.c.h.b16 %v2558
        %v10040 = vunpack.c.l.b16 %v2559
        %v10041 = vunpack.c.h.b16 %v2559
        %v10042 = vunpack.c.l.b16 %v2560
        %v10043 = vunpack.c.h.b16 %v2560
        %v10044 = vunpack.c.l.b16 %v2561
        %v10045 = vunpack.c.h.b16 %v2561
        %v10046 = vunpack.c.l.b16 %v2562
        %v10047 = vunpack.c.h.b16 %v2562
        %v10048 = vunpack.c.l.b16 %v2563
        %v10049 = vunpack.c.h.b16 %v2563
        %v10050 = vunpack.c.l.b16 %v2564
        %v10051 = vunpack.c.h.b16 %v2564
        %v10052 = vunpack.c.l.b16 %v2565
        %v10053 = vunpack.c.h.b16 %v2565
        %v10054 = vunpack.c.l.b16 %v2566
        %v10055 = vunpack.c.h.b16 %v2566
        %v10056 = vunpack.c.l.b16 %v2567
        %v10057 = vunpack.c.h.b16 %v2567
        %v10058 = vunpack.c.l.b16 %v2568
        %v10059 = vunpack.c.h.b16 %v2568
        %v10060 = vunpack.c.l.b16 %v2569
        %v10061 = vunpack.c.h.b16 %v2569
        %v10062 = vunpack.c.l.b16 %v2570
        %v10063 = vunpack.c.h.b16 %v2570
        %v10064 = vunpack.c.l.b16 %v2571
        %v10065 = vunpack.c.h.b16 %v2571
        %v10066 = vunpack.c.l.b16 %v2572
        %v10067 = vunpack.c.h.b16 %v2572
        %v10068 = vunpack.c.l.b16 %v2573
        %v10069 = vunpack.c.h.b16 %v2573
        %v10070 = vunpack.c.l.b16 %v2574
        %v10071 = vunpack.c.h.b16 %v2574
        %v10072 = vunpack.c.l.b16 %v2575
        %v10073 = vunpack.c.h.b16 %v2575
        %v10074 = vunpack.c.l.b16 %v2576
        %v10075 = vunpack.c.h.b16 %v2576
        %v10076 = vunpack.c.l.b16 %v2577
        %v10077 = vunpack.c.h.b16 %v2577
        %v10078 = vunpack.c.l.b16 %v2578
        %v10079 = vunpack.c.h.b16 %v2578
        %v10080 = vunpack.c.l.b16 %v2579
        %v10081 = vunpack.c.h.b16 %v2579
        %v10082 = vunpack.c.l.b16 %v2580
        %v10083 = vunpack.c.h.b16 %v2580
        %v10084 = vunpack.c.l.b16 %v2581
        %v10085 = vunpack.c.h.b16 %v2581
        %v10086 = vunpack.c.l.b16 %v2582
        %v10087 = vunpack.c.h.b16 %v2582
        %v10088 = vunpack.c.l.b16 %v2583
        %v10089 = vunpack.c.h.b16 %v2583
        %v10090 = vunpack.c.l.b16 %v2584
        %v10091 = vunpack.c.h.b16 %v2584
        %v10092 = vunpack.c.l.b16 %v2585
        %v10093 = vunpack.c.h.b16 %v2585
        %v10094 = vunpack.c.l.b16 %v2586
        %v10095 = vunpack.c.h.b16 %v2586
        %v10096 = vunpack.c.l.b16 %v2587
        %v10097 = vunpack.c.h.b16 %v2587
        %v10098 = vunpack.c.l.b16 %v2588
        %v10099 = vunpack.c.h.b16 %v2588
        %v10100 = vunpack.c.l.b16 %v2589
        %v10101 = vunpack.c.h.b16 %v2589
        %v10102 = vunpack.c.l.b16 %v2590
        %v10103 = vunpack.c.h.b16 %v2590
        %v10104 = vunpack.c.l.b16 %v2591
        %v10105 = vunpack.c.h.b16 %v2591
        %v10106 = vunpack.c.l.b16 %v2592
        %v10107 = vunpack.c.h.b16 %v2592
        %v10108 = vunpack.c.l.b16 %v2593
        %v10109 = vunpack.c.h.b16 %v2593
        %v10110 = vunpack.c.l.b16 %v2594
        %v10111 = vunpack.c.h.b16 %v2594
        %v10112 = vunpack.c.l.b16 %v2595
        %v10113 = vunpack.c.h.b16 %v2595
        %v10114 = vunpack.c.l.b16 %v2596
        %v10115 = vunpack.c.h.b16 %v2596
        %v10116 = vunpack.c.l.b16 %v2597
        %v10117 = vunpack.c.h.b16 %v2597
        %v10118 = vunpack.c.l.b16 %v2598
        %v10119 = vunpack.c.h.b16 %v2598
        %v10120 = vunpack.c.l.b16 %v2599
        %v10121 = vunpack.c.h.b16 %v2599
        %v10122 = vunpack.c.l.b16 %v2600
        %v10123 = vunpack.c.h.b16 %v2600
        %v10124 = vunpack.c.l.b16 %v2601
        %v10125 = vunpack.c.h.b16 %v2601
        %v10126 = vunpack.c.l.b16 %v2602
        %v10127 = vunpack.c.h.b16 %v2602
        %v10128 = vunpack.c.l.b16 %v2603
        %v10129 = vunpack.c.h.b16 %v2603
        %v10130 = vunpack.c.l.b16 %v2604
        %v10131 = vunpack.c.h.b16 %v2604
        %v10132 = vpack.c.b16 %v9942, %v9940
        %v10133 = vpack.c.b16 %v9943, %v9941
        %v10134 = vpack.c.b16 %v9946, %v9944
        %v10135 = vpack.c.b16 %v9947, %v9945
        %v10136 = vpack.c.b16 %v9950, %v9948
        %v10137 = vpack.c.b16 %v9951, %v9949
        %v10138 = vpack.c.b16 %v9954, %v9952
        %v10139 = vpack.c.b16 %v9955, %v9953
        %v10140 = vpack.c.b16 %v9958, %v9956
        %v10141 = vpack.c.b16 %v9959, %v9957
        %v10142 = vpack.c.b16 %v9962, %v9960
        %v10143 = vpack.c.b16 %v9963, %v9961
        %v10144 = vpack.c.b16 %v9966, %v9964
        %v10145 = vpack.c.b16 %v9967, %v9965
        %v10146 = vpack.c.b16 %v9970, %v9968
        %v10147 = vpack.c.b16 %v9971, %v9969
        %v10148 = vpack.c.b16 %v9974, %v9972
        %v10149 = vpack.c.b16 %v9975, %v9973
        %v10150 = vpack.c.b16 %v9978, %v9976
        %v10151 = vpack.c.b16 %v9979, %v9977
        %v10152 = vpack.c.b16 %v9982, %v9980
        %v10153 = vpack.c.b16 %v9983, %v9981
        %v10154 = vpack.c.b16 %v9986, %v9984
        %v10155 = vpack.c.b16 %v9987, %v9985
        %v10156 = vpack.c.b16 %v9990, %v9988
        %v10157 = vpack.c.b16 %v9991, %v9989
        %v10158 = vpack.c.b16 %v9994, %v9992
        %v10159 = vpack.c.b16 %v9995, %v9993
        %v10160 = vpack.c.b16 %v9998, %v9996
        %v10161 = vpack.c.b16 %v9999, %v9997
        %v10162 = vpack.c.b16 %v10002, %v10000
        %v10163 = vpack.c.b16 %v10003, %v10001
        %v10164 = vpack.c.b16 %v10006, %v10004
        %v10165 = vpack.c.b16 %v10007, %v10005
        %v10166 = vpack.c.b16 %v10010, %v10008
        %v10167 = vpack.c.b16 %v10011, %v10009
        %v10168 = vpack.c.b16 %v10014, %v10012
        %v10169 = vpack.c.b16 %v10015, %v10013
        %v10170 = vpack.c.b16 %v10018, %v10016
        %v10171 = vpack.c.b16 %v10019, %v10017
        %v10172 = vpack.c.b16 %v10022, %v10020
        %v10173 = vpack.c.b16 %v10023, %v10021
        %v10174 = vpack.c.b16 %v10026, %v10024
        %v10175 = vpack.c.b16 %v10027, %v10025
        %v10176 = vpack.c.b16 %v10030, %v10028
        %v10177 = vpack.c.b16 %v10031, %v10029
        %v10178 = vpack.c.b16 %v10034, %v10032
        %v10179 = vpack.c.b16 %v10035, %v10033
        %v10180 = vpack.c.b16 %v10038, %v10036
        %v10181 = vpack.c.b16 %v10039, %v10037
        %v10182 = vpack.c.b16 %v10042, %v10040
        %v10183 = vpack.c.b16 %v10043, %v10041
        %v10184 = vpack.c.b16 %v10046, %v10044
        %v10185 = vpack.c.b16 %v10047, %v10045
        %v10186 = vpack.c.b16 %v10050, %v10048
        %v10187 = vpack.c.b16 %v10051, %v10049
        %v10188 = vpack.c.b16 %v10054, %v10052
        %v10189 = vpack.c.b16 %v10055, %v10053
        %v10190 = vpack.c.b16 %v10058, %v10056
        %v10191 = vpack.c.b16 %v10059, %v10057
        %v10192 = vpack.c.b16 %v10062, %v10060
        %v10193 = vpack.c.b16 %v10063, %v10061
        %v10194 = vpack.c.b16 %v10066, %v10064
        %v10195 = vpack.c.b16 %v10067, %v10065
        %v10196 = vpack.c.b16 %v10070, %v10068
        %v10197 = vpack.c.b16 %v10071, %v10069
        %v10198 = vpack.c.b16 %v10074, %v10072
        %v10199 = vpack.c.b16 %v10075, %v10073
        %v10200 = vpack.c.b16 %v10078, %v10076
        %v10201 = vpack.c.b16 %v10079, %v10077
        %v10202 = vpack.c.b16 %v10082, %v10080
        %v10203 = vpack.c.b16 %v10083, %v10081
        %v10204 = vpack.c.b16 %v10086, %v10084
        %v10205 = vpack.c.b16 %v10087, %v10085
        %v10206 = vpack.c.b16 %v10090, %v10088
        %v10207 = vpack.c.b16 %v10091, %v10089
        %v10208 = vpack.c.b16 %v10094, %v10092
        %v10209 = vpack.c.b16 %v10095, %v10093
        %v10210 = vpack.c.b16 %v10098, %v10096
        %v10211 = vpack.c.b16 %v10099, %v10097
        %v10212 = vpack.c.b16 %v10102, %v10100
        %v10213 = vpack.c.b16 %v10103, %v10101
        %v10214 = vpack.c.b16 %v10106, %v10104
        %v10215 = vpack.c.b16 %v10107, %v10105
        %v10216 = vpack.c.b16 %v10110, %v10108
        %v10217 = vpack.c.b16 %v10111, %v10109
        %v10218 = vpack.c.b16 %v10114, %v10112
        %v10219 = vpack.c.b16 %v10115, %v10113
        %v10220 = vpack.c.b16 %v10118, %v10116
        %v10221 = vpack.c.b16 %v10119, %v10117
        %v10222 = vpack.c.b16 %v10122, %v10120
        %v10223 = vpack.c.b16 %v10123, %v10121
        %v10224 = vpack.c.b16 %v10126, %v10124
        %v10225 = vpack.c.b16 %v10127, %v10125
        %v10226 = vpack.c.b16 %v10130, %v10128
        %v10227 = vpack.c.b16 %v10131, %v10129
        %10324 = vmatprep.subr.bf16.mxu0 %v10147
        %10325 = vmatpush1.bf16.msra.mxu0 %v10146
        %10326 = vmatprep.subr.bf16.mxu0 %v10145
        %10327 = vmatpush1.bf16.msra.mxu0 %v10144
        %10328 = vmatprep.subr.bf16.mxu0 %v10143
        %10329 = vmatpush1.bf16.msra.mxu0 %v10142
        %10330 = vmatprep.subr.bf16.mxu0 %v10141
        %10331 = vmatpush1.bf16.msra.mxu0 %v10140
        %10332 = vmatprep.subr.bf16.mxu0 %v10139
        %10333 = vmatpush1.bf16.msra.mxu0 %v10138
        %10334 = vmatprep.subr.bf16.mxu0 %v10137
        %10335 = vmatpush1.bf16.msra.mxu0 %v10136
        %10336 = vmatprep.subr.bf16.mxu0 %v10135
        %10337 = vmatpush1.bf16.msra.mxu0 %v10134
        %10338 = vmatprep.subr.bf16.mxu0 %v10133
        %10339 = vmatpush1.bf16.msra.mxu0 %v10132
        %10340 = vmatprep.subr.bf16.mxu0 %v10163
        %10341 = vmatpush2.bf16.msra.mxu0 %v10162
        %10342 = vmatprep.subr.bf16.mxu0 %v10161
        %10343 = vmatpush2.bf16.msra.mxu0 %v10160
        %10344 = vmatprep.subr.bf16.mxu0 %v10159
        %10345 = vmatpush2.bf16.msra.mxu0 %v10158
        %10346 = vmatprep.subr.bf16.mxu0 %v10157
        %10347 = vmatpush2.bf16.msra.mxu0 %v10156
        %10348 = vmatprep.subr.bf16.mxu0 %v10155
        %10349 = vmatpush2.bf16.msra.mxu0 %v10154
        %10350 = vmatprep.subr.bf16.mxu0 %v10153
        %10351 = vmatpush2.bf16.msra.mxu0 %v10152
        %10352 = vmatprep.subr.bf16.mxu0 %v10151
        %10353 = vmatpush2.bf16.msra.mxu0 %v10150
        %10354 = vmatprep.subr.bf16.mxu0 %v10149
        %10355 = vmatpush2.bf16.msra.mxu0 %v10148
        %10356 = vmatprep.mubr.bf16.mxu0 %v2486
        %10357 = vmatmul.mubr.bf16.gmra.mxu0 %v2485
        %v10358 = vpop.f32.mrf.mxu0
        %v10359 = vadd.f32 %v9806, %v10358
        %v10360 = vpop.f32.mrf.mxu0
        %v10361 = vadd.f32 %v9808, %v10360
        %v10362 = vpop.f32.mrf.mxu0
        %v10363 = vadd.f32 %v9810, %v10362
        %v10364 = vpop.f32.mrf.mxu0
        %v10365 = vadd.f32 %v9812, %v10364
        %10366 = vmatprep.mubr.bf16.mxu0 %v2492
        %10367 = vmatmul.mubr.bf16.gmra.mxu0 %v2491
        %v10368 = vpop.f32.mrf.mxu0
        %v10369 = vadd.f32 %v9816, %v10368
        %v10370 = vpop.f32.mrf.mxu0
        %v10371 = vadd.f32 %v9818, %v10370
        %v10372 = vpop.f32.mrf.mxu0
        %v10373 = vadd.f32 %v9820, %v10372
        %v10374 = vpop.f32.mrf.mxu0
        %v10375 = vadd.f32 %v9822, %v10374
        %10376 = vmatprep.mubr.bf16.mxu0 %v2498
        %10377 = vmatmul.mubr.bf16.gmra.mxu0 %v2497
        %v10378 = vpop.f32.mrf.mxu0
        %v10379 = vadd.f32 %v9826, %v10378
        %v10380 = vpop.f32.mrf.mxu0
        %v10381 = vadd.f32 %v9828, %v10380
        %v10382 = vpop.f32.mrf.mxu0
        %v10383 = vadd.f32 %v9830, %v10382
        %v10384 = vpop.f32.mrf.mxu0
        %v10385 = vadd.f32 %v9832, %v10384
        %10386 = vmatprep.mubr.bf16.mxu0 %v2504
        %10387 = vmatmul.mubr.bf16.gmra.mxu0 %v2503
        %v10388 = vpop.f32.mrf.mxu0
        %v10389 = vadd.f32 %v9836, %v10388
        %v10390 = vpop.f32.mrf.mxu0
        %v10391 = vadd.f32 %v9838, %v10390
        %v10392 = vpop.f32.mrf.mxu0
        %v10393 = vadd.f32 %v9840, %v10392
        %v10394 = vpop.f32.mrf.mxu0
        %v10395 = vadd.f32 %v9842, %v10394
        %10396 = vdwg.mxu0
        %10397 = vmatprep.subr.bf16.mxu0 %v10179
        %10398 = vmatpush1.bf16.msra.mxu0 %v10178
        %10399 = vmatprep.subr.bf16.mxu0 %v10177
        %10400 = vmatpush1.bf16.msra.mxu0 %v10176
        %10401 = vmatprep.subr.bf16.mxu0 %v10175
        %10402 = vmatpush1.bf16.msra.mxu0 %v10174
        %10403 = vmatprep.subr.bf16.mxu0 %v10173
        %10404 = vmatpush1.bf16.msra.mxu0 %v10172
        %10405 = vmatprep.subr.bf16.mxu0 %v10171
        %10406 = vmatpush1.bf16.msra.mxu0 %v10170
        %10407 = vmatprep.subr.bf16.mxu0 %v10169
        %10408 = vmatpush1.bf16.msra.mxu0 %v10168
        %10409 = vmatprep.subr.bf16.mxu0 %v10167
        %10410 = vmatpush1.bf16.msra.mxu0 %v10166
        %10411 = vmatprep.subr.bf16.mxu0 %v10165
        %10412 = vmatpush1.bf16.msra.mxu0 %v10164
        %10413 = vmatprep.subr.bf16.mxu0 %v10195
        %10414 = vmatpush2.bf16.msra.mxu0 %v10194
        %10415 = vmatprep.subr.bf16.mxu0 %v10193
        %10416 = vmatpush2.bf16.msra.mxu0 %v10192
        %10417 = vmatprep.subr.bf16.mxu0 %v10191
        %10418 = vmatpush2.bf16.msra.mxu0 %v10190
        %10419 = vmatprep.subr.bf16.mxu0 %v10189
        %10420 = vmatpush2.bf16.msra.mxu0 %v10188
        %10421 = vmatprep.subr.bf16.mxu0 %v10187
        %10422 = vmatpush2.bf16.msra.mxu0 %v10186
        %10423 = vmatprep.subr.bf16.mxu0 %v10185
        %10424 = vmatpush2.bf16.msra.mxu0 %v10184
        %10425 = vmatprep.subr.bf16.mxu0 %v10183
        %10426 = vmatpush2.bf16.msra.mxu0 %v10182
        %10427 = vmatprep.subr.bf16.mxu0 %v10181
        %10428 = vmatpush2.bf16.msra.mxu0 %v10180
        %10429 = vmatprep.mubr.bf16.mxu0 %v2488
        %10430 = vmatmul.mubr.bf16.gmra.mxu0 %v2487
        %v10431 = vpop.f32.mrf.mxu0
        %v10432 = vadd.f32 %v10359, %v10431
        %v10433 = vpop.f32.mrf.mxu0
        %v10434 = vadd.f32 %v10361, %v10433
        %v10435 = vpop.f32.mrf.mxu0
        %v10436 = vadd.f32 %v10363, %v10435
        %v10437 = vpop.f32.mrf.mxu0
        %v10438 = vadd.f32 %v10365, %v10437
        %10439 = vmatprep.mubr.bf16.mxu0 %v2494
        %10440 = vmatmul.mubr.bf16.gmra.mxu0 %v2493
        %v10441 = vpop.f32.mrf.mxu0
        %v10442 = vadd.f32 %v10369, %v10441
        %v10443 = vpop.f32.mrf.mxu0
        %v10444 = vadd.f32 %v10371, %v10443
        %v10445 = vpop.f32.mrf.mxu0
        %v10446 = vadd.f32 %v10373, %v10445
        %v10447 = vpop.f32.mrf.mxu0
        %v10448 = vadd.f32 %v10375, %v10447
        %10449 = vmatprep.mubr.bf16.mxu0 %v2500
        %10450 = vmatmul.mubr.bf16.gmra.mxu0 %v2499
        %v10451 = vpop.f32.mrf.mxu0
        %v10452 = vadd.f32 %v10379, %v10451
        %v10453 = vpop.f32.mrf.mxu0
        %v10454 = vadd.f32 %v10381, %v10453
        %v10455 = vpop.f32.mrf.mxu0
        %v10456 = vadd.f32 %v10383, %v10455
        %v10457 = vpop.f32.mrf.mxu0
        %v10458 = vadd.f32 %v10385, %v10457
        %10459 = vmatprep.mubr.bf16.mxu0 %v2506
        %10460 = vmatmul.mubr.bf16.gmra.mxu0 %v2505
        %v10461 = vpop.f32.mrf.mxu0
        %v10462 = vadd.f32 %v10389, %v10461
        %v10463 = vpop.f32.mrf.mxu0
        %v10464 = vadd.f32 %v10391, %v10463
        %v10465 = vpop.f32.mrf.mxu0
        %v10466 = vadd.f32 %v10393, %v10465
        %v10467 = vpop.f32.mrf.mxu0
        %v10468 = vadd.f32 %v10395, %v10467
        %10469 = vdwg.mxu0
        %10470 = vmatprep.subr.bf16.mxu0 %v10211
        %10471 = vmatpush1.bf16.msra.mxu0 %v10210
        %10472 = vmatprep.subr.bf16.mxu0 %v10209
        %10473 = vmatpush1.bf16.msra.mxu0 %v10208
        %10474 = vmatprep.subr.bf16.mxu0 %v10207
        %10475 = vmatpush1.bf16.msra.mxu0 %v10206
        %10476 = vmatprep.subr.bf16.mxu0 %v10205
        %10477 = vmatpush1.bf16.msra.mxu0 %v10204
        %10478 = vmatprep.subr.bf16.mxu0 %v10203
        %10479 = vmatpush1.bf16.msra.mxu0 %v10202
        %10480 = vmatprep.subr.bf16.mxu0 %v10201
        %10481 = vmatpush1.bf16.msra.mxu0 %v10200
        %10482 = vmatprep.subr.bf16.mxu0 %v10199
        %10483 = vmatpush1.bf16.msra.mxu0 %v10198
        %10484 = vmatprep.subr.bf16.mxu0 %v10197
        %10485 = vmatpush1.bf16.msra.mxu0 %v10196
        %10486 = vmatprep.subr.bf16.mxu0 %v10227
        %10487 = vmatpush2.bf16.msra.mxu0 %v10226
        %10488 = vmatprep.subr.bf16.mxu0 %v10225
        %10489 = vmatpush2.bf16.msra.mxu0 %v10224
        %10490 = vmatprep.subr.bf16.mxu0 %v10223
        %10491 = vmatpush2.bf16.msra.mxu0 %v10222
        %10492 = vmatprep.subr.bf16.mxu0 %v10221
        %10493 = vmatpush2.bf16.msra.mxu0 %v10220
        %10494 = vmatprep.subr.bf16.mxu0 %v10219
        %10495 = vmatpush2.bf16.msra.mxu0 %v10218
        %10496 = vmatprep.subr.bf16.mxu0 %v10217
        %10497 = vmatpush2.bf16.msra.mxu0 %v10216
        %10498 = vmatprep.subr.bf16.mxu0 %v10215
        %10499 = vmatpush2.bf16.msra.mxu0 %v10214
        %10500 = vmatprep.subr.bf16.mxu0 %v10213
        %10501 = vmatpush2.bf16.msra.mxu0 %v10212
        %10502 = vmatprep.mubr.bf16.mxu0 %v2490
        %10503 = vmatmul.mubr.bf16.gmra.mxu0 %v2489
        %v10504 = vpop.f32.mrf.mxu0
        %v10505 = vadd.f32 %v10432, %v10504
        %v10506 = vpop.f32.mrf.mxu0
        %v10507 = vadd.f32 %v10434, %v10506
        %v10508 = vpop.f32.mrf.mxu0
        %v10509 = vadd.f32 %v10436, %v10508
        %v10510 = vpop.f32.mrf.mxu0
        %v10511 = vadd.f32 %v10438, %v10510
        %10512 = vmatprep.mubr.bf16.mxu0 %v2496
        %10513 = vmatmul.mubr.bf16.gmra.mxu0 %v2495
        %v10514 = vpop.f32.mrf.mxu0
        %v10515 = vadd.f32 %v10442, %v10514
        %v10516 = vpop.f32.mrf.mxu0
        %v10517 = vadd.f32 %v10444, %v10516
        %v10518 = vpop.f32.mrf.mxu0
        %v10519 = vadd.f32 %v10446, %v10518
        %v10520 = vpop.f32.mrf.mxu0
        %v10521 = vadd.f32 %v10448, %v10520
        %10522 = vmatprep.mubr.bf16.mxu0 %v2502
        %10523 = vmatmul.mubr.bf16.gmra.mxu0 %v2501
        %v10524 = vpop.f32.mrf.mxu0
        %v10525 = vadd.f32 %v10452, %v10524
        %v10526 = vpop.f32.mrf.mxu0
        %v10527 = vadd.f32 %v10454, %v10526
        %v10528 = vpop.f32.mrf.mxu0
        %v10529 = vadd.f32 %v10456, %v10528
        %v10530 = vpop.f32.mrf.mxu0
        %v10531 = vadd.f32 %v10458, %v10530
        %10532 = vmatprep.mubr.bf16.mxu0 %v2508
        %10533 = vmatmul.mubr.bf16.gmra.mxu0 %v2507
        %v10534 = vpop.f32.mrf.mxu0
        %v10535 = vadd.f32 %v10462, %v10534
        %v10536 = vpop.f32.mrf.mxu0
        %v10537 = vadd.f32 %v10464, %v10536
        %v10538 = vpop.f32.mrf.mxu0
        %v10539 = vadd.f32 %v10466, %v10538
        %v10540 = vpop.f32.mrf.mxu0
        %v10541 = vadd.f32 %v10468, %v10540
        %10542 = vdwg.mxu0
        %v10543 = vld [vmem:[%s632] sm:$0x3]
        %v10545 = vlaneseq
        %v10546 = vshrl.u32 %v10545, 7
        %v10547 = vsub.s32 0, %v10546
        %v10548 = vrot.slane %v10543, %v10547
        %v10549 = vlaneseq
        %v10550 = vshrl.u32 %v10549, 7
        %v10551 = vsub.s32 1, %v10550
        %v10552 = vrot.slane %v10543, %v10551
        %v10555 = vadd.f32 %v10505, %v10548
        %v10556 = vadd.f32 %v10507, %v10552
        %v10557 = vadd.f32 %v10509, %v10548
        %v10558 = vadd.f32 %v10511, %v10552
        %v10559 = vadd.f32 %v10515, %v10548
        %v10560 = vadd.f32 %v10517, %v10552
        %v10561 = vadd.f32 %v10519, %v10548
        %v10562 = vadd.f32 %v10521, %v10552
        %v10563 = vadd.f32 %v10525, %v10548
        %v10564 = vadd.f32 %v10527, %v10552
        %v10565 = vadd.f32 %v10529, %v10548
        %v10566 = vadd.f32 %v10531, %v10552
        %v10567 = vadd.f32 %v10535, %v10548
        %v10568 = vadd.f32 %v10537, %v10552
        %v10569 = vadd.f32 %v10539, %v10548
        %v10570 = vadd.f32 %v10541, %v10552
        %v10571 = vld [vmem:[#allocation17] sm:$0x3]
        %v10573 = vlaneseq
        %v10574 = vshrl.u32 %v10573, 7
        %v10575 = vsub.s32 0, %v10574
        %v10576 = vrot.slane %v10571, %v10575
        %v10577 = vlaneseq
        %v10578 = vshrl.u32 %v10577, 7
        %v10579 = vsub.s32 1, %v10578
        %v10580 = vrot.slane %v10571, %v10579
        %v10583 = vmul.f32 %v10555, %v10576
        %v10584 = vmul.f32 %v10556, %v10580
        %v10585 = vmul.f32 %v10557, %v10576
        %v10586 = vmul.f32 %v10558, %v10580
        %v10587 = vmul.f32 %v10559, %v10576
        %v10588 = vmul.f32 %v10560, %v10580
        %v10589 = vmul.f32 %v10561, %v10576
        %v10590 = vmul.f32 %v10562, %v10580
        %v10591 = vmul.f32 %v10563, %v10576
        %v10592 = vmul.f32 %v10564, %v10580
        %v10593 = vmul.f32 %v10565, %v10576
        %v10594 = vmul.f32 %v10566, %v10580
        %v10595 = vmul.f32 %v10567, %v10576
        %v10596 = vmul.f32 %v10568, %v10580
        %v10597 = vmul.f32 %v10569, %v10576
        %v10598 = vmul.f32 %v10570, %v10580
        %v10599 = vld [vmem:[#allocation19] sm:$0x3]
        %v10601 = vlaneseq
        %v10602 = vshrl.u32 %v10601, 7
        %v10603 = vsub.s32 0, %v10602
        %v10604 = vrot.slane %v10599, %v10603
        %v10605 = vlaneseq
        %v10606 = vshrl.u32 %v10605, 7
        %v10607 = vsub.s32 1, %v10606
        %v10608 = vrot.slane %v10599, %v10607
        %v10611 = vadd.f32 %v10583, %v10604
        %v10612 = vadd.f32 %v10584, %v10608
        %v10613 = vadd.f32 %v10585, %v10604
        %v10614 = vadd.f32 %v10586, %v10608
        %v10615 = vadd.f32 %v10587, %v10604
        %v10616 = vadd.f32 %v10588, %v10608
        %v10617 = vadd.f32 %v10589, %v10604
        %v10618 = vadd.f32 %v10590, %v10608
        %v10619 = vadd.f32 %v10591, %v10604
        %v10620 = vadd.f32 %v10592, %v10608
        %v10621 = vadd.f32 %v10593, %v10604
        %v10622 = vadd.f32 %v10594, %v10608
        %v10623 = vadd.f32 %v10595, %v10604
        %v10624 = vadd.f32 %v10596, %v10608
        %v10625 = vadd.f32 %v10597, %v10604
        %v10626 = vadd.f32 %v10598, %v10608
        %v10627 = vmax.f32 %v10611, 0.0
        %v10628 = vmax.f32 %v10612, 0.0
        %v10629 = vmax.f32 %v10613, 0.0
        %v10630 = vmax.f32 %v10614, 0.0
        %v10631 = vmax.f32 %v10615, 0.0
        %v10632 = vmax.f32 %v10616, 0.0
        %v10633 = vmax.f32 %v10617, 0.0
        %v10634 = vmax.f32 %v10618, 0.0
        %v10635 = vmax.f32 %v10619, 0.0
        %v10636 = vmax.f32 %v10620, 0.0
        %v10637 = vmax.f32 %v10621, 0.0
        %v10638 = vmax.f32 %v10622, 0.0
        %v10639 = vmax.f32 %v10623, 0.0
        %v10640 = vmax.f32 %v10624, 0.0
        %v10641 = vmax.f32 %v10625, 0.0
        %v10642 = vmax.f32 %v10626, 0.0
        %v10643 = vpack.c.bf16 %v10629, %v10627
        %v10644 = vpack.c.bf16 %v10630, %v10628
        %v10645 = vpack.c.bf16 %v10633, %v10631
        %v10646 = vpack.c.bf16 %v10634, %v10632
        %v10647 = vpack.c.bf16 %v10637, %v10635
        %v10648 = vpack.c.bf16 %v10638, %v10636
        %v10649 = vpack.c.bf16 %v10641, %v10639
        %v10650 = vpack.c.bf16 %v10642, %v10640
        %v10651 = vld [vmem:[%s12] sm:$0xf]
        %v10652 = vld [vmem:[%s12 + $0x4] sm:$0xf]
        %v10653 = vld [vmem:[%s12 + $0x8] sm:$0xf]
        %v10654 = vld [vmem:[%s12 + $0xc] sm:$0xf]
        %v10655 = vld [vmem:[%s12 + $0x10] sm:$0xf]
        %v10656 = vld [vmem:[%s12 + $0x14] sm:$0xf]
        %v10657 = vld [vmem:[%s12 + $0x18] sm:$0xf]
        %v10658 = vld [vmem:[%s12 + $0x1c] sm:$0xf]
        %v10659 = vld [vmem:[%s12 + $0x20] sm:$0xf]
        %v10660 = vld [vmem:[%s12 + $0x24] sm:$0xf]
        %v10661 = vld [vmem:[%s12 + $0x28] sm:$0xf]
        %v10662 = vld [vmem:[%s12 + $0x2c] sm:$0xf]
        %v10663 = vld [vmem:[%s12 + $0x30] sm:$0xf]
        %v10664 = vld [vmem:[%s12 + $0x34] sm:$0xf]
        %v10665 = vld [vmem:[%s12 + $0x38] sm:$0xf]
        %v10666 = vld [vmem:[%s12 + $0x3c] sm:$0xf]
        %v10667 = vld [vmem:[%s12 + $0x40] sm:$0xf]
        %v10668 = vld [vmem:[%s12 + $0x44] sm:$0xf]
        %v10669 = vld [vmem:[%s12 + $0x48] sm:$0xf]
        %v10670 = vld [vmem:[%s12 + $0x4c] sm:$0xf]
        %v10671 = vld [vmem:[%s12 + $0x50] sm:$0xf]
        %v10672 = vld [vmem:[%s12 + $0x54] sm:$0xf]
        %v10673 = vld [vmem:[%s12 + $0x58] sm:$0xf]
        %v10674 = vld [vmem:[%s12 + $0x5c] sm:$0xf]
        %v10675 = vld [vmem:[%s12 + $0x60] sm:$0xf]
        %v10676 = vld [vmem:[%s12 + $0x64] sm:$0xf]
        %v10677 = vld [vmem:[%s12 + $0x68] sm:$0xf]
        %v10678 = vld [vmem:[%s12 + $0x6c] sm:$0xf]
        %v10679 = vld [vmem:[%s12 + $0x70] sm:$0xf]
        %v10680 = vld [vmem:[%s12 + $0x74] sm:$0xf]
        %v10681 = vld [vmem:[%s12 + $0x78] sm:$0xf]
        %v10682 = vld [vmem:[%s12 + $0x7c] sm:$0xf]
        %v10683 = vld [vmem:[%s13] sm:$0x1]
        %v10685 = vlaneseq
        %v10686 = vshrl.u32 %v10685, 7
        %v10687 = vsub.s32 0, %v10686
        %v10688 = vrot.slane %v10683, %v10687
        %v10722 = vunpack.c.l.b16 %v10651
        %v10723 = vunpack.c.l.b16 %v10652
        %v10724 = vunpack.c.l.b16 %v10653
        %v10725 = vunpack.c.l.b16 %v10654
        %v10726 = vunpack.c.l.b16 %v10655
        %v10727 = vunpack.c.l.b16 %v10656
        %v10728 = vunpack.c.l.b16 %v10657
        %v10729 = vunpack.c.l.b16 %v10658
        %v10730 = vunpack.c.l.b16 %v10659
        %v10731 = vunpack.c.l.b16 %v10660
        %v10732 = vunpack.c.l.b16 %v10661
        %v10733 = vunpack.c.l.b16 %v10662
        %v10734 = vunpack.c.l.b16 %v10663
        %v10735 = vunpack.c.l.b16 %v10664
        %v10736 = vunpack.c.l.b16 %v10665
        %v10737 = vunpack.c.l.b16 %v10666
        %v10738 = vunpack.c.l.b16 %v10667
        %v10739 = vunpack.c.l.b16 %v10668
        %v10740 = vunpack.c.l.b16 %v10669
        %v10741 = vunpack.c.l.b16 %v10670
        %v10742 = vunpack.c.l.b16 %v10671
        %v10743 = vunpack.c.l.b16 %v10672
        %v10744 = vunpack.c.l.b16 %v10673
        %v10745 = vunpack.c.l.b16 %v10674
        %v10746 = vunpack.c.l.b16 %v10675
        %v10747 = vunpack.c.l.b16 %v10676
        %v10748 = vunpack.c.l.b16 %v10677
        %v10749 = vunpack.c.l.b16 %v10678
        %v10750 = vunpack.c.l.b16 %v10679
        %v10751 = vunpack.c.l.b16 %v10680
        %v10752 = vunpack.c.l.b16 %v10681
        %v10753 = vunpack.c.l.b16 %v10682
        %v10754 = vpack.c.b16 %v10723, %v10722
        %v10755 = vpack.c.b16 %v10725, %v10724
        %v10756 = vpack.c.b16 %v10727, %v10726
        %v10757 = vpack.c.b16 %v10729, %v10728
        %v10758 = vpack.c.b16 %v10731, %v10730
        %v10759 = vpack.c.b16 %v10733, %v10732
        %v10760 = vpack.c.b16 %v10735, %v10734
        %v10761 = vpack.c.b16 %v10737, %v10736
        %v10762 = vpack.c.b16 %v10739, %v10738
        %v10763 = vpack.c.b16 %v10741, %v10740
        %v10764 = vpack.c.b16 %v10743, %v10742
        %v10765 = vpack.c.b16 %v10745, %v10744
        %v10766 = vpack.c.b16 %v10747, %v10746
        %v10767 = vpack.c.b16 %v10749, %v10748
        %v10768 = vpack.c.b16 %v10751, %v10750
        %v10769 = vpack.c.b16 %v10753, %v10752
        %10786 = vmatprep.subr.bf16.mxu0 0
        %10787 = vmatpush1.bf16.msra.mxu0 %v10761
        %10788 = vmatprep.subr.bf16.mxu0 0
        %10789 = vmatpush1.bf16.msra.mxu0 %v10760
        %10790 = vmatprep.subr.bf16.mxu0 0
        %10791 = vmatpush1.bf16.msra.mxu0 %v10759
        %10792 = vmatprep.subr.bf16.mxu0 0
        %10793 = vmatpush1.bf16.msra.mxu0 %v10758
        %10794 = vmatprep.subr.bf16.mxu0 0
        %10795 = vmatpush1.bf16.msra.mxu0 %v10757
        %10796 = vmatprep.subr.bf16.mxu0 0
        %10797 = vmatpush1.bf16.msra.mxu0 %v10756
        %10798 = vmatprep.subr.bf16.mxu0 0
        %10799 = vmatpush1.bf16.msra.mxu0 %v10755
        %10800 = vmatprep.subr.bf16.mxu0 0
        %10801 = vmatpush1.bf16.msra.mxu0 %v10754
        %10802 = vmatprep.subr.bf16.mxu0 0
        %10803 = vmatpush2.bf16.msra.mxu0 %v10769
        %10804 = vmatprep.subr.bf16.mxu0 0
        %10805 = vmatpush2.bf16.msra.mxu0 %v10768
        %10806 = vmatprep.subr.bf16.mxu0 0
        %10807 = vmatpush2.bf16.msra.mxu0 %v10767
        %10808 = vmatprep.subr.bf16.mxu0 0
        %10809 = vmatpush2.bf16.msra.mxu0 %v10766
        %10810 = vmatprep.subr.bf16.mxu0 0
        %10811 = vmatpush2.bf16.msra.mxu0 %v10765
        %10812 = vmatprep.subr.bf16.mxu0 0
        %10813 = vmatpush2.bf16.msra.mxu0 %v10764
        %10814 = vmatprep.subr.bf16.mxu0 0
        %10815 = vmatpush2.bf16.msra.mxu0 %v10763
        %10816 = vmatprep.subr.bf16.mxu0 0
        %10817 = vmatpush2.bf16.msra.mxu0 %v10762
        %10818 = vmatprep.mubr.bf16.mxu0 %v10644
        %10819 = vmatmul.mubr.bf16.gmra.mxu0 %v10643
        %v10820 = vpop.f32.mrf.mxu0
        %v10821 = vadd.f32 %v10688, %v10820
        %v10822 = vpop.f32.mrf.mxu0
        %v10823 = vpop.f32.mrf.mxu0
        %v10824 = vadd.f32 %v10688, %v10823
        %v10825 = vpop.f32.mrf.mxu0
        %10826 = vmatprep.mubr.bf16.mxu0 %v10646
        %10827 = vmatmul.mubr.bf16.gmra.mxu0 %v10645
        %v10828 = vpop.f32.mrf.mxu0
        %v10829 = vadd.f32 %v10688, %v10828
        %v10830 = vpop.f32.mrf.mxu0
        %v10831 = vpop.f32.mrf.mxu0
        %v10832 = vadd.f32 %v10688, %v10831
        %v10833 = vpop.f32.mrf.mxu0
        %10834 = vmatprep.mubr.bf16.mxu0 %v10648
        %10835 = vmatmul.mubr.bf16.gmra.mxu0 %v10647
        %v10836 = vpop.f32.mrf.mxu0
        %v10837 = vadd.f32 %v10688, %v10836
        %v10838 = vpop.f32.mrf.mxu0
        %v10839 = vpop.f32.mrf.mxu0
        %v10840 = vadd.f32 %v10688, %v10839
        %v10841 = vpop.f32.mrf.mxu0
        %10842 = vmatprep.mubr.bf16.mxu0 %v10650
        %10843 = vmatmul.mubr.bf16.gmra.mxu0 %v10649
        %v10844 = vpop.f32.mrf.mxu0
        %v10845 = vadd.f32 %v10688, %v10844
        %v10846 = vpop.f32.mrf.mxu0
        %v10847 = vpop.f32.mrf.mxu0
        %v10848 = vadd.f32 %v10688, %v10847
        %v10849 = vpop.f32.mrf.mxu0
        %10850 = vdwg.mxu0
        %10851 = vst [vmem:[%s637] sm:$0xff] %v10821
        %10852 = vst [vmem:[%s637 + $0x8] sm:$0xff] %v10824
        %10853 = vst [vmem:[%s637 + $0x10] sm:$0xff] %v10829
        %10854 = vst [vmem:[%s637 + $0x18] sm:$0xff] %v10832
        %10855 = vst [vmem:[%s637 + $0x20] sm:$0xff] %v10837
        %10856 = vst [vmem:[%s637 + $0x28] sm:$0xff] %v10840
        %10857 = vst [vmem:[%s637 + $0x30] sm:$0xff] %v10845
        %10858 = vst [vmem:[%s637 + $0x38] sm:$0xff] %v10848
        %p10859 = scmp.lt.s32.totalorder %s33, 1
        %s10860 = scalar_select %p10859, %s33, 1
        %s10861 = smul.addr %s10860, 8
        %s10862 = smul.addr %s10861, 8
        %s10863 = scalar_lea.vmem %s14, %s10862
        // Predicated region
        $region121: #{_lambda_.1} parent=75 // pred_check
          %p10864 = pneg %p355
        $region122: #{_lambda_.1} parent=75 // pred_check_branch
          %10866 = sbr.rel (%p10864) target = $region124
        $region123: #{_lambda_.1} parent=75 // pred_region
          _
        $region124: #{_lambda_.1} parent=75 // pred_fallthru
          _
      $region76: #{_lambda_.1} parent=5 // pred_fallthru
        _
      %p10867 = scmp.le.s32.totalorder 2, %s28
      // Predicated region
      $region125: #{_lambda_.1} parent=5 // pred_check
        %p10868 = pneg %p10867
      $region126: #{_lambda_.1} parent=5 // pred_check_branch
        %10870 = sbr.rel (%p10868) target = $region128
      $region127: #{_lambda_.1} parent=5 // pred_region
        %s10871 = ssub.s32 %s28, 2
        // Predicated region
        $region129: #{_lambda_.1} parent=127 // pred_check
          %p10872 = pneg %p361
        $region130: #{_lambda_.1} parent=127 // pred_check_branch
          %10874 = sbr.rel (%p10872) target = $region132
        $region131: #{_lambda_.1} parent=127 // pred_region
          %p10875 = scmp.lt.s32.totalorder %s34, 1
          %s10876 = scalar_select %p10875, %s34, 1
          %s10877 = smul.addr %s10876, 8
          %s10878 = smul.addr %s10877, 8
          %s10879 = scalar_lea.vmem %s14, %s10878
        $region132: #{_lambda_.1} parent=127 // pred_fallthru
          _
      $region128: #{_lambda_.1} parent=5 // pred_fallthru
        _
    $region6: #{_lambda_.1} parent=1 // loop_footer
      %s32 = sadd.s32 1, %s28
    $region7: #{_lambda_.1} parent=1 // loop_footer_branch
      %27 = sbr.rel target = $region3
    $region8: #{_lambda_.1} parent=1 // loop_exit
      _
    %10880 = vsyncpa [#allocation4], 1
    %s10881 = scalar_lea.sflag [#allocation4], 1
    %10882 = vsyncpa %s10881, 1
    %10883 = vsyncpa [#allocation6], 1
    %10884 = vsyncpa [#allocation9], 1
    %10885 = vsyncpa [#allocation12], 1
    %10886 = vsyncpa [#allocation15], 1
    %10887 = vsyncpa [#allocation18], 1

</llo_original>
